<compile_context>
chip_gen: v6e
topology: v6e:2x2x1
jax: 0.10.0
libtpu: 0.0.40
codegen_flags: <defaults>
</compile_context>

<pallas_src>
import math

import jax
import jax.numpy as jnp
from jax.experimental import pallas as pl
from jax.experimental.pallas import tpu as pltpu

LANES = 128           # channel padding used inside VMEM (full vreg lane width)
KP = 9 * LANES        # tap-major flattened contraction dim of the padded weights


def _cdiv(a, b):
    return -(-a // b)


def compute_stage_dims(h, w, widths):
    """Static per-stage output sizes for a chain of 3x3/s2/p1 convs."""
    dims = []
    for cout in widths:
        ho, wo = _cdiv(h, 2), _cdiv(w, 2)
        dims.append(dict(Ho=ho, Wo=wo, M=ho * wo, cout=cout))
        h, w = ho, wo
    return dims


# ----------------------------------------------------------------------------
# Fused 4-stage kernel: one image per grid step, everything stays in VMEM.
# ----------------------------------------------------------------------------
def _make_fused_kernel(stage_dims):
    n_stages = len(stage_dims)

    def kernel(g0_ref, w_ref, b_ref, *rest):
        # rest = (out_0..out_{S-1}, a_ref, act_ref, pg_1..pg_{S-1})
        out_refs = rest[:n_stages]
        a_ref = rest[n_stages]          # (M_max, 128) bf16  per-tap window
        act_ref = rest[n_stages + 1]    # (M_max, 128) bf16  relu'd stage output
        pg_refs = rest[n_stages + 2:]   # parity-grid scratch for stages 1..S-1

        # Zero the internal parity grids once per image: zero padding border
        # and zero channel tail (lanes >= real cout stay 0 automatically).
        for pg in pg_refs:
            pg[...] = jnp.zeros(pg.shape, pg.dtype)

        # Parity convention: grid p = (row_parity)*2 + (col_parity), and
        # pg[p][i2, j2] == x_padded[2*i2 + row_parity, 2*j2 + col_parity].
        def make_reader(ref, hp, has_batch_dim):
            if has_batch_dim:
                def rd(p, row, c0, width):
                    return ref[0, p * hp + row, c0:c0 + width, :]
            else:
                def rd(p, row, c0, width):
                    return ref[p * hp + row, c0:c0 + width, :]
            return rd

        readers = [make_reader(g0_ref, stage_dims[0]["Ho"] + 1, True)]
        for s in range(1, n_stages):
            readers.append(
                make_reader(pg_refs[s - 1], stage_dims[s]["Ho"] + 1, False))

        for s, d in enumerate(stage_dims):
            ho_n, wo_n, m, cout = d["Ho"], d["Wo"], d["M"], d["cout"]
            read = readers[s]

            # --- Tap-accumulate conv: 9 MXU matmuls into an f32 accumulator.
            acc = jnp.zeros((m, LANES), jnp.float32)
            for kh in range(3):
                for kw in range(3):
                    p = (kh % 2) * 2 + (kw % 2)
                    dh, dw = kh // 2, kw // 2
                    # Build this tap's (M, 128) window with contiguous,
                    # unit-stride row copies only (no strided loads).
                    for r in range(ho_n):
                        a_ref[r * wo_n:(r + 1) * wo_n, :] = read(p, r + dh, dw, wo_n)
                    t = kh * 3 + kw
                    w_t = w_ref[s * KP + t * LANES:s * KP + (t + 1) * LANES, :]
                    acc = acc + jnp.dot(a_ref[0:m, :], w_t,
                                        preferred_element_type=jnp.float32)

            # Bias + ReLU in f32.
            acc = jnp.maximum(acc + b_ref[s:s + 1, :], 0.0)

            # Trimmed store: only the real cout channels go to HBM, so no
            # post-kernel channel slice is needed.
            out_refs[s][0] = acc[:, :cout]

            # --- Epilogue: hand the activation to the next stage as its padded
            # space-to-depth parity grids (bf16), entirely inside VMEM.
            if s + 1 < n_stages:
                act_ref[0:m, :] = acc.astype(act_ref.dtype)
                pg_next = pg_refs[s]
                hp_next = stage_dims[s + 1]["Ho"] + 1
                for r in range(ho_n):
                    rp, a = (r + 1) % 2, (r + 1) // 2
                    for c in range(wo_n):
                        cp_, b = (c + 1) % 2, (c + 1) // 2
                        pidx = rp * 2 + cp_
                        src = r * wo_n + c
                        pg_next[pidx * hp_next + a, b:b + 1, :] = (
                            act_ref[src:src + 1, :])
                # TODO(synk): replace this per-pixel parity scatter with a
                # strided/packed store for production spatial sizes.

    return kernel


def fused_backbone_call(g_stacked, w_all, b_all, stage_dims):
    n = g_stacked.shape[0]
    n_stages = len(stage_dims)
    hp1 = stage_dims[0]["Ho"] + 1
    wp1 = stage_dims[0]["Wo"] + 1
    assert g_stacked.shape == (n, 4 * hp1, wp1, LANES)
    m_max = max(d["M"] for d in stage_dims)

    in_specs = [
        pl.BlockSpec((1, 4 * hp1, wp1, LANES), lambda i: (i, 0, 0, 0)),
        pl.BlockSpec((n_stages * KP, LANES), lambda i: (0, 0)),
        pl.BlockSpec((n_stages, LANES), lambda i: (0, 0)),
    ]
    out_specs = tuple(pl.BlockSpec((1, d["M"], d["cout"]), lambda i: (i, 0, 0))
                      for d in stage_dims)
    out_shape = tuple(jax.ShapeDtypeStruct((n, d["M"], d["cout"]), jnp.float32)
                      for d in stage_dims)

    scratch = [pltpu.VMEM((m_max, LANES), jnp.bfloat16),   # per-tap window
               pltpu.VMEM((m_max, LANES), jnp.bfloat16)]   # bf16 stage output
    for d in stage_dims[1:]:
        scratch.append(pltpu.VMEM((4 * (d["Ho"] + 1), d["Wo"] + 1, LANES),
                                  jnp.bfloat16))

    grid_spec = pltpu.PrefetchScalarGridSpec(
        num_scalar_prefetch=0,
        grid=(n,),                       # one image per grid step
        in_specs=in_specs,
        out_specs=out_specs,
        scratch_shapes=scratch,
    )
    return pl.pallas_call(
        _make_fused_kernel(stage_dims),
        out_shape=out_shape,
        grid_spec=grid_spec,
        compiler_params=pltpu.CompilerParams(
            dimension_semantics=("parallel",),
            vmem_limit_bytes=32 * 1024 * 1024),
    )(g_stacked, w_all, b_all)


# ----------------------------------------------------------------------------
# Host glue: one tiny space-to-depth of the NETWORK INPUT only (not per stage).
# ----------------------------------------------------------------------------
def space_to_depth_parity(x):
    """x: (N, H, W, C<=128) f32 -> stacked parity grids (N, 4*(Ho+1), Wo+1, 128) bf16."""
    n, h, w, c = x.shape
    assert c <= LANES
    he, we = h + (h % 2), w + (w % 2)      # odd sizes: add one extra zero row/col
    ho, wo = he // 2, we // 2
    xp = jnp.pad(x.astype(jnp.bfloat16),
                 ((0, 0), (1, 1 + (he - h)), (1, 1 + (we - w)), (0, LANES - c)))
    xr = xp.reshape(n, ho + 1, 2, wo + 1, 2, LANES)
    grids = (xr[:, :, 0, :, 0, :], xr[:, :, 0, :, 1, :],
             xr[:, :, 1, :, 0, :], xr[:, :, 1, :, 1, :])
    return jnp.concatenate(grids, axis=1)


# ----------------------------------------------------------------------------
# Mask resize: F.interpolate(mode='nearest') semantics (src = floor(dst*in/out)).
# ----------------------------------------------------------------------------
def resize_mask_nearest(mask, ho, wo):
    n, h, w = mask.shape
    h_idx = (jnp.arange(ho) * h) // ho
    w_idx = (jnp.arange(wo) * w) // wo
    return mask[:, h_idx][:, :, w_idx]


# ----------------------------------------------------------------------------
# Synthetic backbone parameters (deterministic): 4 stride-2 conv+ReLU stages.
# ----------------------------------------------------------------------------
def init_backbone_params(key, c_in=4, widths=(8, 16, 32, 64)):
    params = []
    c_prev = c_in
    for c_out in widths:
        key, kw, kb = jax.random.split(key, 3)
        fan_in = 9 * c_prev
        w = jax.random.normal(kw, (3, 3, c_prev, c_out), jnp.float32) / math.sqrt(fan_in)
        b = 0.1 * jax.random.normal(kb, (c_out,), jnp.float32)
        params.append((w, b))
        c_prev = c_out
    return params


def prepare_params(raw_params):
    """Kernel layout: weights (S*9*128, 128) bf16 tap-major, biases (S, 128) f32."""
    w_list, b_list, couts = [], [], []
    for (w, b) in raw_params:
        _, _, cin, cout = w.shape
        w_pad = jnp.zeros((3, 3, LANES, LANES), jnp.float32).at[:, :, :cin, :cout].set(w)
        w_list.append(w_pad.reshape(KP, LANES).astype(jnp.bfloat16))
        b_list.append(jnp.zeros((LANES,), jnp.float32).at[:cout].set(b))
        couts.append(cout)
    return jnp.concatenate(w_list, axis=0), jnp.stack(b_list), tuple(couts)


# ----------------------------------------------------------------------------
# BackboneBase.forward equivalent.
# NOTE: requires_grad freezing in __init__ has no forward-pass effect (no-op).
# ----------------------------------------------------------------------------
def backbone_base_forward(x_nchw, mask, w_all, b_all, widths,
                          return_interm_layers=True):
    n, c, h, w = x_nchw.shape
    x = jnp.transpose(x_nchw, (0, 2, 3, 1)).astype(jnp.float32)   # NCHW -> NHWC
    stage_dims = compute_stage_dims(h, w, widths)
    g_stacked = space_to_depth_parity(x)                          # tiny, once
    feats = fused_backbone_call(g_stacked, w_all, b_all, stage_dims)

    layer_ids = (0, 1, 2, 3) if return_interm_layers else (3,)
    out = {}
    for slot, li in enumerate(layer_ids):
        d = stage_dims[li]
        f = feats[li].reshape(n, d["Ho"], d["Wo"], d["cout"])
        f = jnp.transpose(f, (0, 3, 1, 2))            # NHWC -> NCHW (module layout)
        m = resize_mask_nearest(mask, d["Ho"], d["Wo"])
        out[str(slot)] = (f, m)                       # NestedTensor(x, mask)
    return out


# ----------------------------------------------------------------------------
# Pure-JAX reference (same bf16-input / f32-accumulate numerics) for validation.
# ----------------------------------------------------------------------------
def _reference_features(x_nchw, raw_params):
    x = jnp.transpose(x_nchw, (0, 2, 3, 1)).astype(jnp.float32)
    feats = []
    for (w, b) in raw_params:
        y = jax.lax.conv_general_dilated(
            x.astype(jnp.bfloat16), w.astype(jnp.bfloat16),
            window_strides=(2, 2), padding=((1, 1), (1, 1)),
            dimension_numbers=("NHWC", "HWIO", "NHWC"),
            preferred_element_type=jnp.float32)
        x = jnp.maximum(y + b, 0.0)
        feats.append(x)
    return feats


if __name__ == "__main__":
    key = jax.random.PRNGKey(0)
    N, C, H, W = 2, 4, 16, 16
    widths = (8, 16, 32, 64)          # num_channels = 64

    key, kx = jax.random.split(key)
    x = jax.random.normal(kx, (N, C, H, W), jnp.float32)

    # Padding mask: True where the image was zero-padded (right / bottom), as in
    # detr util.misc.collate_fn.
    mask = jnp.zeros((N, H, W), jnp.bool_)
    mask = mask.at[:, 12:, :].set(True).at[:, :, 12:].set(True)

    raw_params = init_backbone_params(key, c_in=C, widths=widths)
    w_all, b_all, couts = prepare_params(raw_params)

    fwd = jax.jit(lambda xx, mm: backbone_base_forward(xx, mm, w_all, b_all,
                                                       widths, True))
    out = fwd(x, mask)

    # Shape / dtype checks (BackboneBase.forward semantics).
    for name, (feat, m) in out.items():
        jax.block_until_ready(feat)
        jax.block_until_ready(m)
        assert feat.shape[0] == N and m.shape[0] == N
        assert feat.shape[-2:] == m.shape[-2:]
        assert m.dtype == jnp.bool_

    # Numerical check against the pure-JAX conv reference.
    refs = _reference_features(x, raw_params)
    for name, ref in zip(["0", "1", "2", "3"], refs):
        got = jnp.transpose(out[name][0], (0, 2, 3, 1))   # NCHW -> NHWC
        err = float(jnp.max(jnp.abs(got - ref)))
        assert err < 1e-1, f"layer {name} max abs err {err}"

    print("KERNEL_OK")
</pallas_src>

<mosaic_0001>
module attributes {stable_mosaic.version = 11 : i64} {
  func.func @kernel(%arg0: i32, %arg1: memref<1x36x9x128xbf16, #tpu.memory_space<vmem>>, %arg2: memref<4608x128xbf16, #tpu.memory_space<vmem>>, %arg3: memref<4x128xf32, #tpu.memory_space<vmem>>, %arg4: memref<1x64x8xf32, #tpu.memory_space<vmem>>, %arg5: memref<1x16x16xf32, #tpu.memory_space<vmem>>, %arg6: memref<1x4x32xf32, #tpu.memory_space<vmem>>, %arg7: memref<1x1x64xf32, #tpu.memory_space<vmem>>, %arg8: memref<64x128xbf16, #tpu.memory_space<vmem>>, %arg9: memref<64x128xbf16, #tpu.memory_space<vmem>>, %arg10: memref<20x5x128xbf16, #tpu.memory_space<vmem>>, %arg11: memref<12x3x128xbf16, #tpu.memory_space<vmem>>, %arg12: memref<8x2x128xbf16, #tpu.memory_space<vmem>>) attributes {dimension_semantics = [#tpu.dimension_semantics<parallel>], iteration_bounds = array<i64: 2>, scalar_prefetch = 0 : i64, scratch_operands = 5 : i64, tpu.core_type = #tpu.core_type<tc>, window_params = [{transform_indices = @transform_0, window_bounds = array<i64: 1, 36, 9, 128>}, {pipeline_mode = #tpu.pipeline_mode<synchronous>, transform_indices = @transform_1, window_bounds = array<i64: 4608, 128>}, {pipeline_mode = #tpu.pipeline_mode<synchronous>, transform_indices = @transform_2, window_bounds = array<i64: 4, 128>}, {transform_indices = @transform_3, window_bounds = array<i64: 1, 64, 8>}, {transform_indices = @transform_4, window_bounds = array<i64: 1, 16, 16>}, {transform_indices = @transform_5, window_bounds = array<i64: 1, 4, 32>}, {transform_indices = @transform_6, window_bounds = array<i64: 1, 1, 64>}]} {
    %cst = arith.constant 0.000000e+00 : bf16
    %0 = vector.broadcast %cst : bf16 to vector<20x5x128xbf16>
    %c0 = arith.constant 0 : index
    %c0_0 = arith.constant 0 : index
    %c0_1 = arith.constant 0 : index
    %1 = vector.load %arg10[%c0, %c0_0, %c0_1] : memref<20x5x128xbf16, #tpu.memory_space<vmem>>, vector<20x5x128xbf16>
    tpu.vector_store %arg10[%c0, %c0_0, %c0_1], %0 {strides = array<i32>} : memref<20x5x128xbf16, #tpu.memory_space<vmem>>, vector<20x5x128xbf16>,
    %cst_2 = arith.constant 0.000000e+00 : bf16
    %2 = vector.broadcast %cst_2 : bf16 to vector<12x3x128xbf16>
    %c0_3 = arith.constant 0 : index
    %c0_4 = arith.constant 0 : index
    %c0_5 = arith.constant 0 : index
    %3 = vector.load %arg11[%c0_3, %c0_4, %c0_5] : memref<12x3x128xbf16, #tpu.memory_space<vmem>>, vector<12x3x128xbf16>
    tpu.vector_store %arg11[%c0_3, %c0_4, %c0_5], %2 {strides = array<i32>} : memref<12x3x128xbf16, #tpu.memory_space<vmem>>, vector<12x3x128xbf16>,
    %cst_6 = arith.constant 0.000000e+00 : bf16
    %4 = vector.broadcast %cst_6 : bf16 to vector<8x2x128xbf16>
    %c0_7 = arith.constant 0 : index
    %c0_8 = arith.constant 0 : index
    %c0_9 = arith.constant 0 : index
    %5 = vector.load %arg12[%c0_7, %c0_8, %c0_9] : memref<8x2x128xbf16, #tpu.memory_space<vmem>>, vector<8x2x128xbf16>
    tpu.vector_store %arg12[%c0_7, %c0_8, %c0_9], %4 {strides = array<i32>} : memref<8x2x128xbf16, #tpu.memory_space<vmem>>, vector<8x2x128xbf16>,
    %cst_10 = arith.constant 0.000000e+00 : f32
    %6 = vector.broadcast %cst_10 : f32 to vector<64x128xf32>
    %c0_11 = arith.constant 0 : index
    %c0_12 = arith.constant 0 : index
    %c0_13 = arith.constant 0 : index
    %c0_14 = arith.constant 0 : index
    %7 = vector.load %arg1[%c0_11, %c0_12, %c0_13, %c0_14] : memref<1x36x9x128xbf16, #tpu.memory_space<vmem>>, vector<1x1x8x128xbf16>
    %8 = vector.shape_cast %7 : vector<1x1x8x128xbf16> to vector<8x128xbf16>
    %c0_15 = arith.constant 0 : index
    %c0_16 = arith.constant 0 : index
    %9 = vector.load %arg8[%c0_15, %c0_16] : memref<64x128xbf16, #tpu.memory_space<vmem>>, vector<8x128xbf16>
    tpu.vector_store %arg8[%c0_15, %c0_16], %8 {strides = array<i32>} : memref<64x128xbf16, #tpu.memory_space<vmem>>, vector<8x128xbf16>,
    %c0_17 = arith.constant 0 : index
    %c1 = arith.constant 1 : index
    %c0_18 = arith.constant 0 : index
    %c0_19 = arith.constant 0 : index
    %10 = vector.load %arg1[%c0_17, %c1, %c0_18, %c0_19] : memref<1x36x9x128xbf16, #tpu.memory_space<vmem>>, vector<1x1x8x128xbf16>
    %11 = vector.shape_cast %10 : vector<1x1x8x128xbf16> to vector<8x128xbf16>
    %c8 = arith.constant 8 : index
    %c0_20 = arith.constant 0 : index
    %12 = vector.load %arg8[%c8, %c0_20] : memref<64x128xbf16, #tpu.memory_space<vmem>>, vector<8x128xbf16>
    tpu.vector_store %arg8[%c8, %c0_20], %11 {strides = array<i32>} : memref<64x128xbf16, #tpu.memory_space<vmem>>, vector<8x128xbf16>,
    %c0_21 = arith.constant 0 : index
    %c2 = arith.constant 2 : index
    %c0_22 = arith.constant 0 : index
    %c0_23 = arith.constant 0 : index
    %13 = vector.load %arg1[%c0_21, %c2, %c0_22, %c0_23] : memref<1x36x9x128xbf16, #tpu.memory_space<vmem>>, vector<1x1x8x128xbf16>
    %14 = vector.shape_cast %13 : vector<1x1x8x128xbf16> to vector<8x128xbf16>
    %c16 = arith.constant 16 : index
    %c0_24 = arith.constant 0 : index
    %15 = vector.load %arg8[%c16, %c0_24] : memref<64x128xbf16, #tpu.memory_space<vmem>>, vector<8x128xbf16>
    tpu.vector_store %arg8[%c16, %c0_24], %14 {strides = array<i32>} : memref<64x128xbf16, #tpu.memory_space<vmem>>, vector<8x128xbf16>,
    %c0_25 = arith.constant 0 : index
    %c3 = arith.constant 3 : index
    %c0_26 = arith.constant 0 : index
    %c0_27 = arith.constant 0 : index
    %16 = vector.load %arg1[%c0_25, %c3, %c0_26, %c0_27] : memref<1x36x9x128xbf16, #tpu.memory_space<vmem>>, vector<1x1x8x128xbf16>
    %17 = vector.shape_cast %16 : vector<1x1x8x128xbf16> to vector<8x128xbf16>
    %c24 = arith.constant 24 : index
    %c0_28 = arith.constant 0 : index
    %18 = vector.load %arg8[%c24, %c0_28] : memref<64x128xbf16, #tpu.memory_space<vmem>>, vector<8x128xbf16>
    tpu.vector_store %arg8[%c24, %c0_28], %17 {strides = array<i32>} : memref<64x128xbf16, #tpu.memory_space<vmem>>, vector<8x128xbf16>,
    %c0_29 = arith.constant 0 : index
    %c4 = arith.constant 4 : index
    %c0_30 = arith.constant 0 : index
    %c0_31 = arith.constant 0 : index
    %19 = vector.load %arg1[%c0_29, %c4, %c0_30, %c0_31] : memref<1x36x9x128xbf16, #tpu.memory_space<vmem>>, vector<1x1x8x128xbf16>
    %20 = vector.shape_cast %19 : vector<1x1x8x128xbf16> to vector<8x128xbf16>
    %c32 = arith.constant 32 : index
    %c0_32 = arith.constant 0 : index
    %21 = vector.load %arg8[%c32, %c0_32] : memref<64x128xbf16, #tpu.memory_space<vmem>>, vector<8x128xbf16>
    tpu.vector_store %arg8[%c32, %c0_32], %20 {strides = array<i32>} : memref<64x128xbf16, #tpu.memory_space<vmem>>, vector<8x128xbf16>,
    %c0_33 = arith.constant 0 : index
    %c5 = arith.constant 5 : index
    %c0_34 = arith.constant 0 : index
    %c0_35 = arith.constant 0 : index
    %22 = vector.load %arg1[%c0_33, %c5, %c0_34, %c0_35] : memref<1x36x9x128xbf16, #tpu.memory_space<vmem>>, vector<1x1x8x128xbf16>
    %23 = vector.shape_cast %22 : vector<1x1x8x128xbf16> to vector<8x128xbf16>
    %c40 = arith.constant 40 : index
    %c0_36 = arith.constant 0 : index
    %24 = vector.load %arg8[%c40, %c0_36] : memref<64x128xbf16, #tpu.memory_space<vmem>>, vector<8x128xbf16>
    tpu.vector_store %arg8[%c40, %c0_36], %23 {strides = array<i32>} : memref<64x128xbf16, #tpu.memory_space<vmem>>, vector<8x128xbf16>,
    %c0_37 = arith.constant 0 : index
    %c6 = arith.constant 6 : index
    %c0_38 = arith.constant 0 : index
    %c0_39 = arith.constant 0 : index
    %25 = vector.load %arg1[%c0_37, %c6, %c0_38, %c0_39] : memref<1x36x9x128xbf16, #tpu.memory_space<vmem>>, vector<1x1x8x128xbf16>
    %26 = vector.shape_cast %25 : vector<1x1x8x128xbf16> to vector<8x128xbf16>
    %c48 = arith.constant 48 : index
    %c0_40 = arith.constant 0 : index
    %27 = vector.load %arg8[%c48, %c0_40] : memref<64x128xbf16, #tpu.memory_space<vmem>>, vector<8x128xbf16>
    tpu.vector_store %arg8[%c48, %c0_40], %26 {strides = array<i32>} : memref<64x128xbf16, #tpu.memory_space<vmem>>, vector<8x128xbf16>,
    %c0_41 = arith.constant 0 : index
    %c7 = arith.constant 7 : index
    %c0_42 = arith.constant 0 : index
    %c0_43 = arith.constant 0 : index
    %28 = vector.load %arg1[%c0_41, %c7, %c0_42, %c0_43] : memref<1x36x9x128xbf16, #tpu.memory_space<vmem>>, vector<1x1x8x128xbf16>
    %29 = vector.shape_cast %28 : vector<1x1x8x128xbf16> to vector<8x128xbf16>
    %c56 = arith.constant 56 : index
    %c0_44 = arith.constant 0 : index
    %30 = vector.load %arg8[%c56, %c0_44] : memref<64x128xbf16, #tpu.memory_space<vmem>>, vector<8x128xbf16>
    tpu.vector_store %arg8[%c56, %c0_44], %29 {strides = array<i32>} : memref<64x128xbf16, #tpu.memory_space<vmem>>, vector<8x128xbf16>,
    %c0_45 = arith.constant 0 : index
    %c0_46 = arith.constant 0 : index
    %31 = vector.load %arg2[%c0_45, %c0_46] : memref<4608x128xbf16, #tpu.memory_space<vmem>>, vector<128x128xbf16>
    %c0_47 = arith.constant 0 : index
    %c0_48 = arith.constant 0 : index
    %32 = vector.load %arg8[%c0_47, %c0_48] : memref<64x128xbf16, #tpu.memory_space<vmem>>, vector<64x128xbf16>
    %cst_49 = arith.constant dense<0.000000e+00> : vector<64x128xf32>
    %33 = tpu.matmul %32, %31, %cst_49 {dimension_numbers = #tpu.dot_dimension_numbers<[1], [0], [0], [1], [0, 0, 1, 1], [], []>} : vector<64x128xbf16>, vector<128x128xbf16>, vector<64x128xf32> -> vector<64x128xf32>
    %34 = arith.addf %6, %33 : vector<64x128xf32>
    %c0_50 = arith.constant 0 : index
    %c9 = arith.constant 9 : index
    %c0_51 = arith.constant 0 : index
    %c0_52 = arith.constant 0 : index
    %35 = vector.load %arg1[%c0_50, %c9, %c0_51, %c0_52] : memref<1x36x9x128xbf16, #tpu.memory_space<vmem>>, vector<1x1x8x128xbf16>
    %36 = vector.shape_cast %35 : vector<1x1x8x128xbf16> to vector<8x128xbf16>
    %c0_53 = arith.constant 0 : index
    %c0_54 = arith.constant 0 : index
    %37 = vector.load %arg8[%c0_53, %c0_54] : memref<64x128xbf16, #tpu.memory_space<vmem>>, vector<8x128xbf16>
    tpu.vector_store %arg8[%c0_53, %c0_54], %36 {strides = array<i32>} : memref<64x128xbf16, #tpu.memory_space<vmem>>, vector<8x128xbf16>,
    %c0_55 = arith.constant 0 : index
    %c10 = arith.constant 10 : index
    %c0_56 = arith.constant 0 : index
    %c0_57 = arith.constant 0 : index
    %38 = vector.load %arg1[%c0_55, %c10, %c0_56, %c0_57] : memref<1x36x9x128xbf16, #tpu.memory_space<vmem>>, vector<1x1x8x128xbf16>
    %39 = vector.shape_cast %38 : vector<1x1x8x128xbf16> to vector<8x128xbf16>
    %c8_58 = arith.constant 8 : index
    %c0_59 = arith.constant 0 : index
    %40 = vector.load %arg8[%c8_58, %c0_59] : memref<64x128xbf16, #tpu.memory_space<vmem>>, vector<8x128xbf16>
    tpu.vector_store %arg8[%c8_58, %c0_59], %39 {strides = array<i32>} : memref<64x128xbf16, #tpu.memory_space<vmem>>, vector<8x128xbf16>,
    %c0_60 = arith.constant 0 : index
    %c11 = arith.constant 11 : index
    %c0_61 = arith.constant 0 : index
    %c0_62 = arith.constant 0 : index
    %41 = vector.load %arg1[%c0_60, %c11, %c0_61, %c0_62] : memref<1x36x9x128xbf16, #tpu.memory_space<vmem>>, vector<1x1x8x128xbf16>
    %42 = vector.shape_cast %41 : vector<1x1x8x128xbf16> to vector<8x128xbf16>
    %c16_63 = arith.constant 16 : index
    %c0_64 = arith.constant 0 : index
    %43 = vector.load %arg8[%c16_63, %c0_64] : memref<64x128xbf16, #tpu.memory_space<vmem>>, vector<8x128xbf16>
    tpu.vector_store %arg8[%c16_63, %c0_64], %42 {strides = array<i32>} : memref<64x128xbf16, #tpu.memory_space<vmem>>, vector<8x128xbf16>,
    %c0_65 = arith.constant 0 : index
    %c12 = arith.constant 12 : index
    %c0_66 = arith.constant 0 : index
    %c0_67 = arith.constant 0 : index
    %44 = vector.load %arg1[%c0_65, %c12, %c0_66, %c0_67] : memref<1x36x9x128xbf16, #tpu.memory_space<vmem>>, vector<1x1x8x128xbf16>
    %45 = vector.shape_cast %44 : vector<1x1x8x128xbf16> to vector<8x128xbf16>
    %c24_68 = arith.constant 24 : index
    %c0_69 = arith.constant 0 : index
    %46 = vector.load %arg8[%c24_68, %c0_69] : memref<64x128xbf16, #tpu.memory_space<vmem>>, vector<8x128xbf16>
    tpu.vector_store %arg8[%c24_68, %c0_69], %45 {strides = array<i32>} : memref<64x128xbf16, #tpu.memory_space<vmem>>, vector<8x128xbf16>,
    %c0_70 = arith.constant 0 : index
    %c13 = arith.constant 13 : index
    %c0_71 = arith.constant 0 : index
    %c0_72 = arith.constant 0 : index
    %47 = vector.load %arg1[%c0_70, %c13, %c0_71, %c0_72] : memref<1x36x9x128xbf16, #tpu.memory_space<vmem>>, vector<1x1x8x128xbf16>
    %48 = vector.shape_cast %47 : vector<1x1x8x128xbf16> to vector<8x128xbf16>
    %c32_73 = arith.constant 32 : index
    %c0_74 = arith.constant 0 : index
    %49 = vector.load %arg8[%c32_73, %c0_74] : memref<64x128xbf16, #tpu.memory_space<vmem>>, vector<8x128xbf16>
    tpu.vector_store %arg8[%c32_73, %c0_74], %48 {strides = array<i32>} : memref<64x128xbf16, #tpu.memory_space<vmem>>, vector<8x128xbf16>,
    %c0_75 = arith.constant 0 : index
    %c14 = arith.constant 14 : index
    %c0_76 = arith.constant 0 : index
    %c0_77 = arith.constant 0 : index
    %50 = vector.load %arg1[%c0_75, %c14, %c0_76, %c0_77] : memref<1x36x9x128xbf16, #tpu.memory_space<vmem>>, vector<1x1x8x128xbf16>
    %51 = vector.shape_cast %50 : vector<1x1x8x128xbf16> to vector<8x128xbf16>
    %c40_78 = arith.constant 40 : index
    %c0_79 = arith.constant 0 : index
    %52 = vector.load %arg8[%c40_78, %c0_79] : memref<64x128xbf16, #tpu.memory_space<vmem>>, vector<8x128xbf16>
    tpu.vector_store %arg8[%c40_78, %c0_79], %51 {strides = array<i32>} : memref<64x128xbf16, #tpu.memory_space<vmem>>, vector<8x128xbf16>,
    %c0_80 = arith.constant 0 : index
    %c15 = arith.constant 15 : index
    %c0_81 = arith.constant 0 : index
    %c0_82 = arith.constant 0 : index
    %53 = vector.load %arg1[%c0_80, %c15, %c0_81, %c0_82] : memref<1x36x9x128xbf16, #tpu.memory_space<vmem>>, vector<1x1x8x128xbf16>
    %54 = vector.shape_cast %53 : vector<1x1x8x128xbf16> to vector<8x128xbf16>
    %c48_83 = arith.constant 48 : index
    %c0_84 = arith.constant 0 : index
    %55 = vector.load %arg8[%c48_83, %c0_84] : memref<64x128xbf16, #tpu.memory_space<vmem>>, vector<8x128xbf16>
    tpu.vector_store %arg8[%c48_83, %c0_84], %54 {strides = array<i32>} : memref<64x128xbf16, #tpu.memory_space<vmem>>, vector<8x128xbf16>,
    %c0_85 = arith.constant 0 : index
    %c16_86 = arith.constant 16 : index
    %c0_87 = arith.constant 0 : index
    %c0_88 = arith.constant 0 : index
    %56 = vector.load %arg1[%c0_85, %c16_86, %c0_87, %c0_88] : memref<1x36x9x128xbf16, #tpu.memory_space<vmem>>, vector<1x1x8x128xbf16>
    %57 = vector.shape_cast %56 : vector<1x1x8x128xbf16> to vector<8x128xbf16>
    %c56_89 = arith.constant 56 : index
    %c0_90 = arith.constant 0 : index
    %58 = vector.load %arg8[%c56_89, %c0_90] : memref<64x128xbf16, #tpu.memory_space<vmem>>, vector<8x128xbf16>
    tpu.vector_store %arg8[%c56_89, %c0_90], %57 {strides = array<i32>} : memref<64x128xbf16, #tpu.memory_space<vmem>>, vector<8x128xbf16>,
    %c128 = arith.constant 128 : index
    %c0_91 = arith.constant 0 : index
    %59 = vector.load %arg2[%c128, %c0_91] : memref<4608x128xbf16, #tpu.memory_space<vmem>>, vector<128x128xbf16>
    %c0_92 = arith.constant 0 : index
    %c0_93 = arith.constant 0 : index
    %60 = vector.load %arg8[%c0_92, %c0_93] : memref<64x128xbf16, #tpu.memory_space<vmem>>, vector<64x128xbf16>
    %cst_94 = arith.constant dense<0.000000e+00> : vector<64x128xf32>
    %61 = tpu.matmul %60, %59, %cst_94 {dimension_numbers = #tpu.dot_dimension_numbers<[1], [0], [0], [1], [0, 0, 1, 1], [], []>} : vector<64x128xbf16>, vector<128x128xbf16>, vector<64x128xf32> -> vector<64x128xf32>
    %62 = arith.addf %34, %61 : vector<64x128xf32>
    %c0_95 = arith.constant 0 : index
    %c0_96 = arith.constant 0 : index
    %c1_97 = arith.constant 1 : index
    %c0_98 = arith.constant 0 : index
    %63 = vector.load %arg1[%c0_95, %c0_96, %c1_97, %c0_98] : memref<1x36x9x128xbf16, #tpu.memory_space<vmem>>, vector<1x1x8x128xbf16>
    %64 = vector.shape_cast %63 : vector<1x1x8x128xbf16> to vector<8x128xbf16>
    %c0_99 = arith.constant 0 : index
    %c0_100 = arith.constant 0 : index
    %65 = vector.load %arg8[%c0_99, %c0_100] : memref<64x128xbf16, #tpu.memory_space<vmem>>, vector<8x128xbf16>
    tpu.vector_store %arg8[%c0_99, %c0_100], %64 {strides = array<i32>} : memref<64x128xbf16, #tpu.memory_space<vmem>>, vector<8x128xbf16>,
    %c0_101 = arith.constant 0 : index
    %c1_102 = arith.constant 1 : index
    %c1_103 = arith.constant 1 : index
    %c0_104 = arith.constant 0 : index
    %66 = vector.load %arg1[%c0_101, %c1_102, %c1_103, %c0_104] : memref<1x36x9x128xbf16, #tpu.memory_space<vmem>>, vector<1x1x8x128xbf16>
    %67 = vector.shape_cast %66 : vector<1x1x8x128xbf16> to vector<8x128xbf16>
    %c8_105 = arith.constant 8 : index
    %c0_106 = arith.constant 0 : index
    %68 = vector.load %arg8[%c8_105, %c0_106] : memref<64x128xbf16, #tpu.memory_space<vmem>>, vector<8x128xbf16>
    tpu.vector_store %arg8[%c8_105, %c0_106], %67 {strides = array<i32>} : memref<64x128xbf16, #tpu.memory_space<vmem>>, vector<8x128xbf16>,
    %c0_107 = arith.constant 0 : index
    %c2_108 = arith.constant 2 : index
    %c1_109 = arith.constant 1 : index
    %c0_110 = arith.constant 0 : index
    %69 = vector.load %arg1[%c0_107, %c2_108, %c1_109, %c0_110] : memref<1x36x9x128xbf16, #tpu.memory_space<vmem>>, vector<1x1x8x128xbf16>
    %70 = vector.shape_cast %69 : vector<1x1x8x128xbf16> to vector<8x128xbf16>
    %c16_111 = arith.constant 16 : index
    %c0_112 = arith.constant 0 : index
    %71 = vector.load %arg8[%c16_111, %c0_112] : memref<64x128xbf16, #tpu.memory_space<vmem>>, vector<8x128xbf16>
    tpu.vector_store %arg8[%c16_111, %c0_112], %70 {strides = array<i32>} : memref<64x128xbf16, #tpu.memory_space<vmem>>, vector<8x128xbf16>,
    %c0_113 = arith.constant 0 : index
    %c3_114 = arith.constant 3 : index
    %c1_115 = arith.constant 1 : index
    %c0_116 = arith.constant 0 : index
    %72 = vector.load %arg1[%c0_113, %c3_114, %c1_115, %c0_116] : memref<1x36x9x128xbf16, #tpu.memory_space<vmem>>, vector<1x1x8x128xbf16>
    %73 = vector.shape_cast %72 : vector<1x1x8x128xbf16> to vector<8x128xbf16>
    %c24_117 = arith.constant 24 : index
    %c0_118 = arith.constant 0 : index
    %74 = vector.load %arg8[%c24_117, %c0_118] : memref<64x128xbf16, #tpu.memory_space<vmem>>, vector<8x128xbf16>
    tpu.vector_store %arg8[%c24_117, %c0_118], %73 {strides = array<i32>} : memref<64x128xbf16, #tpu.memory_space<vmem>>, vector<8x128xbf16>,
    %c0_119 = arith.constant 0 : index
    %c4_120 = arith.constant 4 : index
    %c1_121 = arith.constant 1 : index
    %c0_122 = arith.constant 0 : index
    %75 = vector.load %arg1[%c0_119, %c4_120, %c1_121, %c0_122] : memref<1x36x9x128xbf16, #tpu.memory_space<vmem>>, vector<1x1x8x128xbf16>
    %76 = vector.shape_cast %75 : vector<1x1x8x128xbf16> to vector<8x128xbf16>
    %c32_123 = arith.constant 32 : index
    %c0_124 = arith.constant 0 : index
    %77 = vector.load %arg8[%c32_123, %c0_124] : memref<64x128xbf16, #tpu.memory_space<vmem>>, vector<8x128xbf16>
    tpu.vector_store %arg8[%c32_123, %c0_124], %76 {strides = array<i32>} : memref<64x128xbf16, #tpu.memory_space<vmem>>, vector<8x128xbf16>,
    %c0_125 = arith.constant 0 : index
    %c5_126 = arith.constant 5 : index
    %c1_127 = arith.constant 1 : index
    %c0_128 = arith.constant 0 : index
    %78 = vector.load %arg1[%c0_125, %c5_126, %c1_127, %c0_128] : memref<1x36x9x128xbf16, #tpu.memory_space<vmem>>, vector<1x1x8x128xbf16>
    %79 = vector.shape_cast %78 : vector<1x1x8x128xbf16> to vector<8x128xbf16>
    %c40_129 = arith.constant 40 : index
    %c0_130 = arith.constant 0 : index
    %80 = vector.load %arg8[%c40_129, %c0_130] : memref<64x128xbf16, #tpu.memory_space<vmem>>, vector<8x128xbf16>
    tpu.vector_store %arg8[%c40_129, %c0_130], %79 {strides = array<i32>} : memref<64x128xbf16, #tpu.memory_space<vmem>>, vector<8x128xbf16>,
    %c0_131 = arith.constant 0 : index
    %c6_132 = arith.constant 6 : index
    %c1_133 = arith.constant 1 : index
    %c0_134 = arith.constant 0 : index
    %81 = vector.load %arg1[%c0_131, %c6_132, %c1_133, %c0_134] : memref<1x36x9x128xbf16, #tpu.memory_space<vmem>>, vector<1x1x8x128xbf16>
    %82 = vector.shape_cast %81 : vector<1x1x8x128xbf16> to vector<8x128xbf16>
    %c48_135 = arith.constant 48 : index
    %c0_136 = arith.constant 0 : index
    %83 = vector.load %arg8[%c48_135, %c0_136] : memref<64x128xbf16, #tpu.memory_space<vmem>>, vector<8x128xbf16>
    tpu.vector_store %arg8[%c48_135, %c0_136], %82 {strides = array<i32>} : memref<64x128xbf16, #tpu.memory_space<vmem>>, vector<8x128xbf16>,
    %c0_137 = arith.constant 0 : index
    %c7_138 = arith.constant 7 : index
    %c1_139 = arith.constant 1 : index
    %c0_140 = arith.constant 0 : index
    %84 = vector.load %arg1[%c0_137, %c7_138, %c1_139, %c0_140] : memref<1x36x9x128xbf16, #tpu.memory_space<vmem>>, vector<1x1x8x128xbf16>
    %85 = vector.shape_cast %84 : vector<1x1x8x128xbf16> to vector<8x128xbf16>
    %c56_141 = arith.constant 56 : index
    %c0_142 = arith.constant 0 : index
    %86 = vector.load %arg8[%c56_141, %c0_142] : memref<64x128xbf16, #tpu.memory_space<vmem>>, vector<8x128xbf16>
    tpu.vector_store %arg8[%c56_141, %c0_142], %85 {strides = array<i32>} : memref<64x128xbf16, #tpu.memory_space<vmem>>, vector<8x128xbf16>,
    %c256 = arith.constant 256 : index
    %c0_143 = arith.constant 0 : index
    %87 = vector.load %arg2[%c256, %c0_143] : memref<4608x128xbf16, #tpu.memory_space<vmem>>, vector<128x128xbf16>
    %c0_144 = arith.constant 0 : index
    %c0_145 = arith.constant 0 : index
    %88 = vector.load %arg8[%c0_144, %c0_145] : memref<64x128xbf16, #tpu.memory_space<vmem>>, vector<64x128xbf16>
    %cst_146 = arith.constant dense<0.000000e+00> : vector<64x128xf32>
    %89 = tpu.matmul %88, %87, %cst_146 {dimension_numbers = #tpu.dot_dimension_numbers<[1], [0], [0], [1], [0, 0, 1, 1], [], []>} : vector<64x128xbf16>, vector<128x128xbf16>, vector<64x128xf32> -> vector<64x128xf32>
    %90 = arith.addf %62, %89 : vector<64x128xf32>
    %c0_147 = arith.constant 0 : index
    %c18 = arith.constant 18 : index
    %c0_148 = arith.constant 0 : index
    %c0_149 = arith.constant 0 : index
    %91 = vector.load %arg1[%c0_147, %c18, %c0_148, %c0_149] : memref<1x36x9x128xbf16, #tpu.memory_space<vmem>>, vector<1x1x8x128xbf16>
    %92 = vector.shape_cast %91 : vector<1x1x8x128xbf16> to vector<8x128xbf16>
    %c0_150 = arith.constant 0 : index
    %c0_151 = arith.constant 0 : index
    %93 = vector.load %arg8[%c0_150, %c0_151] : memref<64x128xbf16, #tpu.memory_space<vmem>>, vector<8x128xbf16>
    tpu.vector_store %arg8[%c0_150, %c0_151], %92 {strides = array<i32>} : memref<64x128xbf16, #tpu.memory_space<vmem>>, vector<8x128xbf16>,
    %c0_152 = arith.constant 0 : index
    %c19 = arith.constant 19 : index
    %c0_153 = arith.constant 0 : index
    %c0_154 = arith.constant 0 : index
    %94 = vector.load %arg1[%c0_152, %c19, %c0_153, %c0_154] : memref<1x36x9x128xbf16, #tpu.memory_space<vmem>>, vector<1x1x8x128xbf16>
    %95 = vector.shape_cast %94 : vector<1x1x8x128xbf16> to vector<8x128xbf16>
    %c8_155 = arith.constant 8 : index
    %c0_156 = arith.constant 0 : index
    %96 = vector.load %arg8[%c8_155, %c0_156] : memref<64x128xbf16, #tpu.memory_space<vmem>>, vector<8x128xbf16>
    tpu.vector_store %arg8[%c8_155, %c0_156], %95 {strides = array<i32>} : memref<64x128xbf16, #tpu.memory_space<vmem>>, vector<8x128xbf16>,
    %c0_157 = arith.constant 0 : index
    %c20 = arith.constant 20 : index
    %c0_158 = arith.constant 0 : index
    %c0_159 = arith.constant 0 : index
    %97 = vector.load %arg1[%c0_157, %c20, %c0_158, %c0_159] : memref<1x36x9x128xbf16, #tpu.memory_space<vmem>>, vector<1x1x8x128xbf16>
    %98 = vector.shape_cast %97 : vector<1x1x8x128xbf16> to vector<8x128xbf16>
    %c16_160 = arith.constant 16 : index
    %c0_161 = arith.constant 0 : index
    %99 = vector.load %arg8[%c16_160, %c0_161] : memref<64x128xbf16, #tpu.memory_space<vmem>>, vector<8x128xbf16>
    tpu.vector_store %arg8[%c16_160, %c0_161], %98 {strides = array<i32>} : memref<64x128xbf16, #tpu.memory_space<vmem>>, vector<8x128xbf16>,
    %c0_162 = arith.constant 0 : index
    %c21 = arith.constant 21 : index
    %c0_163 = arith.constant 0 : index
    %c0_164 = arith.constant 0 : index
    %100 = vector.load %arg1[%c0_162, %c21, %c0_163, %c0_164] : memref<1x36x9x128xbf16, #tpu.memory_space<vmem>>, vector<1x1x8x128xbf16>
    %101 = vector.shape_cast %100 : vector<1x1x8x128xbf16> to vector<8x128xbf16>
    %c24_165 = arith.constant 24 : index
    %c0_166 = arith.constant 0 : index
    %102 = vector.load %arg8[%c24_165, %c0_166] : memref<64x128xbf16, #tpu.memory_space<vmem>>, vector<8x128xbf16>
    tpu.vector_store %arg8[%c24_165, %c0_166], %101 {strides = array<i32>} : memref<64x128xbf16, #tpu.memory_space<vmem>>, vector<8x128xbf16>,
    %c0_167 = arith.constant 0 : index
    %c22 = arith.constant 22 : index
    %c0_168 = arith.constant 0 : index
    %c0_169 = arith.constant 0 : index
    %103 = vector.load %arg1[%c0_167, %c22, %c0_168, %c0_169] : memref<1x36x9x128xbf16, #tpu.memory_space<vmem>>, vector<1x1x8x128xbf16>
    %104 = vector.shape_cast %103 : vector<1x1x8x128xbf16> to vector<8x128xbf16>
    %c32_170 = arith.constant 32 : index
    %c0_171 = arith.constant 0 : index
    %105 = vector.load %arg8[%c32_170, %c0_171] : memref<64x128xbf16, #tpu.memory_space<vmem>>, vector<8x128xbf16>
    tpu.vector_store %arg8[%c32_170, %c0_171], %104 {strides = array<i32>} : memref<64x128xbf16, #tpu.memory_space<vmem>>, vector<8x128xbf16>,
    %c0_172 = arith.constant 0 : index
    %c23 = arith.constant 23 : index
    %c0_173 = arith.constant 0 : index
    %c0_174 = arith.constant 0 : index
    %106 = vector.load %arg1[%c0_172, %c23, %c0_173, %c0_174] : memref<1x36x9x128xbf16, #tpu.memory_space<vmem>>, vector<1x1x8x128xbf16>
    %107 = vector.shape_cast %106 : vector<1x1x8x128xbf16> to vector<8x128xbf16>
    %c40_175 = arith.constant 40 : index
    %c0_176 = arith.constant 0 : index
    %108 = vector.load %arg8[%c40_175, %c0_176] : memref<64x128xbf16, #tpu.memory_space<vmem>>, vector<8x128xbf16>
    tpu.vector_store %arg8[%c40_175, %c0_176], %107 {strides = array<i32>} : memref<64x128xbf16, #tpu.memory_space<vmem>>, vector<8x128xbf16>,
    %c0_177 = arith.constant 0 : index
    %c24_178 = arith.constant 24 : index
    %c0_179 = arith.constant 0 : index
    %c0_180 = arith.constant 0 : index
    %109 = vector.load %arg1[%c0_177, %c24_178, %c0_179, %c0_180] : memref<1x36x9x128xbf16, #tpu.memory_space<vmem>>, vector<1x1x8x128xbf16>
    %110 = vector.shape_cast %109 : vector<1x1x8x128xbf16> to vector<8x128xbf16>
    %c48_181 = arith.constant 48 : index
    %c0_182 = arith.constant 0 : index
    %111 = vector.load %arg8[%c48_181, %c0_182] : memref<64x128xbf16, #tpu.memory_space<vmem>>, vector<8x128xbf16>
    tpu.vector_store %arg8[%c48_181, %c0_182], %110 {strides = array<i32>} : memref<64x128xbf16, #tpu.memory_space<vmem>>, vector<8x128xbf16>,
    %c0_183 = arith.constant 0 : index
    %c25 = arith.constant 25 : index
    %c0_184 = arith.constant 0 : index
    %c0_185 = arith.constant 0 : index
    %112 = vector.load %arg1[%c0_183, %c25, %c0_184, %c0_185] : memref<1x36x9x128xbf16, #tpu.memory_space<vmem>>, vector<1x1x8x128xbf16>
    %113 = vector.shape_cast %112 : vector<1x1x8x128xbf16> to vector<8x128xbf16>
    %c56_186 = arith.constant 56 : index
    %c0_187 = arith.constant 0 : index
    %114 = vector.load %arg8[%c56_186, %c0_187] : memref<64x128xbf16, #tpu.memory_space<vmem>>, vector<8x128xbf16>
    tpu.vector_store %arg8[%c56_186, %c0_187], %113 {strides = array<i32>} : memref<64x128xbf16, #tpu.memory_space<vmem>>, vector<8x128xbf16>,
    %c384 = arith.constant 384 : index
    %c0_188 = arith.constant 0 : index
    %115 = vector.load %arg2[%c384, %c0_188] : memref<4608x128xbf16, #tpu.memory_space<vmem>>, vector<128x128xbf16>
    %c0_189 = arith.constant 0 : index
    %c0_190 = arith.constant 0 : index
    %116 = vector.load %arg8[%c0_189, %c0_190] : memref<64x128xbf16, #tpu.memory_space<vmem>>, vector<64x128xbf16>
    %cst_191 = arith.constant dense<0.000000e+00> : vector<64x128xf32>
    %117 = tpu.matmul %116, %115, %cst_191 {dimension_numbers = #tpu.dot_dimension_numbers<[1], [0], [0], [1], [0, 0, 1, 1], [], []>} : vector<64x128xbf16>, vector<128x128xbf16>, vector<64x128xf32> -> vector<64x128xf32>
    %118 = arith.addf %90, %117 : vector<64x128xf32>
    %c0_192 = arith.constant 0 : index
    %c27 = arith.constant 27 : index
    %c0_193 = arith.constant 0 : index
    %c0_194 = arith.constant 0 : index
    %119 = vector.load %arg1[%c0_192, %c27, %c0_193, %c0_194] : memref<1x36x9x128xbf16, #tpu.memory_space<vmem>>, vector<1x1x8x128xbf16>
    %120 = vector.shape_cast %119 : vector<1x1x8x128xbf16> to vector<8x128xbf16>
    %c0_195 = arith.constant 0 : index
    %c0_196 = arith.constant 0 : index
    %121 = vector.load %arg8[%c0_195, %c0_196] : memref<64x128xbf16, #tpu.memory_space<vmem>>, vector<8x128xbf16>
    tpu.vector_store %arg8[%c0_195, %c0_196], %120 {strides = array<i32>} : memref<64x128xbf16, #tpu.memory_space<vmem>>, vector<8x128xbf16>,
    %c0_197 = arith.constant 0 : index
    %c28 = arith.constant 28 : index
    %c0_198 = arith.constant 0 : index
    %c0_199 = arith.constant 0 : index
    %122 = vector.load %arg1[%c0_197, %c28, %c0_198, %c0_199] : memref<1x36x9x128xbf16, #tpu.memory_space<vmem>>, vector<1x1x8x128xbf16>
    %123 = vector.shape_cast %122 : vector<1x1x8x128xbf16> to vector<8x128xbf16>
    %c8_200 = arith.constant 8 : index
    %c0_201 = arith.constant 0 : index
    %124 = vector.load %arg8[%c8_200, %c0_201] : memref<64x128xbf16, #tpu.memory_space<vmem>>, vector<8x128xbf16>
    tpu.vector_store %arg8[%c8_200, %c0_201], %123 {strides = array<i32>} : memref<64x128xbf16, #tpu.memory_space<vmem>>, vector<8x128xbf16>,
    %c0_202 = arith.constant 0 : index
    %c29 = arith.constant 29 : index
    %c0_203 = arith.constant 0 : index
    %c0_204 = arith.constant 0 : index
    %125 = vector.load %arg1[%c0_202, %c29, %c0_203, %c0_204] : memref<1x36x9x128xbf16, #tpu.memory_space<vmem>>, vector<1x1x8x128xbf16>
    %126 = vector.shape_cast %125 : vector<1x1x8x128xbf16> to vector<8x128xbf16>
    %c16_205 = arith.constant 16 : index
    %c0_206 = arith.constant 0 : index
    %127 = vector.load %arg8[%c16_205, %c0_206] : memref<64x128xbf16, #tpu.memory_space<vmem>>, vector<8x128xbf16>
    tpu.vector_store %arg8[%c16_205, %c0_206], %126 {strides = array<i32>} : memref<64x128xbf16, #tpu.memory_space<vmem>>, vector<8x128xbf16>,
    %c0_207 = arith.constant 0 : index
    %c30 = arith.constant 30 : index
    %c0_208 = arith.constant 0 : index
    %c0_209 = arith.constant 0 : index
    %128 = vector.load %arg1[%c0_207, %c30, %c0_208, %c0_209] : memref<1x36x9x128xbf16, #tpu.memory_space<vmem>>, vector<1x1x8x128xbf16>
    %129 = vector.shape_cast %128 : vector<1x1x8x128xbf16> to vector<8x128xbf16>
    %c24_210 = arith.constant 24 : index
    %c0_211 = arith.constant 0 : index
    %130 = vector.load %arg8[%c24_210, %c0_211] : memref<64x128xbf16, #tpu.memory_space<vmem>>, vector<8x128xbf16>
    tpu.vector_store %arg8[%c24_210, %c0_211], %129 {strides = array<i32>} : memref<64x128xbf16, #tpu.memory_space<vmem>>, vector<8x128xbf16>,
    %c0_212 = arith.constant 0 : index
    %c31 = arith.constant 31 : index
    %c0_213 = arith.constant 0 : index
    %c0_214 = arith.constant 0 : index
    %131 = vector.load %arg1[%c0_212, %c31, %c0_213, %c0_214] : memref<1x36x9x128xbf16, #tpu.memory_space<vmem>>, vector<1x1x8x128xbf16>
    %132 = vector.shape_cast %131 : vector<1x1x8x128xbf16> to vector<8x128xbf16>
    %c32_215 = arith.constant 32 : index
    %c0_216 = arith.constant 0 : index
    %133 = vector.load %arg8[%c32_215, %c0_216] : memref<64x128xbf16, #tpu.memory_space<vmem>>, vector<8x128xbf16>
    tpu.vector_store %arg8[%c32_215, %c0_216], %132 {strides = array<i32>} : memref<64x128xbf16, #tpu.memory_space<vmem>>, vector<8x128xbf16>,
    %c0_217 = arith.constant 0 : index
    %c32_218 = arith.constant 32 : index
    %c0_219 = arith.constant 0 : index
    %c0_220 = arith.constant 0 : index
    %134 = vector.load %arg1[%c0_217, %c32_218, %c0_219, %c0_220] : memref<1x36x9x128xbf16, #tpu.memory_space<vmem>>, vector<1x1x8x128xbf16>
    %135 = vector.shape_cast %134 : vector<1x1x8x128xbf16> to vector<8x128xbf16>
    %c40_221 = arith.constant 40 : index
    %c0_222 = arith.constant 0 : index
    %136 = vector.load %arg8[%c40_221, %c0_222] : memref<64x128xbf16, #tpu.memory_space<vmem>>, vector<8x128xbf16>
    tpu.vector_store %arg8[%c40_221, %c0_222], %135 {strides = array<i32>} : memref<64x128xbf16, #tpu.memory_space<vmem>>, vector<8x128xbf16>,
    %c0_223 = arith.constant 0 : index
    %c33 = arith.constant 33 : index
    %c0_224 = arith.constant 0 : index
    %c0_225 = arith.constant 0 : index
    %137 = vector.load %arg1[%c0_223, %c33, %c0_224, %c0_225] : memref<1x36x9x128xbf16, #tpu.memory_space<vmem>>, vector<1x1x8x128xbf16>
    %138 = vector.shape_cast %137 : vector<1x1x8x128xbf16> to vector<8x128xbf16>
    %c48_226 = arith.constant 48 : index
    %c0_227 = arith.constant 0 : index
    %139 = vector.load %arg8[%c48_226, %c0_227] : memref<64x128xbf16, #tpu.memory_space<vmem>>, vector<8x128xbf16>
    tpu.vector_store %arg8[%c48_226, %c0_227], %138 {strides = array<i32>} : memref<64x128xbf16, #tpu.memory_space<vmem>>, vector<8x128xbf16>,
    %c0_228 = arith.constant 0 : index
    %c34 = arith.constant 34 : index
    %c0_229 = arith.constant 0 : index
    %c0_230 = arith.constant 0 : index
    %140 = vector.load %arg1[%c0_228, %c34, %c0_229, %c0_230] : memref<1x36x9x128xbf16, #tpu.memory_space<vmem>>, vector<1x1x8x128xbf16>
    %141 = vector.shape_cast %140 : vector<1x1x8x128xbf16> to vector<8x128xbf16>
    %c56_231 = arith.constant 56 : index
    %c0_232 = arith.constant 0 : index
    %142 = vector.load %arg8[%c56_231, %c0_232] : memref<64x128xbf16, #tpu.memory_space<vmem>>, vector<8x128xbf16>
    tpu.vector_store %arg8[%c56_231, %c0_232], %141 {strides = array<i32>} : memref<64x128xbf16, #tpu.memory_space<vmem>>, vector<8x128xbf16>,
    %c512 = arith.constant 512 : index
    %c0_233 = arith.constant 0 : index
    %143 = vector.load %arg2[%c512, %c0_233] : memref<4608x128xbf16, #tpu.memory_space<vmem>>, vector<128x128xbf16>
    %c0_234 = arith.constant 0 : index
    %c0_235 = arith.constant 0 : index
    %144 = vector.load %arg8[%c0_234, %c0_235] : memref<64x128xbf16, #tpu.memory_space<vmem>>, vector<64x128xbf16>
    %cst_236 = arith.constant dense<0.000000e+00> : vector<64x128xf32>
    %145 = tpu.matmul %144, %143, %cst_236 {dimension_numbers = #tpu.dot_dimension_numbers<[1], [0], [0], [1], [0, 0, 1, 1], [], []>} : vector<64x128xbf16>, vector<128x128xbf16>, vector<64x128xf32> -> vector<64x128xf32>
    %146 = arith.addf %118, %145 : vector<64x128xf32>
    %c0_237 = arith.constant 0 : index
    %c18_238 = arith.constant 18 : index
    %c1_239 = arith.constant 1 : index
    %c0_240 = arith.constant 0 : index
    %147 = vector.load %arg1[%c0_237, %c18_238, %c1_239, %c0_240] : memref<1x36x9x128xbf16, #tpu.memory_space<vmem>>, vector<1x1x8x128xbf16>
    %148 = vector.shape_cast %147 : vector<1x1x8x128xbf16> to vector<8x128xbf16>
    %c0_241 = arith.constant 0 : index
    %c0_242 = arith.constant 0 : index
    %149 = vector.load %arg8[%c0_241, %c0_242] : memref<64x128xbf16, #tpu.memory_space<vmem>>, vector<8x128xbf16>
    tpu.vector_store %arg8[%c0_241, %c0_242], %148 {strides = array<i32>} : memref<64x128xbf16, #tpu.memory_space<vmem>>, vector<8x128xbf16>,
    %c0_243 = arith.constant 0 : index
    %c19_244 = arith.constant 19 : index
    %c1_245 = arith.constant 1 : index
    %c0_246 = arith.constant 0 : index
    %150 = vector.load %arg1[%c0_243, %c19_244, %c1_245, %c0_246] : memref<1x36x9x128xbf16, #tpu.memory_space<vmem>>, vector<1x1x8x128xbf16>
    %151 = vector.shape_cast %150 : vector<1x1x8x128xbf16> to vector<8x128xbf16>
    %c8_247 = arith.constant 8 : index
    %c0_248 = arith.constant 0 : index
    %152 = vector.load %arg8[%c8_247, %c0_248] : memref<64x128xbf16, #tpu.memory_space<vmem>>, vector<8x128xbf16>
    tpu.vector_store %arg8[%c8_247, %c0_248], %151 {strides = array<i32>} : memref<64x128xbf16, #tpu.memory_space<vmem>>, vector<8x128xbf16>,
    %c0_249 = arith.constant 0 : index
    %c20_250 = arith.constant 20 : index
    %c1_251 = arith.constant 1 : index
    %c0_252 = arith.constant 0 : index
    %153 = vector.load %arg1[%c0_249, %c20_250, %c1_251, %c0_252] : memref<1x36x9x128xbf16, #tpu.memory_space<vmem>>, vector<1x1x8x128xbf16>
    %154 = vector.shape_cast %153 : vector<1x1x8x128xbf16> to vector<8x128xbf16>
    %c16_253 = arith.constant 16 : index
    %c0_254 = arith.constant 0 : index
    %155 = vector.load %arg8[%c16_253, %c0_254] : memref<64x128xbf16, #tpu.memory_space<vmem>>, vector<8x128xbf16>
    tpu.vector_store %arg8[%c16_253, %c0_254], %154 {strides = array<i32>} : memref<64x128xbf16, #tpu.memory_space<vmem>>, vector<8x128xbf16>,
    %c0_255 = arith.constant 0 : index
    %c21_256 = arith.constant 21 : index
    %c1_257 = arith.constant 1 : index
    %c0_258 = arith.constant 0 : index
    %156 = vector.load %arg1[%c0_255, %c21_256, %c1_257, %c0_258] : memref<1x36x9x128xbf16, #tpu.memory_space<vmem>>, vector<1x1x8x128xbf16>
    %157 = vector.shape_cast %156 : vector<1x1x8x128xbf16> to vector<8x128xbf16>
    %c24_259 = arith.constant 24 : index
    %c0_260 = arith.constant 0 : index
    %158 = vector.load %arg8[%c24_259, %c0_260] : memref<64x128xbf16, #tpu.memory_space<vmem>>, vector<8x128xbf16>
    tpu.vector_store %arg8[%c24_259, %c0_260], %157 {strides = array<i32>} : memref<64x128xbf16, #tpu.memory_space<vmem>>, vector<8x128xbf16>,
    %c0_261 = arith.constant 0 : index
    %c22_262 = arith.constant 22 : index
    %c1_263 = arith.constant 1 : index
    %c0_264 = arith.constant 0 : index
    %159 = vector.load %arg1[%c0_261, %c22_262, %c1_263, %c0_264] : memref<1x36x9x128xbf16, #tpu.memory_space<vmem>>, vector<1x1x8x128xbf16>
    %160 = vector.shape_cast %159 : vector<1x1x8x128xbf16> to vector<8x128xbf16>
    %c32_265 = arith.constant 32 : index
    %c0_266 = arith.constant 0 : index
    %161 = vector.load %arg8[%c32_265, %c0_266] : memref<64x128xbf16, #tpu.memory_space<vmem>>, vector<8x128xbf16>
    tpu.vector_store %arg8[%c32_265, %c0_266], %160 {strides = array<i32>} : memref<64x128xbf16, #tpu.memory_space<vmem>>, vector<8x128xbf16>,
    %c0_267 = arith.constant 0 : index
    %c23_268 = arith.constant 23 : index
    %c1_269 = arith.constant 1 : index
    %c0_270 = arith.constant 0 : index
    %162 = vector.load %arg1[%c0_267, %c23_268, %c1_269, %c0_270] : memref<1x36x9x128xbf16, #tpu.memory_space<vmem>>, vector<1x1x8x128xbf16>
    %163 = vector.shape_cast %162 : vector<1x1x8x128xbf16> to vector<8x128xbf16>
    %c40_271 = arith.constant 40 : index
    %c0_272 = arith.constant 0 : index
    %164 = vector.load %arg8[%c40_271, %c0_272] : memref<64x128xbf16, #tpu.memory_space<vmem>>, vector<8x128xbf16>
    tpu.vector_store %arg8[%c40_271, %c0_272], %163 {strides = array<i32>} : memref<64x128xbf16, #tpu.memory_space<vmem>>, vector<8x128xbf16>,
    %c0_273 = arith.constant 0 : index
    %c24_274 = arith.constant 24 : index
    %c1_275 = arith.constant 1 : index
    %c0_276 = arith.constant 0 : index
    %165 = vector.load %arg1[%c0_273, %c24_274, %c1_275, %c0_276] : memref<1x36x9x128xbf16, #tpu.memory_space<vmem>>, vector<1x1x8x128xbf16>
    %166 = vector.shape_cast %165 : vector<1x1x8x128xbf16> to vector<8x128xbf16>
    %c48_277 = arith.constant 48 : index
    %c0_278 = arith.constant 0 : index
    %167 = vector.load %arg8[%c48_277, %c0_278] : memref<64x128xbf16, #tpu.memory_space<vmem>>, vector<8x128xbf16>
    tpu.vector_store %arg8[%c48_277, %c0_278], %166 {strides = array<i32>} : memref<64x128xbf16, #tpu.memory_space<vmem>>, vector<8x128xbf16>,
    %c0_279 = arith.constant 0 : index
    %c25_280 = arith.constant 25 : index
    %c1_281 = arith.constant 1 : index
    %c0_282 = arith.constant 0 : index
    %168 = vector.load %arg1[%c0_279, %c25_280, %c1_281, %c0_282] : memref<1x36x9x128xbf16, #tpu.memory_space<vmem>>, vector<1x1x8x128xbf16>
    %169 = vector.shape_cast %168 : vector<1x1x8x128xbf16> to vector<8x128xbf16>
    %c56_283 = arith.constant 56 : index
    %c0_284 = arith.constant 0 : index
    %170 = vector.load %arg8[%c56_283, %c0_284] : memref<64x128xbf16, #tpu.memory_space<vmem>>, vector<8x128xbf16>
    tpu.vector_store %arg8[%c56_283, %c0_284], %169 {strides = array<i32>} : memref<64x128xbf16, #tpu.memory_space<vmem>>, vector<8x128xbf16>,
    %c640 = arith.constant 640 : index
    %c0_285 = arith.constant 0 : index
    %171 = vector.load %arg2[%c640, %c0_285] : memref<4608x128xbf16, #tpu.memory_space<vmem>>, vector<128x128xbf16>
    %c0_286 = arith.constant 0 : index
    %c0_287 = arith.constant 0 : index
    %172 = vector.load %arg8[%c0_286, %c0_287] : memref<64x128xbf16, #tpu.memory_space<vmem>>, vector<64x128xbf16>
    %cst_288 = arith.constant dense<0.000000e+00> : vector<64x128xf32>
    %173 = tpu.matmul %172, %171, %cst_288 {dimension_numbers = #tpu.dot_dimension_numbers<[1], [0], [0], [1], [0, 0, 1, 1], [], []>} : vector<64x128xbf16>, vector<128x128xbf16>, vector<64x128xf32> -> vector<64x128xf32>
    %174 = arith.addf %146, %173 : vector<64x128xf32>
    %c0_289 = arith.constant 0 : index
    %c1_290 = arith.constant 1 : index
    %c0_291 = arith.constant 0 : index
    %c0_292 = arith.constant 0 : index
    %175 = vector.load %arg1[%c0_289, %c1_290, %c0_291, %c0_292] : memref<1x36x9x128xbf16, #tpu.memory_space<vmem>>, vector<1x1x8x128xbf16>
    %176 = vector.shape_cast %175 : vector<1x1x8x128xbf16> to vector<8x128xbf16>
    %c0_293 = arith.constant 0 : index
    %c0_294 = arith.constant 0 : index
    %177 = vector.load %arg8[%c0_293, %c0_294] : memref<64x128xbf16, #tpu.memory_space<vmem>>, vector<8x128xbf16>
    tpu.vector_store %arg8[%c0_293, %c0_294], %176 {strides = array<i32>} : memref<64x128xbf16, #tpu.memory_space<vmem>>, vector<8x128xbf16>,
    %c0_295 = arith.constant 0 : index
    %c2_296 = arith.constant 2 : index
    %c0_297 = arith.constant 0 : index
    %c0_298 = arith.constant 0 : index
    %178 = vector.load %arg1[%c0_295, %c2_296, %c0_297, %c0_298] : memref<1x36x9x128xbf16, #tpu.memory_space<vmem>>, vector<1x1x8x128xbf16>
    %179 = vector.shape_cast %178 : vector<1x1x8x128xbf16> to vector<8x128xbf16>
    %c8_299 = arith.constant 8 : index
    %c0_300 = arith.constant 0 : index
    %180 = vector.load %arg8[%c8_299, %c0_300] : memref<64x128xbf16, #tpu.memory_space<vmem>>, vector<8x128xbf16>
    tpu.vector_store %arg8[%c8_299, %c0_300], %179 {strides = array<i32>} : memref<64x128xbf16, #tpu.memory_space<vmem>>, vector<8x128xbf16>,
    %c0_301 = arith.constant 0 : index
    %c3_302 = arith.constant 3 : index
    %c0_303 = arith.constant 0 : index
    %c0_304 = arith.constant 0 : index
    %181 = vector.load %arg1[%c0_301, %c3_302, %c0_303, %c0_304] : memref<1x36x9x128xbf16, #tpu.memory_space<vmem>>, vector<1x1x8x128xbf16>
    %182 = vector.shape_cast %181 : vector<1x1x8x128xbf16> to vector<8x128xbf16>
    %c16_305 = arith.constant 16 : index
    %c0_306 = arith.constant 0 : index
    %183 = vector.load %arg8[%c16_305, %c0_306] : memref<64x128xbf16, #tpu.memory_space<vmem>>, vector<8x128xbf16>
    tpu.vector_store %arg8[%c16_305, %c0_306], %182 {strides = array<i32>} : memref<64x128xbf16, #tpu.memory_space<vmem>>, vector<8x128xbf16>,
    %c0_307 = arith.constant 0 : index
    %c4_308 = arith.constant 4 : index
    %c0_309 = arith.constant 0 : index
    %c0_310 = arith.constant 0 : index
    %184 = vector.load %arg1[%c0_307, %c4_308, %c0_309, %c0_310] : memref<1x36x9x128xbf16, #tpu.memory_space<vmem>>, vector<1x1x8x128xbf16>
    %185 = vector.shape_cast %184 : vector<1x1x8x128xbf16> to vector<8x128xbf16>
    %c24_311 = arith.constant 24 : index
    %c0_312 = arith.constant 0 : index
    %186 = vector.load %arg8[%c24_311, %c0_312] : memref<64x128xbf16, #tpu.memory_space<vmem>>, vector<8x128xbf16>
    tpu.vector_store %arg8[%c24_311, %c0_312], %185 {strides = array<i32>} : memref<64x128xbf16, #tpu.memory_space<vmem>>, vector<8x128xbf16>,
    %c0_313 = arith.constant 0 : index
    %c5_314 = arith.constant 5 : index
    %c0_315 = arith.constant 0 : index
    %c0_316 = arith.constant 0 : index
    %187 = vector.load %arg1[%c0_313, %c5_314, %c0_315, %c0_316] : memref<1x36x9x128xbf16, #tpu.memory_space<vmem>>, vector<1x1x8x128xbf16>
    %188 = vector.shape_cast %187 : vector<1x1x8x128xbf16> to vector<8x128xbf16>
    %c32_317 = arith.constant 32 : index
    %c0_318 = arith.constant 0 : index
    %189 = vector.load %arg8[%c32_317, %c0_318] : memref<64x128xbf16, #tpu.memory_space<vmem>>, vector<8x128xbf16>
    tpu.vector_store %arg8[%c32_317, %c0_318], %188 {strides = array<i32>} : memref<64x128xbf16, #tpu.memory_space<vmem>>, vector<8x128xbf16>,
    %c0_319 = arith.constant 0 : index
    %c6_320 = arith.constant 6 : index
    %c0_321 = arith.constant 0 : index
    %c0_322 = arith.constant 0 : index
    %190 = vector.load %arg1[%c0_319, %c6_320, %c0_321, %c0_322] : memref<1x36x9x128xbf16, #tpu.memory_space<vmem>>, vector<1x1x8x128xbf16>
    %191 = vector.shape_cast %190 : vector<1x1x8x128xbf16> to vector<8x128xbf16>
    %c40_323 = arith.constant 40 : index
    %c0_324 = arith.constant 0 : index
    %192 = vector.load %arg8[%c40_323, %c0_324] : memref<64x128xbf16, #tpu.memory_space<vmem>>, vector<8x128xbf16>
    tpu.vector_store %arg8[%c40_323, %c0_324], %191 {strides = array<i32>} : memref<64x128xbf16, #tpu.memory_space<vmem>>, vector<8x128xbf16>,
    %c0_325 = arith.constant 0 : index
    %c7_326 = arith.constant 7 : index
    %c0_327 = arith.constant 0 : index
    %c0_328 = arith.constant 0 : index
    %193 = vector.load %arg1[%c0_325, %c7_326, %c0_327, %c0_328] : memref<1x36x9x128xbf16, #tpu.memory_space<vmem>>, vector<1x1x8x128xbf16>
    %194 = vector.shape_cast %193 : vector<1x1x8x128xbf16> to vector<8x128xbf16>
    %c48_329 = arith.constant 48 : index
    %c0_330 = arith.constant 0 : index
    %195 = vector.load %arg8[%c48_329, %c0_330] : memref<64x128xbf16, #tpu.memory_space<vmem>>, vector<8x128xbf16>
    tpu.vector_store %arg8[%c48_329, %c0_330], %194 {strides = array<i32>} : memref<64x128xbf16, #tpu.memory_space<vmem>>, vector<8x128xbf16>,
    %c0_331 = arith.constant 0 : index
    %c8_332 = arith.constant 8 : index
    %c0_333 = arith.constant 0 : index
    %c0_334 = arith.constant 0 : index
    %196 = vector.load %arg1[%c0_331, %c8_332, %c0_333, %c0_334] : memref<1x36x9x128xbf16, #tpu.memory_space<vmem>>, vector<1x1x8x128xbf16>
    %197 = vector.shape_cast %196 : vector<1x1x8x128xbf16> to vector<8x128xbf16>
    %c56_335 = arith.constant 56 : index
    %c0_336 = arith.constant 0 : index
    %198 = vector.load %arg8[%c56_335, %c0_336] : memref<64x128xbf16, #tpu.memory_space<vmem>>, vector<8x128xbf16>
    tpu.vector_store %arg8[%c56_335, %c0_336], %197 {strides = array<i32>} : memref<64x128xbf16, #tpu.memory_space<vmem>>, vector<8x128xbf16>,
    %c768 = arith.constant 768 : index
    %c0_337 = arith.constant 0 : index
    %199 = vector.load %arg2[%c768, %c0_337] : memref<4608x128xbf16, #tpu.memory_space<vmem>>, vector<128x128xbf16>
    %c0_338 = arith.constant 0 : index
    %c0_339 = arith.constant 0 : index
    %200 = vector.load %arg8[%c0_338, %c0_339] : memref<64x128xbf16, #tpu.memory_space<vmem>>, vector<64x128xbf16>
    %cst_340 = arith.constant dense<0.000000e+00> : vector<64x128xf32>
    %201 = tpu.matmul %200, %199, %cst_340 {dimension_numbers = #tpu.dot_dimension_numbers<[1], [0], [0], [1], [0, 0, 1, 1], [], []>} : vector<64x128xbf16>, vector<128x128xbf16>, vector<64x128xf32> -> vector<64x128xf32>
    %202 = arith.addf %174, %201 : vector<64x128xf32>
    %c0_341 = arith.constant 0 : index
    %c10_342 = arith.constant 10 : index
    %c0_343 = arith.constant 0 : index
    %c0_344 = arith.constant 0 : index
    %203 = vector.load %arg1[%c0_341, %c10_342, %c0_343, %c0_344] : memref<1x36x9x128xbf16, #tpu.memory_space<vmem>>, vector<1x1x8x128xbf16>
    %204 = vector.shape_cast %203 : vector<1x1x8x128xbf16> to vector<8x128xbf16>
    %c0_345 = arith.constant 0 : index
    %c0_346 = arith.constant 0 : index
    %205 = vector.load %arg8[%c0_345, %c0_346] : memref<64x128xbf16, #tpu.memory_space<vmem>>, vector<8x128xbf16>
    tpu.vector_store %arg8[%c0_345, %c0_346], %204 {strides = array<i32>} : memref<64x128xbf16, #tpu.memory_space<vmem>>, vector<8x128xbf16>,
    %c0_347 = arith.constant 0 : index
    %c11_348 = arith.constant 11 : index
    %c0_349 = arith.constant 0 : index
    %c0_350 = arith.constant 0 : index
    %206 = vector.load %arg1[%c0_347, %c11_348, %c0_349, %c0_350] : memref<1x36x9x128xbf16, #tpu.memory_space<vmem>>, vector<1x1x8x128xbf16>
    %207 = vector.shape_cast %206 : vector<1x1x8x128xbf16> to vector<8x128xbf16>
    %c8_351 = arith.constant 8 : index
    %c0_352 = arith.constant 0 : index
    %208 = vector.load %arg8[%c8_351, %c0_352] : memref<64x128xbf16, #tpu.memory_space<vmem>>, vector<8x128xbf16>
    tpu.vector_store %arg8[%c8_351, %c0_352], %207 {strides = array<i32>} : memref<64x128xbf16, #tpu.memory_space<vmem>>, vector<8x128xbf16>,
    %c0_353 = arith.constant 0 : index
    %c12_354 = arith.constant 12 : index
    %c0_355 = arith.constant 0 : index
    %c0_356 = arith.constant 0 : index
    %209 = vector.load %arg1[%c0_353, %c12_354, %c0_355, %c0_356] : memref<1x36x9x128xbf16, #tpu.memory_space<vmem>>, vector<1x1x8x128xbf16>
    %210 = vector.shape_cast %209 : vector<1x1x8x128xbf16> to vector<8x128xbf16>
    %c16_357 = arith.constant 16 : index
    %c0_358 = arith.constant 0 : index
    %211 = vector.load %arg8[%c16_357, %c0_358] : memref<64x128xbf16, #tpu.memory_space<vmem>>, vector<8x128xbf16>
    tpu.vector_store %arg8[%c16_357, %c0_358], %210 {strides = array<i32>} : memref<64x128xbf16, #tpu.memory_space<vmem>>, vector<8x128xbf16>,
    %c0_359 = arith.constant 0 : index
    %c13_360 = arith.constant 13 : index
    %c0_361 = arith.constant 0 : index
    %c0_362 = arith.constant 0 : index
    %212 = vector.load %arg1[%c0_359, %c13_360, %c0_361, %c0_362] : memref<1x36x9x128xbf16, #tpu.memory_space<vmem>>, vector<1x1x8x128xbf16>
    %213 = vector.shape_cast %212 : vector<1x1x8x128xbf16> to vector<8x128xbf16>
    %c24_363 = arith.constant 24 : index
    %c0_364 = arith.constant 0 : index
    %214 = vector.load %arg8[%c24_363, %c0_364] : memref<64x128xbf16, #tpu.memory_space<vmem>>, vector<8x128xbf16>
    tpu.vector_store %arg8[%c24_363, %c0_364], %213 {strides = array<i32>} : memref<64x128xbf16, #tpu.memory_space<vmem>>, vector<8x128xbf16>,
    %c0_365 = arith.constant 0 : index
    %c14_366 = arith.constant 14 : index
    %c0_367 = arith.constant 0 : index
    %c0_368 = arith.constant 0 : index
    %215 = vector.load %arg1[%c0_365, %c14_366, %c0_367, %c0_368] : memref<1x36x9x128xbf16, #tpu.memory_space<vmem>>, vector<1x1x8x128xbf16>
    %216 = vector.shape_cast %215 : vector<1x1x8x128xbf16> to vector<8x128xbf16>
    %c32_369 = arith.constant 32 : index
    %c0_370 = arith.constant 0 : index
    %217 = vector.load %arg8[%c32_369, %c0_370] : memref<64x128xbf16, #tpu.memory_space<vmem>>, vector<8x128xbf16>
    tpu.vector_store %arg8[%c32_369, %c0_370], %216 {strides = array<i32>} : memref<64x128xbf16, #tpu.memory_space<vmem>>, vector<8x128xbf16>,
    %c0_371 = arith.constant 0 : index
    %c15_372 = arith.constant 15 : index
    %c0_373 = arith.constant 0 : index
    %c0_374 = arith.constant 0 : index
    %218 = vector.load %arg1[%c0_371, %c15_372, %c0_373, %c0_374] : memref<1x36x9x128xbf16, #tpu.memory_space<vmem>>, vector<1x1x8x128xbf16>
    %219 = vector.shape_cast %218 : vector<1x1x8x128xbf16> to vector<8x128xbf16>
    %c40_375 = arith.constant 40 : index
    %c0_376 = arith.constant 0 : index
    %220 = vector.load %arg8[%c40_375, %c0_376] : memref<64x128xbf16, #tpu.memory_space<vmem>>, vector<8x128xbf16>
    tpu.vector_store %arg8[%c40_375, %c0_376], %219 {strides = array<i32>} : memref<64x128xbf16, #tpu.memory_space<vmem>>, vector<8x128xbf16>,
    %c0_377 = arith.constant 0 : index
    %c16_378 = arith.constant 16 : index
    %c0_379 = arith.constant 0 : index
    %c0_380 = arith.constant 0 : index
    %221 = vector.load %arg1[%c0_377, %c16_378, %c0_379, %c0_380] : memref<1x36x9x128xbf16, #tpu.memory_space<vmem>>, vector<1x1x8x128xbf16>
    %222 = vector.shape_cast %221 : vector<1x1x8x128xbf16> to vector<8x128xbf16>
    %c48_381 = arith.constant 48 : index
    %c0_382 = arith.constant 0 : index
    %223 = vector.load %arg8[%c48_381, %c0_382] : memref<64x128xbf16, #tpu.memory_space<vmem>>, vector<8x128xbf16>
    tpu.vector_store %arg8[%c48_381, %c0_382], %222 {strides = array<i32>} : memref<64x128xbf16, #tpu.memory_space<vmem>>, vector<8x128xbf16>,
    %c0_383 = arith.constant 0 : index
    %c17 = arith.constant 17 : index
    %c0_384 = arith.constant 0 : index
    %c0_385 = arith.constant 0 : index
    %224 = vector.load %arg1[%c0_383, %c17, %c0_384, %c0_385] : memref<1x36x9x128xbf16, #tpu.memory_space<vmem>>, vector<1x1x8x128xbf16>
    %225 = vector.shape_cast %224 : vector<1x1x8x128xbf16> to vector<8x128xbf16>
    %c56_386 = arith.constant 56 : index
    %c0_387 = arith.constant 0 : index
    %226 = vector.load %arg8[%c56_386, %c0_387] : memref<64x128xbf16, #tpu.memory_space<vmem>>, vector<8x128xbf16>
    tpu.vector_store %arg8[%c56_386, %c0_387], %225 {strides = array<i32>} : memref<64x128xbf16, #tpu.memory_space<vmem>>, vector<8x128xbf16>,
    %c896 = arith.constant 896 : index
    %c0_388 = arith.constant 0 : index
    %227 = vector.load %arg2[%c896, %c0_388] : memref<4608x128xbf16, #tpu.memory_space<vmem>>, vector<128x128xbf16>
    %c0_389 = arith.constant 0 : index
    %c0_390 = arith.constant 0 : index
    %228 = vector.load %arg8[%c0_389, %c0_390] : memref<64x128xbf16, #tpu.memory_space<vmem>>, vector<64x128xbf16>
    %cst_391 = arith.constant dense<0.000000e+00> : vector<64x128xf32>
    %229 = tpu.matmul %228, %227, %cst_391 {dimension_numbers = #tpu.dot_dimension_numbers<[1], [0], [0], [1], [0, 0, 1, 1], [], []>} : vector<64x128xbf16>, vector<128x128xbf16>, vector<64x128xf32> -> vector<64x128xf32>
    %230 = arith.addf %202, %229 : vector<64x128xf32>
    %c0_392 = arith.constant 0 : index
    %c1_393 = arith.constant 1 : index
    %c1_394 = arith.constant 1 : index
    %c0_395 = arith.constant 0 : index
    %231 = vector.load %arg1[%c0_392, %c1_393, %c1_394, %c0_395] : memref<1x36x9x128xbf16, #tpu.memory_space<vmem>>, vector<1x1x8x128xbf16>
    %232 = vector.shape_cast %231 : vector<1x1x8x128xbf16> to vector<8x128xbf16>
    %c0_396 = arith.constant 0 : index
    %c0_397 = arith.constant 0 : index
    %233 = vector.load %arg8[%c0_396, %c0_397] : memref<64x128xbf16, #tpu.memory_space<vmem>>, vector<8x128xbf16>
    tpu.vector_store %arg8[%c0_396, %c0_397], %232 {strides = array<i32>} : memref<64x128xbf16, #tpu.memory_space<vmem>>, vector<8x128xbf16>,
    %c0_398 = arith.constant 0 : index
    %c2_399 = arith.constant 2 : index
    %c1_400 = arith.constant 1 : index
    %c0_401 = arith.constant 0 : index
    %234 = vector.load %arg1[%c0_398, %c2_399, %c1_400, %c0_401] : memref<1x36x9x128xbf16, #tpu.memory_space<vmem>>, vector<1x1x8x128xbf16>
    %235 = vector.shape_cast %234 : vector<1x1x8x128xbf16> to vector<8x128xbf16>
    %c8_402 = arith.constant 8 : index
    %c0_403 = arith.constant 0 : index
    %236 = vector.load %arg8[%c8_402, %c0_403] : memref<64x128xbf16, #tpu.memory_space<vmem>>, vector<8x128xbf16>
    tpu.vector_store %arg8[%c8_402, %c0_403], %235 {strides = array<i32>} : memref<64x128xbf16, #tpu.memory_space<vmem>>, vector<8x128xbf16>,
    %c0_404 = arith.constant 0 : index
    %c3_405 = arith.constant 3 : index
    %c1_406 = arith.constant 1 : index
    %c0_407 = arith.constant 0 : index
    %237 = vector.load %arg1[%c0_404, %c3_405, %c1_406, %c0_407] : memref<1x36x9x128xbf16, #tpu.memory_space<vmem>>, vector<1x1x8x128xbf16>
    %238 = vector.shape_cast %237 : vector<1x1x8x128xbf16> to vector<8x128xbf16>
    %c16_408 = arith.constant 16 : index
    %c0_409 = arith.constant 0 : index
    %239 = vector.load %arg8[%c16_408, %c0_409] : memref<64x128xbf16, #tpu.memory_space<vmem>>, vector<8x128xbf16>
    tpu.vector_store %arg8[%c16_408, %c0_409], %238 {strides = array<i32>} : memref<64x128xbf16, #tpu.memory_space<vmem>>, vector<8x128xbf16>,
    %c0_410 = arith.constant 0 : index
    %c4_411 = arith.constant 4 : index
    %c1_412 = arith.constant 1 : index
    %c0_413 = arith.constant 0 : index
    %240 = vector.load %arg1[%c0_410, %c4_411, %c1_412, %c0_413] : memref<1x36x9x128xbf16, #tpu.memory_space<vmem>>, vector<1x1x8x128xbf16>
    %241 = vector.shape_cast %240 : vector<1x1x8x128xbf16> to vector<8x128xbf16>
    %c24_414 = arith.constant 24 : index
    %c0_415 = arith.constant 0 : index
    %242 = vector.load %arg8[%c24_414, %c0_415] : memref<64x128xbf16, #tpu.memory_space<vmem>>, vector<8x128xbf16>
    tpu.vector_store %arg8[%c24_414, %c0_415], %241 {strides = array<i32>} : memref<64x128xbf16, #tpu.memory_space<vmem>>, vector<8x128xbf16>,
    %c0_416 = arith.constant 0 : index
    %c5_417 = arith.constant 5 : index
    %c1_418 = arith.constant 1 : index
    %c0_419 = arith.constant 0 : index
    %243 = vector.load %arg1[%c0_416, %c5_417, %c1_418, %c0_419] : memref<1x36x9x128xbf16, #tpu.memory_space<vmem>>, vector<1x1x8x128xbf16>
    %244 = vector.shape_cast %243 : vector<1x1x8x128xbf16> to vector<8x128xbf16>
    %c32_420 = arith.constant 32 : index
    %c0_421 = arith.constant 0 : index
    %245 = vector.load %arg8[%c32_420, %c0_421] : memref<64x128xbf16, #tpu.memory_space<vmem>>, vector<8x128xbf16>
    tpu.vector_store %arg8[%c32_420, %c0_421], %244 {strides = array<i32>} : memref<64x128xbf16, #tpu.memory_space<vmem>>, vector<8x128xbf16>,
    %c0_422 = arith.constant 0 : index
    %c6_423 = arith.constant 6 : index
    %c1_424 = arith.constant 1 : index
    %c0_425 = arith.constant 0 : index
    %246 = vector.load %arg1[%c0_422, %c6_423, %c1_424, %c0_425] : memref<1x36x9x128xbf16, #tpu.memory_space<vmem>>, vector<1x1x8x128xbf16>
    %247 = vector.shape_cast %246 : vector<1x1x8x128xbf16> to vector<8x128xbf16>
    %c40_426 = arith.constant 40 : index
    %c0_427 = arith.constant 0 : index
    %248 = vector.load %arg8[%c40_426, %c0_427] : memref<64x128xbf16, #tpu.memory_space<vmem>>, vector<8x128xbf16>
    tpu.vector_store %arg8[%c40_426, %c0_427], %247 {strides = array<i32>} : memref<64x128xbf16, #tpu.memory_space<vmem>>, vector<8x128xbf16>,
    %c0_428 = arith.constant 0 : index
    %c7_429 = arith.constant 7 : index
    %c1_430 = arith.constant 1 : index
    %c0_431 = arith.constant 0 : index
    %249 = vector.load %arg1[%c0_428, %c7_429, %c1_430, %c0_431] : memref<1x36x9x128xbf16, #tpu.memory_space<vmem>>, vector<1x1x8x128xbf16>
    %250 = vector.shape_cast %249 : vector<1x1x8x128xbf16> to vector<8x128xbf16>
    %c48_432 = arith.constant 48 : index
    %c0_433 = arith.constant 0 : index
    %251 = vector.load %arg8[%c48_432, %c0_433] : memref<64x128xbf16, #tpu.memory_space<vmem>>, vector<8x128xbf16>
    tpu.vector_store %arg8[%c48_432, %c0_433], %250 {strides = array<i32>} : memref<64x128xbf16, #tpu.memory_space<vmem>>, vector<8x128xbf16>,
    %c0_434 = arith.constant 0 : index
    %c8_435 = arith.constant 8 : index
    %c1_436 = arith.constant 1 : index
    %c0_437 = arith.constant 0 : index
    %252 = vector.load %arg1[%c0_434, %c8_435, %c1_436, %c0_437] : memref<1x36x9x128xbf16, #tpu.memory_space<vmem>>, vector<1x1x8x128xbf16>
    %253 = vector.shape_cast %252 : vector<1x1x8x128xbf16> to vector<8x128xbf16>
    %c56_438 = arith.constant 56 : index
    %c0_439 = arith.constant 0 : index
    %254 = vector.load %arg8[%c56_438, %c0_439] : memref<64x128xbf16, #tpu.memory_space<vmem>>, vector<8x128xbf16>
    tpu.vector_store %arg8[%c56_438, %c0_439], %253 {strides = array<i32>} : memref<64x128xbf16, #tpu.memory_space<vmem>>, vector<8x128xbf16>,
    %c1024 = arith.constant 1024 : index
    %c0_440 = arith.constant 0 : index
    %255 = vector.load %arg2[%c1024, %c0_440] : memref<4608x128xbf16, #tpu.memory_space<vmem>>, vector<128x128xbf16>
    %c0_441 = arith.constant 0 : index
    %c0_442 = arith.constant 0 : index
    %256 = vector.load %arg8[%c0_441, %c0_442] : memref<64x128xbf16, #tpu.memory_space<vmem>>, vector<64x128xbf16>
    %cst_443 = arith.constant dense<0.000000e+00> : vector<64x128xf32>
    %257 = tpu.matmul %256, %255, %cst_443 {dimension_numbers = #tpu.dot_dimension_numbers<[1], [0], [0], [1], [0, 0, 1, 1], [], []>} : vector<64x128xbf16>, vector<128x128xbf16>, vector<64x128xf32> -> vector<64x128xf32>
    %258 = arith.addf %230, %257 : vector<64x128xf32>
    %c0_444 = arith.constant 0 : index
    %c0_445 = arith.constant 0 : index
    %259 = vector.load %arg3[%c0_444, %c0_445] : memref<4x128xf32, #tpu.memory_space<vmem>>, vector<1x128xf32>
    %260 = vector.broadcast %259 : vector<1x128xf32> to vector<64x128xf32>
    %261 = arith.addf %258, %260 : vector<64x128xf32>
    %cst_446 = arith.constant 0.000000e+00 : f32
    %262 = vector.broadcast %cst_446 : f32 to vector<64x128xf32>
    %263 = arith.maximumf %261, %262 : vector<64x128xf32>
    %264 = vector.extract_strided_slice %263 {offsets = [0, 0], sizes = [64, 8], strides = [1, 1]} : vector<64x128xf32> to vector<64x8xf32>
    %c0_447 = arith.constant 0 : index
    %c0_448 = arith.constant 0 : index
    %c0_449 = arith.constant 0 : index
    %265 = vector.load %arg4[%c0_447, %c0_448, %c0_449] : memref<1x64x8xf32, #tpu.memory_space<vmem>>, vector<1x64x8xf32>
    %266 = vector.shape_cast %265 : vector<1x64x8xf32> to vector<64x8xf32>
    %267 = vector.shape_cast %264 : vector<64x8xf32> to vector<1x64x8xf32>
    tpu.vector_store %arg4[%c0_447, %c0_448, %c0_449], %267 {strides = array<i32>} : memref<1x64x8xf32, #tpu.memory_space<vmem>>, vector<1x64x8xf32>,
    %268 = arith.truncf %263 : vector<64x128xf32> to vector<64x128xbf16>
    %c0_450 = arith.constant 0 : index
    %c0_451 = arith.constant 0 : index
    %269 = vector.load %arg9[%c0_450, %c0_451] : memref<64x128xbf16, #tpu.memory_space<vmem>>, vector<64x128xbf16>
    tpu.vector_store %arg9[%c0_450, %c0_451], %268 {strides = array<i32>} : memref<64x128xbf16, #tpu.memory_space<vmem>>, vector<64x128xbf16>,
    %c0_452 = arith.constant 0 : index
    %c0_453 = arith.constant 0 : index
    %270 = vector.load %arg9[%c0_452, %c0_453] : memref<64x128xbf16, #tpu.memory_space<vmem>>, vector<1x128xbf16>
    %c15_454 = arith.constant 15 : index
    %c0_455 = arith.constant 0 : index
    %c0_456 = arith.constant 0 : index
    %271 = vector.load %arg10[%c15_454, %c0_455, %c0_456] : memref<20x5x128xbf16, #tpu.memory_space<vmem>>, vector<1x1x128xbf16>
    %272 = vector.shape_cast %271 : vector<1x1x128xbf16> to vector<1x128xbf16>
    %273 = vector.shape_cast %270 : vector<1x128xbf16> to vector<1x1x128xbf16>
    tpu.vector_store %arg10[%c15_454, %c0_455, %c0_456], %273 {strides = array<i32>} : memref<20x5x128xbf16, #tpu.memory_space<vmem>>, vector<1x1x128xbf16>,
    %c1_457 = arith.constant 1 : index
    %c0_458 = arith.constant 0 : index
    %274 = vector.load %arg9[%c1_457, %c0_458] : memref<64x128xbf16, #tpu.memory_space<vmem>>, vector<1x128xbf16>
    %c10_459 = arith.constant 10 : index
    %c1_460 = arith.constant 1 : index
    %c0_461 = arith.constant 0 : index
    %275 = vector.load %arg10[%c10_459, %c1_460, %c0_461] : memref<20x5x128xbf16, #tpu.memory_space<vmem>>, vector<1x1x128xbf16>
    %276 = vector.shape_cast %275 : vector<1x1x128xbf16> to vector<1x128xbf16>
    %277 = vector.shape_cast %274 : vector<1x128xbf16> to vector<1x1x128xbf16>
    tpu.vector_store %arg10[%c10_459, %c1_460, %c0_461], %277 {strides = array<i32>} : memref<20x5x128xbf16, #tpu.memory_space<vmem>>, vector<1x1x128xbf16>,
    %c2_462 = arith.constant 2 : index
    %c0_463 = arith.constant 0 : index
    %278 = vector.load %arg9[%c2_462, %c0_463] : memref<64x128xbf16, #tpu.memory_space<vmem>>, vector<1x128xbf16>
    %c15_464 = arith.constant 15 : index
    %c1_465 = arith.constant 1 : index
    %c0_466 = arith.constant 0 : index
    %279 = vector.load %arg10[%c15_464, %c1_465, %c0_466] : memref<20x5x128xbf16, #tpu.memory_space<vmem>>, vector<1x1x128xbf16>
    %280 = vector.shape_cast %279 : vector<1x1x128xbf16> to vector<1x128xbf16>
    %281 = vector.shape_cast %278 : vector<1x128xbf16> to vector<1x1x128xbf16>
    tpu.vector_store %arg10[%c15_464, %c1_465, %c0_466], %281 {strides = array<i32>} : memref<20x5x128xbf16, #tpu.memory_space<vmem>>, vector<1x1x128xbf16>,
    %c3_467 = arith.constant 3 : index
    %c0_468 = arith.constant 0 : index
    %282 = vector.load %arg9[%c3_467, %c0_468] : memref<64x128xbf16, #tpu.memory_space<vmem>>, vector<1x128xbf16>
    %c10_469 = arith.constant 10 : index
    %c2_470 = arith.constant 2 : index
    %c0_471 = arith.constant 0 : index
    %283 = vector.load %arg10[%c10_469, %c2_470, %c0_471] : memref<20x5x128xbf16, #tpu.memory_space<vmem>>, vector<1x1x128xbf16>
    %284 = vector.shape_cast %283 : vector<1x1x128xbf16> to vector<1x128xbf16>
    %285 = vector.shape_cast %282 : vector<1x128xbf16> to vector<1x1x128xbf16>
    tpu.vector_store %arg10[%c10_469, %c2_470, %c0_471], %285 {strides = array<i32>} : memref<20x5x128xbf16, #tpu.memory_space<vmem>>, vector<1x1x128xbf16>,
    %c4_472 = arith.constant 4 : index
    %c0_473 = arith.constant 0 : index
    %286 = vector.load %arg9[%c4_472, %c0_473] : memref<64x128xbf16, #tpu.memory_space<vmem>>, vector<1x128xbf16>
    %c15_474 = arith.constant 15 : index
    %c2_475 = arith.constant 2 : index
    %c0_476 = arith.constant 0 : index
    %287 = vector.load %arg10[%c15_474, %c2_475, %c0_476] : memref<20x5x128xbf16, #tpu.memory_space<vmem>>, vector<1x1x128xbf16>
    %288 = vector.shape_cast %287 : vector<1x1x128xbf16> to vector<1x128xbf16>
    %289 = vector.shape_cast %286 : vector<1x128xbf16> to vector<1x1x128xbf16>
    tpu.vector_store %arg10[%c15_474, %c2_475, %c0_476], %289 {strides = array<i32>} : memref<20x5x128xbf16, #tpu.memory_space<vmem>>, vector<1x1x128xbf16>,
    %c5_477 = arith.constant 5 : index
    %c0_478 = arith.constant 0 : index
    %290 = vector.load %arg9[%c5_477, %c0_478] : memref<64x128xbf16, #tpu.memory_space<vmem>>, vector<1x128xbf16>
    %c10_479 = arith.constant 10 : index
    %c3_480 = arith.constant 3 : index
    %c0_481 = arith.constant 0 : index
    %291 = vector.load %arg10[%c10_479, %c3_480, %c0_481] : memref<20x5x128xbf16, #tpu.memory_space<vmem>>, vector<1x1x128xbf16>
    %292 = vector.shape_cast %291 : vector<1x1x128xbf16> to vector<1x128xbf16>
    %293 = vector.shape_cast %290 : vector<1x128xbf16> to vector<1x1x128xbf16>
    tpu.vector_store %arg10[%c10_479, %c3_480, %c0_481], %293 {strides = array<i32>} : memref<20x5x128xbf16, #tpu.memory_space<vmem>>, vector<1x1x128xbf16>,
    %c6_482 = arith.constant 6 : index
    %c0_483 = arith.constant 0 : index
    %294 = vector.load %arg9[%c6_482, %c0_483] : memref<64x128xbf16, #tpu.memory_space<vmem>>, vector<1x128xbf16>
    %c15_484 = arith.constant 15 : index
    %c3_485 = arith.constant 3 : index
    %c0_486 = arith.constant 0 : index
    %295 = vector.load %arg10[%c15_484, %c3_485, %c0_486] : memref<20x5x128xbf16, #tpu.memory_space<vmem>>, vector<1x1x128xbf16>
    %296 = vector.shape_cast %295 : vector<1x1x128xbf16> to vector<1x128xbf16>
    %297 = vector.shape_cast %294 : vector<1x128xbf16> to vector<1x1x128xbf16>
    tpu.vector_store %arg10[%c15_484, %c3_485, %c0_486], %297 {strides = array<i32>} : memref<20x5x128xbf16, #tpu.memory_space<vmem>>, vector<1x1x128xbf16>,
    %c7_487 = arith.constant 7 : index
    %c0_488 = arith.constant 0 : index
    %298 = vector.load %arg9[%c7_487, %c0_488] : memref<64x128xbf16, #tpu.memory_space<vmem>>, vector<1x128xbf16>
    %c10_489 = arith.constant 10 : index
    %c4_490 = arith.constant 4 : index
    %c0_491 = arith.constant 0 : index
    %299 = vector.load %arg10[%c10_489, %c4_490, %c0_491] : memref<20x5x128xbf16, #tpu.memory_space<vmem>>, vector<1x1x128xbf16>
    %300 = vector.shape_cast %299 : vector<1x1x128xbf16> to vector<1x128xbf16>
    %301 = vector.shape_cast %298 : vector<1x128xbf16> to vector<1x1x128xbf16>
    tpu.vector_store %arg10[%c10_489, %c4_490, %c0_491], %301 {strides = array<i32>} : memref<20x5x128xbf16, #tpu.memory_space<vmem>>, vector<1x1x128xbf16>,
    %c8_492 = arith.constant 8 : index
    %c0_493 = arith.constant 0 : index
    %302 = vector.load %arg9[%c8_492, %c0_493] : memref<64x128xbf16, #tpu.memory_space<vmem>>, vector<1x128xbf16>
    %c6_494 = arith.constant 6 : index
    %c0_495 = arith.constant 0 : index
    %c0_496 = arith.constant 0 : index
    %303 = vector.load %arg10[%c6_494, %c0_495, %c0_496] : memref<20x5x128xbf16, #tpu.memory_space<vmem>>, vector<1x1x128xbf16>
    %304 = vector.shape_cast %303 : vector<1x1x128xbf16> to vector<1x128xbf16>
    %305 = vector.shape_cast %302 : vector<1x128xbf16> to vector<1x1x128xbf16>
    tpu.vector_store %arg10[%c6_494, %c0_495, %c0_496], %305 {strides = array<i32>} : memref<20x5x128xbf16, #tpu.memory_space<vmem>>, vector<1x1x128xbf16>,
    %c9_497 = arith.constant 9 : index
    %c0_498 = arith.constant 0 : index
    %306 = vector.load %arg9[%c9_497, %c0_498] : memref<64x128xbf16, #tpu.memory_space<vmem>>, vector<1x128xbf16>
    %c1_499 = arith.constant 1 : index
    %c1_500 = arith.constant 1 : index
    %c0_501 = arith.constant 0 : index
    %307 = vector.load %arg10[%c1_499, %c1_500, %c0_501] : memref<20x5x128xbf16, #tpu.memory_space<vmem>>, vector<1x1x128xbf16>
    %308 = vector.shape_cast %307 : vector<1x1x128xbf16> to vector<1x128xbf16>
    %309 = vector.shape_cast %306 : vector<1x128xbf16> to vector<1x1x128xbf16>
    tpu.vector_store %arg10[%c1_499, %c1_500, %c0_501], %309 {strides = array<i32>} : memref<20x5x128xbf16, #tpu.memory_space<vmem>>, vector<1x1x128xbf16>,
    %c10_502 = arith.constant 10 : index
    %c0_503 = arith.constant 0 : index
    %310 = vector.load %arg9[%c10_502, %c0_503] : memref<64x128xbf16, #tpu.memory_space<vmem>>, vector<1x128xbf16>
    %c6_504 = arith.constant 6 : index
    %c1_505 = arith.constant 1 : index
    %c0_506 = arith.constant 0 : index
    %311 = vector.load %arg10[%c6_504, %c1_505, %c0_506] : memref<20x5x128xbf16, #tpu.memory_space<vmem>>, vector<1x1x128xbf16>
    %312 = vector.shape_cast %311 : vector<1x1x128xbf16> to vector<1x128xbf16>
    %313 = vector.shape_cast %310 : vector<1x128xbf16> to vector<1x1x128xbf16>
    tpu.vector_store %arg10[%c6_504, %c1_505, %c0_506], %313 {strides = array<i32>} : memref<20x5x128xbf16, #tpu.memory_space<vmem>>, vector<1x1x128xbf16>,
    %c11_507 = arith.constant 11 : index
    %c0_508 = arith.constant 0 : index
    %314 = vector.load %arg9[%c11_507, %c0_508] : memref<64x128xbf16, #tpu.memory_space<vmem>>, vector<1x128xbf16>
    %c1_509 = arith.constant 1 : index
    %c2_510 = arith.constant 2 : index
    %c0_511 = arith.constant 0 : index
    %315 = vector.load %arg10[%c1_509, %c2_510, %c0_511] : memref<20x5x128xbf16, #tpu.memory_space<vmem>>, vector<1x1x128xbf16>
    %316 = vector.shape_cast %315 : vector<1x1x128xbf16> to vector<1x128xbf16>
    %317 = vector.shape_cast %314 : vector<1x128xbf16> to vector<1x1x128xbf16>
    tpu.vector_store %arg10[%c1_509, %c2_510, %c0_511], %317 {strides = array<i32>} : memref<20x5x128xbf16, #tpu.memory_space<vmem>>, vector<1x1x128xbf16>,
    %c12_512 = arith.constant 12 : index
    %c0_513 = arith.constant 0 : index
    %318 = vector.load %arg9[%c12_512, %c0_513] : memref<64x128xbf16, #tpu.memory_space<vmem>>, vector<1x128xbf16>
    %c6_514 = arith.constant 6 : index
    %c2_515 = arith.constant 2 : index
    %c0_516 = arith.constant 0 : index
    %319 = vector.load %arg10[%c6_514, %c2_515, %c0_516] : memref<20x5x128xbf16, #tpu.memory_space<vmem>>, vector<1x1x128xbf16>
    %320 = vector.shape_cast %319 : vector<1x1x128xbf16> to vector<1x128xbf16>
    %321 = vector.shape_cast %318 : vector<1x128xbf16> to vector<1x1x128xbf16>
    tpu.vector_store %arg10[%c6_514, %c2_515, %c0_516], %321 {strides = array<i32>} : memref<20x5x128xbf16, #tpu.memory_space<vmem>>, vector<1x1x128xbf16>,
    %c13_517 = arith.constant 13 : index
    %c0_518 = arith.constant 0 : index
    %322 = vector.load %arg9[%c13_517, %c0_518] : memref<64x128xbf16, #tpu.memory_space<vmem>>, vector<1x128xbf16>
    %c1_519 = arith.constant 1 : index
    %c3_520 = arith.constant 3 : index
    %c0_521 = arith.constant 0 : index
    %323 = vector.load %arg10[%c1_519, %c3_520, %c0_521] : memref<20x5x128xbf16, #tpu.memory_space<vmem>>, vector<1x1x128xbf16>
    %324 = vector.shape_cast %323 : vector<1x1x128xbf16> to vector<1x128xbf16>
    %325 = vector.shape_cast %322 : vector<1x128xbf16> to vector<1x1x128xbf16>
    tpu.vector_store %arg10[%c1_519, %c3_520, %c0_521], %325 {strides = array<i32>} : memref<20x5x128xbf16, #tpu.memory_space<vmem>>, vector<1x1x128xbf16>,
    %c14_522 = arith.constant 14 : index
    %c0_523 = arith.constant 0 : index
    %326 = vector.load %arg9[%c14_522, %c0_523] : memref<64x128xbf16, #tpu.memory_space<vmem>>, vector<1x128xbf16>
    %c6_524 = arith.constant 6 : index
    %c3_525 = arith.constant 3 : index
    %c0_526 = arith.constant 0 : index
    %327 = vector.load %arg10[%c6_524, %c3_525, %c0_526] : memref<20x5x128xbf16, #tpu.memory_space<vmem>>, vector<1x1x128xbf16>
    %328 = vector.shape_cast %327 : vector<1x1x128xbf16> to vector<1x128xbf16>
    %329 = vector.shape_cast %326 : vector<1x128xbf16> to vector<1x1x128xbf16>
    tpu.vector_store %arg10[%c6_524, %c3_525, %c0_526], %329 {strides = array<i32>} : memref<20x5x128xbf16, #tpu.memory_space<vmem>>, vector<1x1x128xbf16>,
    %c15_527 = arith.constant 15 : index
    %c0_528 = arith.constant 0 : index
    %330 = vector.load %arg9[%c15_527, %c0_528] : memref<64x128xbf16, #tpu.memory_space<vmem>>, vector<1x128xbf16>
    %c1_529 = arith.constant 1 : index
    %c4_530 = arith.constant 4 : index
    %c0_531 = arith.constant 0 : index
    %331 = vector.load %arg10[%c1_529, %c4_530, %c0_531] : memref<20x5x128xbf16, #tpu.memory_space<vmem>>, vector<1x1x128xbf16>
    %332 = vector.shape_cast %331 : vector<1x1x128xbf16> to vector<1x128xbf16>
    %333 = vector.shape_cast %330 : vector<1x128xbf16> to vector<1x1x128xbf16>
    tpu.vector_store %arg10[%c1_529, %c4_530, %c0_531], %333 {strides = array<i32>} : memref<20x5x128xbf16, #tpu.memory_space<vmem>>, vector<1x1x128xbf16>,
    %c16_532 = arith.constant 16 : index
    %c0_533 = arith.constant 0 : index
    %334 = vector.load %arg9[%c16_532, %c0_533] : memref<64x128xbf16, #tpu.memory_space<vmem>>, vector<1x128xbf16>
    %c16_534 = arith.constant 16 : index
    %c0_535 = arith.constant 0 : index
    %c0_536 = arith.constant 0 : index
    %335 = vector.load %arg10[%c16_534, %c0_535, %c0_536] : memref<20x5x128xbf16, #tpu.memory_space<vmem>>, vector<1x1x128xbf16>
    %336 = vector.shape_cast %335 : vector<1x1x128xbf16> to vector<1x128xbf16>
    %337 = vector.shape_cast %334 : vector<1x128xbf16> to vector<1x1x128xbf16>
    tpu.vector_store %arg10[%c16_534, %c0_535, %c0_536], %337 {strides = array<i32>} : memref<20x5x128xbf16, #tpu.memory_space<vmem>>, vector<1x1x128xbf16>,
    %c17_537 = arith.constant 17 : index
    %c0_538 = arith.constant 0 : index
    %338 = vector.load %arg9[%c17_537, %c0_538] : memref<64x128xbf16, #tpu.memory_space<vmem>>, vector<1x128xbf16>
    %c11_539 = arith.constant 11 : index
    %c1_540 = arith.constant 1 : index
    %c0_541 = arith.constant 0 : index
    %339 = vector.load %arg10[%c11_539, %c1_540, %c0_541] : memref<20x5x128xbf16, #tpu.memory_space<vmem>>, vector<1x1x128xbf16>
    %340 = vector.shape_cast %339 : vector<1x1x128xbf16> to vector<1x128xbf16>
    %341 = vector.shape_cast %338 : vector<1x128xbf16> to vector<1x1x128xbf16>
    tpu.vector_store %arg10[%c11_539, %c1_540, %c0_541], %341 {strides = array<i32>} : memref<20x5x128xbf16, #tpu.memory_space<vmem>>, vector<1x1x128xbf16>,
    %c18_542 = arith.constant 18 : index
    %c0_543 = arith.constant 0 : index
    %342 = vector.load %arg9[%c18_542, %c0_543] : memref<64x128xbf16, #tpu.memory_space<vmem>>, vector<1x128xbf16>
    %c16_544 = arith.constant 16 : index
    %c1_545 = arith.constant 1 : index
    %c0_546 = arith.constant 0 : index
    %343 = vector.load %arg10[%c16_544, %c1_545, %c0_546] : memref<20x5x128xbf16, #tpu.memory_space<vmem>>, vector<1x1x128xbf16>
    %344 = vector.shape_cast %343 : vector<1x1x128xbf16> to vector<1x128xbf16>
    %345 = vector.shape_cast %342 : vector<1x128xbf16> to vector<1x1x128xbf16>
    tpu.vector_store %arg10[%c16_544, %c1_545, %c0_546], %345 {strides = array<i32>} : memref<20x5x128xbf16, #tpu.memory_space<vmem>>, vector<1x1x128xbf16>,
    %c19_547 = arith.constant 19 : index
    %c0_548 = arith.constant 0 : index
    %346 = vector.load %arg9[%c19_547, %c0_548] : memref<64x128xbf16, #tpu.memory_space<vmem>>, vector<1x128xbf16>
    %c11_549 = arith.constant 11 : index
    %c2_550 = arith.constant 2 : index
    %c0_551 = arith.constant 0 : index
    %347 = vector.load %arg10[%c11_549, %c2_550, %c0_551] : memref<20x5x128xbf16, #tpu.memory_space<vmem>>, vector<1x1x128xbf16>
    %348 = vector.shape_cast %347 : vector<1x1x128xbf16> to vector<1x128xbf16>
    %349 = vector.shape_cast %346 : vector<1x128xbf16> to vector<1x1x128xbf16>
    tpu.vector_store %arg10[%c11_549, %c2_550, %c0_551], %349 {strides = array<i32>} : memref<20x5x128xbf16, #tpu.memory_space<vmem>>, vector<1x1x128xbf16>,
    %c20_552 = arith.constant 20 : index
    %c0_553 = arith.constant 0 : index
    %350 = vector.load %arg9[%c20_552, %c0_553] : memref<64x128xbf16, #tpu.memory_space<vmem>>, vector<1x128xbf16>
    %c16_554 = arith.constant 16 : index
    %c2_555 = arith.constant 2 : index
    %c0_556 = arith.constant 0 : index
    %351 = vector.load %arg10[%c16_554, %c2_555, %c0_556] : memref<20x5x128xbf16, #tpu.memory_space<vmem>>, vector<1x1x128xbf16>
    %352 = vector.shape_cast %351 : vector<1x1x128xbf16> to vector<1x128xbf16>
    %353 = vector.shape_cast %350 : vector<1x128xbf16> to vector<1x1x128xbf16>
    tpu.vector_store %arg10[%c16_554, %c2_555, %c0_556], %353 {strides = array<i32>} : memref<20x5x128xbf16, #tpu.memory_space<vmem>>, vector<1x1x128xbf16>,
    %c21_557 = arith.constant 21 : index
    %c0_558 = arith.constant 0 : index
    %354 = vector.load %arg9[%c21_557, %c0_558] : memref<64x128xbf16, #tpu.memory_space<vmem>>, vector<1x128xbf16>
    %c11_559 = arith.constant 11 : index
    %c3_560 = arith.constant 3 : index
    %c0_561 = arith.constant 0 : index
    %355 = vector.load %arg10[%c11_559, %c3_560, %c0_561] : memref<20x5x128xbf16, #tpu.memory_space<vmem>>, vector<1x1x128xbf16>
    %356 = vector.shape_cast %355 : vector<1x1x128xbf16> to vector<1x128xbf16>
    %357 = vector.shape_cast %354 : vector<1x128xbf16> to vector<1x1x128xbf16>
    tpu.vector_store %arg10[%c11_559, %c3_560, %c0_561], %357 {strides = array<i32>} : memref<20x5x128xbf16, #tpu.memory_space<vmem>>, vector<1x1x128xbf16>,
    %c22_562 = arith.constant 22 : index
    %c0_563 = arith.constant 0 : index
    %358 = vector.load %arg9[%c22_562, %c0_563] : memref<64x128xbf16, #tpu.memory_space<vmem>>, vector<1x128xbf16>
    %c16_564 = arith.constant 16 : index
    %c3_565 = arith.constant 3 : index
    %c0_566 = arith.constant 0 : index
    %359 = vector.load %arg10[%c16_564, %c3_565, %c0_566] : memref<20x5x128xbf16, #tpu.memory_space<vmem>>, vector<1x1x128xbf16>
    %360 = vector.shape_cast %359 : vector<1x1x128xbf16> to vector<1x128xbf16>
    %361 = vector.shape_cast %358 : vector<1x128xbf16> to vector<1x1x128xbf16>
    tpu.vector_store %arg10[%c16_564, %c3_565, %c0_566], %361 {strides = array<i32>} : memref<20x5x128xbf16, #tpu.memory_space<vmem>>, vector<1x1x128xbf16>,
    %c23_567 = arith.constant 23 : index
    %c0_568 = arith.constant 0 : index
    %362 = vector.load %arg9[%c23_567, %c0_568] : memref<64x128xbf16, #tpu.memory_space<vmem>>, vector<1x128xbf16>
    %c11_569 = arith.constant 11 : index
    %c4_570 = arith.constant 4 : index
    %c0_571 = arith.constant 0 : index
    %363 = vector.load %arg10[%c11_569, %c4_570, %c0_571] : memref<20x5x128xbf16, #tpu.memory_space<vmem>>, vector<1x1x128xbf16>
    %364 = vector.shape_cast %363 : vector<1x1x128xbf16> to vector<1x128xbf16>
    %365 = vector.shape_cast %362 : vector<1x128xbf16> to vector<1x1x128xbf16>
    tpu.vector_store %arg10[%c11_569, %c4_570, %c0_571], %365 {strides = array<i32>} : memref<20x5x128xbf16, #tpu.memory_space<vmem>>, vector<1x1x128xbf16>,
    %c24_572 = arith.constant 24 : index
    %c0_573 = arith.constant 0 : index
    %366 = vector.load %arg9[%c24_572, %c0_573] : memref<64x128xbf16, #tpu.memory_space<vmem>>, vector<1x128xbf16>
    %c7_574 = arith.constant 7 : index
    %c0_575 = arith.constant 0 : index
    %c0_576 = arith.constant 0 : index
    %367 = vector.load %arg10[%c7_574, %c0_575, %c0_576] : memref<20x5x128xbf16, #tpu.memory_space<vmem>>, vector<1x1x128xbf16>
    %368 = vector.shape_cast %367 : vector<1x1x128xbf16> to vector<1x128xbf16>
    %369 = vector.shape_cast %366 : vector<1x128xbf16> to vector<1x1x128xbf16>
    tpu.vector_store %arg10[%c7_574, %c0_575, %c0_576], %369 {strides = array<i32>} : memref<20x5x128xbf16, #tpu.memory_space<vmem>>, vector<1x1x128xbf16>,
    %c25_577 = arith.constant 25 : index
    %c0_578 = arith.constant 0 : index
    %370 = vector.load %arg9[%c25_577, %c0_578] : memref<64x128xbf16, #tpu.memory_space<vmem>>, vector<1x128xbf16>
    %c2_579 = arith.constant 2 : index
    %c1_580 = arith.constant 1 : index
    %c0_581 = arith.constant 0 : index
    %371 = vector.load %arg10[%c2_579, %c1_580, %c0_581] : memref<20x5x128xbf16, #tpu.memory_space<vmem>>, vector<1x1x128xbf16>
    %372 = vector.shape_cast %371 : vector<1x1x128xbf16> to vector<1x128xbf16>
    %373 = vector.shape_cast %370 : vector<1x128xbf16> to vector<1x1x128xbf16>
    tpu.vector_store %arg10[%c2_579, %c1_580, %c0_581], %373 {strides = array<i32>} : memref<20x5x128xbf16, #tpu.memory_space<vmem>>, vector<1x1x128xbf16>,
    %c26 = arith.constant 26 : index
    %c0_582 = arith.constant 0 : index
    %374 = vector.load %arg9[%c26, %c0_582] : memref<64x128xbf16, #tpu.memory_space<vmem>>, vector<1x128xbf16>
    %c7_583 = arith.constant 7 : index
    %c1_584 = arith.constant 1 : index
    %c0_585 = arith.constant 0 : index
    %375 = vector.load %arg10[%c7_583, %c1_584, %c0_585] : memref<20x5x128xbf16, #tpu.memory_space<vmem>>, vector<1x1x128xbf16>
    %376 = vector.shape_cast %375 : vector<1x1x128xbf16> to vector<1x128xbf16>
    %377 = vector.shape_cast %374 : vector<1x128xbf16> to vector<1x1x128xbf16>
    tpu.vector_store %arg10[%c7_583, %c1_584, %c0_585], %377 {strides = array<i32>} : memref<20x5x128xbf16, #tpu.memory_space<vmem>>, vector<1x1x128xbf16>,
    %c27_586 = arith.constant 27 : index
    %c0_587 = arith.constant 0 : index
    %378 = vector.load %arg9[%c27_586, %c0_587] : memref<64x128xbf16, #tpu.memory_space<vmem>>, vector<1x128xbf16>
    %c2_588 = arith.constant 2 : index
    %c2_589 = arith.constant 2 : index
    %c0_590 = arith.constant 0 : index
    %379 = vector.load %arg10[%c2_588, %c2_589, %c0_590] : memref<20x5x128xbf16, #tpu.memory_space<vmem>>, vector<1x1x128xbf16>
    %380 = vector.shape_cast %379 : vector<1x1x128xbf16> to vector<1x128xbf16>
    %381 = vector.shape_cast %378 : vector<1x128xbf16> to vector<1x1x128xbf16>
    tpu.vector_store %arg10[%c2_588, %c2_589, %c0_590], %381 {strides = array<i32>} : memref<20x5x128xbf16, #tpu.memory_space<vmem>>, vector<1x1x128xbf16>,
    %c28_591 = arith.constant 28 : index
    %c0_592 = arith.constant 0 : index
    %382 = vector.load %arg9[%c28_591, %c0_592] : memref<64x128xbf16, #tpu.memory_space<vmem>>, vector<1x128xbf16>
    %c7_593 = arith.constant 7 : index
    %c2_594 = arith.constant 2 : index
    %c0_595 = arith.constant 0 : index
    %383 = vector.load %arg10[%c7_593, %c2_594, %c0_595] : memref<20x5x128xbf16, #tpu.memory_space<vmem>>, vector<1x1x128xbf16>
    %384 = vector.shape_cast %383 : vector<1x1x128xbf16> to vector<1x128xbf16>
    %385 = vector.shape_cast %382 : vector<1x128xbf16> to vector<1x1x128xbf16>
    tpu.vector_store %arg10[%c7_593, %c2_594, %c0_595], %385 {strides = array<i32>} : memref<20x5x128xbf16, #tpu.memory_space<vmem>>, vector<1x1x128xbf16>,
    %c29_596 = arith.constant 29 : index
    %c0_597 = arith.constant 0 : index
    %386 = vector.load %arg9[%c29_596, %c0_597] : memref<64x128xbf16, #tpu.memory_space<vmem>>, vector<1x128xbf16>
    %c2_598 = arith.constant 2 : index
    %c3_599 = arith.constant 3 : index
    %c0_600 = arith.constant 0 : index
    %387 = vector.load %arg10[%c2_598, %c3_599, %c0_600] : memref<20x5x128xbf16, #tpu.memory_space<vmem>>, vector<1x1x128xbf16>
    %388 = vector.shape_cast %387 : vector<1x1x128xbf16> to vector<1x128xbf16>
    %389 = vector.shape_cast %386 : vector<1x128xbf16> to vector<1x1x128xbf16>
    tpu.vector_store %arg10[%c2_598, %c3_599, %c0_600], %389 {strides = array<i32>} : memref<20x5x128xbf16, #tpu.memory_space<vmem>>, vector<1x1x128xbf16>,
    %c30_601 = arith.constant 30 : index
    %c0_602 = arith.constant 0 : index
    %390 = vector.load %arg9[%c30_601, %c0_602] : memref<64x128xbf16, #tpu.memory_space<vmem>>, vector<1x128xbf16>
    %c7_603 = arith.constant 7 : index
    %c3_604 = arith.constant 3 : index
    %c0_605 = arith.constant 0 : index
    %391 = vector.load %arg10[%c7_603, %c3_604, %c0_605] : memref<20x5x128xbf16, #tpu.memory_space<vmem>>, vector<1x1x128xbf16>
    %392 = vector.shape_cast %391 : vector<1x1x128xbf16> to vector<1x128xbf16>
    %393 = vector.shape_cast %390 : vector<1x128xbf16> to vector<1x1x128xbf16>
    tpu.vector_store %arg10[%c7_603, %c3_604, %c0_605], %393 {strides = array<i32>} : memref<20x5x128xbf16, #tpu.memory_space<vmem>>, vector<1x1x128xbf16>,
    %c31_606 = arith.constant 31 : index
    %c0_607 = arith.constant 0 : index
    %394 = vector.load %arg9[%c31_606, %c0_607] : memref<64x128xbf16, #tpu.memory_space<vmem>>, vector<1x128xbf16>
    %c2_608 = arith.constant 2 : index
    %c4_609 = arith.constant 4 : index
    %c0_610 = arith.constant 0 : index
    %395 = vector.load %arg10[%c2_608, %c4_609, %c0_610] : memref<20x5x128xbf16, #tpu.memory_space<vmem>>, vector<1x1x128xbf16>
    %396 = vector.shape_cast %395 : vector<1x1x128xbf16> to vector<1x128xbf16>
    %397 = vector.shape_cast %394 : vector<1x128xbf16> to vector<1x1x128xbf16>
    tpu.vector_store %arg10[%c2_608, %c4_609, %c0_610], %397 {strides = array<i32>} : memref<20x5x128xbf16, #tpu.memory_space<vmem>>, vector<1x1x128xbf16>,
    %c32_611 = arith.constant 32 : index
    %c0_612 = arith.constant 0 : index
    %398 = vector.load %arg9[%c32_611, %c0_612] : memref<64x128xbf16, #tpu.memory_space<vmem>>, vector<1x128xbf16>
    %c17_613 = arith.constant 17 : index
    %c0_614 = arith.constant 0 : index
    %c0_615 = arith.constant 0 : index
    %399 = vector.load %arg10[%c17_613, %c0_614, %c0_615] : memref<20x5x128xbf16, #tpu.memory_space<vmem>>, vector<1x1x128xbf16>
    %400 = vector.shape_cast %399 : vector<1x1x128xbf16> to vector<1x128xbf16>
    %401 = vector.shape_cast %398 : vector<1x128xbf16> to vector<1x1x128xbf16>
    tpu.vector_store %arg10[%c17_613, %c0_614, %c0_615], %401 {strides = array<i32>} : memref<20x5x128xbf16, #tpu.memory_space<vmem>>, vector<1x1x128xbf16>,
    %c33_616 = arith.constant 33 : index
    %c0_617 = arith.constant 0 : index
    %402 = vector.load %arg9[%c33_616, %c0_617] : memref<64x128xbf16, #tpu.memory_space<vmem>>, vector<1x128xbf16>
    %c12_618 = arith.constant 12 : index
    %c1_619 = arith.constant 1 : index
    %c0_620 = arith.constant 0 : index
    %403 = vector.load %arg10[%c12_618, %c1_619, %c0_620] : memref<20x5x128xbf16, #tpu.memory_space<vmem>>, vector<1x1x128xbf16>
    %404 = vector.shape_cast %403 : vector<1x1x128xbf16> to vector<1x128xbf16>
    %405 = vector.shape_cast %402 : vector<1x128xbf16> to vector<1x1x128xbf16>
    tpu.vector_store %arg10[%c12_618, %c1_619, %c0_620], %405 {strides = array<i32>} : memref<20x5x128xbf16, #tpu.memory_space<vmem>>, vector<1x1x128xbf16>,
    %c34_621 = arith.constant 34 : index
    %c0_622 = arith.constant 0 : index
    %406 = vector.load %arg9[%c34_621, %c0_622] : memref<64x128xbf16, #tpu.memory_space<vmem>>, vector<1x128xbf16>
    %c17_623 = arith.constant 17 : index
    %c1_624 = arith.constant 1 : index
    %c0_625 = arith.constant 0 : index
    %407 = vector.load %arg10[%c17_623, %c1_624, %c0_625] : memref<20x5x128xbf16, #tpu.memory_space<vmem>>, vector<1x1x128xbf16>
    %408 = vector.shape_cast %407 : vector<1x1x128xbf16> to vector<1x128xbf16>
    %409 = vector.shape_cast %406 : vector<1x128xbf16> to vector<1x1x128xbf16>
    tpu.vector_store %arg10[%c17_623, %c1_624, %c0_625], %409 {strides = array<i32>} : memref<20x5x128xbf16, #tpu.memory_space<vmem>>, vector<1x1x128xbf16>,
    %c35 = arith.constant 35 : index
    %c0_626 = arith.constant 0 : index
    %410 = vector.load %arg9[%c35, %c0_626] : memref<64x128xbf16, #tpu.memory_space<vmem>>, vector<1x128xbf16>
    %c12_627 = arith.constant 12 : index
    %c2_628 = arith.constant 2 : index
    %c0_629 = arith.constant 0 : index
    %411 = vector.load %arg10[%c12_627, %c2_628, %c0_629] : memref<20x5x128xbf16, #tpu.memory_space<vmem>>, vector<1x1x128xbf16>
    %412 = vector.shape_cast %411 : vector<1x1x128xbf16> to vector<1x128xbf16>
    %413 = vector.shape_cast %410 : vector<1x128xbf16> to vector<1x1x128xbf16>
    tpu.vector_store %arg10[%c12_627, %c2_628, %c0_629], %413 {strides = array<i32>} : memref<20x5x128xbf16, #tpu.memory_space<vmem>>, vector<1x1x128xbf16>,
    %c36 = arith.constant 36 : index
    %c0_630 = arith.constant 0 : index
    %414 = vector.load %arg9[%c36, %c0_630] : memref<64x128xbf16, #tpu.memory_space<vmem>>, vector<1x128xbf16>
    %c17_631 = arith.constant 17 : index
    %c2_632 = arith.constant 2 : index
    %c0_633 = arith.constant 0 : index
    %415 = vector.load %arg10[%c17_631, %c2_632, %c0_633] : memref<20x5x128xbf16, #tpu.memory_space<vmem>>, vector<1x1x128xbf16>
    %416 = vector.shape_cast %415 : vector<1x1x128xbf16> to vector<1x128xbf16>
    %417 = vector.shape_cast %414 : vector<1x128xbf16> to vector<1x1x128xbf16>
    tpu.vector_store %arg10[%c17_631, %c2_632, %c0_633], %417 {strides = array<i32>} : memref<20x5x128xbf16, #tpu.memory_space<vmem>>, vector<1x1x128xbf16>,
    %c37 = arith.constant 37 : index
    %c0_634 = arith.constant 0 : index
    %418 = vector.load %arg9[%c37, %c0_634] : memref<64x128xbf16, #tpu.memory_space<vmem>>, vector<1x128xbf16>
    %c12_635 = arith.constant 12 : index
    %c3_636 = arith.constant 3 : index
    %c0_637 = arith.constant 0 : index
    %419 = vector.load %arg10[%c12_635, %c3_636, %c0_637] : memref<20x5x128xbf16, #tpu.memory_space<vmem>>, vector<1x1x128xbf16>
    %420 = vector.shape_cast %419 : vector<1x1x128xbf16> to vector<1x128xbf16>
    %421 = vector.shape_cast %418 : vector<1x128xbf16> to vector<1x1x128xbf16>
    tpu.vector_store %arg10[%c12_635, %c3_636, %c0_637], %421 {strides = array<i32>} : memref<20x5x128xbf16, #tpu.memory_space<vmem>>, vector<1x1x128xbf16>,
    %c38 = arith.constant 38 : index
    %c0_638 = arith.constant 0 : index
    %422 = vector.load %arg9[%c38, %c0_638] : memref<64x128xbf16, #tpu.memory_space<vmem>>, vector<1x128xbf16>
    %c17_639 = arith.constant 17 : index
    %c3_640 = arith.constant 3 : index
    %c0_641 = arith.constant 0 : index
    %423 = vector.load %arg10[%c17_639, %c3_640, %c0_641] : memref<20x5x128xbf16, #tpu.memory_space<vmem>>, vector<1x1x128xbf16>
    %424 = vector.shape_cast %423 : vector<1x1x128xbf16> to vector<1x128xbf16>
    %425 = vector.shape_cast %422 : vector<1x128xbf16> to vector<1x1x128xbf16>
    tpu.vector_store %arg10[%c17_639, %c3_640, %c0_641], %425 {strides = array<i32>} : memref<20x5x128xbf16, #tpu.memory_space<vmem>>, vector<1x1x128xbf16>,
    %c39 = arith.constant 39 : index
    %c0_642 = arith.constant 0 : index
    %426 = vector.load %arg9[%c39, %c0_642] : memref<64x128xbf16, #tpu.memory_space<vmem>>, vector<1x128xbf16>
    %c12_643 = arith.constant 12 : index
    %c4_644 = arith.constant 4 : index
    %c0_645 = arith.constant 0 : index
    %427 = vector.load %arg10[%c12_643, %c4_644, %c0_645] : memref<20x5x128xbf16, #tpu.memory_space<vmem>>, vector<1x1x128xbf16>
    %428 = vector.shape_cast %427 : vector<1x1x128xbf16> to vector<1x128xbf16>
    %429 = vector.shape_cast %426 : vector<1x128xbf16> to vector<1x1x128xbf16>
    tpu.vector_store %arg10[%c12_643, %c4_644, %c0_645], %429 {strides = array<i32>} : memref<20x5x128xbf16, #tpu.memory_space<vmem>>, vector<1x1x128xbf16>,
    %c40_646 = arith.constant 40 : index
    %c0_647 = arith.constant 0 : index
    %430 = vector.load %arg9[%c40_646, %c0_647] : memref<64x128xbf16, #tpu.memory_space<vmem>>, vector<1x128xbf16>
    %c8_648 = arith.constant 8 : index
    %c0_649 = arith.constant 0 : index
    %c0_650 = arith.constant 0 : index
    %431 = vector.load %arg10[%c8_648, %c0_649, %c0_650] : memref<20x5x128xbf16, #tpu.memory_space<vmem>>, vector<1x1x128xbf16>
    %432 = vector.shape_cast %431 : vector<1x1x128xbf16> to vector<1x128xbf16>
    %433 = vector.shape_cast %430 : vector<1x128xbf16> to vector<1x1x128xbf16>
    tpu.vector_store %arg10[%c8_648, %c0_649, %c0_650], %433 {strides = array<i32>} : memref<20x5x128xbf16, #tpu.memory_space<vmem>>, vector<1x1x128xbf16>,
    %c41 = arith.constant 41 : index
    %c0_651 = arith.constant 0 : index
    %434 = vector.load %arg9[%c41, %c0_651] : memref<64x128xbf16, #tpu.memory_space<vmem>>, vector<1x128xbf16>
    %c3_652 = arith.constant 3 : index
    %c1_653 = arith.constant 1 : index
    %c0_654 = arith.constant 0 : index
    %435 = vector.load %arg10[%c3_652, %c1_653, %c0_654] : memref<20x5x128xbf16, #tpu.memory_space<vmem>>, vector<1x1x128xbf16>
    %436 = vector.shape_cast %435 : vector<1x1x128xbf16> to vector<1x128xbf16>
    %437 = vector.shape_cast %434 : vector<1x128xbf16> to vector<1x1x128xbf16>
    tpu.vector_store %arg10[%c3_652, %c1_653, %c0_654], %437 {strides = array<i32>} : memref<20x5x128xbf16, #tpu.memory_space<vmem>>, vector<1x1x128xbf16>,
    %c42 = arith.constant 42 : index
    %c0_655 = arith.constant 0 : index
    %438 = vector.load %arg9[%c42, %c0_655] : memref<64x128xbf16, #tpu.memory_space<vmem>>, vector<1x128xbf16>
    %c8_656 = arith.constant 8 : index
    %c1_657 = arith.constant 1 : index
    %c0_658 = arith.constant 0 : index
    %439 = vector.load %arg10[%c8_656, %c1_657, %c0_658] : memref<20x5x128xbf16, #tpu.memory_space<vmem>>, vector<1x1x128xbf16>
    %440 = vector.shape_cast %439 : vector<1x1x128xbf16> to vector<1x128xbf16>
    %441 = vector.shape_cast %438 : vector<1x128xbf16> to vector<1x1x128xbf16>
    tpu.vector_store %arg10[%c8_656, %c1_657, %c0_658], %441 {strides = array<i32>} : memref<20x5x128xbf16, #tpu.memory_space<vmem>>, vector<1x1x128xbf16>,
    %c43 = arith.constant 43 : index
    %c0_659 = arith.constant 0 : index
    %442 = vector.load %arg9[%c43, %c0_659] : memref<64x128xbf16, #tpu.memory_space<vmem>>, vector<1x128xbf16>
    %c3_660 = arith.constant 3 : index
    %c2_661 = arith.constant 2 : index
    %c0_662 = arith.constant 0 : index
    %443 = vector.load %arg10[%c3_660, %c2_661, %c0_662] : memref<20x5x128xbf16, #tpu.memory_space<vmem>>, vector<1x1x128xbf16>
    %444 = vector.shape_cast %443 : vector<1x1x128xbf16> to vector<1x128xbf16>
    %445 = vector.shape_cast %442 : vector<1x128xbf16> to vector<1x1x128xbf16>
    tpu.vector_store %arg10[%c3_660, %c2_661, %c0_662], %445 {strides = array<i32>} : memref<20x5x128xbf16, #tpu.memory_space<vmem>>, vector<1x1x128xbf16>,
    %c44 = arith.constant 44 : index
    %c0_663 = arith.constant 0 : index
    %446 = vector.load %arg9[%c44, %c0_663] : memref<64x128xbf16, #tpu.memory_space<vmem>>, vector<1x128xbf16>
    %c8_664 = arith.constant 8 : index
    %c2_665 = arith.constant 2 : index
    %c0_666 = arith.constant 0 : index
    %447 = vector.load %arg10[%c8_664, %c2_665, %c0_666] : memref<20x5x128xbf16, #tpu.memory_space<vmem>>, vector<1x1x128xbf16>
    %448 = vector.shape_cast %447 : vector<1x1x128xbf16> to vector<1x128xbf16>
    %449 = vector.shape_cast %446 : vector<1x128xbf16> to vector<1x1x128xbf16>
    tpu.vector_store %arg10[%c8_664, %c2_665, %c0_666], %449 {strides = array<i32>} : memref<20x5x128xbf16, #tpu.memory_space<vmem>>, vector<1x1x128xbf16>,
    %c45 = arith.constant 45 : index
    %c0_667 = arith.constant 0 : index
    %450 = vector.load %arg9[%c45, %c0_667] : memref<64x128xbf16, #tpu.memory_space<vmem>>, vector<1x128xbf16>
    %c3_668 = arith.constant 3 : index
    %c3_669 = arith.constant 3 : index
    %c0_670 = arith.constant 0 : index
    %451 = vector.load %arg10[%c3_668, %c3_669, %c0_670] : memref<20x5x128xbf16, #tpu.memory_space<vmem>>, vector<1x1x128xbf16>
    %452 = vector.shape_cast %451 : vector<1x1x128xbf16> to vector<1x128xbf16>
    %453 = vector.shape_cast %450 : vector<1x128xbf16> to vector<1x1x128xbf16>
    tpu.vector_store %arg10[%c3_668, %c3_669, %c0_670], %453 {strides = array<i32>} : memref<20x5x128xbf16, #tpu.memory_space<vmem>>, vector<1x1x128xbf16>,
    %c46 = arith.constant 46 : index
    %c0_671 = arith.constant 0 : index
    %454 = vector.load %arg9[%c46, %c0_671] : memref<64x128xbf16, #tpu.memory_space<vmem>>, vector<1x128xbf16>
    %c8_672 = arith.constant 8 : index
    %c3_673 = arith.constant 3 : index
    %c0_674 = arith.constant 0 : index
    %455 = vector.load %arg10[%c8_672, %c3_673, %c0_674] : memref<20x5x128xbf16, #tpu.memory_space<vmem>>, vector<1x1x128xbf16>
    %456 = vector.shape_cast %455 : vector<1x1x128xbf16> to vector<1x128xbf16>
    %457 = vector.shape_cast %454 : vector<1x128xbf16> to vector<1x1x128xbf16>
    tpu.vector_store %arg10[%c8_672, %c3_673, %c0_674], %457 {strides = array<i32>} : memref<20x5x128xbf16, #tpu.memory_space<vmem>>, vector<1x1x128xbf16>,
    %c47 = arith.constant 47 : index
    %c0_675 = arith.constant 0 : index
    %458 = vector.load %arg9[%c47, %c0_675] : memref<64x128xbf16, #tpu.memory_space<vmem>>, vector<1x128xbf16>
    %c3_676 = arith.constant 3 : index
    %c4_677 = arith.constant 4 : index
    %c0_678 = arith.constant 0 : index
    %459 = vector.load %arg10[%c3_676, %c4_677, %c0_678] : memref<20x5x128xbf16, #tpu.memory_space<vmem>>, vector<1x1x128xbf16>
    %460 = vector.shape_cast %459 : vector<1x1x128xbf16> to vector<1x128xbf16>
    %461 = vector.shape_cast %458 : vector<1x128xbf16> to vector<1x1x128xbf16>
    tpu.vector_store %arg10[%c3_676, %c4_677, %c0_678], %461 {strides = array<i32>} : memref<20x5x128xbf16, #tpu.memory_space<vmem>>, vector<1x1x128xbf16>,
    %c48_679 = arith.constant 48 : index
    %c0_680 = arith.constant 0 : index
    %462 = vector.load %arg9[%c48_679, %c0_680] : memref<64x128xbf16, #tpu.memory_space<vmem>>, vector<1x128xbf16>
    %c18_681 = arith.constant 18 : index
    %c0_682 = arith.constant 0 : index
    %c0_683 = arith.constant 0 : index
    %463 = vector.load %arg10[%c18_681, %c0_682, %c0_683] : memref<20x5x128xbf16, #tpu.memory_space<vmem>>, vector<1x1x128xbf16>
    %464 = vector.shape_cast %463 : vector<1x1x128xbf16> to vector<1x128xbf16>
    %465 = vector.shape_cast %462 : vector<1x128xbf16> to vector<1x1x128xbf16>
    tpu.vector_store %arg10[%c18_681, %c0_682, %c0_683], %465 {strides = array<i32>} : memref<20x5x128xbf16, #tpu.memory_space<vmem>>, vector<1x1x128xbf16>,
    %c49 = arith.constant 49 : index
    %c0_684 = arith.constant 0 : index
    %466 = vector.load %arg9[%c49, %c0_684] : memref<64x128xbf16, #tpu.memory_space<vmem>>, vector<1x128xbf16>
    %c13_685 = arith.constant 13 : index
    %c1_686 = arith.constant 1 : index
    %c0_687 = arith.constant 0 : index
    %467 = vector.load %arg10[%c13_685, %c1_686, %c0_687] : memref<20x5x128xbf16, #tpu.memory_space<vmem>>, vector<1x1x128xbf16>
    %468 = vector.shape_cast %467 : vector<1x1x128xbf16> to vector<1x128xbf16>
    %469 = vector.shape_cast %466 : vector<1x128xbf16> to vector<1x1x128xbf16>
    tpu.vector_store %arg10[%c13_685, %c1_686, %c0_687], %469 {strides = array<i32>} : memref<20x5x128xbf16, #tpu.memory_space<vmem>>, vector<1x1x128xbf16>,
    %c50 = arith.constant 50 : index
    %c0_688 = arith.constant 0 : index
    %470 = vector.load %arg9[%c50, %c0_688] : memref<64x128xbf16, #tpu.memory_space<vmem>>, vector<1x128xbf16>
    %c18_689 = arith.constant 18 : index
    %c1_690 = arith.constant 1 : index
    %c0_691 = arith.constant 0 : index
    %471 = vector.load %arg10[%c18_689, %c1_690, %c0_691] : memref<20x5x128xbf16, #tpu.memory_space<vmem>>, vector<1x1x128xbf16>
    %472 = vector.shape_cast %471 : vector<1x1x128xbf16> to vector<1x128xbf16>
    %473 = vector.shape_cast %470 : vector<1x128xbf16> to vector<1x1x128xbf16>
    tpu.vector_store %arg10[%c18_689, %c1_690, %c0_691], %473 {strides = array<i32>} : memref<20x5x128xbf16, #tpu.memory_space<vmem>>, vector<1x1x128xbf16>,
    %c51 = arith.constant 51 : index
    %c0_692 = arith.constant 0 : index
    %474 = vector.load %arg9[%c51, %c0_692] : memref<64x128xbf16, #tpu.memory_space<vmem>>, vector<1x128xbf16>
    %c13_693 = arith.constant 13 : index
    %c2_694 = arith.constant 2 : index
    %c0_695 = arith.constant 0 : index
    %475 = vector.load %arg10[%c13_693, %c2_694, %c0_695] : memref<20x5x128xbf16, #tpu.memory_space<vmem>>, vector<1x1x128xbf16>
    %476 = vector.shape_cast %475 : vector<1x1x128xbf16> to vector<1x128xbf16>
    %477 = vector.shape_cast %474 : vector<1x128xbf16> to vector<1x1x128xbf16>
    tpu.vector_store %arg10[%c13_693, %c2_694, %c0_695], %477 {strides = array<i32>} : memref<20x5x128xbf16, #tpu.memory_space<vmem>>, vector<1x1x128xbf16>,
    %c52 = arith.constant 52 : index
    %c0_696 = arith.constant 0 : index
    %478 = vector.load %arg9[%c52, %c0_696] : memref<64x128xbf16, #tpu.memory_space<vmem>>, vector<1x128xbf16>
    %c18_697 = arith.constant 18 : index
    %c2_698 = arith.constant 2 : index
    %c0_699 = arith.constant 0 : index
    %479 = vector.load %arg10[%c18_697, %c2_698, %c0_699] : memref<20x5x128xbf16, #tpu.memory_space<vmem>>, vector<1x1x128xbf16>
    %480 = vector.shape_cast %479 : vector<1x1x128xbf16> to vector<1x128xbf16>
    %481 = vector.shape_cast %478 : vector<1x128xbf16> to vector<1x1x128xbf16>
    tpu.vector_store %arg10[%c18_697, %c2_698, %c0_699], %481 {strides = array<i32>} : memref<20x5x128xbf16, #tpu.memory_space<vmem>>, vector<1x1x128xbf16>,
    %c53 = arith.constant 53 : index
    %c0_700 = arith.constant 0 : index
    %482 = vector.load %arg9[%c53, %c0_700] : memref<64x128xbf16, #tpu.memory_space<vmem>>, vector<1x128xbf16>
    %c13_701 = arith.constant 13 : index
    %c3_702 = arith.constant 3 : index
    %c0_703 = arith.constant 0 : index
    %483 = vector.load %arg10[%c13_701, %c3_702, %c0_703] : memref<20x5x128xbf16, #tpu.memory_space<vmem>>, vector<1x1x128xbf16>
    %484 = vector.shape_cast %483 : vector<1x1x128xbf16> to vector<1x128xbf16>
    %485 = vector.shape_cast %482 : vector<1x128xbf16> to vector<1x1x128xbf16>
    tpu.vector_store %arg10[%c13_701, %c3_702, %c0_703], %485 {strides = array<i32>} : memref<20x5x128xbf16, #tpu.memory_space<vmem>>, vector<1x1x128xbf16>,
    %c54 = arith.constant 54 : index
    %c0_704 = arith.constant 0 : index
    %486 = vector.load %arg9[%c54, %c0_704] : memref<64x128xbf16, #tpu.memory_space<vmem>>, vector<1x128xbf16>
    %c18_705 = arith.constant 18 : index
    %c3_706 = arith.constant 3 : index
    %c0_707 = arith.constant 0 : index
    %487 = vector.load %arg10[%c18_705, %c3_706, %c0_707] : memref<20x5x128xbf16, #tpu.memory_space<vmem>>, vector<1x1x128xbf16>
    %488 = vector.shape_cast %487 : vector<1x1x128xbf16> to vector<1x128xbf16>
    %489 = vector.shape_cast %486 : vector<1x128xbf16> to vector<1x1x128xbf16>
    tpu.vector_store %arg10[%c18_705, %c3_706, %c0_707], %489 {strides = array<i32>} : memref<20x5x128xbf16, #tpu.memory_space<vmem>>, vector<1x1x128xbf16>,
    %c55 = arith.constant 55 : index
    %c0_708 = arith.constant 0 : index
    %490 = vector.load %arg9[%c55, %c0_708] : memref<64x128xbf16, #tpu.memory_space<vmem>>, vector<1x128xbf16>
    %c13_709 = arith.constant 13 : index
    %c4_710 = arith.constant 4 : index
    %c0_711 = arith.constant 0 : index
    %491 = vector.load %arg10[%c13_709, %c4_710, %c0_711] : memref<20x5x128xbf16, #tpu.memory_space<vmem>>, vector<1x1x128xbf16>
    %492 = vector.shape_cast %491 : vector<1x1x128xbf16> to vector<1x128xbf16>
    %493 = vector.shape_cast %490 : vector<1x128xbf16> to vector<1x1x128xbf16>
    tpu.vector_store %arg10[%c13_709, %c4_710, %c0_711], %493 {strides = array<i32>} : memref<20x5x128xbf16, #tpu.memory_space<vmem>>, vector<1x1x128xbf16>,
    %c56_712 = arith.constant 56 : index
    %c0_713 = arith.constant 0 : index
    %494 = vector.load %arg9[%c56_712, %c0_713] : memref<64x128xbf16, #tpu.memory_space<vmem>>, vector<1x128xbf16>
    %c9_714 = arith.constant 9 : index
    %c0_715 = arith.constant 0 : index
    %c0_716 = arith.constant 0 : index
    %495 = vector.load %arg10[%c9_714, %c0_715, %c0_716] : memref<20x5x128xbf16, #tpu.memory_space<vmem>>, vector<1x1x128xbf16>
    %496 = vector.shape_cast %495 : vector<1x1x128xbf16> to vector<1x128xbf16>
    %497 = vector.shape_cast %494 : vector<1x128xbf16> to vector<1x1x128xbf16>
    tpu.vector_store %arg10[%c9_714, %c0_715, %c0_716], %497 {strides = array<i32>} : memref<20x5x128xbf16, #tpu.memory_space<vmem>>, vector<1x1x128xbf16>,
    %c57 = arith.constant 57 : index
    %c0_717 = arith.constant 0 : index
    %498 = vector.load %arg9[%c57, %c0_717] : memref<64x128xbf16, #tpu.memory_space<vmem>>, vector<1x128xbf16>
    %c4_718 = arith.constant 4 : index
    %c1_719 = arith.constant 1 : index
    %c0_720 = arith.constant 0 : index
    %499 = vector.load %arg10[%c4_718, %c1_719, %c0_720] : memref<20x5x128xbf16, #tpu.memory_space<vmem>>, vector<1x1x128xbf16>
    %500 = vector.shape_cast %499 : vector<1x1x128xbf16> to vector<1x128xbf16>
    %501 = vector.shape_cast %498 : vector<1x128xbf16> to vector<1x1x128xbf16>
    tpu.vector_store %arg10[%c4_718, %c1_719, %c0_720], %501 {strides = array<i32>} : memref<20x5x128xbf16, #tpu.memory_space<vmem>>, vector<1x1x128xbf16>,
    %c58 = arith.constant 58 : index
    %c0_721 = arith.constant 0 : index
    %502 = vector.load %arg9[%c58, %c0_721] : memref<64x128xbf16, #tpu.memory_space<vmem>>, vector<1x128xbf16>
    %c9_722 = arith.constant 9 : index
    %c1_723 = arith.constant 1 : index
    %c0_724 = arith.constant 0 : index
    %503 = vector.load %arg10[%c9_722, %c1_723, %c0_724] : memref<20x5x128xbf16, #tpu.memory_space<vmem>>, vector<1x1x128xbf16>
    %504 = vector.shape_cast %503 : vector<1x1x128xbf16> to vector<1x128xbf16>
    %505 = vector.shape_cast %502 : vector<1x128xbf16> to vector<1x1x128xbf16>
    tpu.vector_store %arg10[%c9_722, %c1_723, %c0_724], %505 {strides = array<i32>} : memref<20x5x128xbf16, #tpu.memory_space<vmem>>, vector<1x1x128xbf16>,
    %c59 = arith.constant 59 : index
    %c0_725 = arith.constant 0 : index
    %506 = vector.load %arg9[%c59, %c0_725] : memref<64x128xbf16, #tpu.memory_space<vmem>>, vector<1x128xbf16>
    %c4_726 = arith.constant 4 : index
    %c2_727 = arith.constant 2 : index
    %c0_728 = arith.constant 0 : index
    %507 = vector.load %arg10[%c4_726, %c2_727, %c0_728] : memref<20x5x128xbf16, #tpu.memory_space<vmem>>, vector<1x1x128xbf16>
    %508 = vector.shape_cast %507 : vector<1x1x128xbf16> to vector<1x128xbf16>
    %509 = vector.shape_cast %506 : vector<1x128xbf16> to vector<1x1x128xbf16>
    tpu.vector_store %arg10[%c4_726, %c2_727, %c0_728], %509 {strides = array<i32>} : memref<20x5x128xbf16, #tpu.memory_space<vmem>>, vector<1x1x128xbf16>,
    %c60 = arith.constant 60 : index
    %c0_729 = arith.constant 0 : index
    %510 = vector.load %arg9[%c60, %c0_729] : memref<64x128xbf16, #tpu.memory_space<vmem>>, vector<1x128xbf16>
    %c9_730 = arith.constant 9 : index
    %c2_731 = arith.constant 2 : index
    %c0_732 = arith.constant 0 : index
    %511 = vector.load %arg10[%c9_730, %c2_731, %c0_732] : memref<20x5x128xbf16, #tpu.memory_space<vmem>>, vector<1x1x128xbf16>
    %512 = vector.shape_cast %511 : vector<1x1x128xbf16> to vector<1x128xbf16>
    %513 = vector.shape_cast %510 : vector<1x128xbf16> to vector<1x1x128xbf16>
    tpu.vector_store %arg10[%c9_730, %c2_731, %c0_732], %513 {strides = array<i32>} : memref<20x5x128xbf16, #tpu.memory_space<vmem>>, vector<1x1x128xbf16>,
    %c61 = arith.constant 61 : index
    %c0_733 = arith.constant 0 : index
    %514 = vector.load %arg9[%c61, %c0_733] : memref<64x128xbf16, #tpu.memory_space<vmem>>, vector<1x128xbf16>
    %c4_734 = arith.constant 4 : index
    %c3_735 = arith.constant 3 : index
    %c0_736 = arith.constant 0 : index
    %515 = vector.load %arg10[%c4_734, %c3_735, %c0_736] : memref<20x5x128xbf16, #tpu.memory_space<vmem>>, vector<1x1x128xbf16>
    %516 = vector.shape_cast %515 : vector<1x1x128xbf16> to vector<1x128xbf16>
    %517 = vector.shape_cast %514 : vector<1x128xbf16> to vector<1x1x128xbf16>
    tpu.vector_store %arg10[%c4_734, %c3_735, %c0_736], %517 {strides = array<i32>} : memref<20x5x128xbf16, #tpu.memory_space<vmem>>, vector<1x1x128xbf16>,
    %c62 = arith.constant 62 : index
    %c0_737 = arith.constant 0 : index
    %518 = vector.load %arg9[%c62, %c0_737] : memref<64x128xbf16, #tpu.memory_space<vmem>>, vector<1x128xbf16>
    %c9_738 = arith.constant 9 : index
    %c3_739 = arith.constant 3 : index
    %c0_740 = arith.constant 0 : index
    %519 = vector.load %arg10[%c9_738, %c3_739, %c0_740] : memref<20x5x128xbf16, #tpu.memory_space<vmem>>, vector<1x1x128xbf16>
    %520 = vector.shape_cast %519 : vector<1x1x128xbf16> to vector<1x128xbf16>
    %521 = vector.shape_cast %518 : vector<1x128xbf16> to vector<1x1x128xbf16>
    tpu.vector_store %arg10[%c9_738, %c3_739, %c0_740], %521 {strides = array<i32>} : memref<20x5x128xbf16, #tpu.memory_space<vmem>>, vector<1x1x128xbf16>,
    %c63 = arith.constant 63 : index
    %c0_741 = arith.constant 0 : index
    %522 = vector.load %arg9[%c63, %c0_741] : memref<64x128xbf16, #tpu.memory_space<vmem>>, vector<1x128xbf16>
    %c4_742 = arith.constant 4 : index
    %c4_743 = arith.constant 4 : index
    %c0_744 = arith.constant 0 : index
    %523 = vector.load %arg10[%c4_742, %c4_743, %c0_744] : memref<20x5x128xbf16, #tpu.memory_space<vmem>>, vector<1x1x128xbf16>
    %524 = vector.shape_cast %523 : vector<1x1x128xbf16> to vector<1x128xbf16>
    %525 = vector.shape_cast %522 : vector<1x128xbf16> to vector<1x1x128xbf16>
    tpu.vector_store %arg10[%c4_742, %c4_743, %c0_744], %525 {strides = array<i32>} : memref<20x5x128xbf16, #tpu.memory_space<vmem>>, vector<1x1x128xbf16>,
    %cst_745 = arith.constant 0.000000e+00 : f32
    %526 = vector.broadcast %cst_745 : f32 to vector<16x128xf32>
    %c0_746 = arith.constant 0 : index
    %c0_747 = arith.constant 0 : index
    %c0_748 = arith.constant 0 : index
    %527 = vector.load %arg10[%c0_746, %c0_747, %c0_748] : memref<20x5x128xbf16, #tpu.memory_space<vmem>>, vector<1x4x128xbf16>
    %528 = vector.shape_cast %527 : vector<1x4x128xbf16> to vector<4x128xbf16>
    %c0_749 = arith.constant 0 : index
    %c0_750 = arith.constant 0 : index
    %529 = vector.load %arg8[%c0_749, %c0_750] : memref<64x128xbf16, #tpu.memory_space<vmem>>, vector<4x128xbf16>
    tpu.vector_store %arg8[%c0_749, %c0_750], %528 {strides = array<i32>} : memref<64x128xbf16, #tpu.memory_space<vmem>>, vector<4x128xbf16>,
    %c1_751 = arith.constant 1 : index
    %c0_752 = arith.constant 0 : index
    %c0_753 = arith.constant 0 : index
    %530 = vector.load %arg10[%c1_751, %c0_752, %c0_753] : memref<20x5x128xbf16, #tpu.memory_space<vmem>>, vector<1x4x128xbf16>
    %531 = vector.shape_cast %530 : vector<1x4x128xbf16> to vector<4x128xbf16>
    %c4_754 = arith.constant 4 : index
    %c0_755 = arith.constant 0 : index
    %532 = vector.load %arg8[%c4_754, %c0_755] : memref<64x128xbf16, #tpu.memory_space<vmem>>, vector<4x128xbf16>
    tpu.vector_store %arg8[%c4_754, %c0_755], %531 {strides = array<i32>} : memref<64x128xbf16, #tpu.memory_space<vmem>>, vector<4x128xbf16>,
    %c2_756 = arith.constant 2 : index
    %c0_757 = arith.constant 0 : index
    %c0_758 = arith.constant 0 : index
    %533 = vector.load %arg10[%c2_756, %c0_757, %c0_758] : memref<20x5x128xbf16, #tpu.memory_space<vmem>>, vector<1x4x128xbf16>
    %534 = vector.shape_cast %533 : vector<1x4x128xbf16> to vector<4x128xbf16>
    %c8_759 = arith.constant 8 : index
    %c0_760 = arith.constant 0 : index
    %535 = vector.load %arg8[%c8_759, %c0_760] : memref<64x128xbf16, #tpu.memory_space<vmem>>, vector<4x128xbf16>
    tpu.vector_store %arg8[%c8_759, %c0_760], %534 {strides = array<i32>} : memref<64x128xbf16, #tpu.memory_space<vmem>>, vector<4x128xbf16>,
    %c3_761 = arith.constant 3 : index
    %c0_762 = arith.constant 0 : index
    %c0_763 = arith.constant 0 : index
    %536 = vector.load %arg10[%c3_761, %c0_762, %c0_763] : memref<20x5x128xbf16, #tpu.memory_space<vmem>>, vector<1x4x128xbf16>
    %537 = vector.shape_cast %536 : vector<1x4x128xbf16> to vector<4x128xbf16>
    %c12_764 = arith.constant 12 : index
    %c0_765 = arith.constant 0 : index
    %538 = vector.load %arg8[%c12_764, %c0_765] : memref<64x128xbf16, #tpu.memory_space<vmem>>, vector<4x128xbf16>
    tpu.vector_store %arg8[%c12_764, %c0_765], %537 {strides = array<i32>} : memref<64x128xbf16, #tpu.memory_space<vmem>>, vector<4x128xbf16>,
    %c1152 = arith.constant 1152 : index
    %c0_766 = arith.constant 0 : index
    %539 = vector.load %arg2[%c1152, %c0_766] : memref<4608x128xbf16, #tpu.memory_space<vmem>>, vector<128x128xbf16>
    %c0_767 = arith.constant 0 : index
    %c0_768 = arith.constant 0 : index
    %540 = vector.load %arg8[%c0_767, %c0_768] : memref<64x128xbf16, #tpu.memory_space<vmem>>, vector<16x128xbf16>
    %cst_769 = arith.constant dense<0.000000e+00> : vector<16x128xf32>
    %541 = tpu.matmul %540, %539, %cst_769 {dimension_numbers = #tpu.dot_dimension_numbers<[1], [0], [0], [1], [0, 0, 1, 1], [], []>} : vector<16x128xbf16>, vector<128x128xbf16>, vector<16x128xf32> -> vector<16x128xf32>
    %542 = arith.addf %526, %541 : vector<16x128xf32>
    %c5_770 = arith.constant 5 : index
    %c0_771 = arith.constant 0 : index
    %c0_772 = arith.constant 0 : index
    %543 = vector.load %arg10[%c5_770, %c0_771, %c0_772] : memref<20x5x128xbf16, #tpu.memory_space<vmem>>, vector<1x4x128xbf16>
    %544 = vector.shape_cast %543 : vector<1x4x128xbf16> to vector<4x128xbf16>
    %c0_773 = arith.constant 0 : index
    %c0_774 = arith.constant 0 : index
    %545 = vector.load %arg8[%c0_773, %c0_774] : memref<64x128xbf16, #tpu.memory_space<vmem>>, vector<4x128xbf16>
    tpu.vector_store %arg8[%c0_773, %c0_774], %544 {strides = array<i32>} : memref<64x128xbf16, #tpu.memory_space<vmem>>, vector<4x128xbf16>,
    %c6_775 = arith.constant 6 : index
    %c0_776 = arith.constant 0 : index
    %c0_777 = arith.constant 0 : index
    %546 = vector.load %arg10[%c6_775, %c0_776, %c0_777] : memref<20x5x128xbf16, #tpu.memory_space<vmem>>, vector<1x4x128xbf16>
    %547 = vector.shape_cast %546 : vector<1x4x128xbf16> to vector<4x128xbf16>
    %c4_778 = arith.constant 4 : index
    %c0_779 = arith.constant 0 : index
    %548 = vector.load %arg8[%c4_778, %c0_779] : memref<64x128xbf16, #tpu.memory_space<vmem>>, vector<4x128xbf16>
    tpu.vector_store %arg8[%c4_778, %c0_779], %547 {strides = array<i32>} : memref<64x128xbf16, #tpu.memory_space<vmem>>, vector<4x128xbf16>,
    %c7_780 = arith.constant 7 : index
    %c0_781 = arith.constant 0 : index
    %c0_782 = arith.constant 0 : index
    %549 = vector.load %arg10[%c7_780, %c0_781, %c0_782] : memref<20x5x128xbf16, #tpu.memory_space<vmem>>, vector<1x4x128xbf16>
    %550 = vector.shape_cast %549 : vector<1x4x128xbf16> to vector<4x128xbf16>
    %c8_783 = arith.constant 8 : index
    %c0_784 = arith.constant 0 : index
    %551 = vector.load %arg8[%c8_783, %c0_784] : memref<64x128xbf16, #tpu.memory_space<vmem>>, vector<4x128xbf16>
    tpu.vector_store %arg8[%c8_783, %c0_784], %550 {strides = array<i32>} : memref<64x128xbf16, #tpu.memory_space<vmem>>, vector<4x128xbf16>,
    %c8_785 = arith.constant 8 : index
    %c0_786 = arith.constant 0 : index
    %c0_787 = arith.constant 0 : index
    %552 = vector.load %arg10[%c8_785, %c0_786, %c0_787] : memref<20x5x128xbf16, #tpu.memory_space<vmem>>, vector<1x4x128xbf16>
    %553 = vector.shape_cast %552 : vector<1x4x128xbf16> to vector<4x128xbf16>
    %c12_788 = arith.constant 12 : index
    %c0_789 = arith.constant 0 : index
    %554 = vector.load %arg8[%c12_788, %c0_789] : memref<64x128xbf16, #tpu.memory_space<vmem>>, vector<4x128xbf16>
    tpu.vector_store %arg8[%c12_788, %c0_789], %553 {strides = array<i32>} : memref<64x128xbf16, #tpu.memory_space<vmem>>, vector<4x128xbf16>,
    %c1280 = arith.constant 1280 : index
    %c0_790 = arith.constant 0 : index
    %555 = vector.load %arg2[%c1280, %c0_790] : memref<4608x128xbf16, #tpu.memory_space<vmem>>, vector<128x128xbf16>
    %c0_791 = arith.constant 0 : index
    %c0_792 = arith.constant 0 : index
    %556 = vector.load %arg8[%c0_791, %c0_792] : memref<64x128xbf16, #tpu.memory_space<vmem>>, vector<16x128xbf16>
    %cst_793 = arith.constant dense<0.000000e+00> : vector<16x128xf32>
    %557 = tpu.matmul %556, %555, %cst_793 {dimension_numbers = #tpu.dot_dimension_numbers<[1], [0], [0], [1], [0, 0, 1, 1], [], []>} : vector<16x128xbf16>, vector<128x128xbf16>, vector<16x128xf32> -> vector<16x128xf32>
    %558 = arith.addf %542, %557 : vector<16x128xf32>
    %c0_794 = arith.constant 0 : index
    %c1_795 = arith.constant 1 : index
    %c0_796 = arith.constant 0 : index
    %559 = vector.load %arg10[%c0_794, %c1_795, %c0_796] : memref<20x5x128xbf16, #tpu.memory_space<vmem>>, vector<1x4x128xbf16>
    %560 = vector.shape_cast %559 : vector<1x4x128xbf16> to vector<4x128xbf16>
    %c0_797 = arith.constant 0 : index
    %c0_798 = arith.constant 0 : index
    %561 = vector.load %arg8[%c0_797, %c0_798] : memref<64x128xbf16, #tpu.memory_space<vmem>>, vector<4x128xbf16>
    tpu.vector_store %arg8[%c0_797, %c0_798], %560 {strides = array<i32>} : memref<64x128xbf16, #tpu.memory_space<vmem>>, vector<4x128xbf16>,
    %c1_799 = arith.constant 1 : index
    %c1_800 = arith.constant 1 : index
    %c0_801 = arith.constant 0 : index
    %562 = vector.load %arg10[%c1_799, %c1_800, %c0_801] : memref<20x5x128xbf16, #tpu.memory_space<vmem>>, vector<1x4x128xbf16>
    %563 = vector.shape_cast %562 : vector<1x4x128xbf16> to vector<4x128xbf16>
    %c4_802 = arith.constant 4 : index
    %c0_803 = arith.constant 0 : index
    %564 = vector.load %arg8[%c4_802, %c0_803] : memref<64x128xbf16, #tpu.memory_space<vmem>>, vector<4x128xbf16>
    tpu.vector_store %arg8[%c4_802, %c0_803], %563 {strides = array<i32>} : memref<64x128xbf16, #tpu.memory_space<vmem>>, vector<4x128xbf16>,
    %c2_804 = arith.constant 2 : index
    %c1_805 = arith.constant 1 : index
    %c0_806 = arith.constant 0 : index
    %565 = vector.load %arg10[%c2_804, %c1_805, %c0_806] : memref<20x5x128xbf16, #tpu.memory_space<vmem>>, vector<1x4x128xbf16>
    %566 = vector.shape_cast %565 : vector<1x4x128xbf16> to vector<4x128xbf16>
    %c8_807 = arith.constant 8 : index
    %c0_808 = arith.constant 0 : index
    %567 = vector.load %arg8[%c8_807, %c0_808] : memref<64x128xbf16, #tpu.memory_space<vmem>>, vector<4x128xbf16>
    tpu.vector_store %arg8[%c8_807, %c0_808], %566 {strides = array<i32>} : memref<64x128xbf16, #tpu.memory_space<vmem>>, vector<4x128xbf16>,
    %c3_809 = arith.constant 3 : index
    %c1_810 = arith.constant 1 : index
    %c0_811 = arith.constant 0 : index
    %568 = vector.load %arg10[%c3_809, %c1_810, %c0_811] : memref<20x5x128xbf16, #tpu.memory_space<vmem>>, vector<1x4x128xbf16>
    %569 = vector.shape_cast %568 : vector<1x4x128xbf16> to vector<4x128xbf16>
    %c12_812 = arith.constant 12 : index
    %c0_813 = arith.constant 0 : index
    %570 = vector.load %arg8[%c12_812, %c0_813] : memref<64x128xbf16, #tpu.memory_space<vmem>>, vector<4x128xbf16>
    tpu.vector_store %arg8[%c12_812, %c0_813], %569 {strides = array<i32>} : memref<64x128xbf16, #tpu.memory_space<vmem>>, vector<4x128xbf16>,
    %c1408 = arith.constant 1408 : index
    %c0_814 = arith.constant 0 : index
    %571 = vector.load %arg2[%c1408, %c0_814] : memref<4608x128xbf16, #tpu.memory_space<vmem>>, vector<128x128xbf16>
    %c0_815 = arith.constant 0 : index
    %c0_816 = arith.constant 0 : index
    %572 = vector.load %arg8[%c0_815, %c0_816] : memref<64x128xbf16, #tpu.memory_space<vmem>>, vector<16x128xbf16>
    %cst_817 = arith.constant dense<0.000000e+00> : vector<16x128xf32>
    %573 = tpu.matmul %572, %571, %cst_817 {dimension_numbers = #tpu.dot_dimension_numbers<[1], [0], [0], [1], [0, 0, 1, 1], [], []>} : vector<16x128xbf16>, vector<128x128xbf16>, vector<16x128xf32> -> vector<16x128xf32>
    %574 = arith.addf %558, %573 : vector<16x128xf32>
    %c10_818 = arith.constant 10 : index
    %c0_819 = arith.constant 0 : index
    %c0_820 = arith.constant 0 : index
    %575 = vector.load %arg10[%c10_818, %c0_819, %c0_820] : memref<20x5x128xbf16, #tpu.memory_space<vmem>>, vector<1x4x128xbf16>
    %576 = vector.shape_cast %575 : vector<1x4x128xbf16> to vector<4x128xbf16>
    %c0_821 = arith.constant 0 : index
    %c0_822 = arith.constant 0 : index
    %577 = vector.load %arg8[%c0_821, %c0_822] : memref<64x128xbf16, #tpu.memory_space<vmem>>, vector<4x128xbf16>
    tpu.vector_store %arg8[%c0_821, %c0_822], %576 {strides = array<i32>} : memref<64x128xbf16, #tpu.memory_space<vmem>>, vector<4x128xbf16>,
    %c11_823 = arith.constant 11 : index
    %c0_824 = arith.constant 0 : index
    %c0_825 = arith.constant 0 : index
    %578 = vector.load %arg10[%c11_823, %c0_824, %c0_825] : memref<20x5x128xbf16, #tpu.memory_space<vmem>>, vector<1x4x128xbf16>
    %579 = vector.shape_cast %578 : vector<1x4x128xbf16> to vector<4x128xbf16>
    %c4_826 = arith.constant 4 : index
    %c0_827 = arith.constant 0 : index
    %580 = vector.load %arg8[%c4_826, %c0_827] : memref<64x128xbf16, #tpu.memory_space<vmem>>, vector<4x128xbf16>
    tpu.vector_store %arg8[%c4_826, %c0_827], %579 {strides = array<i32>} : memref<64x128xbf16, #tpu.memory_space<vmem>>, vector<4x128xbf16>,
    %c12_828 = arith.constant 12 : index
    %c0_829 = arith.constant 0 : index
    %c0_830 = arith.constant 0 : index
    %581 = vector.load %arg10[%c12_828, %c0_829, %c0_830] : memref<20x5x128xbf16, #tpu.memory_space<vmem>>, vector<1x4x128xbf16>
    %582 = vector.shape_cast %581 : vector<1x4x128xbf16> to vector<4x128xbf16>
    %c8_831 = arith.constant 8 : index
    %c0_832 = arith.constant 0 : index
    %583 = vector.load %arg8[%c8_831, %c0_832] : memref<64x128xbf16, #tpu.memory_space<vmem>>, vector<4x128xbf16>
    tpu.vector_store %arg8[%c8_831, %c0_832], %582 {strides = array<i32>} : memref<64x128xbf16, #tpu.memory_space<vmem>>, vector<4x128xbf16>,
    %c13_833 = arith.constant 13 : index
    %c0_834 = arith.constant 0 : index
    %c0_835 = arith.constant 0 : index
    %584 = vector.load %arg10[%c13_833, %c0_834, %c0_835] : memref<20x5x128xbf16, #tpu.memory_space<vmem>>, vector<1x4x128xbf16>
    %585 = vector.shape_cast %584 : vector<1x4x128xbf16> to vector<4x128xbf16>
    %c12_836 = arith.constant 12 : index
    %c0_837 = arith.constant 0 : index
    %586 = vector.load %arg8[%c12_836, %c0_837] : memref<64x128xbf16, #tpu.memory_space<vmem>>, vector<4x128xbf16>
    tpu.vector_store %arg8[%c12_836, %c0_837], %585 {strides = array<i32>} : memref<64x128xbf16, #tpu.memory_space<vmem>>, vector<4x128xbf16>,
    %c1536 = arith.constant 1536 : index
    %c0_838 = arith.constant 0 : index
    %587 = vector.load %arg2[%c1536, %c0_838] : memref<4608x128xbf16, #tpu.memory_space<vmem>>, vector<128x128xbf16>
    %c0_839 = arith.constant 0 : index
    %c0_840 = arith.constant 0 : index
    %588 = vector.load %arg8[%c0_839, %c0_840] : memref<64x128xbf16, #tpu.memory_space<vmem>>, vector<16x128xbf16>
    %cst_841 = arith.constant dense<0.000000e+00> : vector<16x128xf32>
    %589 = tpu.matmul %588, %587, %cst_841 {dimension_numbers = #tpu.dot_dimension_numbers<[1], [0], [0], [1], [0, 0, 1, 1], [], []>} : vector<16x128xbf16>, vector<128x128xbf16>, vector<16x128xf32> -> vector<16x128xf32>
    %590 = arith.addf %574, %589 : vector<16x128xf32>
    %c15_842 = arith.constant 15 : index
    %c0_843 = arith.constant 0 : index
    %c0_844 = arith.constant 0 : index
    %591 = vector.load %arg10[%c15_842, %c0_843, %c0_844] : memref<20x5x128xbf16, #tpu.memory_space<vmem>>, vector<1x4x128xbf16>
    %592 = vector.shape_cast %591 : vector<1x4x128xbf16> to vector<4x128xbf16>
    %c0_845 = arith.constant 0 : index
    %c0_846 = arith.constant 0 : index
    %593 = vector.load %arg8[%c0_845, %c0_846] : memref<64x128xbf16, #tpu.memory_space<vmem>>, vector<4x128xbf16>
    tpu.vector_store %arg8[%c0_845, %c0_846], %592 {strides = array<i32>} : memref<64x128xbf16, #tpu.memory_space<vmem>>, vector<4x128xbf16>,
    %c16_847 = arith.constant 16 : index
    %c0_848 = arith.constant 0 : index
    %c0_849 = arith.constant 0 : index
    %594 = vector.load %arg10[%c16_847, %c0_848, %c0_849] : memref<20x5x128xbf16, #tpu.memory_space<vmem>>, vector<1x4x128xbf16>
    %595 = vector.shape_cast %594 : vector<1x4x128xbf16> to vector<4x128xbf16>
    %c4_850 = arith.constant 4 : index
    %c0_851 = arith.constant 0 : index
    %596 = vector.load %arg8[%c4_850, %c0_851] : memref<64x128xbf16, #tpu.memory_space<vmem>>, vector<4x128xbf16>
    tpu.vector_store %arg8[%c4_850, %c0_851], %595 {strides = array<i32>} : memref<64x128xbf16, #tpu.memory_space<vmem>>, vector<4x128xbf16>,
    %c17_852 = arith.constant 17 : index
    %c0_853 = arith.constant 0 : index
    %c0_854 = arith.constant 0 : index
    %597 = vector.load %arg10[%c17_852, %c0_853, %c0_854] : memref<20x5x128xbf16, #tpu.memory_space<vmem>>, vector<1x4x128xbf16>
    %598 = vector.shape_cast %597 : vector<1x4x128xbf16> to vector<4x128xbf16>
    %c8_855 = arith.constant 8 : index
    %c0_856 = arith.constant 0 : index
    %599 = vector.load %arg8[%c8_855, %c0_856] : memref<64x128xbf16, #tpu.memory_space<vmem>>, vector<4x128xbf16>
    tpu.vector_store %arg8[%c8_855, %c0_856], %598 {strides = array<i32>} : memref<64x128xbf16, #tpu.memory_space<vmem>>, vector<4x128xbf16>,
    %c18_857 = arith.constant 18 : index
    %c0_858 = arith.constant 0 : index
    %c0_859 = arith.constant 0 : index
    %600 = vector.load %arg10[%c18_857, %c0_858, %c0_859] : memref<20x5x128xbf16, #tpu.memory_space<vmem>>, vector<1x4x128xbf16>
    %601 = vector.shape_cast %600 : vector<1x4x128xbf16> to vector<4x128xbf16>
    %c12_860 = arith.constant 12 : index
    %c0_861 = arith.constant 0 : index
    %602 = vector.load %arg8[%c12_860, %c0_861] : memref<64x128xbf16, #tpu.memory_space<vmem>>, vector<4x128xbf16>
    tpu.vector_store %arg8[%c12_860, %c0_861], %601 {strides = array<i32>} : memref<64x128xbf16, #tpu.memory_space<vmem>>, vector<4x128xbf16>,
    %c1664 = arith.constant 1664 : index
    %c0_862 = arith.constant 0 : index
    %603 = vector.load %arg2[%c1664, %c0_862] : memref<4608x128xbf16, #tpu.memory_space<vmem>>, vector<128x128xbf16>
    %c0_863 = arith.constant 0 : index
    %c0_864 = arith.constant 0 : index
    %604 = vector.load %arg8[%c0_863, %c0_864] : memref<64x128xbf16, #tpu.memory_space<vmem>>, vector<16x128xbf16>
    %cst_865 = arith.constant dense<0.000000e+00> : vector<16x128xf32>
    %605 = tpu.matmul %604, %603, %cst_865 {dimension_numbers = #tpu.dot_dimension_numbers<[1], [0], [0], [1], [0, 0, 1, 1], [], []>} : vector<16x128xbf16>, vector<128x128xbf16>, vector<16x128xf32> -> vector<16x128xf32>
    %606 = arith.addf %590, %605 : vector<16x128xf32>
    %c10_866 = arith.constant 10 : index
    %c1_867 = arith.constant 1 : index
    %c0_868 = arith.constant 0 : index
    %607 = vector.load %arg10[%c10_866, %c1_867, %c0_868] : memref<20x5x128xbf16, #tpu.memory_space<vmem>>, vector<1x4x128xbf16>
    %608 = vector.shape_cast %607 : vector<1x4x128xbf16> to vector<4x128xbf16>
    %c0_869 = arith.constant 0 : index
    %c0_870 = arith.constant 0 : index
    %609 = vector.load %arg8[%c0_869, %c0_870] : memref<64x128xbf16, #tpu.memory_space<vmem>>, vector<4x128xbf16>
    tpu.vector_store %arg8[%c0_869, %c0_870], %608 {strides = array<i32>} : memref<64x128xbf16, #tpu.memory_space<vmem>>, vector<4x128xbf16>,
    %c11_871 = arith.constant 11 : index
    %c1_872 = arith.constant 1 : index
    %c0_873 = arith.constant 0 : index
    %610 = vector.load %arg10[%c11_871, %c1_872, %c0_873] : memref<20x5x128xbf16, #tpu.memory_space<vmem>>, vector<1x4x128xbf16>
    %611 = vector.shape_cast %610 : vector<1x4x128xbf16> to vector<4x128xbf16>
    %c4_874 = arith.constant 4 : index
    %c0_875 = arith.constant 0 : index
    %612 = vector.load %arg8[%c4_874, %c0_875] : memref<64x128xbf16, #tpu.memory_space<vmem>>, vector<4x128xbf16>
    tpu.vector_store %arg8[%c4_874, %c0_875], %611 {strides = array<i32>} : memref<64x128xbf16, #tpu.memory_space<vmem>>, vector<4x128xbf16>,
    %c12_876 = arith.constant 12 : index
    %c1_877 = arith.constant 1 : index
    %c0_878 = arith.constant 0 : index
    %613 = vector.load %arg10[%c12_876, %c1_877, %c0_878] : memref<20x5x128xbf16, #tpu.memory_space<vmem>>, vector<1x4x128xbf16>
    %614 = vector.shape_cast %613 : vector<1x4x128xbf16> to vector<4x128xbf16>
    %c8_879 = arith.constant 8 : index
    %c0_880 = arith.constant 0 : index
    %615 = vector.load %arg8[%c8_879, %c0_880] : memref<64x128xbf16, #tpu.memory_space<vmem>>, vector<4x128xbf16>
    tpu.vector_store %arg8[%c8_879, %c0_880], %614 {strides = array<i32>} : memref<64x128xbf16, #tpu.memory_space<vmem>>, vector<4x128xbf16>,
    %c13_881 = arith.constant 13 : index
    %c1_882 = arith.constant 1 : index
    %c0_883 = arith.constant 0 : index
    %616 = vector.load %arg10[%c13_881, %c1_882, %c0_883] : memref<20x5x128xbf16, #tpu.memory_space<vmem>>, vector<1x4x128xbf16>
    %617 = vector.shape_cast %616 : vector<1x4x128xbf16> to vector<4x128xbf16>
    %c12_884 = arith.constant 12 : index
    %c0_885 = arith.constant 0 : index
    %618 = vector.load %arg8[%c12_884, %c0_885] : memref<64x128xbf16, #tpu.memory_space<vmem>>, vector<4x128xbf16>
    tpu.vector_store %arg8[%c12_884, %c0_885], %617 {strides = array<i32>} : memref<64x128xbf16, #tpu.memory_space<vmem>>, vector<4x128xbf16>,
    %c1792 = arith.constant 1792 : index
    %c0_886 = arith.constant 0 : index
    %619 = vector.load %arg2[%c1792, %c0_886] : memref<4608x128xbf16, #tpu.memory_space<vmem>>, vector<128x128xbf16>
    %c0_887 = arith.constant 0 : index
    %c0_888 = arith.constant 0 : index
    %620 = vector.load %arg8[%c0_887, %c0_888] : memref<64x128xbf16, #tpu.memory_space<vmem>>, vector<16x128xbf16>
    %cst_889 = arith.constant dense<0.000000e+00> : vector<16x128xf32>
    %621 = tpu.matmul %620, %619, %cst_889 {dimension_numbers = #tpu.dot_dimension_numbers<[1], [0], [0], [1], [0, 0, 1, 1], [], []>} : vector<16x128xbf16>, vector<128x128xbf16>, vector<16x128xf32> -> vector<16x128xf32>
    %622 = arith.addf %606, %621 : vector<16x128xf32>
    %c1_890 = arith.constant 1 : index
    %c0_891 = arith.constant 0 : index
    %c0_892 = arith.constant 0 : index
    %623 = vector.load %arg10[%c1_890, %c0_891, %c0_892] : memref<20x5x128xbf16, #tpu.memory_space<vmem>>, vector<1x4x128xbf16>
    %624 = vector.shape_cast %623 : vector<1x4x128xbf16> to vector<4x128xbf16>
    %c0_893 = arith.constant 0 : index
    %c0_894 = arith.constant 0 : index
    %625 = vector.load %arg8[%c0_893, %c0_894] : memref<64x128xbf16, #tpu.memory_space<vmem>>, vector<4x128xbf16>
    tpu.vector_store %arg8[%c0_893, %c0_894], %624 {strides = array<i32>} : memref<64x128xbf16, #tpu.memory_space<vmem>>, vector<4x128xbf16>,
    %c2_895 = arith.constant 2 : index
    %c0_896 = arith.constant 0 : index
    %c0_897 = arith.constant 0 : index
    %626 = vector.load %arg10[%c2_895, %c0_896, %c0_897] : memref<20x5x128xbf16, #tpu.memory_space<vmem>>, vector<1x4x128xbf16>
    %627 = vector.shape_cast %626 : vector<1x4x128xbf16> to vector<4x128xbf16>
    %c4_898 = arith.constant 4 : index
    %c0_899 = arith.constant 0 : index
    %628 = vector.load %arg8[%c4_898, %c0_899] : memref<64x128xbf16, #tpu.memory_space<vmem>>, vector<4x128xbf16>
    tpu.vector_store %arg8[%c4_898, %c0_899], %627 {strides = array<i32>} : memref<64x128xbf16, #tpu.memory_space<vmem>>, vector<4x128xbf16>,
    %c3_900 = arith.constant 3 : index
    %c0_901 = arith.constant 0 : index
    %c0_902 = arith.constant 0 : index
    %629 = vector.load %arg10[%c3_900, %c0_901, %c0_902] : memref<20x5x128xbf16, #tpu.memory_space<vmem>>, vector<1x4x128xbf16>
    %630 = vector.shape_cast %629 : vector<1x4x128xbf16> to vector<4x128xbf16>
    %c8_903 = arith.constant 8 : index
    %c0_904 = arith.constant 0 : index
    %631 = vector.load %arg8[%c8_903, %c0_904] : memref<64x128xbf16, #tpu.memory_space<vmem>>, vector<4x128xbf16>
    tpu.vector_store %arg8[%c8_903, %c0_904], %630 {strides = array<i32>} : memref<64x128xbf16, #tpu.memory_space<vmem>>, vector<4x128xbf16>,
    %c4_905 = arith.constant 4 : index
    %c0_906 = arith.constant 0 : index
    %c0_907 = arith.constant 0 : index
    %632 = vector.load %arg10[%c4_905, %c0_906, %c0_907] : memref<20x5x128xbf16, #tpu.memory_space<vmem>>, vector<1x4x128xbf16>
    %633 = vector.shape_cast %632 : vector<1x4x128xbf16> to vector<4x128xbf16>
    %c12_908 = arith.constant 12 : index
    %c0_909 = arith.constant 0 : index
    %634 = vector.load %arg8[%c12_908, %c0_909] : memref<64x128xbf16, #tpu.memory_space<vmem>>, vector<4x128xbf16>
    tpu.vector_store %arg8[%c12_908, %c0_909], %633 {strides = array<i32>} : memref<64x128xbf16, #tpu.memory_space<vmem>>, vector<4x128xbf16>,
    %c1920 = arith.constant 1920 : index
    %c0_910 = arith.constant 0 : index
    %635 = vector.load %arg2[%c1920, %c0_910] : memref<4608x128xbf16, #tpu.memory_space<vmem>>, vector<128x128xbf16>
    %c0_911 = arith.constant 0 : index
    %c0_912 = arith.constant 0 : index
    %636 = vector.load %arg8[%c0_911, %c0_912] : memref<64x128xbf16, #tpu.memory_space<vmem>>, vector<16x128xbf16>
    %cst_913 = arith.constant dense<0.000000e+00> : vector<16x128xf32>
    %637 = tpu.matmul %636, %635, %cst_913 {dimension_numbers = #tpu.dot_dimension_numbers<[1], [0], [0], [1], [0, 0, 1, 1], [], []>} : vector<16x128xbf16>, vector<128x128xbf16>, vector<16x128xf32> -> vector<16x128xf32>
    %638 = arith.addf %622, %637 : vector<16x128xf32>
    %c6_914 = arith.constant 6 : index
    %c0_915 = arith.constant 0 : index
    %c0_916 = arith.constant 0 : index
    %639 = vector.load %arg10[%c6_914, %c0_915, %c0_916] : memref<20x5x128xbf16, #tpu.memory_space<vmem>>, vector<1x4x128xbf16>
    %640 = vector.shape_cast %639 : vector<1x4x128xbf16> to vector<4x128xbf16>
    %c0_917 = arith.constant 0 : index
    %c0_918 = arith.constant 0 : index
    %641 = vector.load %arg8[%c0_917, %c0_918] : memref<64x128xbf16, #tpu.memory_space<vmem>>, vector<4x128xbf16>
    tpu.vector_store %arg8[%c0_917, %c0_918], %640 {strides = array<i32>} : memref<64x128xbf16, #tpu.memory_space<vmem>>, vector<4x128xbf16>,
    %c7_919 = arith.constant 7 : index
    %c0_920 = arith.constant 0 : index
    %c0_921 = arith.constant 0 : index
    %642 = vector.load %arg10[%c7_919, %c0_920, %c0_921] : memref<20x5x128xbf16, #tpu.memory_space<vmem>>, vector<1x4x128xbf16>
    %643 = vector.shape_cast %642 : vector<1x4x128xbf16> to vector<4x128xbf16>
    %c4_922 = arith.constant 4 : index
    %c0_923 = arith.constant 0 : index
    %644 = vector.load %arg8[%c4_922, %c0_923] : memref<64x128xbf16, #tpu.memory_space<vmem>>, vector<4x128xbf16>
    tpu.vector_store %arg8[%c4_922, %c0_923], %643 {strides = array<i32>} : memref<64x128xbf16, #tpu.memory_space<vmem>>, vector<4x128xbf16>,
    %c8_924 = arith.constant 8 : index
    %c0_925 = arith.constant 0 : index
    %c0_926 = arith.constant 0 : index
    %645 = vector.load %arg10[%c8_924, %c0_925, %c0_926] : memref<20x5x128xbf16, #tpu.memory_space<vmem>>, vector<1x4x128xbf16>
    %646 = vector.shape_cast %645 : vector<1x4x128xbf16> to vector<4x128xbf16>
    %c8_927 = arith.constant 8 : index
    %c0_928 = arith.constant 0 : index
    %647 = vector.load %arg8[%c8_927, %c0_928] : memref<64x128xbf16, #tpu.memory_space<vmem>>, vector<4x128xbf16>
    tpu.vector_store %arg8[%c8_927, %c0_928], %646 {strides = array<i32>} : memref<64x128xbf16, #tpu.memory_space<vmem>>, vector<4x128xbf16>,
    %c9_929 = arith.constant 9 : index
    %c0_930 = arith.constant 0 : index
    %c0_931 = arith.constant 0 : index
    %648 = vector.load %arg10[%c9_929, %c0_930, %c0_931] : memref<20x5x128xbf16, #tpu.memory_space<vmem>>, vector<1x4x128xbf16>
    %649 = vector.shape_cast %648 : vector<1x4x128xbf16> to vector<4x128xbf16>
    %c12_932 = arith.constant 12 : index
    %c0_933 = arith.constant 0 : index
    %650 = vector.load %arg8[%c12_932, %c0_933] : memref<64x128xbf16, #tpu.memory_space<vmem>>, vector<4x128xbf16>
    tpu.vector_store %arg8[%c12_932, %c0_933], %649 {strides = array<i32>} : memref<64x128xbf16, #tpu.memory_space<vmem>>, vector<4x128xbf16>,
    %c2048 = arith.constant 2048 : index
    %c0_934 = arith.constant 0 : index
    %651 = vector.load %arg2[%c2048, %c0_934] : memref<4608x128xbf16, #tpu.memory_space<vmem>>, vector<128x128xbf16>
    %c0_935 = arith.constant 0 : index
    %c0_936 = arith.constant 0 : index
    %652 = vector.load %arg8[%c0_935, %c0_936] : memref<64x128xbf16, #tpu.memory_space<vmem>>, vector<16x128xbf16>
    %cst_937 = arith.constant dense<0.000000e+00> : vector<16x128xf32>
    %653 = tpu.matmul %652, %651, %cst_937 {dimension_numbers = #tpu.dot_dimension_numbers<[1], [0], [0], [1], [0, 0, 1, 1], [], []>} : vector<16x128xbf16>, vector<128x128xbf16>, vector<16x128xf32> -> vector<16x128xf32>
    %654 = arith.addf %638, %653 : vector<16x128xf32>
    %c1_938 = arith.constant 1 : index
    %c1_939 = arith.constant 1 : index
    %c0_940 = arith.constant 0 : index
    %655 = vector.load %arg10[%c1_938, %c1_939, %c0_940] : memref<20x5x128xbf16, #tpu.memory_space<vmem>>, vector<1x4x128xbf16>
    %656 = vector.shape_cast %655 : vector<1x4x128xbf16> to vector<4x128xbf16>
    %c0_941 = arith.constant 0 : index
    %c0_942 = arith.constant 0 : index
    %657 = vector.load %arg8[%c0_941, %c0_942] : memref<64x128xbf16, #tpu.memory_space<vmem>>, vector<4x128xbf16>
    tpu.vector_store %arg8[%c0_941, %c0_942], %656 {strides = array<i32>} : memref<64x128xbf16, #tpu.memory_space<vmem>>, vector<4x128xbf16>,
    %c2_943 = arith.constant 2 : index
    %c1_944 = arith.constant 1 : index
    %c0_945 = arith.constant 0 : index
    %658 = vector.load %arg10[%c2_943, %c1_944, %c0_945] : memref<20x5x128xbf16, #tpu.memory_space<vmem>>, vector<1x4x128xbf16>
    %659 = vector.shape_cast %658 : vector<1x4x128xbf16> to vector<4x128xbf16>
    %c4_946 = arith.constant 4 : index
    %c0_947 = arith.constant 0 : index
    %660 = vector.load %arg8[%c4_946, %c0_947] : memref<64x128xbf16, #tpu.memory_space<vmem>>, vector<4x128xbf16>
    tpu.vector_store %arg8[%c4_946, %c0_947], %659 {strides = array<i32>} : memref<64x128xbf16, #tpu.memory_space<vmem>>, vector<4x128xbf16>,
    %c3_948 = arith.constant 3 : index
    %c1_949 = arith.constant 1 : index
    %c0_950 = arith.constant 0 : index
    %661 = vector.load %arg10[%c3_948, %c1_949, %c0_950] : memref<20x5x128xbf16, #tpu.memory_space<vmem>>, vector<1x4x128xbf16>
    %662 = vector.shape_cast %661 : vector<1x4x128xbf16> to vector<4x128xbf16>
    %c8_951 = arith.constant 8 : index
    %c0_952 = arith.constant 0 : index
    %663 = vector.load %arg8[%c8_951, %c0_952] : memref<64x128xbf16, #tpu.memory_space<vmem>>, vector<4x128xbf16>
    tpu.vector_store %arg8[%c8_951, %c0_952], %662 {strides = array<i32>} : memref<64x128xbf16, #tpu.memory_space<vmem>>, vector<4x128xbf16>,
    %c4_953 = arith.constant 4 : index
    %c1_954 = arith.constant 1 : index
    %c0_955 = arith.constant 0 : index
    %664 = vector.load %arg10[%c4_953, %c1_954, %c0_955] : memref<20x5x128xbf16, #tpu.memory_space<vmem>>, vector<1x4x128xbf16>
    %665 = vector.shape_cast %664 : vector<1x4x128xbf16> to vector<4x128xbf16>
    %c12_956 = arith.constant 12 : index
    %c0_957 = arith.constant 0 : index
    %666 = vector.load %arg8[%c12_956, %c0_957] : memref<64x128xbf16, #tpu.memory_space<vmem>>, vector<4x128xbf16>
    tpu.vector_store %arg8[%c12_956, %c0_957], %665 {strides = array<i32>} : memref<64x128xbf16, #tpu.memory_space<vmem>>, vector<4x128xbf16>,
    %c2176 = arith.constant 2176 : index
    %c0_958 = arith.constant 0 : index
    %667 = vector.load %arg2[%c2176, %c0_958] : memref<4608x128xbf16, #tpu.memory_space<vmem>>, vector<128x128xbf16>
    %c0_959 = arith.constant 0 : index
    %c0_960 = arith.constant 0 : index
    %668 = vector.load %arg8[%c0_959, %c0_960] : memref<64x128xbf16, #tpu.memory_space<vmem>>, vector<16x128xbf16>
    %cst_961 = arith.constant dense<0.000000e+00> : vector<16x128xf32>
    %669 = tpu.matmul %668, %667, %cst_961 {dimension_numbers = #tpu.dot_dimension_numbers<[1], [0], [0], [1], [0, 0, 1, 1], [], []>} : vector<16x128xbf16>, vector<128x128xbf16>, vector<16x128xf32> -> vector<16x128xf32>
    %670 = arith.addf %654, %669 : vector<16x128xf32>
    %c1_962 = arith.constant 1 : index
    %c0_963 = arith.constant 0 : index
    %671 = vector.load %arg3[%c1_962, %c0_963] : memref<4x128xf32, #tpu.memory_space<vmem>>, vector<1x128xf32>
    %672 = vector.broadcast %671 : vector<1x128xf32> to vector<16x128xf32>
    %673 = arith.addf %670, %672 : vector<16x128xf32>
    %cst_964 = arith.constant 0.000000e+00 : f32
    %674 = vector.broadcast %cst_964 : f32 to vector<16x128xf32>
    %675 = arith.maximumf %673, %674 : vector<16x128xf32>
    %676 = vector.extract_strided_slice %675 {offsets = [0, 0], sizes = [16, 16], strides = [1, 1]} : vector<16x128xf32> to vector<16x16xf32>
    %c0_965 = arith.constant 0 : index
    %c0_966 = arith.constant 0 : index
    %c0_967 = arith.constant 0 : index
    %677 = vector.load %arg5[%c0_965, %c0_966, %c0_967] : memref<1x16x16xf32, #tpu.memory_space<vmem>>, vector<1x16x16xf32>
    %678 = vector.shape_cast %677 : vector<1x16x16xf32> to vector<16x16xf32>
    %679 = vector.shape_cast %676 : vector<16x16xf32> to vector<1x16x16xf32>
    tpu.vector_store %arg5[%c0_965, %c0_966, %c0_967], %679 {strides = array<i32>} : memref<1x16x16xf32, #tpu.memory_space<vmem>>, vector<1x16x16xf32>,
    %680 = arith.truncf %675 : vector<16x128xf32> to vector<16x128xbf16>
    %c0_968 = arith.constant 0 : index
    %c0_969 = arith.constant 0 : index
    %681 = vector.load %arg9[%c0_968, %c0_969] : memref<64x128xbf16, #tpu.memory_space<vmem>>, vector<16x128xbf16>
    tpu.vector_store %arg9[%c0_968, %c0_969], %680 {strides = array<i32>} : memref<64x128xbf16, #tpu.memory_space<vmem>>, vector<16x128xbf16>,
    %c0_970 = arith.constant 0 : index
    %c0_971 = arith.constant 0 : index
    %682 = vector.load %arg9[%c0_970, %c0_971] : memref<64x128xbf16, #tpu.memory_space<vmem>>, vector<1x128xbf16>
    %c9_972 = arith.constant 9 : index
    %c0_973 = arith.constant 0 : index
    %c0_974 = arith.constant 0 : index
    %683 = vector.load %arg11[%c9_972, %c0_973, %c0_974] : memref<12x3x128xbf16, #tpu.memory_space<vmem>>, vector<1x1x128xbf16>
    %684 = vector.shape_cast %683 : vector<1x1x128xbf16> to vector<1x128xbf16>
    %685 = vector.shape_cast %682 : vector<1x128xbf16> to vector<1x1x128xbf16>
    tpu.vector_store %arg11[%c9_972, %c0_973, %c0_974], %685 {strides = array<i32>} : memref<12x3x128xbf16, #tpu.memory_space<vmem>>, vector<1x1x128xbf16>,
    %c1_975 = arith.constant 1 : index
    %c0_976 = arith.constant 0 : index
    %686 = vector.load %arg9[%c1_975, %c0_976] : memref<64x128xbf16, #tpu.memory_space<vmem>>, vector<1x128xbf16>
    %c6_977 = arith.constant 6 : index
    %c1_978 = arith.constant 1 : index
    %c0_979 = arith.constant 0 : index
    %687 = vector.load %arg11[%c6_977, %c1_978, %c0_979] : memref<12x3x128xbf16, #tpu.memory_space<vmem>>, vector<1x1x128xbf16>
    %688 = vector.shape_cast %687 : vector<1x1x128xbf16> to vector<1x128xbf16>
    %689 = vector.shape_cast %686 : vector<1x128xbf16> to vector<1x1x128xbf16>
    tpu.vector_store %arg11[%c6_977, %c1_978, %c0_979], %689 {strides = array<i32>} : memref<12x3x128xbf16, #tpu.memory_space<vmem>>, vector<1x1x128xbf16>,
    %c2_980 = arith.constant 2 : index
    %c0_981 = arith.constant 0 : index
    %690 = vector.load %arg9[%c2_980, %c0_981] : memref<64x128xbf16, #tpu.memory_space<vmem>>, vector<1x128xbf16>
    %c9_982 = arith.constant 9 : index
    %c1_983 = arith.constant 1 : index
    %c0_984 = arith.constant 0 : index
    %691 = vector.load %arg11[%c9_982, %c1_983, %c0_984] : memref<12x3x128xbf16, #tpu.memory_space<vmem>>, vector<1x1x128xbf16>
    %692 = vector.shape_cast %691 : vector<1x1x128xbf16> to vector<1x128xbf16>
    %693 = vector.shape_cast %690 : vector<1x128xbf16> to vector<1x1x128xbf16>
    tpu.vector_store %arg11[%c9_982, %c1_983, %c0_984], %693 {strides = array<i32>} : memref<12x3x128xbf16, #tpu.memory_space<vmem>>, vector<1x1x128xbf16>,
    %c3_985 = arith.constant 3 : index
    %c0_986 = arith.constant 0 : index
    %694 = vector.load %arg9[%c3_985, %c0_986] : memref<64x128xbf16, #tpu.memory_space<vmem>>, vector<1x128xbf16>
    %c6_987 = arith.constant 6 : index
    %c2_988 = arith.constant 2 : index
    %c0_989 = arith.constant 0 : index
    %695 = vector.load %arg11[%c6_987, %c2_988, %c0_989] : memref<12x3x128xbf16, #tpu.memory_space<vmem>>, vector<1x1x128xbf16>
    %696 = vector.shape_cast %695 : vector<1x1x128xbf16> to vector<1x128xbf16>
    %697 = vector.shape_cast %694 : vector<1x128xbf16> to vector<1x1x128xbf16>
    tpu.vector_store %arg11[%c6_987, %c2_988, %c0_989], %697 {strides = array<i32>} : memref<12x3x128xbf16, #tpu.memory_space<vmem>>, vector<1x1x128xbf16>,
    %c4_990 = arith.constant 4 : index
    %c0_991 = arith.constant 0 : index
    %698 = vector.load %arg9[%c4_990, %c0_991] : memref<64x128xbf16, #tpu.memory_space<vmem>>, vector<1x128xbf16>
    %c4_992 = arith.constant 4 : index
    %c0_993 = arith.constant 0 : index
    %c0_994 = arith.constant 0 : index
    %699 = vector.load %arg11[%c4_992, %c0_993, %c0_994] : memref<12x3x128xbf16, #tpu.memory_space<vmem>>, vector<1x1x128xbf16>
    %700 = vector.shape_cast %699 : vector<1x1x128xbf16> to vector<1x128xbf16>
    %701 = vector.shape_cast %698 : vector<1x128xbf16> to vector<1x1x128xbf16>
    tpu.vector_store %arg11[%c4_992, %c0_993, %c0_994], %701 {strides = array<i32>} : memref<12x3x128xbf16, #tpu.memory_space<vmem>>, vector<1x1x128xbf16>,
    %c5_995 = arith.constant 5 : index
    %c0_996 = arith.constant 0 : index
    %702 = vector.load %arg9[%c5_995, %c0_996] : memref<64x128xbf16, #tpu.memory_space<vmem>>, vector<1x128xbf16>
    %c1_997 = arith.constant 1 : index
    %c1_998 = arith.constant 1 : index
    %c0_999 = arith.constant 0 : index
    %703 = vector.load %arg11[%c1_997, %c1_998, %c0_999] : memref<12x3x128xbf16, #tpu.memory_space<vmem>>, vector<1x1x128xbf16>
    %704 = vector.shape_cast %703 : vector<1x1x128xbf16> to vector<1x128xbf16>
    %705 = vector.shape_cast %702 : vector<1x128xbf16> to vector<1x1x128xbf16>
    tpu.vector_store %arg11[%c1_997, %c1_998, %c0_999], %705 {strides = array<i32>} : memref<12x3x128xbf16, #tpu.memory_space<vmem>>, vector<1x1x128xbf16>,
    %c6_1000 = arith.constant 6 : index
    %c0_1001 = arith.constant 0 : index
    %706 = vector.load %arg9[%c6_1000, %c0_1001] : memref<64x128xbf16, #tpu.memory_space<vmem>>, vector<1x128xbf16>
    %c4_1002 = arith.constant 4 : index
    %c1_1003 = arith.constant 1 : index
    %c0_1004 = arith.constant 0 : index
    %707 = vector.load %arg11[%c4_1002, %c1_1003, %c0_1004] : memref<12x3x128xbf16, #tpu.memory_space<vmem>>, vector<1x1x128xbf16>
    %708 = vector.shape_cast %707 : vector<1x1x128xbf16> to vector<1x128xbf16>
    %709 = vector.shape_cast %706 : vector<1x128xbf16> to vector<1x1x128xbf16>
    tpu.vector_store %arg11[%c4_1002, %c1_1003, %c0_1004], %709 {strides = array<i32>} : memref<12x3x128xbf16, #tpu.memory_space<vmem>>, vector<1x1x128xbf16>,
    %c7_1005 = arith.constant 7 : index
    %c0_1006 = arith.constant 0 : index
    %710 = vector.load %arg9[%c7_1005, %c0_1006] : memref<64x128xbf16, #tpu.memory_space<vmem>>, vector<1x128xbf16>
    %c1_1007 = arith.constant 1 : index
    %c2_1008 = arith.constant 2 : index
    %c0_1009 = arith.constant 0 : index
    %711 = vector.load %arg11[%c1_1007, %c2_1008, %c0_1009] : memref<12x3x128xbf16, #tpu.memory_space<vmem>>, vector<1x1x128xbf16>
    %712 = vector.shape_cast %711 : vector<1x1x128xbf16> to vector<1x128xbf16>
    %713 = vector.shape_cast %710 : vector<1x128xbf16> to vector<1x1x128xbf16>
    tpu.vector_store %arg11[%c1_1007, %c2_1008, %c0_1009], %713 {strides = array<i32>} : memref<12x3x128xbf16, #tpu.memory_space<vmem>>, vector<1x1x128xbf16>,
    %c8_1010 = arith.constant 8 : index
    %c0_1011 = arith.constant 0 : index
    %714 = vector.load %arg9[%c8_1010, %c0_1011] : memref<64x128xbf16, #tpu.memory_space<vmem>>, vector<1x128xbf16>
    %c10_1012 = arith.constant 10 : index
    %c0_1013 = arith.constant 0 : index
    %c0_1014 = arith.constant 0 : index
    %715 = vector.load %arg11[%c10_1012, %c0_1013, %c0_1014] : memref<12x3x128xbf16, #tpu.memory_space<vmem>>, vector<1x1x128xbf16>
    %716 = vector.shape_cast %715 : vector<1x1x128xbf16> to vector<1x128xbf16>
    %717 = vector.shape_cast %714 : vector<1x128xbf16> to vector<1x1x128xbf16>
    tpu.vector_store %arg11[%c10_1012, %c0_1013, %c0_1014], %717 {strides = array<i32>} : memref<12x3x128xbf16, #tpu.memory_space<vmem>>, vector<1x1x128xbf16>,
    %c9_1015 = arith.constant 9 : index
    %c0_1016 = arith.constant 0 : index
    %718 = vector.load %arg9[%c9_1015, %c0_1016] : memref<64x128xbf16, #tpu.memory_space<vmem>>, vector<1x128xbf16>
    %c7_1017 = arith.constant 7 : index
    %c1_1018 = arith.constant 1 : index
    %c0_1019 = arith.constant 0 : index
    %719 = vector.load %arg11[%c7_1017, %c1_1018, %c0_1019] : memref<12x3x128xbf16, #tpu.memory_space<vmem>>, vector<1x1x128xbf16>
    %720 = vector.shape_cast %719 : vector<1x1x128xbf16> to vector<1x128xbf16>
    %721 = vector.shape_cast %718 : vector<1x128xbf16> to vector<1x1x128xbf16>
    tpu.vector_store %arg11[%c7_1017, %c1_1018, %c0_1019], %721 {strides = array<i32>} : memref<12x3x128xbf16, #tpu.memory_space<vmem>>, vector<1x1x128xbf16>,
    %c10_1020 = arith.constant 10 : index
    %c0_1021 = arith.constant 0 : index
    %722 = vector.load %arg9[%c10_1020, %c0_1021] : memref<64x128xbf16, #tpu.memory_space<vmem>>, vector<1x128xbf16>
    %c10_1022 = arith.constant 10 : index
    %c1_1023 = arith.constant 1 : index
    %c0_1024 = arith.constant 0 : index
    %723 = vector.load %arg11[%c10_1022, %c1_1023, %c0_1024] : memref<12x3x128xbf16, #tpu.memory_space<vmem>>, vector<1x1x128xbf16>
    %724 = vector.shape_cast %723 : vector<1x1x128xbf16> to vector<1x128xbf16>
    %725 = vector.shape_cast %722 : vector<1x128xbf16> to vector<1x1x128xbf16>
    tpu.vector_store %arg11[%c10_1022, %c1_1023, %c0_1024], %725 {strides = array<i32>} : memref<12x3x128xbf16, #tpu.memory_space<vmem>>, vector<1x1x128xbf16>,
    %c11_1025 = arith.constant 11 : index
    %c0_1026 = arith.constant 0 : index
    %726 = vector.load %arg9[%c11_1025, %c0_1026] : memref<64x128xbf16, #tpu.memory_space<vmem>>, vector<1x128xbf16>
    %c7_1027 = arith.constant 7 : index
    %c2_1028 = arith.constant 2 : index
    %c0_1029 = arith.constant 0 : index
    %727 = vector.load %arg11[%c7_1027, %c2_1028, %c0_1029] : memref<12x3x128xbf16, #tpu.memory_space<vmem>>, vector<1x1x128xbf16>
    %728 = vector.shape_cast %727 : vector<1x1x128xbf16> to vector<1x128xbf16>
    %729 = vector.shape_cast %726 : vector<1x128xbf16> to vector<1x1x128xbf16>
    tpu.vector_store %arg11[%c7_1027, %c2_1028, %c0_1029], %729 {strides = array<i32>} : memref<12x3x128xbf16, #tpu.memory_space<vmem>>, vector<1x1x128xbf16>,
    %c12_1030 = arith.constant 12 : index
    %c0_1031 = arith.constant 0 : index
    %730 = vector.load %arg9[%c12_1030, %c0_1031] : memref<64x128xbf16, #tpu.memory_space<vmem>>, vector<1x128xbf16>
    %c5_1032 = arith.constant 5 : index
    %c0_1033 = arith.constant 0 : index
    %c0_1034 = arith.constant 0 : index
    %731 = vector.load %arg11[%c5_1032, %c0_1033, %c0_1034] : memref<12x3x128xbf16, #tpu.memory_space<vmem>>, vector<1x1x128xbf16>
    %732 = vector.shape_cast %731 : vector<1x1x128xbf16> to vector<1x128xbf16>
    %733 = vector.shape_cast %730 : vector<1x128xbf16> to vector<1x1x128xbf16>
    tpu.vector_store %arg11[%c5_1032, %c0_1033, %c0_1034], %733 {strides = array<i32>} : memref<12x3x128xbf16, #tpu.memory_space<vmem>>, vector<1x1x128xbf16>,
    %c13_1035 = arith.constant 13 : index
    %c0_1036 = arith.constant 0 : index
    %734 = vector.load %arg9[%c13_1035, %c0_1036] : memref<64x128xbf16, #tpu.memory_space<vmem>>, vector<1x128xbf16>
    %c2_1037 = arith.constant 2 : index
    %c1_1038 = arith.constant 1 : index
    %c0_1039 = arith.constant 0 : index
    %735 = vector.load %arg11[%c2_1037, %c1_1038, %c0_1039] : memref<12x3x128xbf16, #tpu.memory_space<vmem>>, vector<1x1x128xbf16>
    %736 = vector.shape_cast %735 : vector<1x1x128xbf16> to vector<1x128xbf16>
    %737 = vector.shape_cast %734 : vector<1x128xbf16> to vector<1x1x128xbf16>
    tpu.vector_store %arg11[%c2_1037, %c1_1038, %c0_1039], %737 {strides = array<i32>} : memref<12x3x128xbf16, #tpu.memory_space<vmem>>, vector<1x1x128xbf16>,
    %c14_1040 = arith.constant 14 : index
    %c0_1041 = arith.constant 0 : index
    %738 = vector.load %arg9[%c14_1040, %c0_1041] : memref<64x128xbf16, #tpu.memory_space<vmem>>, vector<1x128xbf16>
    %c5_1042 = arith.constant 5 : index
    %c1_1043 = arith.constant 1 : index
    %c0_1044 = arith.constant 0 : index
    %739 = vector.load %arg11[%c5_1042, %c1_1043, %c0_1044] : memref<12x3x128xbf16, #tpu.memory_space<vmem>>, vector<1x1x128xbf16>
    %740 = vector.shape_cast %739 : vector<1x1x128xbf16> to vector<1x128xbf16>
    %741 = vector.shape_cast %738 : vector<1x128xbf16> to vector<1x1x128xbf16>
    tpu.vector_store %arg11[%c5_1042, %c1_1043, %c0_1044], %741 {strides = array<i32>} : memref<12x3x128xbf16, #tpu.memory_space<vmem>>, vector<1x1x128xbf16>,
    %c15_1045 = arith.constant 15 : index
    %c0_1046 = arith.constant 0 : index
    %742 = vector.load %arg9[%c15_1045, %c0_1046] : memref<64x128xbf16, #tpu.memory_space<vmem>>, vector<1x128xbf16>
    %c2_1047 = arith.constant 2 : index
    %c2_1048 = arith.constant 2 : index
    %c0_1049 = arith.constant 0 : index
    %743 = vector.load %arg11[%c2_1047, %c2_1048, %c0_1049] : memref<12x3x128xbf16, #tpu.memory_space<vmem>>, vector<1x1x128xbf16>
    %744 = vector.shape_cast %743 : vector<1x1x128xbf16> to vector<1x128xbf16>
    %745 = vector.shape_cast %742 : vector<1x128xbf16> to vector<1x1x128xbf16>
    tpu.vector_store %arg11[%c2_1047, %c2_1048, %c0_1049], %745 {strides = array<i32>} : memref<12x3x128xbf16, #tpu.memory_space<vmem>>, vector<1x1x128xbf16>,
    %cst_1050 = arith.constant 0.000000e+00 : f32
    %746 = vector.broadcast %cst_1050 : f32 to vector<4x128xf32>
    %c0_1051 = arith.constant 0 : index
    %c0_1052 = arith.constant 0 : index
    %c0_1053 = arith.constant 0 : index
    %747 = vector.load %arg11[%c0_1051, %c0_1052, %c0_1053] : memref<12x3x128xbf16, #tpu.memory_space<vmem>>, vector<1x2x128xbf16>
    %748 = vector.shape_cast %747 : vector<1x2x128xbf16> to vector<2x128xbf16>
    %c0_1054 = arith.constant 0 : index
    %c0_1055 = arith.constant 0 : index
    %749 = vector.load %arg8[%c0_1054, %c0_1055] : memref<64x128xbf16, #tpu.memory_space<vmem>>, vector<2x128xbf16>
    tpu.vector_store %arg8[%c0_1054, %c0_1055], %748 {strides = array<i32>} : memref<64x128xbf16, #tpu.memory_space<vmem>>, vector<2x128xbf16>,
    %c1_1056 = arith.constant 1 : index
    %c0_1057 = arith.constant 0 : index
    %c0_1058 = arith.constant 0 : index
    %750 = vector.load %arg11[%c1_1056, %c0_1057, %c0_1058] : memref<12x3x128xbf16, #tpu.memory_space<vmem>>, vector<1x2x128xbf16>
    %751 = vector.shape_cast %750 : vector<1x2x128xbf16> to vector<2x128xbf16>
    %c2_1059 = arith.constant 2 : index
    %c0_1060 = arith.constant 0 : index
    %752 = vector.load %arg8[%c2_1059, %c0_1060] : memref<64x128xbf16, #tpu.memory_space<vmem>>, vector<2x128xbf16>
    tpu.vector_store %arg8[%c2_1059, %c0_1060], %751 {strides = array<i32>} : memref<64x128xbf16, #tpu.memory_space<vmem>>, vector<2x128xbf16>,
    %c2304 = arith.constant 2304 : index
    %c0_1061 = arith.constant 0 : index
    %753 = vector.load %arg2[%c2304, %c0_1061] : memref<4608x128xbf16, #tpu.memory_space<vmem>>, vector<128x128xbf16>
    %c0_1062 = arith.constant 0 : index
    %c0_1063 = arith.constant 0 : index
    %754 = vector.load %arg8[%c0_1062, %c0_1063] : memref<64x128xbf16, #tpu.memory_space<vmem>>, vector<4x128xbf16>
    %cst_1064 = arith.constant dense<0.000000e+00> : vector<4x128xf32>
    %755 = tpu.matmul %754, %753, %cst_1064 {dimension_numbers = #tpu.dot_dimension_numbers<[1], [0], [0], [1], [0, 0, 1, 1], [], []>} : vector<4x128xbf16>, vector<128x128xbf16>, vector<4x128xf32> -> vector<4x128xf32>
    %756 = arith.addf %746, %755 : vector<4x128xf32>
    %c3_1065 = arith.constant 3 : index
    %c0_1066 = arith.constant 0 : index
    %c0_1067 = arith.constant 0 : index
    %757 = vector.load %arg11[%c3_1065, %c0_1066, %c0_1067] : memref<12x3x128xbf16, #tpu.memory_space<vmem>>, vector<1x2x128xbf16>
    %758 = vector.shape_cast %757 : vector<1x2x128xbf16> to vector<2x128xbf16>
    %c0_1068 = arith.constant 0 : index
    %c0_1069 = arith.constant 0 : index
    %759 = vector.load %arg8[%c0_1068, %c0_1069] : memref<64x128xbf16, #tpu.memory_space<vmem>>, vector<2x128xbf16>
    tpu.vector_store %arg8[%c0_1068, %c0_1069], %758 {strides = array<i32>} : memref<64x128xbf16, #tpu.memory_space<vmem>>, vector<2x128xbf16>,
    %c4_1070 = arith.constant 4 : index
    %c0_1071 = arith.constant 0 : index
    %c0_1072 = arith.constant 0 : index
    %760 = vector.load %arg11[%c4_1070, %c0_1071, %c0_1072] : memref<12x3x128xbf16, #tpu.memory_space<vmem>>, vector<1x2x128xbf16>
    %761 = vector.shape_cast %760 : vector<1x2x128xbf16> to vector<2x128xbf16>
    %c2_1073 = arith.constant 2 : index
    %c0_1074 = arith.constant 0 : index
    %762 = vector.load %arg8[%c2_1073, %c0_1074] : memref<64x128xbf16, #tpu.memory_space<vmem>>, vector<2x128xbf16>
    tpu.vector_store %arg8[%c2_1073, %c0_1074], %761 {strides = array<i32>} : memref<64x128xbf16, #tpu.memory_space<vmem>>, vector<2x128xbf16>,
    %c2432 = arith.constant 2432 : index
    %c0_1075 = arith.constant 0 : index
    %763 = vector.load %arg2[%c2432, %c0_1075] : memref<4608x128xbf16, #tpu.memory_space<vmem>>, vector<128x128xbf16>
    %c0_1076 = arith.constant 0 : index
    %c0_1077 = arith.constant 0 : index
    %764 = vector.load %arg8[%c0_1076, %c0_1077] : memref<64x128xbf16, #tpu.memory_space<vmem>>, vector<4x128xbf16>
    %cst_1078 = arith.constant dense<0.000000e+00> : vector<4x128xf32>
    %765 = tpu.matmul %764, %763, %cst_1078 {dimension_numbers = #tpu.dot_dimension_numbers<[1], [0], [0], [1], [0, 0, 1, 1], [], []>} : vector<4x128xbf16>, vector<128x128xbf16>, vector<4x128xf32> -> vector<4x128xf32>
    %766 = arith.addf %756, %765 : vector<4x128xf32>
    %c0_1079 = arith.constant 0 : index
    %c1_1080 = arith.constant 1 : index
    %c0_1081 = arith.constant 0 : index
    %767 = vector.load %arg11[%c0_1079, %c1_1080, %c0_1081] : memref<12x3x128xbf16, #tpu.memory_space<vmem>>, vector<1x2x128xbf16>
    %768 = vector.shape_cast %767 : vector<1x2x128xbf16> to vector<2x128xbf16>
    %c0_1082 = arith.constant 0 : index
    %c0_1083 = arith.constant 0 : index
    %769 = vector.load %arg8[%c0_1082, %c0_1083] : memref<64x128xbf16, #tpu.memory_space<vmem>>, vector<2x128xbf16>
    tpu.vector_store %arg8[%c0_1082, %c0_1083], %768 {strides = array<i32>} : memref<64x128xbf16, #tpu.memory_space<vmem>>, vector<2x128xbf16>,
    %c1_1084 = arith.constant 1 : index
    %c1_1085 = arith.constant 1 : index
    %c0_1086 = arith.constant 0 : index
    %770 = vector.load %arg11[%c1_1084, %c1_1085, %c0_1086] : memref<12x3x128xbf16, #tpu.memory_space<vmem>>, vector<1x2x128xbf16>
    %771 = vector.shape_cast %770 : vector<1x2x128xbf16> to vector<2x128xbf16>
    %c2_1087 = arith.constant 2 : index
    %c0_1088 = arith.constant 0 : index
    %772 = vector.load %arg8[%c2_1087, %c0_1088] : memref<64x128xbf16, #tpu.memory_space<vmem>>, vector<2x128xbf16>
    tpu.vector_store %arg8[%c2_1087, %c0_1088], %771 {strides = array<i32>} : memref<64x128xbf16, #tpu.memory_space<vmem>>, vector<2x128xbf16>,
    %c2560 = arith.constant 2560 : index
    %c0_1089 = arith.constant 0 : index
    %773 = vector.load %arg2[%c2560, %c0_1089] : memref<4608x128xbf16, #tpu.memory_space<vmem>>, vector<128x128xbf16>
    %c0_1090 = arith.constant 0 : index
    %c0_1091 = arith.constant 0 : index
    %774 = vector.load %arg8[%c0_1090, %c0_1091] : memref<64x128xbf16, #tpu.memory_space<vmem>>, vector<4x128xbf16>
    %cst_1092 = arith.constant dense<0.000000e+00> : vector<4x128xf32>
    %775 = tpu.matmul %774, %773, %cst_1092 {dimension_numbers = #tpu.dot_dimension_numbers<[1], [0], [0], [1], [0, 0, 1, 1], [], []>} : vector<4x128xbf16>, vector<128x128xbf16>, vector<4x128xf32> -> vector<4x128xf32>
    %776 = arith.addf %766, %775 : vector<4x128xf32>
    %c6_1093 = arith.constant 6 : index
    %c0_1094 = arith.constant 0 : index
    %c0_1095 = arith.constant 0 : index
    %777 = vector.load %arg11[%c6_1093, %c0_1094, %c0_1095] : memref<12x3x128xbf16, #tpu.memory_space<vmem>>, vector<1x2x128xbf16>
    %778 = vector.shape_cast %777 : vector<1x2x128xbf16> to vector<2x128xbf16>
    %c0_1096 = arith.constant 0 : index
    %c0_1097 = arith.constant 0 : index
    %779 = vector.load %arg8[%c0_1096, %c0_1097] : memref<64x128xbf16, #tpu.memory_space<vmem>>, vector<2x128xbf16>
    tpu.vector_store %arg8[%c0_1096, %c0_1097], %778 {strides = array<i32>} : memref<64x128xbf16, #tpu.memory_space<vmem>>, vector<2x128xbf16>,
    %c7_1098 = arith.constant 7 : index
    %c0_1099 = arith.constant 0 : index
    %c0_1100 = arith.constant 0 : index
    %780 = vector.load %arg11[%c7_1098, %c0_1099, %c0_1100] : memref<12x3x128xbf16, #tpu.memory_space<vmem>>, vector<1x2x128xbf16>
    %781 = vector.shape_cast %780 : vector<1x2x128xbf16> to vector<2x128xbf16>
    %c2_1101 = arith.constant 2 : index
    %c0_1102 = arith.constant 0 : index
    %782 = vector.load %arg8[%c2_1101, %c0_1102] : memref<64x128xbf16, #tpu.memory_space<vmem>>, vector<2x128xbf16>
    tpu.vector_store %arg8[%c2_1101, %c0_1102], %781 {strides = array<i32>} : memref<64x128xbf16, #tpu.memory_space<vmem>>, vector<2x128xbf16>,
    %c2688 = arith.constant 2688 : index
    %c0_1103 = arith.constant 0 : index
    %783 = vector.load %arg2[%c2688, %c0_1103] : memref<4608x128xbf16, #tpu.memory_space<vmem>>, vector<128x128xbf16>
    %c0_1104 = arith.constant 0 : index
    %c0_1105 = arith.constant 0 : index
    %784 = vector.load %arg8[%c0_1104, %c0_1105] : memref<64x128xbf16, #tpu.memory_space<vmem>>, vector<4x128xbf16>
    %cst_1106 = arith.constant dense<0.000000e+00> : vector<4x128xf32>
    %785 = tpu.matmul %784, %783, %cst_1106 {dimension_numbers = #tpu.dot_dimension_numbers<[1], [0], [0], [1], [0, 0, 1, 1], [], []>} : vector<4x128xbf16>, vector<128x128xbf16>, vector<4x128xf32> -> vector<4x128xf32>
    %786 = arith.addf %776, %785 : vector<4x128xf32>
    %c9_1107 = arith.constant 9 : index
    %c0_1108 = arith.constant 0 : index
    %c0_1109 = arith.constant 0 : index
    %787 = vector.load %arg11[%c9_1107, %c0_1108, %c0_1109] : memref<12x3x128xbf16, #tpu.memory_space<vmem>>, vector<1x2x128xbf16>
    %788 = vector.shape_cast %787 : vector<1x2x128xbf16> to vector<2x128xbf16>
    %c0_1110 = arith.constant 0 : index
    %c0_1111 = arith.constant 0 : index
    %789 = vector.load %arg8[%c0_1110, %c0_1111] : memref<64x128xbf16, #tpu.memory_space<vmem>>, vector<2x128xbf16>
    tpu.vector_store %arg8[%c0_1110, %c0_1111], %788 {strides = array<i32>} : memref<64x128xbf16, #tpu.memory_space<vmem>>, vector<2x128xbf16>,
    %c10_1112 = arith.constant 10 : index
    %c0_1113 = arith.constant 0 : index
    %c0_1114 = arith.constant 0 : index
    %790 = vector.load %arg11[%c10_1112, %c0_1113, %c0_1114] : memref<12x3x128xbf16, #tpu.memory_space<vmem>>, vector<1x2x128xbf16>
    %791 = vector.shape_cast %790 : vector<1x2x128xbf16> to vector<2x128xbf16>
    %c2_1115 = arith.constant 2 : index
    %c0_1116 = arith.constant 0 : index
    %792 = vector.load %arg8[%c2_1115, %c0_1116] : memref<64x128xbf16, #tpu.memory_space<vmem>>, vector<2x128xbf16>
    tpu.vector_store %arg8[%c2_1115, %c0_1116], %791 {strides = array<i32>} : memref<64x128xbf16, #tpu.memory_space<vmem>>, vector<2x128xbf16>,
    %c2816 = arith.constant 2816 : index
    %c0_1117 = arith.constant 0 : index
    %793 = vector.load %arg2[%c2816, %c0_1117] : memref<4608x128xbf16, #tpu.memory_space<vmem>>, vector<128x128xbf16>
    %c0_1118 = arith.constant 0 : index
    %c0_1119 = arith.constant 0 : index
    %794 = vector.load %arg8[%c0_1118, %c0_1119] : memref<64x128xbf16, #tpu.memory_space<vmem>>, vector<4x128xbf16>
    %cst_1120 = arith.constant dense<0.000000e+00> : vector<4x128xf32>
    %795 = tpu.matmul %794, %793, %cst_1120 {dimension_numbers = #tpu.dot_dimension_numbers<[1], [0], [0], [1], [0, 0, 1, 1], [], []>} : vector<4x128xbf16>, vector<128x128xbf16>, vector<4x128xf32> -> vector<4x128xf32>
    %796 = arith.addf %786, %795 : vector<4x128xf32>
    %c6_1121 = arith.constant 6 : index
    %c1_1122 = arith.constant 1 : index
    %c0_1123 = arith.constant 0 : index
    %797 = vector.load %arg11[%c6_1121, %c1_1122, %c0_1123] : memref<12x3x128xbf16, #tpu.memory_space<vmem>>, vector<1x2x128xbf16>
    %798 = vector.shape_cast %797 : vector<1x2x128xbf16> to vector<2x128xbf16>
    %c0_1124 = arith.constant 0 : index
    %c0_1125 = arith.constant 0 : index
    %799 = vector.load %arg8[%c0_1124, %c0_1125] : memref<64x128xbf16, #tpu.memory_space<vmem>>, vector<2x128xbf16>
    tpu.vector_store %arg8[%c0_1124, %c0_1125], %798 {strides = array<i32>} : memref<64x128xbf16, #tpu.memory_space<vmem>>, vector<2x128xbf16>,
    %c7_1126 = arith.constant 7 : index
    %c1_1127 = arith.constant 1 : index
    %c0_1128 = arith.constant 0 : index
    %800 = vector.load %arg11[%c7_1126, %c1_1127, %c0_1128] : memref<12x3x128xbf16, #tpu.memory_space<vmem>>, vector<1x2x128xbf16>
    %801 = vector.shape_cast %800 : vector<1x2x128xbf16> to vector<2x128xbf16>
    %c2_1129 = arith.constant 2 : index
    %c0_1130 = arith.constant 0 : index
    %802 = vector.load %arg8[%c2_1129, %c0_1130] : memref<64x128xbf16, #tpu.memory_space<vmem>>, vector<2x128xbf16>
    tpu.vector_store %arg8[%c2_1129, %c0_1130], %801 {strides = array<i32>} : memref<64x128xbf16, #tpu.memory_space<vmem>>, vector<2x128xbf16>,
    %c2944 = arith.constant 2944 : index
    %c0_1131 = arith.constant 0 : index
    %803 = vector.load %arg2[%c2944, %c0_1131] : memref<4608x128xbf16, #tpu.memory_space<vmem>>, vector<128x128xbf16>
    %c0_1132 = arith.constant 0 : index
    %c0_1133 = arith.constant 0 : index
    %804 = vector.load %arg8[%c0_1132, %c0_1133] : memref<64x128xbf16, #tpu.memory_space<vmem>>, vector<4x128xbf16>
    %cst_1134 = arith.constant dense<0.000000e+00> : vector<4x128xf32>
    %805 = tpu.matmul %804, %803, %cst_1134 {dimension_numbers = #tpu.dot_dimension_numbers<[1], [0], [0], [1], [0, 0, 1, 1], [], []>} : vector<4x128xbf16>, vector<128x128xbf16>, vector<4x128xf32> -> vector<4x128xf32>
    %806 = arith.addf %796, %805 : vector<4x128xf32>
    %c1_1135 = arith.constant 1 : index
    %c0_1136 = arith.constant 0 : index
    %c0_1137 = arith.constant 0 : index
    %807 = vector.load %arg11[%c1_1135, %c0_1136, %c0_1137] : memref<12x3x128xbf16, #tpu.memory_space<vmem>>, vector<1x2x128xbf16>
    %808 = vector.shape_cast %807 : vector<1x2x128xbf16> to vector<2x128xbf16>
    %c0_1138 = arith.constant 0 : index
    %c0_1139 = arith.constant 0 : index
    %809 = vector.load %arg8[%c0_1138, %c0_1139] : memref<64x128xbf16, #tpu.memory_space<vmem>>, vector<2x128xbf16>
    tpu.vector_store %arg8[%c0_1138, %c0_1139], %808 {strides = array<i32>} : memref<64x128xbf16, #tpu.memory_space<vmem>>, vector<2x128xbf16>,
    %c2_1140 = arith.constant 2 : index
    %c0_1141 = arith.constant 0 : index
    %c0_1142 = arith.constant 0 : index
    %810 = vector.load %arg11[%c2_1140, %c0_1141, %c0_1142] : memref<12x3x128xbf16, #tpu.memory_space<vmem>>, vector<1x2x128xbf16>
    %811 = vector.shape_cast %810 : vector<1x2x128xbf16> to vector<2x128xbf16>
    %c2_1143 = arith.constant 2 : index
    %c0_1144 = arith.constant 0 : index
    %812 = vector.load %arg8[%c2_1143, %c0_1144] : memref<64x128xbf16, #tpu.memory_space<vmem>>, vector<2x128xbf16>
    tpu.vector_store %arg8[%c2_1143, %c0_1144], %811 {strides = array<i32>} : memref<64x128xbf16, #tpu.memory_space<vmem>>, vector<2x128xbf16>,
    %c3072 = arith.constant 3072 : index
    %c0_1145 = arith.constant 0 : index
    %813 = vector.load %arg2[%c3072, %c0_1145] : memref<4608x128xbf16, #tpu.memory_space<vmem>>, vector<128x128xbf16>
    %c0_1146 = arith.constant 0 : index
    %c0_1147 = arith.constant 0 : index
    %814 = vector.load %arg8[%c0_1146, %c0_1147] : memref<64x128xbf16, #tpu.memory_space<vmem>>, vector<4x128xbf16>
    %cst_1148 = arith.constant dense<0.000000e+00> : vector<4x128xf32>
    %815 = tpu.matmul %814, %813, %cst_1148 {dimension_numbers = #tpu.dot_dimension_numbers<[1], [0], [0], [1], [0, 0, 1, 1], [], []>} : vector<4x128xbf16>, vector<128x128xbf16>, vector<4x128xf32> -> vector<4x128xf32>
    %816 = arith.addf %806, %815 : vector<4x128xf32>
    %c4_1149 = arith.constant 4 : index
    %c0_1150 = arith.constant 0 : index
    %c0_1151 = arith.constant 0 : index
    %817 = vector.load %arg11[%c4_1149, %c0_1150, %c0_1151] : memref<12x3x128xbf16, #tpu.memory_space<vmem>>, vector<1x2x128xbf16>
    %818 = vector.shape_cast %817 : vector<1x2x128xbf16> to vector<2x128xbf16>
    %c0_1152 = arith.constant 0 : index
    %c0_1153 = arith.constant 0 : index
    %819 = vector.load %arg8[%c0_1152, %c0_1153] : memref<64x128xbf16, #tpu.memory_space<vmem>>, vector<2x128xbf16>
    tpu.vector_store %arg8[%c0_1152, %c0_1153], %818 {strides = array<i32>} : memref<64x128xbf16, #tpu.memory_space<vmem>>, vector<2x128xbf16>,
    %c5_1154 = arith.constant 5 : index
    %c0_1155 = arith.constant 0 : index
    %c0_1156 = arith.constant 0 : index
    %820 = vector.load %arg11[%c5_1154, %c0_1155, %c0_1156] : memref<12x3x128xbf16, #tpu.memory_space<vmem>>, vector<1x2x128xbf16>
    %821 = vector.shape_cast %820 : vector<1x2x128xbf16> to vector<2x128xbf16>
    %c2_1157 = arith.constant 2 : index
    %c0_1158 = arith.constant 0 : index
    %822 = vector.load %arg8[%c2_1157, %c0_1158] : memref<64x128xbf16, #tpu.memory_space<vmem>>, vector<2x128xbf16>
    tpu.vector_store %arg8[%c2_1157, %c0_1158], %821 {strides = array<i32>} : memref<64x128xbf16, #tpu.memory_space<vmem>>, vector<2x128xbf16>,
    %c3200 = arith.constant 3200 : index
    %c0_1159 = arith.constant 0 : index
    %823 = vector.load %arg2[%c3200, %c0_1159] : memref<4608x128xbf16, #tpu.memory_space<vmem>>, vector<128x128xbf16>
    %c0_1160 = arith.constant 0 : index
    %c0_1161 = arith.constant 0 : index
    %824 = vector.load %arg8[%c0_1160, %c0_1161] : memref<64x128xbf16, #tpu.memory_space<vmem>>, vector<4x128xbf16>
    %cst_1162 = arith.constant dense<0.000000e+00> : vector<4x128xf32>
    %825 = tpu.matmul %824, %823, %cst_1162 {dimension_numbers = #tpu.dot_dimension_numbers<[1], [0], [0], [1], [0, 0, 1, 1], [], []>} : vector<4x128xbf16>, vector<128x128xbf16>, vector<4x128xf32> -> vector<4x128xf32>
    %826 = arith.addf %816, %825 : vector<4x128xf32>
    %c1_1163 = arith.constant 1 : index
    %c1_1164 = arith.constant 1 : index
    %c0_1165 = arith.constant 0 : index
    %827 = vector.load %arg11[%c1_1163, %c1_1164, %c0_1165] : memref<12x3x128xbf16, #tpu.memory_space<vmem>>, vector<1x2x128xbf16>
    %828 = vector.shape_cast %827 : vector<1x2x128xbf16> to vector<2x128xbf16>
    %c0_1166 = arith.constant 0 : index
    %c0_1167 = arith.constant 0 : index
    %829 = vector.load %arg8[%c0_1166, %c0_1167] : memref<64x128xbf16, #tpu.memory_space<vmem>>, vector<2x128xbf16>
    tpu.vector_store %arg8[%c0_1166, %c0_1167], %828 {strides = array<i32>} : memref<64x128xbf16, #tpu.memory_space<vmem>>, vector<2x128xbf16>,
    %c2_1168 = arith.constant 2 : index
    %c1_1169 = arith.constant 1 : index
    %c0_1170 = arith.constant 0 : index
    %830 = vector.load %arg11[%c2_1168, %c1_1169, %c0_1170] : memref<12x3x128xbf16, #tpu.memory_space<vmem>>, vector<1x2x128xbf16>
    %831 = vector.shape_cast %830 : vector<1x2x128xbf16> to vector<2x128xbf16>
    %c2_1171 = arith.constant 2 : index
    %c0_1172 = arith.constant 0 : index
    %832 = vector.load %arg8[%c2_1171, %c0_1172] : memref<64x128xbf16, #tpu.memory_space<vmem>>, vector<2x128xbf16>
    tpu.vector_store %arg8[%c2_1171, %c0_1172], %831 {strides = array<i32>} : memref<64x128xbf16, #tpu.memory_space<vmem>>, vector<2x128xbf16>,
    %c3328 = arith.constant 3328 : index
    %c0_1173 = arith.constant 0 : index
    %833 = vector.load %arg2[%c3328, %c0_1173] : memref<4608x128xbf16, #tpu.memory_space<vmem>>, vector<128x128xbf16>
    %c0_1174 = arith.constant 0 : index
    %c0_1175 = arith.constant 0 : index
    %834 = vector.load %arg8[%c0_1174, %c0_1175] : memref<64x128xbf16, #tpu.memory_space<vmem>>, vector<4x128xbf16>
    %cst_1176 = arith.constant dense<0.000000e+00> : vector<4x128xf32>
    %835 = tpu.matmul %834, %833, %cst_1176 {dimension_numbers = #tpu.dot_dimension_numbers<[1], [0], [0], [1], [0, 0, 1, 1], [], []>} : vector<4x128xbf16>, vector<128x128xbf16>, vector<4x128xf32> -> vector<4x128xf32>
    %836 = arith.addf %826, %835 : vector<4x128xf32>
    %c2_1177 = arith.constant 2 : index
    %c0_1178 = arith.constant 0 : index
    %837 = vector.load %arg3[%c2_1177, %c0_1178] : memref<4x128xf32, #tpu.memory_space<vmem>>, vector<1x128xf32>
    %838 = vector.broadcast %837 : vector<1x128xf32> to vector<4x128xf32>
    %839 = arith.addf %836, %838 : vector<4x128xf32>
    %cst_1179 = arith.constant 0.000000e+00 : f32
    %840 = vector.broadcast %cst_1179 : f32 to vector<4x128xf32>
    %841 = arith.maximumf %839, %840 : vector<4x128xf32>
    %842 = vector.extract_strided_slice %841 {offsets = [0, 0], sizes = [4, 32], strides = [1, 1]} : vector<4x128xf32> to vector<4x32xf32>
    %c0_1180 = arith.constant 0 : index
    %c0_1181 = arith.constant 0 : index
    %c0_1182 = arith.constant 0 : index
    %843 = vector.load %arg6[%c0_1180, %c0_1181, %c0_1182] : memref<1x4x32xf32, #tpu.memory_space<vmem>>, vector<1x4x32xf32>
    %844 = vector.shape_cast %843 : vector<1x4x32xf32> to vector<4x32xf32>
    %845 = vector.shape_cast %842 : vector<4x32xf32> to vector<1x4x32xf32>
    tpu.vector_store %arg6[%c0_1180, %c0_1181, %c0_1182], %845 {strides = array<i32>} : memref<1x4x32xf32, #tpu.memory_space<vmem>>, vector<1x4x32xf32>,
    %846 = arith.truncf %841 : vector<4x128xf32> to vector<4x128xbf16>
    %c0_1183 = arith.constant 0 : index
    %c0_1184 = arith.constant 0 : index
    %847 = vector.load %arg9[%c0_1183, %c0_1184] : memref<64x128xbf16, #tpu.memory_space<vmem>>, vector<4x128xbf16>
    tpu.vector_store %arg9[%c0_1183, %c0_1184], %846 {strides = array<i32>} : memref<64x128xbf16, #tpu.memory_space<vmem>>, vector<4x128xbf16>,
    %c0_1185 = arith.constant 0 : index
    %c0_1186 = arith.constant 0 : index
    %848 = vector.load %arg9[%c0_1185, %c0_1186] : memref<64x128xbf16, #tpu.memory_space<vmem>>, vector<1x128xbf16>
    %c6_1187 = arith.constant 6 : index
    %c0_1188 = arith.constant 0 : index
    %c0_1189 = arith.constant 0 : index
    %849 = vector.load %arg12[%c6_1187, %c0_1188, %c0_1189] : memref<8x2x128xbf16, #tpu.memory_space<vmem>>, vector<1x1x128xbf16>
    %850 = vector.shape_cast %849 : vector<1x1x128xbf16> to vector<1x128xbf16>
    %851 = vector.shape_cast %848 : vector<1x128xbf16> to vector<1x1x128xbf16>
    tpu.vector_store %arg12[%c6_1187, %c0_1188, %c0_1189], %851 {strides = array<i32>} : memref<8x2x128xbf16, #tpu.memory_space<vmem>>, vector<1x1x128xbf16>,
    %c1_1190 = arith.constant 1 : index
    %c0_1191 = arith.constant 0 : index
    %852 = vector.load %arg9[%c1_1190, %c0_1191] : memref<64x128xbf16, #tpu.memory_space<vmem>>, vector<1x128xbf16>
    %c4_1192 = arith.constant 4 : index
    %c1_1193 = arith.constant 1 : index
    %c0_1194 = arith.constant 0 : index
    %853 = vector.load %arg12[%c4_1192, %c1_1193, %c0_1194] : memref<8x2x128xbf16, #tpu.memory_space<vmem>>, vector<1x1x128xbf16>
    %854 = vector.shape_cast %853 : vector<1x1x128xbf16> to vector<1x128xbf16>
    %855 = vector.shape_cast %852 : vector<1x128xbf16> to vector<1x1x128xbf16>
    tpu.vector_store %arg12[%c4_1192, %c1_1193, %c0_1194], %855 {strides = array<i32>} : memref<8x2x128xbf16, #tpu.memory_space<vmem>>, vector<1x1x128xbf16>,
    %c2_1195 = arith.constant 2 : index
    %c0_1196 = arith.constant 0 : index
    %856 = vector.load %arg9[%c2_1195, %c0_1196] : memref<64x128xbf16, #tpu.memory_space<vmem>>, vector<1x128xbf16>
    %c3_1197 = arith.constant 3 : index
    %c0_1198 = arith.constant 0 : index
    %c0_1199 = arith.constant 0 : index
    %857 = vector.load %arg12[%c3_1197, %c0_1198, %c0_1199] : memref<8x2x128xbf16, #tpu.memory_space<vmem>>, vector<1x1x128xbf16>
    %858 = vector.shape_cast %857 : vector<1x1x128xbf16> to vector<1x128xbf16>
    %859 = vector.shape_cast %856 : vector<1x128xbf16> to vector<1x1x128xbf16>
    tpu.vector_store %arg12[%c3_1197, %c0_1198, %c0_1199], %859 {strides = array<i32>} : memref<8x2x128xbf16, #tpu.memory_space<vmem>>, vector<1x1x128xbf16>,
    %c3_1200 = arith.constant 3 : index
    %c0_1201 = arith.constant 0 : index
    %860 = vector.load %arg9[%c3_1200, %c0_1201] : memref<64x128xbf16, #tpu.memory_space<vmem>>, vector<1x128xbf16>
    %c1_1202 = arith.constant 1 : index
    %c1_1203 = arith.constant 1 : index
    %c0_1204 = arith.constant 0 : index
    %861 = vector.load %arg12[%c1_1202, %c1_1203, %c0_1204] : memref<8x2x128xbf16, #tpu.memory_space<vmem>>, vector<1x1x128xbf16>
    %862 = vector.shape_cast %861 : vector<1x1x128xbf16> to vector<1x128xbf16>
    %863 = vector.shape_cast %860 : vector<1x128xbf16> to vector<1x1x128xbf16>
    tpu.vector_store %arg12[%c1_1202, %c1_1203, %c0_1204], %863 {strides = array<i32>} : memref<8x2x128xbf16, #tpu.memory_space<vmem>>, vector<1x1x128xbf16>,
    %cst_1205 = arith.constant 0.000000e+00 : f32
    %864 = vector.broadcast %cst_1205 : f32 to vector<1x128xf32>
    %c0_1206 = arith.constant 0 : index
    %c0_1207 = arith.constant 0 : index
    %c0_1208 = arith.constant 0 : index
    %865 = vector.load %arg12[%c0_1206, %c0_1207, %c0_1208] : memref<8x2x128xbf16, #tpu.memory_space<vmem>>, vector<1x1x128xbf16>
    %866 = vector.shape_cast %865 : vector<1x1x128xbf16> to vector<1x128xbf16>
    %c0_1209 = arith.constant 0 : index
    %c0_1210 = arith.constant 0 : index
    %867 = vector.load %arg8[%c0_1209, %c0_1210] : memref<64x128xbf16, #tpu.memory_space<vmem>>, vector<1x128xbf16>
    tpu.vector_store %arg8[%c0_1209, %c0_1210], %866 {strides = array<i32>} : memref<64x128xbf16, #tpu.memory_space<vmem>>, vector<1x128xbf16>,
    %c3456 = arith.constant 3456 : index
    %c0_1211 = arith.constant 0 : index
    %868 = vector.load %arg2[%c3456, %c0_1211] : memref<4608x128xbf16, #tpu.memory_space<vmem>>, vector<128x128xbf16>
    %c0_1212 = arith.constant 0 : index
    %c0_1213 = arith.constant 0 : index
    %869 = vector.load %arg8[%c0_1212, %c0_1213] : memref<64x128xbf16, #tpu.memory_space<vmem>>, vector<1x128xbf16>
    %cst_1214 = arith.constant dense<0.000000e+00> : vector<1x128xf32>
    %870 = tpu.matmul %869, %868, %cst_1214 {dimension_numbers = #tpu.dot_dimension_numbers<[1], [0], [0], [1], [0, 0, 1, 1], [], []>} : vector<1x128xbf16>, vector<128x128xbf16>, vector<1x128xf32> -> vector<1x128xf32>
    %871 = arith.addf %864, %870 : vector<1x128xf32>
    %c2_1215 = arith.constant 2 : index
    %c0_1216 = arith.constant 0 : index
    %c0_1217 = arith.constant 0 : index
    %872 = vector.load %arg12[%c2_1215, %c0_1216, %c0_1217] : memref<8x2x128xbf16, #tpu.memory_space<vmem>>, vector<1x1x128xbf16>
    %873 = vector.shape_cast %872 : vector<1x1x128xbf16> to vector<1x128xbf16>
    %c0_1218 = arith.constant 0 : index
    %c0_1219 = arith.constant 0 : index
    %874 = vector.load %arg8[%c0_1218, %c0_1219] : memref<64x128xbf16, #tpu.memory_space<vmem>>, vector<1x128xbf16>
    tpu.vector_store %arg8[%c0_1218, %c0_1219], %873 {strides = array<i32>} : memref<64x128xbf16, #tpu.memory_space<vmem>>, vector<1x128xbf16>,
    %c3584 = arith.constant 3584 : index
    %c0_1220 = arith.constant 0 : index
    %875 = vector.load %arg2[%c3584, %c0_1220] : memref<4608x128xbf16, #tpu.memory_space<vmem>>, vector<128x128xbf16>
    %c0_1221 = arith.constant 0 : index
    %c0_1222 = arith.constant 0 : index
    %876 = vector.load %arg8[%c0_1221, %c0_1222] : memref<64x128xbf16, #tpu.memory_space<vmem>>, vector<1x128xbf16>
    %cst_1223 = arith.constant dense<0.000000e+00> : vector<1x128xf32>
    %877 = tpu.matmul %876, %875, %cst_1223 {dimension_numbers = #tpu.dot_dimension_numbers<[1], [0], [0], [1], [0, 0, 1, 1], [], []>} : vector<1x128xbf16>, vector<128x128xbf16>, vector<1x128xf32> -> vector<1x128xf32>
    %878 = arith.addf %871, %877 : vector<1x128xf32>
    %c0_1224 = arith.constant 0 : index
    %c1_1225 = arith.constant 1 : index
    %c0_1226 = arith.constant 0 : index
    %879 = vector.load %arg12[%c0_1224, %c1_1225, %c0_1226] : memref<8x2x128xbf16, #tpu.memory_space<vmem>>, vector<1x1x128xbf16>
    %880 = vector.shape_cast %879 : vector<1x1x128xbf16> to vector<1x128xbf16>
    %c0_1227 = arith.constant 0 : index
    %c0_1228 = arith.constant 0 : index
    %881 = vector.load %arg8[%c0_1227, %c0_1228] : memref<64x128xbf16, #tpu.memory_space<vmem>>, vector<1x128xbf16>
    tpu.vector_store %arg8[%c0_1227, %c0_1228], %880 {strides = array<i32>} : memref<64x128xbf16, #tpu.memory_space<vmem>>, vector<1x128xbf16>,
    %c3712 = arith.constant 3712 : index
    %c0_1229 = arith.constant 0 : index
    %882 = vector.load %arg2[%c3712, %c0_1229] : memref<4608x128xbf16, #tpu.memory_space<vmem>>, vector<128x128xbf16>
    %c0_1230 = arith.constant 0 : index
    %c0_1231 = arith.constant 0 : index
    %883 = vector.load %arg8[%c0_1230, %c0_1231] : memref<64x128xbf16, #tpu.memory_space<vmem>>, vector<1x128xbf16>
    %cst_1232 = arith.constant dense<0.000000e+00> : vector<1x128xf32>
    %884 = tpu.matmul %883, %882, %cst_1232 {dimension_numbers = #tpu.dot_dimension_numbers<[1], [0], [0], [1], [0, 0, 1, 1], [], []>} : vector<1x128xbf16>, vector<128x128xbf16>, vector<1x128xf32> -> vector<1x128xf32>
    %885 = arith.addf %878, %884 : vector<1x128xf32>
    %c4_1233 = arith.constant 4 : index
    %c0_1234 = arith.constant 0 : index
    %c0_1235 = arith.constant 0 : index
    %886 = vector.load %arg12[%c4_1233, %c0_1234, %c0_1235] : memref<8x2x128xbf16, #tpu.memory_space<vmem>>, vector<1x1x128xbf16>
    %887 = vector.shape_cast %886 : vector<1x1x128xbf16> to vector<1x128xbf16>
    %c0_1236 = arith.constant 0 : index
    %c0_1237 = arith.constant 0 : index
    %888 = vector.load %arg8[%c0_1236, %c0_1237] : memref<64x128xbf16, #tpu.memory_space<vmem>>, vector<1x128xbf16>
    tpu.vector_store %arg8[%c0_1236, %c0_1237], %887 {strides = array<i32>} : memref<64x128xbf16, #tpu.memory_space<vmem>>, vector<1x128xbf16>,
    %c3840 = arith.constant 3840 : index
    %c0_1238 = arith.constant 0 : index
    %889 = vector.load %arg2[%c3840, %c0_1238] : memref<4608x128xbf16, #tpu.memory_space<vmem>>, vector<128x128xbf16>
    %c0_1239 = arith.constant 0 : index
    %c0_1240 = arith.constant 0 : index
    %890 = vector.load %arg8[%c0_1239, %c0_1240] : memref<64x128xbf16, #tpu.memory_space<vmem>>, vector<1x128xbf16>
    %cst_1241 = arith.constant dense<0.000000e+00> : vector<1x128xf32>
    %891 = tpu.matmul %890, %889, %cst_1241 {dimension_numbers = #tpu.dot_dimension_numbers<[1], [0], [0], [1], [0, 0, 1, 1], [], []>} : vector<1x128xbf16>, vector<128x128xbf16>, vector<1x128xf32> -> vector<1x128xf32>
    %892 = arith.addf %885, %891 : vector<1x128xf32>
    %c6_1242 = arith.constant 6 : index
    %c0_1243 = arith.constant 0 : index
    %c0_1244 = arith.constant 0 : index
    %893 = vector.load %arg12[%c6_1242, %c0_1243, %c0_1244] : memref<8x2x128xbf16, #tpu.memory_space<vmem>>, vector<1x1x128xbf16>
    %894 = vector.shape_cast %893 : vector<1x1x128xbf16> to vector<1x128xbf16>
    %c0_1245 = arith.constant 0 : index
    %c0_1246 = arith.constant 0 : index
    %895 = vector.load %arg8[%c0_1245, %c0_1246] : memref<64x128xbf16, #tpu.memory_space<vmem>>, vector<1x128xbf16>
    tpu.vector_store %arg8[%c0_1245, %c0_1246], %894 {strides = array<i32>} : memref<64x128xbf16, #tpu.memory_space<vmem>>, vector<1x128xbf16>,
    %c3968 = arith.constant 3968 : index
    %c0_1247 = arith.constant 0 : index
    %896 = vector.load %arg2[%c3968, %c0_1247] : memref<4608x128xbf16, #tpu.memory_space<vmem>>, vector<128x128xbf16>
    %c0_1248 = arith.constant 0 : index
    %c0_1249 = arith.constant 0 : index
    %897 = vector.load %arg8[%c0_1248, %c0_1249] : memref<64x128xbf16, #tpu.memory_space<vmem>>, vector<1x128xbf16>
    %cst_1250 = arith.constant dense<0.000000e+00> : vector<1x128xf32>
    %898 = tpu.matmul %897, %896, %cst_1250 {dimension_numbers = #tpu.dot_dimension_numbers<[1], [0], [0], [1], [0, 0, 1, 1], [], []>} : vector<1x128xbf16>, vector<128x128xbf16>, vector<1x128xf32> -> vector<1x128xf32>
    %899 = arith.addf %892, %898 : vector<1x128xf32>
    %c4_1251 = arith.constant 4 : index
    %c1_1252 = arith.constant 1 : index
    %c0_1253 = arith.constant 0 : index
    %900 = vector.load %arg12[%c4_1251, %c1_1252, %c0_1253] : memref<8x2x128xbf16, #tpu.memory_space<vmem>>, vector<1x1x128xbf16>
    %901 = vector.shape_cast %900 : vector<1x1x128xbf16> to vector<1x128xbf16>
    %c0_1254 = arith.constant 0 : index
    %c0_1255 = arith.constant 0 : index
    %902 = vector.load %arg8[%c0_1254, %c0_1255] : memref<64x128xbf16, #tpu.memory_space<vmem>>, vector<1x128xbf16>
    tpu.vector_store %arg8[%c0_1254, %c0_1255], %901 {strides = array<i32>} : memref<64x128xbf16, #tpu.memory_space<vmem>>, vector<1x128xbf16>,
    %c4096 = arith.constant 4096 : index
    %c0_1256 = arith.constant 0 : index
    %903 = vector.load %arg2[%c4096, %c0_1256] : memref<4608x128xbf16, #tpu.memory_space<vmem>>, vector<128x128xbf16>
    %c0_1257 = arith.constant 0 : index
    %c0_1258 = arith.constant 0 : index
    %904 = vector.load %arg8[%c0_1257, %c0_1258] : memref<64x128xbf16, #tpu.memory_space<vmem>>, vector<1x128xbf16>
    %cst_1259 = arith.constant dense<0.000000e+00> : vector<1x128xf32>
    %905 = tpu.matmul %904, %903, %cst_1259 {dimension_numbers = #tpu.dot_dimension_numbers<[1], [0], [0], [1], [0, 0, 1, 1], [], []>} : vector<1x128xbf16>, vector<128x128xbf16>, vector<1x128xf32> -> vector<1x128xf32>
    %906 = arith.addf %899, %905 : vector<1x128xf32>
    %c1_1260 = arith.constant 1 : index
    %c0_1261 = arith.constant 0 : index
    %c0_1262 = arith.constant 0 : index
    %907 = vector.load %arg12[%c1_1260, %c0_1261, %c0_1262] : memref<8x2x128xbf16, #tpu.memory_space<vmem>>, vector<1x1x128xbf16>
    %908 = vector.shape_cast %907 : vector<1x1x128xbf16> to vector<1x128xbf16>
    %c0_1263 = arith.constant 0 : index
    %c0_1264 = arith.constant 0 : index
    %909 = vector.load %arg8[%c0_1263, %c0_1264] : memref<64x128xbf16, #tpu.memory_space<vmem>>, vector<1x128xbf16>
    tpu.vector_store %arg8[%c0_1263, %c0_1264], %908 {strides = array<i32>} : memref<64x128xbf16, #tpu.memory_space<vmem>>, vector<1x128xbf16>,
    %c4224 = arith.constant 4224 : index
    %c0_1265 = arith.constant 0 : index
    %910 = vector.load %arg2[%c4224, %c0_1265] : memref<4608x128xbf16, #tpu.memory_space<vmem>>, vector<128x128xbf16>
    %c0_1266 = arith.constant 0 : index
    %c0_1267 = arith.constant 0 : index
    %911 = vector.load %arg8[%c0_1266, %c0_1267] : memref<64x128xbf16, #tpu.memory_space<vmem>>, vector<1x128xbf16>
    %cst_1268 = arith.constant dense<0.000000e+00> : vector<1x128xf32>
    %912 = tpu.matmul %911, %910, %cst_1268 {dimension_numbers = #tpu.dot_dimension_numbers<[1], [0], [0], [1], [0, 0, 1, 1], [], []>} : vector<1x128xbf16>, vector<128x128xbf16>, vector<1x128xf32> -> vector<1x128xf32>
    %913 = arith.addf %906, %912 : vector<1x128xf32>
    %c3_1269 = arith.constant 3 : index
    %c0_1270 = arith.constant 0 : index
    %c0_1271 = arith.constant 0 : index
    %914 = vector.load %arg12[%c3_1269, %c0_1270, %c0_1271] : memref<8x2x128xbf16, #tpu.memory_space<vmem>>, vector<1x1x128xbf16>
    %915 = vector.shape_cast %914 : vector<1x1x128xbf16> to vector<1x128xbf16>
    %c0_1272 = arith.constant 0 : index
    %c0_1273 = arith.constant 0 : index
    %916 = vector.load %arg8[%c0_1272, %c0_1273] : memref<64x128xbf16, #tpu.memory_space<vmem>>, vector<1x128xbf16>
    tpu.vector_store %arg8[%c0_1272, %c0_1273], %915 {strides = array<i32>} : memref<64x128xbf16, #tpu.memory_space<vmem>>, vector<1x128xbf16>,
    %c4352 = arith.constant 4352 : index
    %c0_1274 = arith.constant 0 : index
    %917 = vector.load %arg2[%c4352, %c0_1274] : memref<4608x128xbf16, #tpu.memory_space<vmem>>, vector<128x128xbf16>
    %c0_1275 = arith.constant 0 : index
    %c0_1276 = arith.constant 0 : index
    %918 = vector.load %arg8[%c0_1275, %c0_1276] : memref<64x128xbf16, #tpu.memory_space<vmem>>, vector<1x128xbf16>
    %cst_1277 = arith.constant dense<0.000000e+00> : vector<1x128xf32>
    %919 = tpu.matmul %918, %917, %cst_1277 {dimension_numbers = #tpu.dot_dimension_numbers<[1], [0], [0], [1], [0, 0, 1, 1], [], []>} : vector<1x128xbf16>, vector<128x128xbf16>, vector<1x128xf32> -> vector<1x128xf32>
    %920 = arith.addf %913, %919 : vector<1x128xf32>
    %c1_1278 = arith.constant 1 : index
    %c1_1279 = arith.constant 1 : index
    %c0_1280 = arith.constant 0 : index
    %921 = vector.load %arg12[%c1_1278, %c1_1279, %c0_1280] : memref<8x2x128xbf16, #tpu.memory_space<vmem>>, vector<1x1x128xbf16>
    %922 = vector.shape_cast %921 : vector<1x1x128xbf16> to vector<1x128xbf16>
    %c0_1281 = arith.constant 0 : index
    %c0_1282 = arith.constant 0 : index
    %923 = vector.load %arg8[%c0_1281, %c0_1282] : memref<64x128xbf16, #tpu.memory_space<vmem>>, vector<1x128xbf16>
    tpu.vector_store %arg8[%c0_1281, %c0_1282], %922 {strides = array<i32>} : memref<64x128xbf16, #tpu.memory_space<vmem>>, vector<1x128xbf16>,
    %c4480 = arith.constant 4480 : index
    %c0_1283 = arith.constant 0 : index
    %924 = vector.load %arg2[%c4480, %c0_1283] : memref<4608x128xbf16, #tpu.memory_space<vmem>>, vector<128x128xbf16>
    %c0_1284 = arith.constant 0 : index
    %c0_1285 = arith.constant 0 : index
    %925 = vector.load %arg8[%c0_1284, %c0_1285] : memref<64x128xbf16, #tpu.memory_space<vmem>>, vector<1x128xbf16>
    %cst_1286 = arith.constant dense<0.000000e+00> : vector<1x128xf32>
    %926 = tpu.matmul %925, %924, %cst_1286 {dimension_numbers = #tpu.dot_dimension_numbers<[1], [0], [0], [1], [0, 0, 1, 1], [], []>} : vector<1x128xbf16>, vector<128x128xbf16>, vector<1x128xf32> -> vector<1x128xf32>
    %927 = arith.addf %920, %926 : vector<1x128xf32>
    %c3_1287 = arith.constant 3 : index
    %c0_1288 = arith.constant 0 : index
    %928 = vector.load %arg3[%c3_1287, %c0_1288] : memref<4x128xf32, #tpu.memory_space<vmem>>, vector<1x128xf32>
    %929 = arith.addf %927, %928 : vector<1x128xf32>
    %cst_1289 = arith.constant 0.000000e+00 : f32
    %930 = vector.broadcast %cst_1289 : f32 to vector<1x128xf32>
    %931 = arith.maximumf %929, %930 : vector<1x128xf32>
    %932 = vector.extract_strided_slice %931 {offsets = [0, 0], sizes = [1, 64], strides = [1, 1]} : vector<1x128xf32> to vector<1x64xf32>
    %c0_1290 = arith.constant 0 : index
    %c0_1291 = arith.constant 0 : index
    %c0_1292 = arith.constant 0 : index
    %933 = vector.load %arg7[%c0_1290, %c0_1291, %c0_1292] : memref<1x1x64xf32, #tpu.memory_space<vmem>>, vector<1x1x64xf32>
    %934 = vector.shape_cast %933 : vector<1x1x64xf32> to vector<1x64xf32>
    %935 = vector.shape_cast %932 : vector<1x64xf32> to vector<1x1x64xf32>
    tpu.vector_store %arg7[%c0_1290, %c0_1291, %c0_1292], %935 {strides = array<i32>} : memref<1x1x64xf32, #tpu.memory_space<vmem>>, vector<1x1x64xf32>,
    return
  }
  func.func @transform_0(%arg0: i32) -> (i32, i32, i32, i32) {
    %c0_i32 = arith.constant 0 : i32
    %c0_i32_0 = arith.constant 0 : i32
    %c0_i32_1 = arith.constant 0 : i32
    %c0_i32_2 = arith.constant 0 : i32
    return %arg0, %c0_i32, %c0_i32_0, %c0_i32_1 : i32, i32, i32, i32
  }
  func.func @transform_1(%arg0: i32) -> (i32, i32) {
    %c0_i32 = arith.constant 0 : i32
    %c0_i32_0 = arith.constant 0 : i32
    %c0_i32_1 = arith.constant 0 : i32
    return %c0_i32, %c0_i32_0 : i32, i32
  }
  func.func @transform_2(%arg0: i32) -> (i32, i32) {
    %c0_i32 = arith.constant 0 : i32
    %c0_i32_0 = arith.constant 0 : i32
    %c0_i32_1 = arith.constant 0 : i32
    return %c0_i32, %c0_i32_0 : i32, i32
  }
  func.func @transform_3(%arg0: i32) -> (i32, i32, i32) {
    %c0_i32 = arith.constant 0 : i32
    %c0_i32_0 = arith.constant 0 : i32
    %c0_i32_1 = arith.constant 0 : i32
    return %arg0, %c0_i32, %c0_i32_0 : i32, i32, i32
  }
  func.func @transform_4(%arg0: i32) -> (i32, i32, i32) {
    %c0_i32 = arith.constant 0 : i32
    %c0_i32_0 = arith.constant 0 : i32
    %c0_i32_1 = arith.constant 0 : i32
    return %arg0, %c0_i32, %c0_i32_0 : i32, i32, i32
  }
  func.func @transform_5(%arg0: i32) -> (i32, i32, i32) {
    %c0_i32 = arith.constant 0 : i32
    %c0_i32_0 = arith.constant 0 : i32
    %c0_i32_1 = arith.constant 0 : i32
    return %arg0, %c0_i32, %c0_i32_0 : i32, i32, i32
  }
  func.func @transform_6(%arg0: i32) -> (i32, i32, i32) {
    %c0_i32 = arith.constant 0 : i32
    %c0_i32_0 = arith.constant 0 : i32
    %c0_i32_1 = arith.constant 0 : i32
    return %arg0, %c0_i32, %c0_i32_0 : i32, i32, i32
  }
}

</mosaic_0001>

<llo_original>
// kernel: _lambda_.1
$region0: #{_lambda_.1}
  #allocation0 [shape = 'u32[]', space=smem, size = 0x4, offset = 0x4, fixed_abs, tag = 'smem constant byte address 0x4 - core index']
  #allocation1 [shape = 'u32[144,128]{1,0:T(1,128)}', space=vmem, size = 0x12000, scoped, tag = 'internal scratch']
  #allocation2 [shape = 'bf16[64,128]{1,0:T(8,128)(2,1)}', space=vmem, size = 0x4000, scoped, tag = 'scratch operand']
  #allocation3 [shape = 'bf16[64,128]{1,0:T(8,128)(2,1)}', space=vmem, size = 0x4000, scoped, tag = 'scratch operand']
  #allocation4 [shape = 'bf16[20,5,128]{2,1,0:T(8,128)(2,1)}', space=vmem, size = 0xa000, scoped, tag = 'scratch operand']
  #allocation5 [shape = 'bf16[12,3,128]{2,1,0:T(4,128)(2,1)}', space=vmem, size = 0x3000, scoped, tag = 'scratch operand']
  #allocation6 [shape = 'bf16[8,2,128]{2,1,0:T(2,128)(2,1)}', space=vmem, size = 0x1000, scoped, tag = 'scratch operand']
  %s0 = inlined_call_operand.vmem [shape: bf16[2,36,9,128], index: 0, kind: input, shape index: {}]
  %s1 = inlined_call_operand.vmem [shape: bf16[4608,128], index: 1, kind: input, shape index: {}]
  %s2 = inlined_call_operand.vmem [shape: f32[4,128], index: 2, kind: input, shape index: {}]
  %s3 = inlined_call_operand.vmem [shape: f32[2,64,8], index: 3, kind: output, shape index: {0}]
  %s4 = inlined_call_operand.hbm [shape: f32[2,16,16], index: 4, kind: output, shape index: {1}]
  %s5 = inlined_call_operand.hbm [shape: f32[2,4,32], index: 5, kind: output, shape index: {2}]
  %s6 = inlined_call_operand.hbm [shape: f32[2,1,64], index: 6, kind: output, shape index: {3}]
  %7 = xla_tuple %s3, %s4, %s5, %s6
  %s8 = sld [smem:[#allocation0]]
  $region69: #{_lambda_.1} parent=0
    _
  %s10 = ssub.s32 1, %s8
  %s11 = scalar_select 0, %s10, %s8
  $region1: #{_lambda_.1} parent=0
    #allocation7 [shape = 'u8[16384]{0}', space=vmem, size = 0x4000, scoped, tag = 'output window, operand 1']
    #allocation8 [shape = 's32[2]{0}', space=sflag, size = 0x8, scoped, tag = 'scoped memory for _lambda_.1']
    #allocation9 [shape = 'u8[4096]{0}', space=vmem, size = 0x1000, scoped, tag = 'output window, operand 2']
    #allocation10 [shape = 's32[2]{0}', space=sflag, size = 0x8, scoped, tag = 'scoped memory for _lambda_.1']
    #allocation11 [shape = 'u8[1024]{0}', space=vmem, size = 0x400, scoped, tag = 'output window, operand 3']
    %12 = vsyncpa [#allocation8], 0
    %s13 = scalar_lea.sflag [#allocation8], 1
    %14 = vsyncpa %s13, 0
    %15 = vsyncpa [#allocation10], 0
    %s16 = scalar_lea.sflag [#allocation10], 1
    %17 = vsyncpa %s16, 0
    loop: start=0, step=1, limit=4
    $region2: #{_lambda_.1} parent=1 // loop_pre_header
      _
    $region3: #{_lambda_.1} parent=1 // loop_header
      %s19 = sphi 0, %s23
      %p20 = scmp.ge.s32.totalorder %s19, 4
      %s29 = sphi 0, %s31
      %s32 = sphi 0, %s29
      %s33 = sphi 0, %s32
      %s49 = sphi 0, %s33
      %s53 = sphi 0, %s53
      %s55 = sphi 0, %s53
      %s56 = sphi 0, %s55
      %s70 = sphi 0, %s56
      %s74 = sphi 0, %s74
      %s76 = sphi 0, %s74
      %s77 = sphi 0, %s76
      %s91 = sphi 0, %s77
      %s97 = sphi 0, %s99
      %s100 = sphi 0, %s97
      %s101 = sphi 0, %s100
      %s117 = sphi 0, %s101
      %s123 = sphi 0, %s125
      %s126 = sphi 0, %s123
      %s127 = sphi 0, %s126
      %s143 = sphi 0, %s127
      %s149 = sphi 0, %s151
      %s152 = sphi 0, %s149
      %s153 = sphi 0, %s152
      %s169 = sphi 0, %s153
      %s175 = sphi 0, %s177
      %s178 = sphi 0, %s175
      %s179 = sphi 0, %s178
      %s195 = sphi 0, %s179
    $region4: #{_lambda_.1} parent=1 // loop_header_branch
      %22 = sbr.rel (%p20) target = $region8
    $region5: #{_lambda_.1} parent=1 // loop_body
      %s24 = ssub.s32 %s19, 1
      %s25 = ssub.s32 %s19, 2
      %s26 = sadd.s32 %s19, 1
      %s27 = ssub.s32 %s19, %s26
      %p28 = scmp.eq.s32.totalorder %s27, 0
      %s30 = sadd.s32 %s29, 1
      %s31 = scalar_select %p28, %s29, %s30
      %p34 = pneg %p28
      %p35 = scmp.eq.s32.totalorder %s19, 1
      %p36 = por %p34, %p35
      %p37 = scmp.ne.s32.totalorder %s29, %s32
      %p38 = scmp.eq.s32.totalorder %s19, 0
      %p39 = por %p37, %p38
      %p40 = scmp.ne.s32.totalorder %s29, %s32
      %p41 = scmp.eq.s32.totalorder %s24, 1
      %p42 = por %p40, %p41
      %p43 = scmp.ne.s32.totalorder %s32, %s33
      %p44 = scmp.eq.s32.totalorder %s24, 0
      %p45 = por %p43, %p44
      %p46 = scmp.ne.s32.totalorder %s32, %s33
      %p47 = scmp.eq.s32.totalorder %s25, 1
      %p48 = por %p46, %p47
      %p50 = scmp.ne.s32.totalorder %s33, %s49
      %p51 = scmp.eq.s32.totalorder %s25, 0
      %p52 = por %p50, %p51
      %s54 = sadd.s32 %s53, 1
      %p57 = scmp.eq.s32.totalorder %s19, 1
      %p58 = scmp.ne.s32.totalorder %s53, %s55
      %p59 = scmp.eq.s32.totalorder %s19, 0
      %p60 = por %p58, %p59
      %p61 = scmp.ne.s32.totalorder %s53, %s55
      %p62 = scmp.eq.s32.totalorder %s24, 1
      %p63 = por %p61, %p62
      %p64 = scmp.ne.s32.totalorder %s55, %s56
      %p65 = scmp.eq.s32.totalorder %s24, 0
      %p66 = por %p64, %p65
      %p67 = scmp.ne.s32.totalorder %s55, %s56
      %p68 = scmp.eq.s32.totalorder %s25, 1
      %p69 = por %p67, %p68
      %p71 = scmp.ne.s32.totalorder %s56, %s70
      %p72 = scmp.eq.s32.totalorder %s25, 0
      %p73 = por %p71, %p72
      %s75 = sadd.s32 %s74, 1
      %p78 = scmp.eq.s32.totalorder %s19, 1
      %p79 = scmp.ne.s32.totalorder %s74, %s76
      %p80 = scmp.eq.s32.totalorder %s19, 0
      %p81 = por %p79, %p80
      %p82 = scmp.ne.s32.totalorder %s74, %s76
      %p83 = scmp.eq.s32.totalorder %s24, 1
      %p84 = por %p82, %p83
      %p85 = scmp.ne.s32.totalorder %s76, %s77
      %p86 = scmp.eq.s32.totalorder %s24, 0
      %p87 = por %p85, %p86
      %p88 = scmp.ne.s32.totalorder %s76, %s77
      %p89 = scmp.eq.s32.totalorder %s25, 1
      %p90 = por %p88, %p89
      %p92 = scmp.ne.s32.totalorder %s77, %s91
      %p93 = scmp.eq.s32.totalorder %s25, 0
      %p94 = por %p92, %p93
      %s95 = ssub.s32 %s19, %s26
      %p96 = scmp.eq.s32.totalorder %s95, 0
      %s98 = sadd.s32 %s97, 1
      %s99 = scalar_select %p96, %s97, %s98
      %p102 = pneg %p96
      %p103 = scmp.eq.s32.totalorder %s19, 1
      %p104 = por %p102, %p103
      %p105 = scmp.ne.s32.totalorder %s97, %s100
      %p106 = scmp.eq.s32.totalorder %s19, 0
      %p107 = por %p105, %p106
      %p108 = scmp.ne.s32.totalorder %s97, %s100
      %p109 = scmp.eq.s32.totalorder %s24, 1
      %p110 = por %p108, %p109
      %p111 = scmp.ne.s32.totalorder %s100, %s101
      %p112 = scmp.eq.s32.totalorder %s24, 0
      %p113 = por %p111, %p112
      %p114 = scmp.ne.s32.totalorder %s100, %s101
      %p115 = scmp.eq.s32.totalorder %s25, 1
      %p116 = por %p114, %p115
      %p118 = scmp.ne.s32.totalorder %s101, %s117
      %p119 = scmp.eq.s32.totalorder %s25, 0
      %p120 = por %p118, %p119
      %s121 = ssub.s32 %s19, %s26
      %p122 = scmp.eq.s32.totalorder %s121, 0
      %s124 = sadd.s32 %s123, 1
      %s125 = scalar_select %p122, %s123, %s124
      %p128 = pneg %p122
      %p129 = scmp.eq.s32.totalorder %s19, 1
      %p130 = por %p128, %p129
      %p131 = scmp.ne.s32.totalorder %s123, %s126
      %p132 = scmp.eq.s32.totalorder %s19, 0
      %p133 = por %p131, %p132
      %p134 = scmp.ne.s32.totalorder %s123, %s126
      %p135 = scmp.eq.s32.totalorder %s24, 1
      %p136 = por %p134, %p135
      %p137 = scmp.ne.s32.totalorder %s126, %s127
      %p138 = scmp.eq.s32.totalorder %s24, 0
      %p139 = por %p137, %p138
      %p140 = scmp.ne.s32.totalorder %s126, %s127
      %p141 = scmp.eq.s32.totalorder %s25, 1
      %p142 = por %p140, %p141
      %p144 = scmp.ne.s32.totalorder %s127, %s143
      %p145 = scmp.eq.s32.totalorder %s25, 0
      %p146 = por %p144, %p145
      %s147 = ssub.s32 %s19, %s26
      %p148 = scmp.eq.s32.totalorder %s147, 0
      %s150 = sadd.s32 %s149, 1
      %s151 = scalar_select %p148, %s149, %s150
      %p154 = pneg %p148
      %p155 = scmp.eq.s32.totalorder %s19, 1
      %p156 = por %p154, %p155
      %p157 = scmp.ne.s32.totalorder %s149, %s152
      %p158 = scmp.eq.s32.totalorder %s19, 0
      %p159 = por %p157, %p158
      %p160 = scmp.ne.s32.totalorder %s149, %s152
      %p161 = scmp.eq.s32.totalorder %s24, 1
      %p162 = por %p160, %p161
      %p163 = scmp.ne.s32.totalorder %s152, %s153
      %p164 = scmp.eq.s32.totalorder %s24, 0
      %p165 = por %p163, %p164
      %p166 = scmp.ne.s32.totalorder %s152, %s153
      %p167 = scmp.eq.s32.totalorder %s25, 1
      %p168 = por %p166, %p167
      %p170 = scmp.ne.s32.totalorder %s153, %s169
      %p171 = scmp.eq.s32.totalorder %s25, 0
      %p172 = por %p170, %p171
      %s173 = ssub.s32 %s19, %s26
      %p174 = scmp.eq.s32.totalorder %s173, 0
      %s176 = sadd.s32 %s175, 1
      %s177 = scalar_select %p174, %s175, %s176
      %p180 = pneg %p174
      %p181 = scmp.eq.s32.totalorder %s19, 1
      %p182 = por %p180, %p181
      %p183 = scmp.ne.s32.totalorder %s175, %s178
      %p184 = scmp.eq.s32.totalorder %s19, 0
      %p185 = por %p183, %p184
      %p186 = scmp.ne.s32.totalorder %s175, %s178
      %p187 = scmp.eq.s32.totalorder %s24, 1
      %p188 = por %p186, %p187
      %p189 = scmp.ne.s32.totalorder %s178, %s179
      %p190 = scmp.eq.s32.totalorder %s24, 0
      %p191 = por %p189, %p190
      %p192 = scmp.ne.s32.totalorder %s178, %s179
      %p193 = scmp.eq.s32.totalorder %s25, 1
      %p194 = por %p192, %p193
      %p196 = scmp.ne.s32.totalorder %s179, %s195
      %p197 = scmp.eq.s32.totalorder %s25, 0
      %p198 = por %p196, %p197
      %p199 = scmp.le.s32.totalorder 1, %s19
      %p200 = scmp.lt.s32.totalorder %s19, 3
      %p201 = pnand %p199, %p200
      %p202 = pneg %p201
      // Predicated region
      $region9: #{_lambda_.1} parent=5 // pred_check
        _
      $region10: #{_lambda_.1} parent=5 // pred_check_branch
        %204 = sbr.rel (%p201) target = $region12
      $region11: #{_lambda_.1} parent=5 // pred_region
        %s205 = ssub.s32 %s19, 1
        // Predicated region
        $region13: #{_lambda_.1} parent=11 // pred_check
          %p206 = pneg %p66
        $region14: #{_lambda_.1} parent=11 // pred_check_branch
          %208 = sbr.rel (%p206) target = $region16
        $region15: #{_lambda_.1} parent=11 // pred_region
          _
        $region16: #{_lambda_.1} parent=11 // pred_fallthru
          _
        // Predicated region
        $region17: #{_lambda_.1} parent=11 // pred_check
          %p209 = pneg %p87
        $region18: #{_lambda_.1} parent=11 // pred_check_branch
          %211 = sbr.rel (%p209) target = $region20
        $region19: #{_lambda_.1} parent=11 // pred_region
          _
        $region20: #{_lambda_.1} parent=11 // pred_fallthru
          _
      $region12: #{_lambda_.1} parent=5 // pred_fallthru
        _
      %p212 = scmp.lt.s32.totalorder %s19, 2
      // Predicated region
      $region21: #{_lambda_.1} parent=5 // pred_check
        %p213 = pneg %p212
      $region22: #{_lambda_.1} parent=5 // pred_check_branch
        %215 = sbr.rel (%p213) target = $region24
      $region23: #{_lambda_.1} parent=5 // pred_region
        // Predicated region
        $region25: #{_lambda_.1} parent=23 // pred_check
          %p216 = pneg %p39
        $region26: #{_lambda_.1} parent=23 // pred_check_branch
          %218 = sbr.rel (%p216) target = $region28
        $region27: #{_lambda_.1} parent=23 // pred_region
          %p219 = scmp.lt.s32.totalorder %s19, 1
          %s220 = scalar_select %p219, %s19, 1
          %s221 = smul.addr %s220, 72
          %s222 = smul.addr %s221, 4
          %s223 = scalar_lea.vmem %s0, %s222
        $region28: #{_lambda_.1} parent=23 // pred_fallthru
          _
      $region24: #{_lambda_.1} parent=5 // pred_fallthru
        _
      %p224 = scmp.le.s32.totalorder 1, %s19
      %p225 = scmp.lt.s32.totalorder %s19, 3
      %p226 = pnand %p224, %p225
      %p227 = pneg %p226
      // Predicated region
      $region29: #{_lambda_.1} parent=5 // pred_check
        _
      $region30: #{_lambda_.1} parent=5 // pred_check_branch
        %229 = sbr.rel (%p226) target = $region32
      $region31: #{_lambda_.1} parent=5 // pred_region
        %s230 = ssub.s32 %s19, 1
        %p231 = scmp.lt.s32.totalorder %s24, 1
        %s232 = scalar_select %p231, %s24, 1
        %s233 = smul.addr %s232, 72
        %s234 = smul.addr %s233, 4
        %s235 = scalar_lea.vmem %s0, %s234
        %p236 = pneg %p45
        %p237 = pneg %p42
        %p238 = pneg %p66
        %p239 = pneg %p63
        %p240 = pneg %p87
        %p241 = pneg %p84
        %p242 = pneg %p113
        %p243 = pneg %p110
        %p244 = scmp.lt.s32.totalorder %s24, 1
        %s245 = scalar_select %p244, %s24, 1
        %s246 = smul.addr %s245, 8
        %s247 = smul.addr %s246, 8
        %s248 = scalar_lea.vmem %s3, %s247
        %p249 = pneg %p139
        %p250 = pneg %p136
        %s251 = sand.u32 %s126, 1
        %s252 = scalar_lea.sflag [#allocation8], %s251
        %s253 = sand.u32 %s126, 1
        %s254 = smul.addr %s253, 16
        %s255 = scalar_lea.vmem [#allocation7], %s254
        %p256 = pneg %p165
        %p257 = pneg %p162
        %s258 = sand.u32 %s24, 1
        %s259 = scalar_lea.sflag [#allocation10], %s258
        %s260 = sand.u32 %s152, 1
        %s261 = smul.addr %s260, 4
        %s262 = scalar_lea.vmem [#allocation9], %s261
        %p263 = pneg %p191
        %p264 = pneg %p188
        %s265 = sand.u32 %s24, 1
        %s266 = scalar_lea.sflag [#allocation10], %s265
        %s267 = sand.u32 %s178, 1
        %s268 = scalar_lea.vmem [#allocation11], %s267
        %p269 = scmp.lt.s32.totalorder %s24, 1
        %s270 = scalar_select %p269, %s24, 1
        %s271 = smul.addr %s270, 72
        %s272 = smul.addr %s271, 4
        %s273 = scalar_lea.vmem %s0, %s272
        %p274 = scmp.lt.s32.totalorder %s24, 1
        %s275 = scalar_select %p274, %s24, 1
        %s276 = smul.addr %s275, 8
        %s277 = smul.addr %s276, 8
        %s278 = scalar_lea.vmem %s3, %s277
        %vm280 = vcmask 1042432
        %vm281 = vsmask.f32 2304
        %vm282 = vmand %vm280, %vm281
        %v283 = vld [vmem:[#allocation4] sm:$0x7]
        %v284 = vsel %vm282, 0, %v283
        %285 = vst [vmem:[#allocation4] sm:$0x7] %v284
        %v286 = vld [vmem:[#allocation4 + $0x4] sm:$0x7]
        %v287 = vsel %vm282, 0, %v286
        %288 = vst [vmem:[#allocation4 + $0x4] sm:$0x7] %v287
        %v289 = vld [vmem:[#allocation4 + $0x8] sm:$0x7]
        %v290 = vsel %vm282, 0, %v289
        %291 = vst [vmem:[#allocation4 + $0x8] sm:$0x7] %v290
        %v292 = vld [vmem:[#allocation4 + $0xc] sm:$0x7]
        %v293 = vsel %vm282, 0, %v292
        %294 = vst [vmem:[#allocation4 + $0xc] sm:$0x7] %v293
        %v295 = vld [vmem:[#allocation4 + $0x10] sm:$0x7]
        %v296 = vsel %vm282, 0, %v295
        %297 = vst [vmem:[#allocation4 + $0x10] sm:$0x7] %v296
        %v298 = vld [vmem:[#allocation4 + $0x14] sm:$0x7]
        %v299 = vsel %vm282, 0, %v298
        %300 = vst [vmem:[#allocation4 + $0x14] sm:$0x7] %v299
        %v301 = vld [vmem:[#allocation4 + $0x18] sm:$0x7]
        %v302 = vsel %vm282, 0, %v301
        %303 = vst [vmem:[#allocation4 + $0x18] sm:$0x7] %v302
        %v304 = vld [vmem:[#allocation4 + $0x1c] sm:$0x7]
        %v305 = vsel %vm282, 0, %v304
        %306 = vst [vmem:[#allocation4 + $0x1c] sm:$0x7] %v305
        %v307 = vld [vmem:[#allocation4 + $0x20] sm:$0x7]
        %v308 = vsel %vm282, 0, %v307
        %309 = vst [vmem:[#allocation4 + $0x20] sm:$0x7] %v308
        %v310 = vld [vmem:[#allocation4 + $0x24] sm:$0x7]
        %v311 = vsel %vm282, 0, %v310
        %312 = vst [vmem:[#allocation4 + $0x24] sm:$0x7] %v311
        %v313 = vld [vmem:[#allocation4 + $0x28] sm:$0x7]
        %v314 = vsel %vm282, 0, %v313
        %315 = vst [vmem:[#allocation4 + $0x28] sm:$0x7] %v314
        %v316 = vld [vmem:[#allocation4 + $0x2c] sm:$0x7]
        %v317 = vsel %vm282, 0, %v316
        %318 = vst [vmem:[#allocation4 + $0x2c] sm:$0x7] %v317
        %v319 = vld [vmem:[#allocation4 + $0x30] sm:$0x7]
        %v320 = vsel %vm282, 0, %v319
        %321 = vst [vmem:[#allocation4 + $0x30] sm:$0x7] %v320
        %v322 = vld [vmem:[#allocation4 + $0x34] sm:$0x7]
        %v323 = vsel %vm282, 0, %v322
        %324 = vst [vmem:[#allocation4 + $0x34] sm:$0x7] %v323
        %v325 = vld [vmem:[#allocation4 + $0x38] sm:$0x7]
        %v326 = vsel %vm282, 0, %v325
        %327 = vst [vmem:[#allocation4 + $0x38] sm:$0x7] %v326
        %v328 = vld [vmem:[#allocation4 + $0x3c] sm:$0x7]
        %v329 = vsel %vm282, 0, %v328
        %330 = vst [vmem:[#allocation4 + $0x3c] sm:$0x7] %v329
        %v331 = vld [vmem:[#allocation4 + $0x40] sm:$0x7]
        %v332 = vsel %vm282, 0, %v331
        %333 = vst [vmem:[#allocation4 + $0x40] sm:$0x7] %v332
        %v334 = vld [vmem:[#allocation4 + $0x44] sm:$0x7]
        %v335 = vsel %vm282, 0, %v334
        %336 = vst [vmem:[#allocation4 + $0x44] sm:$0x7] %v335
        %v337 = vld [vmem:[#allocation4 + $0x48] sm:$0x7]
        %v338 = vsel %vm282, 0, %v337
        %339 = vst [vmem:[#allocation4 + $0x48] sm:$0x7] %v338
        %v340 = vld [vmem:[#allocation4 + $0x4c] sm:$0x7]
        %v341 = vsel %vm282, 0, %v340
        %342 = vst [vmem:[#allocation4 + $0x4c] sm:$0x7] %v341
        %vm343 = vcmask 1041408
        %vm344 = vsmask.f32 1280
        %vm345 = vmand %vm343, %vm344
        %v346 = vld [vmem:[#allocation5] sm:$0x3]
        %v347 = vsel %vm345, 0, %v346
        %348 = vst [vmem:[#allocation5] sm:$0x3] %v347
        %v349 = vld [vmem:[#allocation5 + $0x2] sm:$0x3]
        %v350 = vsel %vm345, 0, %v349
        %351 = vst [vmem:[#allocation5 + $0x2] sm:$0x3] %v350
        %v352 = vld [vmem:[#allocation5 + $0x4] sm:$0x3]
        %v353 = vsel %vm345, 0, %v352
        %354 = vst [vmem:[#allocation5 + $0x4] sm:$0x3] %v353
        %v355 = vld [vmem:[#allocation5 + $0x6] sm:$0x3]
        %v356 = vsel %vm345, 0, %v355
        %357 = vst [vmem:[#allocation5 + $0x6] sm:$0x3] %v356
        %v358 = vld [vmem:[#allocation5 + $0x8] sm:$0x3]
        %v359 = vsel %vm345, 0, %v358
        %360 = vst [vmem:[#allocation5 + $0x8] sm:$0x3] %v359
        %v361 = vld [vmem:[#allocation5 + $0xa] sm:$0x3]
        %v362 = vsel %vm345, 0, %v361
        %363 = vst [vmem:[#allocation5 + $0xa] sm:$0x3] %v362
        %v364 = vld [vmem:[#allocation5 + $0xc] sm:$0x3]
        %v365 = vsel %vm345, 0, %v364
        %366 = vst [vmem:[#allocation5 + $0xc] sm:$0x3] %v365
        %v367 = vld [vmem:[#allocation5 + $0xe] sm:$0x3]
        %v368 = vsel %vm345, 0, %v367
        %369 = vst [vmem:[#allocation5 + $0xe] sm:$0x3] %v368
        %v370 = vld [vmem:[#allocation5 + $0x10] sm:$0x3]
        %v371 = vsel %vm345, 0, %v370
        %372 = vst [vmem:[#allocation5 + $0x10] sm:$0x3] %v371
        %v373 = vld [vmem:[#allocation5 + $0x12] sm:$0x3]
        %v374 = vsel %vm345, 0, %v373
        %375 = vst [vmem:[#allocation5 + $0x12] sm:$0x3] %v374
        %v376 = vld [vmem:[#allocation5 + $0x14] sm:$0x3]
        %v377 = vsel %vm345, 0, %v376
        %378 = vst [vmem:[#allocation5 + $0x14] sm:$0x3] %v377
        %v379 = vld [vmem:[#allocation5 + $0x16] sm:$0x3]
        %v380 = vsel %vm345, 0, %v379
        %381 = vst [vmem:[#allocation5 + $0x16] sm:$0x3] %v380
        %382 = vst [vmem:[#allocation6] sm:$0x1] 0
        %383 = vst [vmem:[#allocation6 + $0x1] sm:$0x1] 0
        %384 = vst [vmem:[#allocation6 + $0x2] sm:$0x1] 0
        %385 = vst [vmem:[#allocation6 + $0x3] sm:$0x1] 0
        %386 = vst [vmem:[#allocation6 + $0x4] sm:$0x1] 0
        %387 = vst [vmem:[#allocation6 + $0x5] sm:$0x1] 0
        %388 = vst [vmem:[#allocation6 + $0x6] sm:$0x1] 0
        %389 = vst [vmem:[#allocation6 + $0x7] sm:$0x1] 0
        %v390 = vld [vmem:[%s273] sm:$0xf]
        %391 = vst [vmem:[#allocation2] sm:$0xf] %v390
        %s392 = scalar_lea.vmem %s273, 8
        %v393 = vld [vmem:[%s392] sm:$0xf]
        %394 = vst [vmem:[#allocation2 + $0x4] sm:$0xf] %v393
        %s395 = scalar_lea.vmem %s273, 16
        %v396 = vld [vmem:[%s395] sm:$0xf]
        %397 = vst [vmem:[#allocation2 + $0x8] sm:$0xf] %v396
        %s398 = scalar_lea.vmem %s273, 24
        %v399 = vld [vmem:[%s398] sm:$0xf]
        %400 = vst [vmem:[#allocation2 + $0xc] sm:$0xf] %v399
        %s401 = scalar_lea.vmem %s273, 32
        %v402 = vld [vmem:[%s401] sm:$0xf]
        %403 = vst [vmem:[#allocation2 + $0x10] sm:$0xf] %v402
        %s404 = scalar_lea.vmem %s273, 40
        %v405 = vld [vmem:[%s404] sm:$0xf]
        %406 = vst [vmem:[#allocation2 + $0x14] sm:$0xf] %v405
        %s407 = scalar_lea.vmem %s273, 48
        %v408 = vld [vmem:[%s407] sm:$0xf]
        %409 = vst [vmem:[#allocation2 + $0x18] sm:$0xf] %v408
        %s410 = scalar_lea.vmem %s273, 56
        %v411 = vld [vmem:[%s410] sm:$0xf]
        %412 = vst [vmem:[#allocation2 + $0x1c] sm:$0xf] %v411
        %v413 = vld [vmem:[%s1] sm:$0xf]
        %v414 = vld [vmem:[%s1 + $0x4] sm:$0xf]
        %v415 = vld [vmem:[%s1 + $0x8] sm:$0xf]
        %v416 = vld [vmem:[%s1 + $0xc] sm:$0xf]
        %v417 = vld [vmem:[%s1 + $0x10] sm:$0xf]
        %v418 = vld [vmem:[%s1 + $0x14] sm:$0xf]
        %v419 = vld [vmem:[%s1 + $0x18] sm:$0xf]
        %v420 = vld [vmem:[%s1 + $0x1c] sm:$0xf]
        %v421 = vld [vmem:[%s1 + $0x20] sm:$0xf]
        %v422 = vld [vmem:[%s1 + $0x24] sm:$0xf]
        %v423 = vld [vmem:[%s1 + $0x28] sm:$0xf]
        %v424 = vld [vmem:[%s1 + $0x2c] sm:$0xf]
        %v425 = vld [vmem:[%s1 + $0x30] sm:$0xf]
        %v426 = vld [vmem:[%s1 + $0x34] sm:$0xf]
        %v427 = vld [vmem:[%s1 + $0x38] sm:$0xf]
        %v428 = vld [vmem:[%s1 + $0x3c] sm:$0xf]
        %v429 = vld [vmem:[#allocation2] sm:$0xf]
        %v430 = vld [vmem:[#allocation2 + $0x4] sm:$0xf]
        %v431 = vld [vmem:[#allocation2 + $0x8] sm:$0xf]
        %v432 = vld [vmem:[#allocation2 + $0xc] sm:$0xf]
        %v433 = vld [vmem:[#allocation2 + $0x10] sm:$0xf]
        %v434 = vld [vmem:[#allocation2 + $0x14] sm:$0xf]
        %v435 = vld [vmem:[#allocation2 + $0x18] sm:$0xf]
        %v436 = vld [vmem:[#allocation2 + $0x1c] sm:$0xf]
        %s437 = scalar_lea.vmem %s273, 72
        %v438 = vld [vmem:[%s437] sm:$0xf]
        %439 = vst [vmem:[#allocation2] sm:$0xf] %v438
        %s440 = scalar_lea.vmem %s273, 80
        %v441 = vld [vmem:[%s440] sm:$0xf]
        %442 = vst [vmem:[#allocation2 + $0x4] sm:$0xf] %v441
        %s443 = scalar_lea.vmem %s273, 88
        %v444 = vld [vmem:[%s443] sm:$0xf]
        %445 = vst [vmem:[#allocation2 + $0x8] sm:$0xf] %v444
        %s446 = scalar_lea.vmem %s273, 96
        %v447 = vld [vmem:[%s446] sm:$0xf]
        %448 = vst [vmem:[#allocation2 + $0xc] sm:$0xf] %v447
        %s449 = scalar_lea.vmem %s273, 104
        %v450 = vld [vmem:[%s449] sm:$0xf]
        %451 = vst [vmem:[#allocation2 + $0x10] sm:$0xf] %v450
        %s452 = scalar_lea.vmem %s273, 112
        %v453 = vld [vmem:[%s452] sm:$0xf]
        %454 = vst [vmem:[#allocation2 + $0x14] sm:$0xf] %v453
        %s455 = scalar_lea.vmem %s273, 120
        %v456 = vld [vmem:[%s455] sm:$0xf]
        %457 = vst [vmem:[#allocation2 + $0x18] sm:$0xf] %v456
        %s458 = scalar_lea.vmem %s273, 128
        %v459 = vld [vmem:[%s458] sm:$0xf]
        %460 = vst [vmem:[#allocation2 + $0x1c] sm:$0xf] %v459
        %v461 = vld [vmem:[%s1 + $0x40] sm:$0xf]
        %v462 = vld [vmem:[%s1 + $0x44] sm:$0xf]
        %v463 = vld [vmem:[%s1 + $0x48] sm:$0xf]
        %v464 = vld [vmem:[%s1 + $0x4c] sm:$0xf]
        %v465 = vld [vmem:[%s1 + $0x50] sm:$0xf]
        %v466 = vld [vmem:[%s1 + $0x54] sm:$0xf]
        %v467 = vld [vmem:[%s1 + $0x58] sm:$0xf]
        %v468 = vld [vmem:[%s1 + $0x5c] sm:$0xf]
        %v469 = vld [vmem:[%s1 + $0x60] sm:$0xf]
        %v470 = vld [vmem:[%s1 + $0x64] sm:$0xf]
        %v471 = vld [vmem:[%s1 + $0x68] sm:$0xf]
        %v472 = vld [vmem:[%s1 + $0x6c] sm:$0xf]
        %v473 = vld [vmem:[%s1 + $0x70] sm:$0xf]
        %v474 = vld [vmem:[%s1 + $0x74] sm:$0xf]
        %v475 = vld [vmem:[%s1 + $0x78] sm:$0xf]
        %v476 = vld [vmem:[%s1 + $0x7c] sm:$0xf]
        %v477 = vld [vmem:[#allocation2] sm:$0xf]
        %v478 = vld [vmem:[#allocation2 + $0x4] sm:$0xf]
        %v479 = vld [vmem:[#allocation2 + $0x8] sm:$0xf]
        %v480 = vld [vmem:[#allocation2 + $0xc] sm:$0xf]
        %v481 = vld [vmem:[#allocation2 + $0x10] sm:$0xf]
        %v482 = vld [vmem:[#allocation2 + $0x14] sm:$0xf]
        %v483 = vld [vmem:[#allocation2 + $0x18] sm:$0xf]
        %v484 = vld [vmem:[#allocation2 + $0x1c] sm:$0xf]
        %v493 = vunpack.c.l.b16 %v477
        %v494 = vunpack.c.l.b16 %v478
        %v495 = vunpack.c.l.b16 %v479
        %v496 = vunpack.c.l.b16 %v480
        %v497 = vunpack.c.l.b16 %v481
        %v498 = vunpack.c.l.b16 %v482
        %v499 = vunpack.c.l.b16 %v483
        %v500 = vunpack.c.l.b16 %v484
        %v501 = vpack.c.b16 %v494, %v493
        %v502 = vpack.c.b16 %v496, %v495
        %v503 = vpack.c.b16 %v498, %v497
        %v504 = vpack.c.b16 %v500, %v499
        %v525 = vunpack.c.l.b16 %v461
        %v526 = vunpack.c.l.b16 %v462
        %v527 = vunpack.c.l.b16 %v463
        %v528 = vunpack.c.l.b16 %v464
        %v529 = vunpack.c.l.b16 %v465
        %v530 = vunpack.c.l.b16 %v466
        %v531 = vunpack.c.l.b16 %v467
        %v532 = vunpack.c.l.b16 %v468
        %v533 = vunpack.c.l.b16 %v469
        %v534 = vunpack.c.l.b16 %v470
        %v535 = vunpack.c.l.b16 %v471
        %v536 = vunpack.c.l.b16 %v472
        %v537 = vunpack.c.l.b16 %v473
        %v538 = vunpack.c.l.b16 %v474
        %v539 = vunpack.c.l.b16 %v475
        %v540 = vunpack.c.l.b16 %v476
        %v541 = vpack.c.b16 %v526, %v525
        %v542 = vpack.c.b16 %v528, %v527
        %v543 = vpack.c.b16 %v530, %v529
        %v544 = vpack.c.b16 %v532, %v531
        %v545 = vpack.c.b16 %v534, %v533
        %v546 = vpack.c.b16 %v536, %v535
        %v547 = vpack.c.b16 %v538, %v537
        %v548 = vpack.c.b16 %v540, %v539
        %557 = vmatprep.subr.bf16.mxu0 0
        %558 = vmatpush1.bf16.msra.mxu0 %v548
        %559 = vmatprep.subr.bf16.mxu0 0
        %560 = vmatpush1.bf16.msra.mxu0 %v547
        %561 = vmatprep.subr.bf16.mxu0 0
        %562 = vmatpush1.bf16.msra.mxu0 %v546
        %563 = vmatprep.subr.bf16.mxu0 0
        %564 = vmatpush1.bf16.msra.mxu0 %v545
        %565 = vmatprep.subr.bf16.mxu0 0
        %566 = vmatpush1.bf16.msra.mxu0 %v544
        %567 = vmatprep.subr.bf16.mxu0 0
        %568 = vmatpush1.bf16.msra.mxu0 %v543
        %569 = vmatprep.subr.bf16.mxu0 0
        %570 = vmatpush1.bf16.msra.mxu0 %v542
        %571 = vmatprep.subr.bf16.mxu0 0
        %572 = vmatpush1.bf16.msra.mxu0 %v541
        %573 = vmatprep.subr.bf16.mxu0 0
        %574 = vmatpush2.bf16.msra.mxu0 0
        %575 = vmatprep.subr.bf16.mxu0 0
        %576 = vmatpush2.bf16.msra.mxu0 0
        %577 = vmatprep.subr.bf16.mxu0 0
        %578 = vmatpush2.bf16.msra.mxu0 0
        %579 = vmatprep.subr.bf16.mxu0 0
        %580 = vmatpush2.bf16.msra.mxu0 0
        %581 = vmatprep.subr.bf16.mxu0 0
        %582 = vmatpush2.bf16.msra.mxu0 0
        %583 = vmatprep.subr.bf16.mxu0 0
        %584 = vmatpush2.bf16.msra.mxu0 0
        %585 = vmatprep.subr.bf16.mxu0 0
        %586 = vmatpush2.bf16.msra.mxu0 0
        %587 = vmatprep.subr.bf16.mxu0 0
        %588 = vmatpush2.bf16.msra.mxu0 0
        %589 = vmatprep.mubr.bf16.mxu0 0
        %590 = vmatmul.mubr.bf16.gmra.mxu0 %v501
        %v591 = vpop.f32.mrf.mxu0
        %v592 = vadd.f32 0.0, %v591
        %v593 = vpop.f32.mrf.mxu0
        %v594 = vpop.f32.mrf.mxu0
        %v595 = vadd.f32 0.0, %v594
        %v596 = vpop.f32.mrf.mxu0
        %597 = vmatprep.mubr.bf16.mxu0 0
        %598 = vmatmul.mubr.bf16.gmra.mxu0 %v502
        %v599 = vpop.f32.mrf.mxu0
        %v600 = vadd.f32 0.0, %v599
        %v601 = vpop.f32.mrf.mxu0
        %v602 = vpop.f32.mrf.mxu0
        %v603 = vadd.f32 0.0, %v602
        %v604 = vpop.f32.mrf.mxu0
        %605 = vmatprep.mubr.bf16.mxu0 0
        %606 = vmatmul.mubr.bf16.gmra.mxu0 %v503
        %v607 = vpop.f32.mrf.mxu0
        %v608 = vadd.f32 0.0, %v607
        %v609 = vpop.f32.mrf.mxu0
        %v610 = vpop.f32.mrf.mxu0
        %v611 = vadd.f32 0.0, %v610
        %v612 = vpop.f32.mrf.mxu0
        %613 = vmatprep.mubr.bf16.mxu0 0
        %614 = vmatmul.mubr.bf16.gmra.mxu0 %v504
        %v615 = vpop.f32.mrf.mxu0
        %v616 = vadd.f32 0.0, %v615
        %v617 = vpop.f32.mrf.mxu0
        %v618 = vpop.f32.mrf.mxu0
        %v619 = vadd.f32 0.0, %v618
        %v620 = vpop.f32.mrf.mxu0
        %621 = vdwg.mxu0
        %v630 = vunpack.c.l.b16 %v429
        %v631 = vunpack.c.l.b16 %v430
        %v632 = vunpack.c.l.b16 %v431
        %v633 = vunpack.c.l.b16 %v432
        %v634 = vunpack.c.l.b16 %v433
        %v635 = vunpack.c.l.b16 %v434
        %v636 = vunpack.c.l.b16 %v435
        %v637 = vunpack.c.l.b16 %v436
        %v638 = vpack.c.b16 %v631, %v630
        %v639 = vpack.c.b16 %v633, %v632
        %v640 = vpack.c.b16 %v635, %v634
        %v641 = vpack.c.b16 %v637, %v636
        %v662 = vunpack.c.l.b16 %v413
        %v663 = vunpack.c.l.b16 %v414
        %v664 = vunpack.c.l.b16 %v415
        %v665 = vunpack.c.l.b16 %v416
        %v666 = vunpack.c.l.b16 %v417
        %v667 = vunpack.c.l.b16 %v418
        %v668 = vunpack.c.l.b16 %v419
        %v669 = vunpack.c.l.b16 %v420
        %v670 = vunpack.c.l.b16 %v421
        %v671 = vunpack.c.l.b16 %v422
        %v672 = vunpack.c.l.b16 %v423
        %v673 = vunpack.c.l.b16 %v424
        %v674 = vunpack.c.l.b16 %v425
        %v675 = vunpack.c.l.b16 %v426
        %v676 = vunpack.c.l.b16 %v427
        %v677 = vunpack.c.l.b16 %v428
        %v678 = vpack.c.b16 %v663, %v662
        %v679 = vpack.c.b16 %v665, %v664
        %v680 = vpack.c.b16 %v667, %v666
        %v681 = vpack.c.b16 %v669, %v668
        %v682 = vpack.c.b16 %v671, %v670
        %v683 = vpack.c.b16 %v673, %v672
        %v684 = vpack.c.b16 %v675, %v674
        %v685 = vpack.c.b16 %v677, %v676
        %694 = vmatprep.subr.bf16.mxu0 0
        %695 = vmatpush1.bf16.msra.mxu0 %v685
        %696 = vmatprep.subr.bf16.mxu0 0
        %697 = vmatpush1.bf16.msra.mxu0 %v684
        %698 = vmatprep.subr.bf16.mxu0 0
        %699 = vmatpush1.bf16.msra.mxu0 %v683
        %700 = vmatprep.subr.bf16.mxu0 0
        %701 = vmatpush1.bf16.msra.mxu0 %v682
        %702 = vmatprep.subr.bf16.mxu0 0
        %703 = vmatpush1.bf16.msra.mxu0 %v681
        %704 = vmatprep.subr.bf16.mxu0 0
        %705 = vmatpush1.bf16.msra.mxu0 %v680
        %706 = vmatprep.subr.bf16.mxu0 0
        %707 = vmatpush1.bf16.msra.mxu0 %v679
        %708 = vmatprep.subr.bf16.mxu0 0
        %709 = vmatpush1.bf16.msra.mxu0 %v678
        %710 = vmatprep.subr.bf16.mxu0 0
        %711 = vmatpush2.bf16.msra.mxu0 0
        %712 = vmatprep.subr.bf16.mxu0 0
        %713 = vmatpush2.bf16.msra.mxu0 0
        %714 = vmatprep.subr.bf16.mxu0 0
        %715 = vmatpush2.bf16.msra.mxu0 0
        %716 = vmatprep.subr.bf16.mxu0 0
        %717 = vmatpush2.bf16.msra.mxu0 0
        %718 = vmatprep.subr.bf16.mxu0 0
        %719 = vmatpush2.bf16.msra.mxu0 0
        %720 = vmatprep.subr.bf16.mxu0 0
        %721 = vmatpush2.bf16.msra.mxu0 0
        %722 = vmatprep.subr.bf16.mxu0 0
        %723 = vmatpush2.bf16.msra.mxu0 0
        %724 = vmatprep.subr.bf16.mxu0 0
        %725 = vmatpush2.bf16.msra.mxu0 0
        %726 = vmatprep.mubr.bf16.mxu0 0
        %727 = vmatmul.mubr.bf16.gmra.mxu0 %v638
        %v728 = vpop.f32.mrf.mxu0
        %v729 = vadd.f32 %v592, %v728
        %v730 = vpop.f32.mrf.mxu0
        %v731 = vpop.f32.mrf.mxu0
        %v732 = vadd.f32 %v595, %v731
        %v733 = vpop.f32.mrf.mxu0
        %734 = vmatprep.mubr.bf16.mxu0 0
        %735 = vmatmul.mubr.bf16.gmra.mxu0 %v639
        %v736 = vpop.f32.mrf.mxu0
        %v737 = vadd.f32 %v600, %v736
        %v738 = vpop.f32.mrf.mxu0
        %v739 = vpop.f32.mrf.mxu0
        %v740 = vadd.f32 %v603, %v739
        %v741 = vpop.f32.mrf.mxu0
        %742 = vmatprep.mubr.bf16.mxu0 0
        %743 = vmatmul.mubr.bf16.gmra.mxu0 %v640
        %v744 = vpop.f32.mrf.mxu0
        %v745 = vadd.f32 %v608, %v744
        %v746 = vpop.f32.mrf.mxu0
        %v747 = vpop.f32.mrf.mxu0
        %v748 = vadd.f32 %v611, %v747
        %v749 = vpop.f32.mrf.mxu0
        %750 = vmatprep.mubr.bf16.mxu0 0
        %751 = vmatmul.mubr.bf16.gmra.mxu0 %v641
        %v752 = vpop.f32.mrf.mxu0
        %v753 = vadd.f32 %v616, %v752
        %v754 = vpop.f32.mrf.mxu0
        %v755 = vpop.f32.mrf.mxu0
        %v756 = vadd.f32 %v619, %v755
        %v757 = vpop.f32.mrf.mxu0
        %758 = vdwg.mxu0
        %v759 = vld [vmem:[%s273] sm:$0xf]
        %v760 = vld [vmem:[%s273 + $0x4] sm:$0x1]
        %vm761 = vsmask.f32 3328
        %vm762 = vsmask.f32 7440
        %vm763 = vmor %vm761, %vm762
        %v765 = vshrl.u32 %v759, 16
        %v767 = vrot.slane %v765, 4
        %v768 = vshll.u32 %v759, 16
        %v770 = vrot.slane %v768, 5
        %v771 = vor.u32 %v767, %v770
        %v772 = vrot.slane %v771, 4
        %v774 = vshll.u32 %v760, 16
        %v776 = vrot.slane %v774, 5
        %v777 = vsel %vm763, %v772, %v776
        %779 = vst [vmem:[#allocation2] sm:$0xf] %v777
        %v780 = vld [vmem:[%s392] sm:$0xf]
        %v781 = vld [vmem:[%s392 + $0x4] sm:$0x1]
        %v783 = vshrl.u32 %v780, 16
        %v785 = vrot.slane %v783, 4
        %v786 = vshll.u32 %v780, 16
        %v788 = vrot.slane %v786, 5
        %v789 = vor.u32 %v785, %v788
        %v790 = vrot.slane %v789, 4
        %v792 = vshll.u32 %v781, 16
        %v794 = vrot.slane %v792, 5
        %v795 = vsel %vm763, %v790, %v794
        %797 = vst [vmem:[#allocation2 + $0x4] sm:$0xf] %v795
        %v798 = vld [vmem:[%s395] sm:$0xf]
        %v799 = vld [vmem:[%s395 + $0x4] sm:$0x1]
        %v801 = vshrl.u32 %v798, 16
        %v803 = vrot.slane %v801, 4
        %v804 = vshll.u32 %v798, 16
        %v806 = vrot.slane %v804, 5
        %v807 = vor.u32 %v803, %v806
        %v808 = vrot.slane %v807, 4
        %v810 = vshll.u32 %v799, 16
        %v812 = vrot.slane %v810, 5
        %v813 = vsel %vm763, %v808, %v812
        %815 = vst [vmem:[#allocation2 + $0x8] sm:$0xf] %v813
        %v816 = vld [vmem:[%s398] sm:$0xf]
        %v817 = vld [vmem:[%s398 + $0x4] sm:$0x1]
        %v819 = vshrl.u32 %v816, 16
        %v821 = vrot.slane %v819, 4
        %v822 = vshll.u32 %v816, 16
        %v824 = vrot.slane %v822, 5
        %v825 = vor.u32 %v821, %v824
        %v826 = vrot.slane %v825, 4
        %v828 = vshll.u32 %v817, 16
        %v830 = vrot.slane %v828, 5
        %v831 = vsel %vm763, %v826, %v830
        %833 = vst [vmem:[#allocation2 + $0xc] sm:$0xf] %v831
        %v834 = vld [vmem:[%s401] sm:$0xf]
        %v835 = vld [vmem:[%s401 + $0x4] sm:$0x1]
        %v837 = vshrl.u32 %v834, 16
        %v839 = vrot.slane %v837, 4
        %v840 = vshll.u32 %v834, 16
        %v842 = vrot.slane %v840, 5
        %v843 = vor.u32 %v839, %v842
        %v844 = vrot.slane %v843, 4
        %v846 = vshll.u32 %v835, 16
        %v848 = vrot.slane %v846, 5
        %v849 = vsel %vm763, %v844, %v848
        %851 = vst [vmem:[#allocation2 + $0x10] sm:$0xf] %v849
        %v852 = vld [vmem:[%s404] sm:$0xf]
        %v853 = vld [vmem:[%s404 + $0x4] sm:$0x1]
        %v855 = vshrl.u32 %v852, 16
        %v857 = vrot.slane %v855, 4
        %v858 = vshll.u32 %v852, 16
        %v860 = vrot.slane %v858, 5
        %v861 = vor.u32 %v857, %v860
        %v862 = vrot.slane %v861, 4
        %v864 = vshll.u32 %v853, 16
        %v866 = vrot.slane %v864, 5
        %v867 = vsel %vm763, %v862, %v866
        %869 = vst [vmem:[#allocation2 + $0x14] sm:$0xf] %v867
        %v870 = vld [vmem:[%s407] sm:$0xf]
        %v871 = vld [vmem:[%s407 + $0x4] sm:$0x1]
        %v873 = vshrl.u32 %v870, 16
        %v875 = vrot.slane %v873, 4
        %v876 = vshll.u32 %v870, 16
        %v878 = vrot.slane %v876, 5
        %v879 = vor.u32 %v875, %v878
        %v880 = vrot.slane %v879, 4
        %v882 = vshll.u32 %v871, 16
        %v884 = vrot.slane %v882, 5
        %v885 = vsel %vm763, %v880, %v884
        %887 = vst [vmem:[#allocation2 + $0x18] sm:$0xf] %v885
        %v888 = vld [vmem:[%s410] sm:$0xf]
        %v889 = vld [vmem:[%s410 + $0x4] sm:$0x1]
        %v891 = vshrl.u32 %v888, 16
        %v893 = vrot.slane %v891, 4
        %v894 = vshll.u32 %v888, 16
        %v896 = vrot.slane %v894, 5
        %v897 = vor.u32 %v893, %v896
        %v898 = vrot.slane %v897, 4
        %v900 = vshll.u32 %v889, 16
        %v902 = vrot.slane %v900, 5
        %v903 = vsel %vm763, %v898, %v902
        %905 = vst [vmem:[#allocation2 + $0x1c] sm:$0xf] %v903
        %v906 = vld [vmem:[%s1 + $0x80] sm:$0xf]
        %v907 = vld [vmem:[%s1 + $0x84] sm:$0xf]
        %v908 = vld [vmem:[%s1 + $0x88] sm:$0xf]
        %v909 = vld [vmem:[%s1 + $0x8c] sm:$0xf]
        %v910 = vld [vmem:[%s1 + $0x90] sm:$0xf]
        %v911 = vld [vmem:[%s1 + $0x94] sm:$0xf]
        %v912 = vld [vmem:[%s1 + $0x98] sm:$0xf]
        %v913 = vld [vmem:[%s1 + $0x9c] sm:$0xf]
        %v914 = vld [vmem:[%s1 + $0xa0] sm:$0xf]
        %v915 = vld [vmem:[%s1 + $0xa4] sm:$0xf]
        %v916 = vld [vmem:[%s1 + $0xa8] sm:$0xf]
        %v917 = vld [vmem:[%s1 + $0xac] sm:$0xf]
        %v918 = vld [vmem:[%s1 + $0xb0] sm:$0xf]
        %v919 = vld [vmem:[%s1 + $0xb4] sm:$0xf]
        %v920 = vld [vmem:[%s1 + $0xb8] sm:$0xf]
        %v921 = vld [vmem:[%s1 + $0xbc] sm:$0xf]
        %v922 = vld [vmem:[#allocation2] sm:$0xf]
        %v923 = vld [vmem:[#allocation2 + $0x4] sm:$0xf]
        %v924 = vld [vmem:[#allocation2 + $0x8] sm:$0xf]
        %v925 = vld [vmem:[#allocation2 + $0xc] sm:$0xf]
        %v926 = vld [vmem:[#allocation2 + $0x10] sm:$0xf]
        %v927 = vld [vmem:[#allocation2 + $0x14] sm:$0xf]
        %v928 = vld [vmem:[#allocation2 + $0x18] sm:$0xf]
        %v929 = vld [vmem:[#allocation2 + $0x1c] sm:$0xf]
        %v938 = vunpack.c.l.b16 %v922
        %v939 = vunpack.c.l.b16 %v923
        %v940 = vunpack.c.l.b16 %v924
        %v941 = vunpack.c.l.b16 %v925
        %v942 = vunpack.c.l.b16 %v926
        %v943 = vunpack.c.l.b16 %v927
        %v944 = vunpack.c.l.b16 %v928
        %v945 = vunpack.c.l.b16 %v929
        %v946 = vpack.c.b16 %v939, %v938
        %v947 = vpack.c.b16 %v941, %v940
        %v948 = vpack.c.b16 %v943, %v942
        %v949 = vpack.c.b16 %v945, %v944
        %v970 = vunpack.c.l.b16 %v906
        %v971 = vunpack.c.l.b16 %v907
        %v972 = vunpack.c.l.b16 %v908
        %v973 = vunpack.c.l.b16 %v909
        %v974 = vunpack.c.l.b16 %v910
        %v975 = vunpack.c.l.b16 %v911
        %v976 = vunpack.c.l.b16 %v912
        %v977 = vunpack.c.l.b16 %v913
        %v978 = vunpack.c.l.b16 %v914
        %v979 = vunpack.c.l.b16 %v915
        %v980 = vunpack.c.l.b16 %v916
        %v981 = vunpack.c.l.b16 %v917
        %v982 = vunpack.c.l.b16 %v918
        %v983 = vunpack.c.l.b16 %v919
        %v984 = vunpack.c.l.b16 %v920
        %v985 = vunpack.c.l.b16 %v921
        %v986 = vpack.c.b16 %v971, %v970
        %v987 = vpack.c.b16 %v973, %v972
        %v988 = vpack.c.b16 %v975, %v974
        %v989 = vpack.c.b16 %v977, %v976
        %v990 = vpack.c.b16 %v979, %v978
        %v991 = vpack.c.b16 %v981, %v980
        %v992 = vpack.c.b16 %v983, %v982
        %v993 = vpack.c.b16 %v985, %v984
        %1002 = vmatprep.subr.bf16.mxu0 0
        %1003 = vmatpush1.bf16.msra.mxu0 %v993
        %1004 = vmatprep.subr.bf16.mxu0 0
        %1005 = vmatpush1.bf16.msra.mxu0 %v992
        %1006 = vmatprep.subr.bf16.mxu0 0
        %1007 = vmatpush1.bf16.msra.mxu0 %v991
        %1008 = vmatprep.subr.bf16.mxu0 0
        %1009 = vmatpush1.bf16.msra.mxu0 %v990
        %1010 = vmatprep.subr.bf16.mxu0 0
        %1011 = vmatpush1.bf16.msra.mxu0 %v989
        %1012 = vmatprep.subr.bf16.mxu0 0
        %1013 = vmatpush1.bf16.msra.mxu0 %v988
        %1014 = vmatprep.subr.bf16.mxu0 0
        %1015 = vmatpush1.bf16.msra.mxu0 %v987
        %1016 = vmatprep.subr.bf16.mxu0 0
        %1017 = vmatpush1.bf16.msra.mxu0 %v986
        %1018 = vmatprep.subr.bf16.mxu0 0
        %1019 = vmatpush2.bf16.msra.mxu0 0
        %1020 = vmatprep.subr.bf16.mxu0 0
        %1021 = vmatpush2.bf16.msra.mxu0 0
        %1022 = vmatprep.subr.bf16.mxu0 0
        %1023 = vmatpush2.bf16.msra.mxu0 0
        %1024 = vmatprep.subr.bf16.mxu0 0
        %1025 = vmatpush2.bf16.msra.mxu0 0
        %1026 = vmatprep.subr.bf16.mxu0 0
        %1027 = vmatpush2.bf16.msra.mxu0 0
        %1028 = vmatprep.subr.bf16.mxu0 0
        %1029 = vmatpush2.bf16.msra.mxu0 0
        %1030 = vmatprep.subr.bf16.mxu0 0
        %1031 = vmatpush2.bf16.msra.mxu0 0
        %1032 = vmatprep.subr.bf16.mxu0 0
        %1033 = vmatpush2.bf16.msra.mxu0 0
        %1034 = vmatprep.mubr.bf16.mxu0 0
        %1035 = vmatmul.mubr.bf16.gmra.mxu0 %v946
        %v1036 = vpop.f32.mrf.mxu0
        %v1037 = vadd.f32 0.0, %v1036
        %v1038 = vpop.f32.mrf.mxu0
        %v1039 = vpop.f32.mrf.mxu0
        %v1040 = vadd.f32 0.0, %v1039
        %v1041 = vpop.f32.mrf.mxu0
        %1042 = vmatprep.mubr.bf16.mxu0 0
        %1043 = vmatmul.mubr.bf16.gmra.mxu0 %v947
        %v1044 = vpop.f32.mrf.mxu0
        %v1045 = vadd.f32 0.0, %v1044
        %v1046 = vpop.f32.mrf.mxu0
        %v1047 = vpop.f32.mrf.mxu0
        %v1048 = vadd.f32 0.0, %v1047
        %v1049 = vpop.f32.mrf.mxu0
        %1050 = vmatprep.mubr.bf16.mxu0 0
        %1051 = vmatmul.mubr.bf16.gmra.mxu0 %v948
        %v1052 = vpop.f32.mrf.mxu0
        %v1053 = vadd.f32 0.0, %v1052
        %v1054 = vpop.f32.mrf.mxu0
        %v1055 = vpop.f32.mrf.mxu0
        %v1056 = vadd.f32 0.0, %v1055
        %v1057 = vpop.f32.mrf.mxu0
        %1058 = vmatprep.mubr.bf16.mxu0 0
        %1059 = vmatmul.mubr.bf16.gmra.mxu0 %v949
        %v1060 = vpop.f32.mrf.mxu0
        %v1061 = vadd.f32 0.0, %v1060
        %v1062 = vpop.f32.mrf.mxu0
        %v1063 = vpop.f32.mrf.mxu0
        %v1064 = vadd.f32 0.0, %v1063
        %v1065 = vpop.f32.mrf.mxu0
        %1066 = vdwg.mxu0
        %v1067 = vadd.f32 %v729, %v1037
        %v1068 = vadd.f32 %v732, %v1040
        %v1069 = vadd.f32 %v737, %v1045
        %v1070 = vadd.f32 %v740, %v1048
        %v1071 = vadd.f32 %v745, %v1053
        %v1072 = vadd.f32 %v748, %v1056
        %v1073 = vadd.f32 %v753, %v1061
        %v1074 = vadd.f32 %v756, %v1064
        %s1075 = scalar_lea.vmem %s273, 144
        %v1076 = vld [vmem:[%s1075] sm:$0xf]
        %1077 = vst [vmem:[#allocation2] sm:$0xf] %v1076
        %s1078 = scalar_lea.vmem %s273, 152
        %v1079 = vld [vmem:[%s1078] sm:$0xf]
        %1080 = vst [vmem:[#allocation2 + $0x4] sm:$0xf] %v1079
        %s1081 = scalar_lea.vmem %s273, 160
        %v1082 = vld [vmem:[%s1081] sm:$0xf]
        %1083 = vst [vmem:[#allocation2 + $0x8] sm:$0xf] %v1082
        %s1084 = scalar_lea.vmem %s273, 168
        %v1085 = vld [vmem:[%s1084] sm:$0xf]
        %1086 = vst [vmem:[#allocation2 + $0xc] sm:$0xf] %v1085
        %s1087 = scalar_lea.vmem %s273, 176
        %v1088 = vld [vmem:[%s1087] sm:$0xf]
        %1089 = vst [vmem:[#allocation2 + $0x10] sm:$0xf] %v1088
        %s1090 = scalar_lea.vmem %s273, 184
        %v1091 = vld [vmem:[%s1090] sm:$0xf]
        %1092 = vst [vmem:[#allocation2 + $0x14] sm:$0xf] %v1091
        %s1093 = scalar_lea.vmem %s273, 192
        %v1094 = vld [vmem:[%s1093] sm:$0xf]
        %1095 = vst [vmem:[#allocation2 + $0x18] sm:$0xf] %v1094
        %s1096 = scalar_lea.vmem %s273, 200
        %v1097 = vld [vmem:[%s1096] sm:$0xf]
        %1098 = vst [vmem:[#allocation2 + $0x1c] sm:$0xf] %v1097
        %v1099 = vld [vmem:[%s1 + $0xc0] sm:$0xf]
        %v1100 = vld [vmem:[%s1 + $0xc4] sm:$0xf]
        %v1101 = vld [vmem:[%s1 + $0xc8] sm:$0xf]
        %v1102 = vld [vmem:[%s1 + $0xcc] sm:$0xf]
        %v1103 = vld [vmem:[%s1 + $0xd0] sm:$0xf]
        %v1104 = vld [vmem:[%s1 + $0xd4] sm:$0xf]
        %v1105 = vld [vmem:[%s1 + $0xd8] sm:$0xf]
        %v1106 = vld [vmem:[%s1 + $0xdc] sm:$0xf]
        %v1107 = vld [vmem:[%s1 + $0xe0] sm:$0xf]
        %v1108 = vld [vmem:[%s1 + $0xe4] sm:$0xf]
        %v1109 = vld [vmem:[%s1 + $0xe8] sm:$0xf]
        %v1110 = vld [vmem:[%s1 + $0xec] sm:$0xf]
        %v1111 = vld [vmem:[%s1 + $0xf0] sm:$0xf]
        %v1112 = vld [vmem:[%s1 + $0xf4] sm:$0xf]
        %v1113 = vld [vmem:[%s1 + $0xf8] sm:$0xf]
        %v1114 = vld [vmem:[%s1 + $0xfc] sm:$0xf]
        %v1115 = vld [vmem:[#allocation2] sm:$0xf]
        %v1116 = vld [vmem:[#allocation2 + $0x4] sm:$0xf]
        %v1117 = vld [vmem:[#allocation2 + $0x8] sm:$0xf]
        %v1118 = vld [vmem:[#allocation2 + $0xc] sm:$0xf]
        %v1119 = vld [vmem:[#allocation2 + $0x10] sm:$0xf]
        %v1120 = vld [vmem:[#allocation2 + $0x14] sm:$0xf]
        %v1121 = vld [vmem:[#allocation2 + $0x18] sm:$0xf]
        %v1122 = vld [vmem:[#allocation2 + $0x1c] sm:$0xf]
        %v1131 = vunpack.c.l.b16 %v1115
        %v1132 = vunpack.c.l.b16 %v1116
        %v1133 = vunpack.c.l.b16 %v1117
        %v1134 = vunpack.c.l.b16 %v1118
        %v1135 = vunpack.c.l.b16 %v1119
        %v1136 = vunpack.c.l.b16 %v1120
        %v1137 = vunpack.c.l.b16 %v1121
        %v1138 = vunpack.c.l.b16 %v1122
        %v1139 = vpack.c.b16 %v1132, %v1131
        %v1140 = vpack.c.b16 %v1134, %v1133
        %v1141 = vpack.c.b16 %v1136, %v1135
        %v1142 = vpack.c.b16 %v1138, %v1137
        %v1163 = vunpack.c.l.b16 %v1099
        %v1164 = vunpack.c.l.b16 %v1100
        %v1165 = vunpack.c.l.b16 %v1101
        %v1166 = vunpack.c.l.b16 %v1102
        %v1167 = vunpack.c.l.b16 %v1103
        %v1168 = vunpack.c.l.b16 %v1104
        %v1169 = vunpack.c.l.b16 %v1105
        %v1170 = vunpack.c.l.b16 %v1106
        %v1171 = vunpack.c.l.b16 %v1107
        %v1172 = vunpack.c.l.b16 %v1108
        %v1173 = vunpack.c.l.b16 %v1109
        %v1174 = vunpack.c.l.b16 %v1110
        %v1175 = vunpack.c.l.b16 %v1111
        %v1176 = vunpack.c.l.b16 %v1112
        %v1177 = vunpack.c.l.b16 %v1113
        %v1178 = vunpack.c.l.b16 %v1114
        %v1179 = vpack.c.b16 %v1164, %v1163
        %v1180 = vpack.c.b16 %v1166, %v1165
        %v1181 = vpack.c.b16 %v1168, %v1167
        %v1182 = vpack.c.b16 %v1170, %v1169
        %v1183 = vpack.c.b16 %v1172, %v1171
        %v1184 = vpack.c.b16 %v1174, %v1173
        %v1185 = vpack.c.b16 %v1176, %v1175
        %v1186 = vpack.c.b16 %v1178, %v1177
        %1195 = vmatprep.subr.bf16.mxu0 0
        %1196 = vmatpush1.bf16.msra.mxu0 %v1186
        %1197 = vmatprep.subr.bf16.mxu0 0
        %1198 = vmatpush1.bf16.msra.mxu0 %v1185
        %1199 = vmatprep.subr.bf16.mxu0 0
        %1200 = vmatpush1.bf16.msra.mxu0 %v1184
        %1201 = vmatprep.subr.bf16.mxu0 0
        %1202 = vmatpush1.bf16.msra.mxu0 %v1183
        %1203 = vmatprep.subr.bf16.mxu0 0
        %1204 = vmatpush1.bf16.msra.mxu0 %v1182
        %1205 = vmatprep.subr.bf16.mxu0 0
        %1206 = vmatpush1.bf16.msra.mxu0 %v1181
        %1207 = vmatprep.subr.bf16.mxu0 0
        %1208 = vmatpush1.bf16.msra.mxu0 %v1180
        %1209 = vmatprep.subr.bf16.mxu0 0
        %1210 = vmatpush1.bf16.msra.mxu0 %v1179
        %1211 = vmatprep.subr.bf16.mxu0 0
        %1212 = vmatpush2.bf16.msra.mxu0 0
        %1213 = vmatprep.subr.bf16.mxu0 0
        %1214 = vmatpush2.bf16.msra.mxu0 0
        %1215 = vmatprep.subr.bf16.mxu0 0
        %1216 = vmatpush2.bf16.msra.mxu0 0
        %1217 = vmatprep.subr.bf16.mxu0 0
        %1218 = vmatpush2.bf16.msra.mxu0 0
        %1219 = vmatprep.subr.bf16.mxu0 0
        %1220 = vmatpush2.bf16.msra.mxu0 0
        %1221 = vmatprep.subr.bf16.mxu0 0
        %1222 = vmatpush2.bf16.msra.mxu0 0
        %1223 = vmatprep.subr.bf16.mxu0 0
        %1224 = vmatpush2.bf16.msra.mxu0 0
        %1225 = vmatprep.subr.bf16.mxu0 0
        %1226 = vmatpush2.bf16.msra.mxu0 0
        %1227 = vmatprep.mubr.bf16.mxu0 0
        %1228 = vmatmul.mubr.bf16.gmra.mxu0 %v1139
        %v1229 = vpop.f32.mrf.mxu0
        %v1230 = vadd.f32 0.0, %v1229
        %v1231 = vpop.f32.mrf.mxu0
        %v1232 = vpop.f32.mrf.mxu0
        %v1233 = vadd.f32 0.0, %v1232
        %v1234 = vpop.f32.mrf.mxu0
        %1235 = vmatprep.mubr.bf16.mxu0 0
        %1236 = vmatmul.mubr.bf16.gmra.mxu0 %v1140
        %v1237 = vpop.f32.mrf.mxu0
        %v1238 = vadd.f32 0.0, %v1237
        %v1239 = vpop.f32.mrf.mxu0
        %v1240 = vpop.f32.mrf.mxu0
        %v1241 = vadd.f32 0.0, %v1240
        %v1242 = vpop.f32.mrf.mxu0
        %1243 = vmatprep.mubr.bf16.mxu0 0
        %1244 = vmatmul.mubr.bf16.gmra.mxu0 %v1141
        %v1245 = vpop.f32.mrf.mxu0
        %v1246 = vadd.f32 0.0, %v1245
        %v1247 = vpop.f32.mrf.mxu0
        %v1248 = vpop.f32.mrf.mxu0
        %v1249 = vadd.f32 0.0, %v1248
        %v1250 = vpop.f32.mrf.mxu0
        %1251 = vmatprep.mubr.bf16.mxu0 0
        %1252 = vmatmul.mubr.bf16.gmra.mxu0 %v1142
        %v1253 = vpop.f32.mrf.mxu0
        %v1254 = vadd.f32 0.0, %v1253
        %v1255 = vpop.f32.mrf.mxu0
        %v1256 = vpop.f32.mrf.mxu0
        %v1257 = vadd.f32 0.0, %v1256
        %v1258 = vpop.f32.mrf.mxu0
        %1259 = vdwg.mxu0
        %v1260 = vadd.f32 %v1067, %v1230
        %v1261 = vadd.f32 %v1068, %v1233
        %v1262 = vadd.f32 %v1069, %v1238
        %v1263 = vadd.f32 %v1070, %v1241
        %v1264 = vadd.f32 %v1071, %v1246
        %v1265 = vadd.f32 %v1072, %v1249
        %v1266 = vadd.f32 %v1073, %v1254
        %v1267 = vadd.f32 %v1074, %v1257
        %s1268 = scalar_lea.vmem %s273, 216
        %v1269 = vld [vmem:[%s1268] sm:$0xf]
        %1270 = vst [vmem:[#allocation2] sm:$0xf] %v1269
        %s1271 = scalar_lea.vmem %s273, 224
        %v1272 = vld [vmem:[%s1271] sm:$0xf]
        %1273 = vst [vmem:[#allocation2 + $0x4] sm:$0xf] %v1272
        %s1274 = scalar_lea.vmem %s273, 232
        %v1275 = vld [vmem:[%s1274] sm:$0xf]
        %1276 = vst [vmem:[#allocation2 + $0x8] sm:$0xf] %v1275
        %s1277 = scalar_lea.vmem %s273, 240
        %v1278 = vld [vmem:[%s1277] sm:$0xf]
        %1279 = vst [vmem:[#allocation2 + $0xc] sm:$0xf] %v1278
        %s1280 = scalar_lea.vmem %s273, 248
        %v1281 = vld [vmem:[%s1280] sm:$0xf]
        %1282 = vst [vmem:[#allocation2 + $0x10] sm:$0xf] %v1281
        %s1283 = scalar_lea.vmem %s273, 256
        %v1284 = vld [vmem:[%s1283] sm:$0xf]
        %1285 = vst [vmem:[#allocation2 + $0x14] sm:$0xf] %v1284
        %s1286 = scalar_lea.vmem %s273, 264
        %v1287 = vld [vmem:[%s1286] sm:$0xf]
        %1288 = vst [vmem:[#allocation2 + $0x18] sm:$0xf] %v1287
        %s1289 = scalar_lea.vmem %s273, 272
        %v1290 = vld [vmem:[%s1289] sm:$0xf]
        %1291 = vst [vmem:[#allocation2 + $0x1c] sm:$0xf] %v1290
        %v1292 = vld [vmem:[%s1 + $0x100] sm:$0xf]
        %v1293 = vld [vmem:[%s1 + $0x104] sm:$0xf]
        %v1294 = vld [vmem:[%s1 + $0x108] sm:$0xf]
        %v1295 = vld [vmem:[%s1 + $0x10c] sm:$0xf]
        %v1296 = vld [vmem:[%s1 + $0x110] sm:$0xf]
        %v1297 = vld [vmem:[%s1 + $0x114] sm:$0xf]
        %v1298 = vld [vmem:[%s1 + $0x118] sm:$0xf]
        %v1299 = vld [vmem:[%s1 + $0x11c] sm:$0xf]
        %v1300 = vld [vmem:[%s1 + $0x120] sm:$0xf]
        %v1301 = vld [vmem:[%s1 + $0x124] sm:$0xf]
        %v1302 = vld [vmem:[%s1 + $0x128] sm:$0xf]
        %v1303 = vld [vmem:[%s1 + $0x12c] sm:$0xf]
        %v1304 = vld [vmem:[%s1 + $0x130] sm:$0xf]
        %v1305 = vld [vmem:[%s1 + $0x134] sm:$0xf]
        %v1306 = vld [vmem:[%s1 + $0x138] sm:$0xf]
        %v1307 = vld [vmem:[%s1 + $0x13c] sm:$0xf]
        %v1308 = vld [vmem:[#allocation2] sm:$0xf]
        %v1309 = vld [vmem:[#allocation2 + $0x4] sm:$0xf]
        %v1310 = vld [vmem:[#allocation2 + $0x8] sm:$0xf]
        %v1311 = vld [vmem:[#allocation2 + $0xc] sm:$0xf]
        %v1312 = vld [vmem:[#allocation2 + $0x10] sm:$0xf]
        %v1313 = vld [vmem:[#allocation2 + $0x14] sm:$0xf]
        %v1314 = vld [vmem:[#allocation2 + $0x18] sm:$0xf]
        %v1315 = vld [vmem:[#allocation2 + $0x1c] sm:$0xf]
        %v1324 = vunpack.c.l.b16 %v1308
        %v1325 = vunpack.c.l.b16 %v1309
        %v1326 = vunpack.c.l.b16 %v1310
        %v1327 = vunpack.c.l.b16 %v1311
        %v1328 = vunpack.c.l.b16 %v1312
        %v1329 = vunpack.c.l.b16 %v1313
        %v1330 = vunpack.c.l.b16 %v1314
        %v1331 = vunpack.c.l.b16 %v1315
        %v1332 = vpack.c.b16 %v1325, %v1324
        %v1333 = vpack.c.b16 %v1327, %v1326
        %v1334 = vpack.c.b16 %v1329, %v1328
        %v1335 = vpack.c.b16 %v1331, %v1330
        %v1356 = vunpack.c.l.b16 %v1292
        %v1357 = vunpack.c.l.b16 %v1293
        %v1358 = vunpack.c.l.b16 %v1294
        %v1359 = vunpack.c.l.b16 %v1295
        %v1360 = vunpack.c.l.b16 %v1296
        %v1361 = vunpack.c.l.b16 %v1297
        %v1362 = vunpack.c.l.b16 %v1298
        %v1363 = vunpack.c.l.b16 %v1299
        %v1364 = vunpack.c.l.b16 %v1300
        %v1365 = vunpack.c.l.b16 %v1301
        %v1366 = vunpack.c.l.b16 %v1302
        %v1367 = vunpack.c.l.b16 %v1303
        %v1368 = vunpack.c.l.b16 %v1304
        %v1369 = vunpack.c.l.b16 %v1305
        %v1370 = vunpack.c.l.b16 %v1306
        %v1371 = vunpack.c.l.b16 %v1307
        %v1372 = vpack.c.b16 %v1357, %v1356
        %v1373 = vpack.c.b16 %v1359, %v1358
        %v1374 = vpack.c.b16 %v1361, %v1360
        %v1375 = vpack.c.b16 %v1363, %v1362
        %v1376 = vpack.c.b16 %v1365, %v1364
        %v1377 = vpack.c.b16 %v1367, %v1366
        %v1378 = vpack.c.b16 %v1369, %v1368
        %v1379 = vpack.c.b16 %v1371, %v1370
        %1388 = vmatprep.subr.bf16.mxu0 0
        %1389 = vmatpush1.bf16.msra.mxu0 %v1379
        %1390 = vmatprep.subr.bf16.mxu0 0
        %1391 = vmatpush1.bf16.msra.mxu0 %v1378
        %1392 = vmatprep.subr.bf16.mxu0 0
        %1393 = vmatpush1.bf16.msra.mxu0 %v1377
        %1394 = vmatprep.subr.bf16.mxu0 0
        %1395 = vmatpush1.bf16.msra.mxu0 %v1376
        %1396 = vmatprep.subr.bf16.mxu0 0
        %1397 = vmatpush1.bf16.msra.mxu0 %v1375
        %1398 = vmatprep.subr.bf16.mxu0 0
        %1399 = vmatpush1.bf16.msra.mxu0 %v1374
        %1400 = vmatprep.subr.bf16.mxu0 0
        %1401 = vmatpush1.bf16.msra.mxu0 %v1373
        %1402 = vmatprep.subr.bf16.mxu0 0
        %1403 = vmatpush1.bf16.msra.mxu0 %v1372
        %1404 = vmatprep.subr.bf16.mxu0 0
        %1405 = vmatpush2.bf16.msra.mxu0 0
        %1406 = vmatprep.subr.bf16.mxu0 0
        %1407 = vmatpush2.bf16.msra.mxu0 0
        %1408 = vmatprep.subr.bf16.mxu0 0
        %1409 = vmatpush2.bf16.msra.mxu0 0
        %1410 = vmatprep.subr.bf16.mxu0 0
        %1411 = vmatpush2.bf16.msra.mxu0 0
        %1412 = vmatprep.subr.bf16.mxu0 0
        %1413 = vmatpush2.bf16.msra.mxu0 0
        %1414 = vmatprep.subr.bf16.mxu0 0
        %1415 = vmatpush2.bf16.msra.mxu0 0
        %1416 = vmatprep.subr.bf16.mxu0 0
        %1417 = vmatpush2.bf16.msra.mxu0 0
        %1418 = vmatprep.subr.bf16.mxu0 0
        %1419 = vmatpush2.bf16.msra.mxu0 0
        %1420 = vmatprep.mubr.bf16.mxu0 0
        %1421 = vmatmul.mubr.bf16.gmra.mxu0 %v1332
        %v1422 = vpop.f32.mrf.mxu0
        %v1423 = vadd.f32 0.0, %v1422
        %v1424 = vpop.f32.mrf.mxu0
        %v1425 = vpop.f32.mrf.mxu0
        %v1426 = vadd.f32 0.0, %v1425
        %v1427 = vpop.f32.mrf.mxu0
        %1428 = vmatprep.mubr.bf16.mxu0 0
        %1429 = vmatmul.mubr.bf16.gmra.mxu0 %v1333
        %v1430 = vpop.f32.mrf.mxu0
        %v1431 = vadd.f32 0.0, %v1430
        %v1432 = vpop.f32.mrf.mxu0
        %v1433 = vpop.f32.mrf.mxu0
        %v1434 = vadd.f32 0.0, %v1433
        %v1435 = vpop.f32.mrf.mxu0
        %1436 = vmatprep.mubr.bf16.mxu0 0
        %1437 = vmatmul.mubr.bf16.gmra.mxu0 %v1334
        %v1438 = vpop.f32.mrf.mxu0
        %v1439 = vadd.f32 0.0, %v1438
        %v1440 = vpop.f32.mrf.mxu0
        %v1441 = vpop.f32.mrf.mxu0
        %v1442 = vadd.f32 0.0, %v1441
        %v1443 = vpop.f32.mrf.mxu0
        %1444 = vmatprep.mubr.bf16.mxu0 0
        %1445 = vmatmul.mubr.bf16.gmra.mxu0 %v1335
        %v1446 = vpop.f32.mrf.mxu0
        %v1447 = vadd.f32 0.0, %v1446
        %v1448 = vpop.f32.mrf.mxu0
        %v1449 = vpop.f32.mrf.mxu0
        %v1450 = vadd.f32 0.0, %v1449
        %v1451 = vpop.f32.mrf.mxu0
        %1452 = vdwg.mxu0
        %v1453 = vadd.f32 %v1260, %v1423
        %v1454 = vadd.f32 %v1261, %v1426
        %v1455 = vadd.f32 %v1262, %v1431
        %v1456 = vadd.f32 %v1263, %v1434
        %v1457 = vadd.f32 %v1264, %v1439
        %v1458 = vadd.f32 %v1265, %v1442
        %v1459 = vadd.f32 %v1266, %v1447
        %v1460 = vadd.f32 %v1267, %v1450
        %v1461 = vld [vmem:[%s1075] sm:$0xf]
        %v1462 = vld [vmem:[%s1075 + $0x4] sm:$0x1]
        %v1464 = vshrl.u32 %v1461, 16
        %v1466 = vrot.slane %v1464, 4
        %v1467 = vshll.u32 %v1461, 16
        %v1469 = vrot.slane %v1467, 5
        %v1470 = vor.u32 %v1466, %v1469
        %v1471 = vrot.slane %v1470, 4
        %v1473 = vshll.u32 %v1462, 16
        %v1475 = vrot.slane %v1473, 5
        %v1476 = vsel %vm763, %v1471, %v1475
        %1478 = vst [vmem:[#allocation2] sm:$0xf] %v1476
        %v1479 = vld [vmem:[%s1078] sm:$0xf]
        %v1480 = vld [vmem:[%s1078 + $0x4] sm:$0x1]
        %v1482 = vshrl.u32 %v1479, 16
        %v1484 = vrot.slane %v1482, 4
        %v1485 = vshll.u32 %v1479, 16
        %v1487 = vrot.slane %v1485, 5
        %v1488 = vor.u32 %v1484, %v1487
        %v1489 = vrot.slane %v1488, 4
        %v1491 = vshll.u32 %v1480, 16
        %v1493 = vrot.slane %v1491, 5
        %v1494 = vsel %vm763, %v1489, %v1493
        %1496 = vst [vmem:[#allocation2 + $0x4] sm:$0xf] %v1494
        %v1497 = vld [vmem:[%s1081] sm:$0xf]
        %v1498 = vld [vmem:[%s1081 + $0x4] sm:$0x1]
        %v1500 = vshrl.u32 %v1497, 16
        %v1502 = vrot.slane %v1500, 4
        %v1503 = vshll.u32 %v1497, 16
        %v1505 = vrot.slane %v1503, 5
        %v1506 = vor.u32 %v1502, %v1505
        %v1507 = vrot.slane %v1506, 4
        %v1509 = vshll.u32 %v1498, 16
        %v1511 = vrot.slane %v1509, 5
        %v1512 = vsel %vm763, %v1507, %v1511
        %1514 = vst [vmem:[#allocation2 + $0x8] sm:$0xf] %v1512
        %v1515 = vld [vmem:[%s1084] sm:$0xf]
        %v1516 = vld [vmem:[%s1084 + $0x4] sm:$0x1]
        %v1518 = vshrl.u32 %v1515, 16
        %v1520 = vrot.slane %v1518, 4
        %v1521 = vshll.u32 %v1515, 16
        %v1523 = vrot.slane %v1521, 5
        %v1524 = vor.u32 %v1520, %v1523
        %v1525 = vrot.slane %v1524, 4
        %v1527 = vshll.u32 %v1516, 16
        %v1529 = vrot.slane %v1527, 5
        %v1530 = vsel %vm763, %v1525, %v1529
        %1532 = vst [vmem:[#allocation2 + $0xc] sm:$0xf] %v1530
        %v1533 = vld [vmem:[%s1087] sm:$0xf]
        %v1534 = vld [vmem:[%s1087 + $0x4] sm:$0x1]
        %v1536 = vshrl.u32 %v1533, 16
        %v1538 = vrot.slane %v1536, 4
        %v1539 = vshll.u32 %v1533, 16
        %v1541 = vrot.slane %v1539, 5
        %v1542 = vor.u32 %v1538, %v1541
        %v1543 = vrot.slane %v1542, 4
        %v1545 = vshll.u32 %v1534, 16
        %v1547 = vrot.slane %v1545, 5
        %v1548 = vsel %vm763, %v1543, %v1547
        %1550 = vst [vmem:[#allocation2 + $0x10] sm:$0xf] %v1548
        %v1551 = vld [vmem:[%s1090] sm:$0xf]
        %v1552 = vld [vmem:[%s1090 + $0x4] sm:$0x1]
        %v1554 = vshrl.u32 %v1551, 16
        %v1556 = vrot.slane %v1554, 4
        %v1557 = vshll.u32 %v1551, 16
        %v1559 = vrot.slane %v1557, 5
        %v1560 = vor.u32 %v1556, %v1559
        %v1561 = vrot.slane %v1560, 4
        %v1563 = vshll.u32 %v1552, 16
        %v1565 = vrot.slane %v1563, 5
        %v1566 = vsel %vm763, %v1561, %v1565
        %1568 = vst [vmem:[#allocation2 + $0x14] sm:$0xf] %v1566
        %v1569 = vld [vmem:[%s1093] sm:$0xf]
        %v1570 = vld [vmem:[%s1093 + $0x4] sm:$0x1]
        %v1572 = vshrl.u32 %v1569, 16
        %v1574 = vrot.slane %v1572, 4
        %v1575 = vshll.u32 %v1569, 16
        %v1577 = vrot.slane %v1575, 5
        %v1578 = vor.u32 %v1574, %v1577
        %v1579 = vrot.slane %v1578, 4
        %v1581 = vshll.u32 %v1570, 16
        %v1583 = vrot.slane %v1581, 5
        %v1584 = vsel %vm763, %v1579, %v1583
        %1586 = vst [vmem:[#allocation2 + $0x18] sm:$0xf] %v1584
        %v1587 = vld [vmem:[%s1096] sm:$0xf]
        %v1588 = vld [vmem:[%s1096 + $0x4] sm:$0x1]
        %v1590 = vshrl.u32 %v1587, 16
        %v1592 = vrot.slane %v1590, 4
        %v1593 = vshll.u32 %v1587, 16
        %v1595 = vrot.slane %v1593, 5
        %v1596 = vor.u32 %v1592, %v1595
        %v1597 = vrot.slane %v1596, 4
        %v1599 = vshll.u32 %v1588, 16
        %v1601 = vrot.slane %v1599, 5
        %v1602 = vsel %vm763, %v1597, %v1601
        %1604 = vst [vmem:[#allocation2 + $0x1c] sm:$0xf] %v1602
        %v1605 = vld [vmem:[%s1 + $0x140] sm:$0xf]
        %v1606 = vld [vmem:[%s1 + $0x144] sm:$0xf]
        %v1607 = vld [vmem:[%s1 + $0x148] sm:$0xf]
        %v1608 = vld [vmem:[%s1 + $0x14c] sm:$0xf]
        %v1609 = vld [vmem:[%s1 + $0x150] sm:$0xf]
        %v1610 = vld [vmem:[%s1 + $0x154] sm:$0xf]
        %v1611 = vld [vmem:[%s1 + $0x158] sm:$0xf]
        %v1612 = vld [vmem:[%s1 + $0x15c] sm:$0xf]
        %v1613 = vld [vmem:[%s1 + $0x160] sm:$0xf]
        %v1614 = vld [vmem:[%s1 + $0x164] sm:$0xf]
        %v1615 = vld [vmem:[%s1 + $0x168] sm:$0xf]
        %v1616 = vld [vmem:[%s1 + $0x16c] sm:$0xf]
        %v1617 = vld [vmem:[%s1 + $0x170] sm:$0xf]
        %v1618 = vld [vmem:[%s1 + $0x174] sm:$0xf]
        %v1619 = vld [vmem:[%s1 + $0x178] sm:$0xf]
        %v1620 = vld [vmem:[%s1 + $0x17c] sm:$0xf]
        %v1621 = vld [vmem:[#allocation2] sm:$0xf]
        %v1622 = vld [vmem:[#allocation2 + $0x4] sm:$0xf]
        %v1623 = vld [vmem:[#allocation2 + $0x8] sm:$0xf]
        %v1624 = vld [vmem:[#allocation2 + $0xc] sm:$0xf]
        %v1625 = vld [vmem:[#allocation2 + $0x10] sm:$0xf]
        %v1626 = vld [vmem:[#allocation2 + $0x14] sm:$0xf]
        %v1627 = vld [vmem:[#allocation2 + $0x18] sm:$0xf]
        %v1628 = vld [vmem:[#allocation2 + $0x1c] sm:$0xf]
        %v1637 = vunpack.c.l.b16 %v1621
        %v1638 = vunpack.c.l.b16 %v1622
        %v1639 = vunpack.c.l.b16 %v1623
        %v1640 = vunpack.c.l.b16 %v1624
        %v1641 = vunpack.c.l.b16 %v1625
        %v1642 = vunpack.c.l.b16 %v1626
        %v1643 = vunpack.c.l.b16 %v1627
        %v1644 = vunpack.c.l.b16 %v1628
        %v1645 = vpack.c.b16 %v1638, %v1637
        %v1646 = vpack.c.b16 %v1640, %v1639
        %v1647 = vpack.c.b16 %v1642, %v1641
        %v1648 = vpack.c.b16 %v1644, %v1643
        %v1669 = vunpack.c.l.b16 %v1605
        %v1670 = vunpack.c.l.b16 %v1606
        %v1671 = vunpack.c.l.b16 %v1607
        %v1672 = vunpack.c.l.b16 %v1608
        %v1673 = vunpack.c.l.b16 %v1609
        %v1674 = vunpack.c.l.b16 %v1610
        %v1675 = vunpack.c.l.b16 %v1611
        %v1676 = vunpack.c.l.b16 %v1612
        %v1677 = vunpack.c.l.b16 %v1613
        %v1678 = vunpack.c.l.b16 %v1614
        %v1679 = vunpack.c.l.b16 %v1615
        %v1680 = vunpack.c.l.b16 %v1616
        %v1681 = vunpack.c.l.b16 %v1617
        %v1682 = vunpack.c.l.b16 %v1618
        %v1683 = vunpack.c.l.b16 %v1619
        %v1684 = vunpack.c.l.b16 %v1620
        %v1685 = vpack.c.b16 %v1670, %v1669
        %v1686 = vpack.c.b16 %v1672, %v1671
        %v1687 = vpack.c.b16 %v1674, %v1673
        %v1688 = vpack.c.b16 %v1676, %v1675
        %v1689 = vpack.c.b16 %v1678, %v1677
        %v1690 = vpack.c.b16 %v1680, %v1679
        %v1691 = vpack.c.b16 %v1682, %v1681
        %v1692 = vpack.c.b16 %v1684, %v1683
        %1701 = vmatprep.subr.bf16.mxu0 0
        %1702 = vmatpush1.bf16.msra.mxu0 %v1692
        %1703 = vmatprep.subr.bf16.mxu0 0
        %1704 = vmatpush1.bf16.msra.mxu0 %v1691
        %1705 = vmatprep.subr.bf16.mxu0 0
        %1706 = vmatpush1.bf16.msra.mxu0 %v1690
        %1707 = vmatprep.subr.bf16.mxu0 0
        %1708 = vmatpush1.bf16.msra.mxu0 %v1689
        %1709 = vmatprep.subr.bf16.mxu0 0
        %1710 = vmatpush1.bf16.msra.mxu0 %v1688
        %1711 = vmatprep.subr.bf16.mxu0 0
        %1712 = vmatpush1.bf16.msra.mxu0 %v1687
        %1713 = vmatprep.subr.bf16.mxu0 0
        %1714 = vmatpush1.bf16.msra.mxu0 %v1686
        %1715 = vmatprep.subr.bf16.mxu0 0
        %1716 = vmatpush1.bf16.msra.mxu0 %v1685
        %1717 = vmatprep.subr.bf16.mxu0 0
        %1718 = vmatpush2.bf16.msra.mxu0 0
        %1719 = vmatprep.subr.bf16.mxu0 0
        %1720 = vmatpush2.bf16.msra.mxu0 0
        %1721 = vmatprep.subr.bf16.mxu0 0
        %1722 = vmatpush2.bf16.msra.mxu0 0
        %1723 = vmatprep.subr.bf16.mxu0 0
        %1724 = vmatpush2.bf16.msra.mxu0 0
        %1725 = vmatprep.subr.bf16.mxu0 0
        %1726 = vmatpush2.bf16.msra.mxu0 0
        %1727 = vmatprep.subr.bf16.mxu0 0
        %1728 = vmatpush2.bf16.msra.mxu0 0
        %1729 = vmatprep.subr.bf16.mxu0 0
        %1730 = vmatpush2.bf16.msra.mxu0 0
        %1731 = vmatprep.subr.bf16.mxu0 0
        %1732 = vmatpush2.bf16.msra.mxu0 0
        %1733 = vmatprep.mubr.bf16.mxu0 0
        %1734 = vmatmul.mubr.bf16.gmra.mxu0 %v1645
        %v1735 = vpop.f32.mrf.mxu0
        %v1736 = vadd.f32 0.0, %v1735
        %v1737 = vpop.f32.mrf.mxu0
        %v1738 = vpop.f32.mrf.mxu0
        %v1739 = vadd.f32 0.0, %v1738
        %v1740 = vpop.f32.mrf.mxu0
        %1741 = vmatprep.mubr.bf16.mxu0 0
        %1742 = vmatmul.mubr.bf16.gmra.mxu0 %v1646
        %v1743 = vpop.f32.mrf.mxu0
        %v1744 = vadd.f32 0.0, %v1743
        %v1745 = vpop.f32.mrf.mxu0
        %v1746 = vpop.f32.mrf.mxu0
        %v1747 = vadd.f32 0.0, %v1746
        %v1748 = vpop.f32.mrf.mxu0
        %1749 = vmatprep.mubr.bf16.mxu0 0
        %1750 = vmatmul.mubr.bf16.gmra.mxu0 %v1647
        %v1751 = vpop.f32.mrf.mxu0
        %v1752 = vadd.f32 0.0, %v1751
        %v1753 = vpop.f32.mrf.mxu0
        %v1754 = vpop.f32.mrf.mxu0
        %v1755 = vadd.f32 0.0, %v1754
        %v1756 = vpop.f32.mrf.mxu0
        %1757 = vmatprep.mubr.bf16.mxu0 0
        %1758 = vmatmul.mubr.bf16.gmra.mxu0 %v1648
        %v1759 = vpop.f32.mrf.mxu0
        %v1760 = vadd.f32 0.0, %v1759
        %v1761 = vpop.f32.mrf.mxu0
        %v1762 = vpop.f32.mrf.mxu0
        %v1763 = vadd.f32 0.0, %v1762
        %v1764 = vpop.f32.mrf.mxu0
        %1765 = vdwg.mxu0
        %v1766 = vadd.f32 %v1453, %v1736
        %v1767 = vadd.f32 %v1454, %v1739
        %v1768 = vadd.f32 %v1455, %v1744
        %v1769 = vadd.f32 %v1456, %v1747
        %v1770 = vadd.f32 %v1457, %v1752
        %v1771 = vadd.f32 %v1458, %v1755
        %v1772 = vadd.f32 %v1459, %v1760
        %v1773 = vadd.f32 %v1460, %v1763
        %v1774 = vld [vmem:[%s392] sm:$0xf]
        %1775 = vst [vmem:[#allocation2] sm:$0xf] %v1774
        %v1776 = vld [vmem:[%s395] sm:$0xf]
        %1777 = vst [vmem:[#allocation2 + $0x4] sm:$0xf] %v1776
        %v1778 = vld [vmem:[%s398] sm:$0xf]
        %1779 = vst [vmem:[#allocation2 + $0x8] sm:$0xf] %v1778
        %v1780 = vld [vmem:[%s401] sm:$0xf]
        %1781 = vst [vmem:[#allocation2 + $0xc] sm:$0xf] %v1780
        %v1782 = vld [vmem:[%s404] sm:$0xf]
        %1783 = vst [vmem:[#allocation2 + $0x10] sm:$0xf] %v1782
        %v1784 = vld [vmem:[%s407] sm:$0xf]
        %1785 = vst [vmem:[#allocation2 + $0x14] sm:$0xf] %v1784
        %v1786 = vld [vmem:[%s410] sm:$0xf]
        %1787 = vst [vmem:[#allocation2 + $0x18] sm:$0xf] %v1786
        %s1788 = scalar_lea.vmem %s273, 64
        %v1789 = vld [vmem:[%s1788] sm:$0xf]
        %1790 = vst [vmem:[#allocation2 + $0x1c] sm:$0xf] %v1789
        %v1791 = vld [vmem:[%s1 + $0x180] sm:$0xf]
        %v1792 = vld [vmem:[%s1 + $0x184] sm:$0xf]
        %v1793 = vld [vmem:[%s1 + $0x188] sm:$0xf]
        %v1794 = vld [vmem:[%s1 + $0x18c] sm:$0xf]
        %v1795 = vld [vmem:[%s1 + $0x190] sm:$0xf]
        %v1796 = vld [vmem:[%s1 + $0x194] sm:$0xf]
        %v1797 = vld [vmem:[%s1 + $0x198] sm:$0xf]
        %v1798 = vld [vmem:[%s1 + $0x19c] sm:$0xf]
        %v1799 = vld [vmem:[%s1 + $0x1a0] sm:$0xf]
        %v1800 = vld [vmem:[%s1 + $0x1a4] sm:$0xf]
        %v1801 = vld [vmem:[%s1 + $0x1a8] sm:$0xf]
        %v1802 = vld [vmem:[%s1 + $0x1ac] sm:$0xf]
        %v1803 = vld [vmem:[%s1 + $0x1b0] sm:$0xf]
        %v1804 = vld [vmem:[%s1 + $0x1b4] sm:$0xf]
        %v1805 = vld [vmem:[%s1 + $0x1b8] sm:$0xf]
        %v1806 = vld [vmem:[%s1 + $0x1bc] sm:$0xf]
        %v1807 = vld [vmem:[#allocation2] sm:$0xf]
        %v1808 = vld [vmem:[#allocation2 + $0x4] sm:$0xf]
        %v1809 = vld [vmem:[#allocation2 + $0x8] sm:$0xf]
        %v1810 = vld [vmem:[#allocation2 + $0xc] sm:$0xf]
        %v1811 = vld [vmem:[#allocation2 + $0x10] sm:$0xf]
        %v1812 = vld [vmem:[#allocation2 + $0x14] sm:$0xf]
        %v1813 = vld [vmem:[#allocation2 + $0x18] sm:$0xf]
        %v1814 = vld [vmem:[#allocation2 + $0x1c] sm:$0xf]
        %v1823 = vunpack.c.l.b16 %v1807
        %v1824 = vunpack.c.l.b16 %v1808
        %v1825 = vunpack.c.l.b16 %v1809
        %v1826 = vunpack.c.l.b16 %v1810
        %v1827 = vunpack.c.l.b16 %v1811
        %v1828 = vunpack.c.l.b16 %v1812
        %v1829 = vunpack.c.l.b16 %v1813
        %v1830 = vunpack.c.l.b16 %v1814
        %v1831 = vpack.c.b16 %v1824, %v1823
        %v1832 = vpack.c.b16 %v1826, %v1825
        %v1833 = vpack.c.b16 %v1828, %v1827
        %v1834 = vpack.c.b16 %v1830, %v1829
        %v1855 = vunpack.c.l.b16 %v1791
        %v1856 = vunpack.c.l.b16 %v1792
        %v1857 = vunpack.c.l.b16 %v1793
        %v1858 = vunpack.c.l.b16 %v1794
        %v1859 = vunpack.c.l.b16 %v1795
        %v1860 = vunpack.c.l.b16 %v1796
        %v1861 = vunpack.c.l.b16 %v1797
        %v1862 = vunpack.c.l.b16 %v1798
        %v1863 = vunpack.c.l.b16 %v1799
        %v1864 = vunpack.c.l.b16 %v1800
        %v1865 = vunpack.c.l.b16 %v1801
        %v1866 = vunpack.c.l.b16 %v1802
        %v1867 = vunpack.c.l.b16 %v1803
        %v1868 = vunpack.c.l.b16 %v1804
        %v1869 = vunpack.c.l.b16 %v1805
        %v1870 = vunpack.c.l.b16 %v1806
        %v1871 = vpack.c.b16 %v1856, %v1855
        %v1872 = vpack.c.b16 %v1858, %v1857
        %v1873 = vpack.c.b16 %v1860, %v1859
        %v1874 = vpack.c.b16 %v1862, %v1861
        %v1875 = vpack.c.b16 %v1864, %v1863
        %v1876 = vpack.c.b16 %v1866, %v1865
        %v1877 = vpack.c.b16 %v1868, %v1867
        %v1878 = vpack.c.b16 %v1870, %v1869
        %1887 = vmatprep.subr.bf16.mxu0 0
        %1888 = vmatpush1.bf16.msra.mxu0 %v1878
        %1889 = vmatprep.subr.bf16.mxu0 0
        %1890 = vmatpush1.bf16.msra.mxu0 %v1877
        %1891 = vmatprep.subr.bf16.mxu0 0
        %1892 = vmatpush1.bf16.msra.mxu0 %v1876
        %1893 = vmatprep.subr.bf16.mxu0 0
        %1894 = vmatpush1.bf16.msra.mxu0 %v1875
        %1895 = vmatprep.subr.bf16.mxu0 0
        %1896 = vmatpush1.bf16.msra.mxu0 %v1874
        %1897 = vmatprep.subr.bf16.mxu0 0
        %1898 = vmatpush1.bf16.msra.mxu0 %v1873
        %1899 = vmatprep.subr.bf16.mxu0 0
        %1900 = vmatpush1.bf16.msra.mxu0 %v1872
        %1901 = vmatprep.subr.bf16.mxu0 0
        %1902 = vmatpush1.bf16.msra.mxu0 %v1871
        %1903 = vmatprep.subr.bf16.mxu0 0
        %1904 = vmatpush2.bf16.msra.mxu0 0
        %1905 = vmatprep.subr.bf16.mxu0 0
        %1906 = vmatpush2.bf16.msra.mxu0 0
        %1907 = vmatprep.subr.bf16.mxu0 0
        %1908 = vmatpush2.bf16.msra.mxu0 0
        %1909 = vmatprep.subr.bf16.mxu0 0
        %1910 = vmatpush2.bf16.msra.mxu0 0
        %1911 = vmatprep.subr.bf16.mxu0 0
        %1912 = vmatpush2.bf16.msra.mxu0 0
        %1913 = vmatprep.subr.bf16.mxu0 0
        %1914 = vmatpush2.bf16.msra.mxu0 0
        %1915 = vmatprep.subr.bf16.mxu0 0
        %1916 = vmatpush2.bf16.msra.mxu0 0
        %1917 = vmatprep.subr.bf16.mxu0 0
        %1918 = vmatpush2.bf16.msra.mxu0 0
        %1919 = vmatprep.mubr.bf16.mxu0 0
        %1920 = vmatmul.mubr.bf16.gmra.mxu0 %v1831
        %v1921 = vpop.f32.mrf.mxu0
        %v1922 = vadd.f32 0.0, %v1921
        %v1923 = vpop.f32.mrf.mxu0
        %v1924 = vpop.f32.mrf.mxu0
        %v1925 = vadd.f32 0.0, %v1924
        %v1926 = vpop.f32.mrf.mxu0
        %1927 = vmatprep.mubr.bf16.mxu0 0
        %1928 = vmatmul.mubr.bf16.gmra.mxu0 %v1832
        %v1929 = vpop.f32.mrf.mxu0
        %v1930 = vadd.f32 0.0, %v1929
        %v1931 = vpop.f32.mrf.mxu0
        %v1932 = vpop.f32.mrf.mxu0
        %v1933 = vadd.f32 0.0, %v1932
        %v1934 = vpop.f32.mrf.mxu0
        %1935 = vmatprep.mubr.bf16.mxu0 0
        %1936 = vmatmul.mubr.bf16.gmra.mxu0 %v1833
        %v1937 = vpop.f32.mrf.mxu0
        %v1938 = vadd.f32 0.0, %v1937
        %v1939 = vpop.f32.mrf.mxu0
        %v1940 = vpop.f32.mrf.mxu0
        %v1941 = vadd.f32 0.0, %v1940
        %v1942 = vpop.f32.mrf.mxu0
        %1943 = vmatprep.mubr.bf16.mxu0 0
        %1944 = vmatmul.mubr.bf16.gmra.mxu0 %v1834
        %v1945 = vpop.f32.mrf.mxu0
        %v1946 = vadd.f32 0.0, %v1945
        %v1947 = vpop.f32.mrf.mxu0
        %v1948 = vpop.f32.mrf.mxu0
        %v1949 = vadd.f32 0.0, %v1948
        %v1950 = vpop.f32.mrf.mxu0
        %1951 = vdwg.mxu0
        %v1952 = vadd.f32 %v1766, %v1922
        %v1953 = vadd.f32 %v1767, %v1925
        %v1954 = vadd.f32 %v1768, %v1930
        %v1955 = vadd.f32 %v1769, %v1933
        %v1956 = vadd.f32 %v1770, %v1938
        %v1957 = vadd.f32 %v1771, %v1941
        %v1958 = vadd.f32 %v1772, %v1946
        %v1959 = vadd.f32 %v1773, %v1949
        %v1960 = vld [vmem:[%s440] sm:$0xf]
        %1961 = vst [vmem:[#allocation2] sm:$0xf] %v1960
        %v1962 = vld [vmem:[%s443] sm:$0xf]
        %1963 = vst [vmem:[#allocation2 + $0x4] sm:$0xf] %v1962
        %v1964 = vld [vmem:[%s446] sm:$0xf]
        %1965 = vst [vmem:[#allocation2 + $0x8] sm:$0xf] %v1964
        %v1966 = vld [vmem:[%s449] sm:$0xf]
        %1967 = vst [vmem:[#allocation2 + $0xc] sm:$0xf] %v1966
        %v1968 = vld [vmem:[%s452] sm:$0xf]
        %1969 = vst [vmem:[#allocation2 + $0x10] sm:$0xf] %v1968
        %v1970 = vld [vmem:[%s455] sm:$0xf]
        %1971 = vst [vmem:[#allocation2 + $0x14] sm:$0xf] %v1970
        %v1972 = vld [vmem:[%s458] sm:$0xf]
        %1973 = vst [vmem:[#allocation2 + $0x18] sm:$0xf] %v1972
        %s1974 = scalar_lea.vmem %s273, 136
        %v1975 = vld [vmem:[%s1974] sm:$0xf]
        %1976 = vst [vmem:[#allocation2 + $0x1c] sm:$0xf] %v1975
        %v1977 = vld [vmem:[%s1 + $0x1c0] sm:$0xf]
        %v1978 = vld [vmem:[%s1 + $0x1c4] sm:$0xf]
        %v1979 = vld [vmem:[%s1 + $0x1c8] sm:$0xf]
        %v1980 = vld [vmem:[%s1 + $0x1cc] sm:$0xf]
        %v1981 = vld [vmem:[%s1 + $0x1d0] sm:$0xf]
        %v1982 = vld [vmem:[%s1 + $0x1d4] sm:$0xf]
        %v1983 = vld [vmem:[%s1 + $0x1d8] sm:$0xf]
        %v1984 = vld [vmem:[%s1 + $0x1dc] sm:$0xf]
        %v1985 = vld [vmem:[%s1 + $0x1e0] sm:$0xf]
        %v1986 = vld [vmem:[%s1 + $0x1e4] sm:$0xf]
        %v1987 = vld [vmem:[%s1 + $0x1e8] sm:$0xf]
        %v1988 = vld [vmem:[%s1 + $0x1ec] sm:$0xf]
        %v1989 = vld [vmem:[%s1 + $0x1f0] sm:$0xf]
        %v1990 = vld [vmem:[%s1 + $0x1f4] sm:$0xf]
        %v1991 = vld [vmem:[%s1 + $0x1f8] sm:$0xf]
        %v1992 = vld [vmem:[%s1 + $0x1fc] sm:$0xf]
        %v1993 = vld [vmem:[#allocation2] sm:$0xf]
        %v1994 = vld [vmem:[#allocation2 + $0x4] sm:$0xf]
        %v1995 = vld [vmem:[#allocation2 + $0x8] sm:$0xf]
        %v1996 = vld [vmem:[#allocation2 + $0xc] sm:$0xf]
        %v1997 = vld [vmem:[#allocation2 + $0x10] sm:$0xf]
        %v1998 = vld [vmem:[#allocation2 + $0x14] sm:$0xf]
        %v1999 = vld [vmem:[#allocation2 + $0x18] sm:$0xf]
        %v2000 = vld [vmem:[#allocation2 + $0x1c] sm:$0xf]
        %v2009 = vunpack.c.l.b16 %v1993
        %v2010 = vunpack.c.l.b16 %v1994
        %v2011 = vunpack.c.l.b16 %v1995
        %v2012 = vunpack.c.l.b16 %v1996
        %v2013 = vunpack.c.l.b16 %v1997
        %v2014 = vunpack.c.l.b16 %v1998
        %v2015 = vunpack.c.l.b16 %v1999
        %v2016 = vunpack.c.l.b16 %v2000
        %v2017 = vpack.c.b16 %v2010, %v2009
        %v2018 = vpack.c.b16 %v2012, %v2011
        %v2019 = vpack.c.b16 %v2014, %v2013
        %v2020 = vpack.c.b16 %v2016, %v2015
        %v2041 = vunpack.c.l.b16 %v1977
        %v2042 = vunpack.c.l.b16 %v1978
        %v2043 = vunpack.c.l.b16 %v1979
        %v2044 = vunpack.c.l.b16 %v1980
        %v2045 = vunpack.c.l.b16 %v1981
        %v2046 = vunpack.c.l.b16 %v1982
        %v2047 = vunpack.c.l.b16 %v1983
        %v2048 = vunpack.c.l.b16 %v1984
        %v2049 = vunpack.c.l.b16 %v1985
        %v2050 = vunpack.c.l.b16 %v1986
        %v2051 = vunpack.c.l.b16 %v1987
        %v2052 = vunpack.c.l.b16 %v1988
        %v2053 = vunpack.c.l.b16 %v1989
        %v2054 = vunpack.c.l.b16 %v1990
        %v2055 = vunpack.c.l.b16 %v1991
        %v2056 = vunpack.c.l.b16 %v1992
        %v2057 = vpack.c.b16 %v2042, %v2041
        %v2058 = vpack.c.b16 %v2044, %v2043
        %v2059 = vpack.c.b16 %v2046, %v2045
        %v2060 = vpack.c.b16 %v2048, %v2047
        %v2061 = vpack.c.b16 %v2050, %v2049
        %v2062 = vpack.c.b16 %v2052, %v2051
        %v2063 = vpack.c.b16 %v2054, %v2053
        %v2064 = vpack.c.b16 %v2056, %v2055
        %2073 = vmatprep.subr.bf16.mxu0 0
        %2074 = vmatpush1.bf16.msra.mxu0 %v2064
        %2075 = vmatprep.subr.bf16.mxu0 0
        %2076 = vmatpush1.bf16.msra.mxu0 %v2063
        %2077 = vmatprep.subr.bf16.mxu0 0
        %2078 = vmatpush1.bf16.msra.mxu0 %v2062
        %2079 = vmatprep.subr.bf16.mxu0 0
        %2080 = vmatpush1.bf16.msra.mxu0 %v2061
        %2081 = vmatprep.subr.bf16.mxu0 0
        %2082 = vmatpush1.bf16.msra.mxu0 %v2060
        %2083 = vmatprep.subr.bf16.mxu0 0
        %2084 = vmatpush1.bf16.msra.mxu0 %v2059
        %2085 = vmatprep.subr.bf16.mxu0 0
        %2086 = vmatpush1.bf16.msra.mxu0 %v2058
        %2087 = vmatprep.subr.bf16.mxu0 0
        %2088 = vmatpush1.bf16.msra.mxu0 %v2057
        %2089 = vmatprep.subr.bf16.mxu0 0
        %2090 = vmatpush2.bf16.msra.mxu0 0
        %2091 = vmatprep.subr.bf16.mxu0 0
        %2092 = vmatpush2.bf16.msra.mxu0 0
        %2093 = vmatprep.subr.bf16.mxu0 0
        %2094 = vmatpush2.bf16.msra.mxu0 0
        %2095 = vmatprep.subr.bf16.mxu0 0
        %2096 = vmatpush2.bf16.msra.mxu0 0
        %2097 = vmatprep.subr.bf16.mxu0 0
        %2098 = vmatpush2.bf16.msra.mxu0 0
        %2099 = vmatprep.subr.bf16.mxu0 0
        %2100 = vmatpush2.bf16.msra.mxu0 0
        %2101 = vmatprep.subr.bf16.mxu0 0
        %2102 = vmatpush2.bf16.msra.mxu0 0
        %2103 = vmatprep.subr.bf16.mxu0 0
        %2104 = vmatpush2.bf16.msra.mxu0 0
        %2105 = vmatprep.mubr.bf16.mxu0 0
        %2106 = vmatmul.mubr.bf16.gmra.mxu0 %v2017
        %v2107 = vpop.f32.mrf.mxu0
        %v2108 = vadd.f32 0.0, %v2107
        %v2109 = vpop.f32.mrf.mxu0
        %v2110 = vpop.f32.mrf.mxu0
        %v2111 = vadd.f32 0.0, %v2110
        %v2112 = vpop.f32.mrf.mxu0
        %2113 = vmatprep.mubr.bf16.mxu0 0
        %2114 = vmatmul.mubr.bf16.gmra.mxu0 %v2018
        %v2115 = vpop.f32.mrf.mxu0
        %v2116 = vadd.f32 0.0, %v2115
        %v2117 = vpop.f32.mrf.mxu0
        %v2118 = vpop.f32.mrf.mxu0
        %v2119 = vadd.f32 0.0, %v2118
        %v2120 = vpop.f32.mrf.mxu0
        %2121 = vmatprep.mubr.bf16.mxu0 0
        %2122 = vmatmul.mubr.bf16.gmra.mxu0 %v2019
        %v2123 = vpop.f32.mrf.mxu0
        %v2124 = vadd.f32 0.0, %v2123
        %v2125 = vpop.f32.mrf.mxu0
        %v2126 = vpop.f32.mrf.mxu0
        %v2127 = vadd.f32 0.0, %v2126
        %v2128 = vpop.f32.mrf.mxu0
        %2129 = vmatprep.mubr.bf16.mxu0 0
        %2130 = vmatmul.mubr.bf16.gmra.mxu0 %v2020
        %v2131 = vpop.f32.mrf.mxu0
        %v2132 = vadd.f32 0.0, %v2131
        %v2133 = vpop.f32.mrf.mxu0
        %v2134 = vpop.f32.mrf.mxu0
        %v2135 = vadd.f32 0.0, %v2134
        %v2136 = vpop.f32.mrf.mxu0
        %2137 = vdwg.mxu0
        %v2138 = vadd.f32 %v1952, %v2108
        %v2139 = vadd.f32 %v1953, %v2111
        %v2140 = vadd.f32 %v1954, %v2116
        %v2141 = vadd.f32 %v1955, %v2119
        %v2142 = vadd.f32 %v1956, %v2124
        %v2143 = vadd.f32 %v1957, %v2127
        %v2144 = vadd.f32 %v1958, %v2132
        %v2145 = vadd.f32 %v1959, %v2135
        %v2146 = vld [vmem:[%s392] sm:$0xf]
        %v2147 = vld [vmem:[%s392 + $0x4] sm:$0x1]
        %v2149 = vshrl.u32 %v2146, 16
        %v2151 = vrot.slane %v2149, 4
        %v2152 = vshll.u32 %v2146, 16
        %v2154 = vrot.slane %v2152, 5
        %v2155 = vor.u32 %v2151, %v2154
        %v2156 = vrot.slane %v2155, 4
        %v2158 = vshll.u32 %v2147, 16
        %v2160 = vrot.slane %v2158, 5
        %v2161 = vsel %vm763, %v2156, %v2160
        %2163 = vst [vmem:[#allocation2] sm:$0xf] %v2161
        %v2164 = vld [vmem:[%s395] sm:$0xf]
        %v2165 = vld [vmem:[%s395 + $0x4] sm:$0x1]
        %v2167 = vshrl.u32 %v2164, 16
        %v2169 = vrot.slane %v2167, 4
        %v2170 = vshll.u32 %v2164, 16
        %v2172 = vrot.slane %v2170, 5
        %v2173 = vor.u32 %v2169, %v2172
        %v2174 = vrot.slane %v2173, 4
        %v2176 = vshll.u32 %v2165, 16
        %v2178 = vrot.slane %v2176, 5
        %v2179 = vsel %vm763, %v2174, %v2178
        %2181 = vst [vmem:[#allocation2 + $0x4] sm:$0xf] %v2179
        %v2182 = vld [vmem:[%s398] sm:$0xf]
        %v2183 = vld [vmem:[%s398 + $0x4] sm:$0x1]
        %v2185 = vshrl.u32 %v2182, 16
        %v2187 = vrot.slane %v2185, 4
        %v2188 = vshll.u32 %v2182, 16
        %v2190 = vrot.slane %v2188, 5
        %v2191 = vor.u32 %v2187, %v2190
        %v2192 = vrot.slane %v2191, 4
        %v2194 = vshll.u32 %v2183, 16
        %v2196 = vrot.slane %v2194, 5
        %v2197 = vsel %vm763, %v2192, %v2196
        %2199 = vst [vmem:[#allocation2 + $0x8] sm:$0xf] %v2197
        %v2200 = vld [vmem:[%s401] sm:$0xf]
        %v2201 = vld [vmem:[%s401 + $0x4] sm:$0x1]
        %v2203 = vshrl.u32 %v2200, 16
        %v2205 = vrot.slane %v2203, 4
        %v2206 = vshll.u32 %v2200, 16
        %v2208 = vrot.slane %v2206, 5
        %v2209 = vor.u32 %v2205, %v2208
        %v2210 = vrot.slane %v2209, 4
        %v2212 = vshll.u32 %v2201, 16
        %v2214 = vrot.slane %v2212, 5
        %v2215 = vsel %vm763, %v2210, %v2214
        %2217 = vst [vmem:[#allocation2 + $0xc] sm:$0xf] %v2215
        %v2218 = vld [vmem:[%s404] sm:$0xf]
        %v2219 = vld [vmem:[%s404 + $0x4] sm:$0x1]
        %v2221 = vshrl.u32 %v2218, 16
        %v2223 = vrot.slane %v2221, 4
        %v2224 = vshll.u32 %v2218, 16
        %v2226 = vrot.slane %v2224, 5
        %v2227 = vor.u32 %v2223, %v2226
        %v2228 = vrot.slane %v2227, 4
        %v2230 = vshll.u32 %v2219, 16
        %v2232 = vrot.slane %v2230, 5
        %v2233 = vsel %vm763, %v2228, %v2232
        %2235 = vst [vmem:[#allocation2 + $0x10] sm:$0xf] %v2233
        %v2236 = vld [vmem:[%s407] sm:$0xf]
        %v2237 = vld [vmem:[%s407 + $0x4] sm:$0x1]
        %v2239 = vshrl.u32 %v2236, 16
        %v2241 = vrot.slane %v2239, 4
        %v2242 = vshll.u32 %v2236, 16
        %v2244 = vrot.slane %v2242, 5
        %v2245 = vor.u32 %v2241, %v2244
        %v2246 = vrot.slane %v2245, 4
        %v2248 = vshll.u32 %v2237, 16
        %v2250 = vrot.slane %v2248, 5
        %v2251 = vsel %vm763, %v2246, %v2250
        %2253 = vst [vmem:[#allocation2 + $0x14] sm:$0xf] %v2251
        %v2254 = vld [vmem:[%s410] sm:$0xf]
        %v2255 = vld [vmem:[%s410 + $0x4] sm:$0x1]
        %v2257 = vshrl.u32 %v2254, 16
        %v2259 = vrot.slane %v2257, 4
        %v2260 = vshll.u32 %v2254, 16
        %v2262 = vrot.slane %v2260, 5
        %v2263 = vor.u32 %v2259, %v2262
        %v2264 = vrot.slane %v2263, 4
        %v2266 = vshll.u32 %v2255, 16
        %v2268 = vrot.slane %v2266, 5
        %v2269 = vsel %vm763, %v2264, %v2268
        %2271 = vst [vmem:[#allocation2 + $0x18] sm:$0xf] %v2269
        %v2272 = vld [vmem:[%s1788] sm:$0xf]
        %v2273 = vld [vmem:[%s1788 + $0x4] sm:$0x1]
        %v2275 = vshrl.u32 %v2272, 16
        %v2277 = vrot.slane %v2275, 4
        %v2278 = vshll.u32 %v2272, 16
        %v2280 = vrot.slane %v2278, 5
        %v2281 = vor.u32 %v2277, %v2280
        %v2282 = vrot.slane %v2281, 4
        %v2284 = vshll.u32 %v2273, 16
        %v2286 = vrot.slane %v2284, 5
        %v2287 = vsel %vm763, %v2282, %v2286
        %2289 = vst [vmem:[#allocation2 + $0x1c] sm:$0xf] %v2287
        %v2290 = vld [vmem:[%s1 + $0x200] sm:$0xf]
        %v2291 = vld [vmem:[%s1 + $0x204] sm:$0xf]
        %v2292 = vld [vmem:[%s1 + $0x208] sm:$0xf]
        %v2293 = vld [vmem:[%s1 + $0x20c] sm:$0xf]
        %v2294 = vld [vmem:[%s1 + $0x210] sm:$0xf]
        %v2295 = vld [vmem:[%s1 + $0x214] sm:$0xf]
        %v2296 = vld [vmem:[%s1 + $0x218] sm:$0xf]
        %v2297 = vld [vmem:[%s1 + $0x21c] sm:$0xf]
        %v2298 = vld [vmem:[%s1 + $0x220] sm:$0xf]
        %v2299 = vld [vmem:[%s1 + $0x224] sm:$0xf]
        %v2300 = vld [vmem:[%s1 + $0x228] sm:$0xf]
        %v2301 = vld [vmem:[%s1 + $0x22c] sm:$0xf]
        %v2302 = vld [vmem:[%s1 + $0x230] sm:$0xf]
        %v2303 = vld [vmem:[%s1 + $0x234] sm:$0xf]
        %v2304 = vld [vmem:[%s1 + $0x238] sm:$0xf]
        %v2305 = vld [vmem:[%s1 + $0x23c] sm:$0xf]
        %v2306 = vld [vmem:[#allocation2] sm:$0xf]
        %v2307 = vld [vmem:[#allocation2 + $0x4] sm:$0xf]
        %v2308 = vld [vmem:[#allocation2 + $0x8] sm:$0xf]
        %v2309 = vld [vmem:[#allocation2 + $0xc] sm:$0xf]
        %v2310 = vld [vmem:[#allocation2 + $0x10] sm:$0xf]
        %v2311 = vld [vmem:[#allocation2 + $0x14] sm:$0xf]
        %v2312 = vld [vmem:[#allocation2 + $0x18] sm:$0xf]
        %v2313 = vld [vmem:[#allocation2 + $0x1c] sm:$0xf]
        %v2322 = vunpack.c.l.b16 %v2306
        %v2323 = vunpack.c.l.b16 %v2307
        %v2324 = vunpack.c.l.b16 %v2308
        %v2325 = vunpack.c.l.b16 %v2309
        %v2326 = vunpack.c.l.b16 %v2310
        %v2327 = vunpack.c.l.b16 %v2311
        %v2328 = vunpack.c.l.b16 %v2312
        %v2329 = vunpack.c.l.b16 %v2313
        %v2330 = vpack.c.b16 %v2323, %v2322
        %v2331 = vpack.c.b16 %v2325, %v2324
        %v2332 = vpack.c.b16 %v2327, %v2326
        %v2333 = vpack.c.b16 %v2329, %v2328
        %v2354 = vunpack.c.l.b16 %v2290
        %v2355 = vunpack.c.l.b16 %v2291
        %v2356 = vunpack.c.l.b16 %v2292
        %v2357 = vunpack.c.l.b16 %v2293
        %v2358 = vunpack.c.l.b16 %v2294
        %v2359 = vunpack.c.l.b16 %v2295
        %v2360 = vunpack.c.l.b16 %v2296
        %v2361 = vunpack.c.l.b16 %v2297
        %v2362 = vunpack.c.l.b16 %v2298
        %v2363 = vunpack.c.l.b16 %v2299
        %v2364 = vunpack.c.l.b16 %v2300
        %v2365 = vunpack.c.l.b16 %v2301
        %v2366 = vunpack.c.l.b16 %v2302
        %v2367 = vunpack.c.l.b16 %v2303
        %v2368 = vunpack.c.l.b16 %v2304
        %v2369 = vunpack.c.l.b16 %v2305
        %v2370 = vpack.c.b16 %v2355, %v2354
        %v2371 = vpack.c.b16 %v2357, %v2356
        %v2372 = vpack.c.b16 %v2359, %v2358
        %v2373 = vpack.c.b16 %v2361, %v2360
        %v2374 = vpack.c.b16 %v2363, %v2362
        %v2375 = vpack.c.b16 %v2365, %v2364
        %v2376 = vpack.c.b16 %v2367, %v2366
        %v2377 = vpack.c.b16 %v2369, %v2368
        %2386 = vmatprep.subr.bf16.mxu0 0
        %2387 = vmatpush1.bf16.msra.mxu0 %v2377
        %2388 = vmatprep.subr.bf16.mxu0 0
        %2389 = vmatpush1.bf16.msra.mxu0 %v2376
        %2390 = vmatprep.subr.bf16.mxu0 0
        %2391 = vmatpush1.bf16.msra.mxu0 %v2375
        %2392 = vmatprep.subr.bf16.mxu0 0
        %2393 = vmatpush1.bf16.msra.mxu0 %v2374
        %2394 = vmatprep.subr.bf16.mxu0 0
        %2395 = vmatpush1.bf16.msra.mxu0 %v2373
        %2396 = vmatprep.subr.bf16.mxu0 0
        %2397 = vmatpush1.bf16.msra.mxu0 %v2372
        %2398 = vmatprep.subr.bf16.mxu0 0
        %2399 = vmatpush1.bf16.msra.mxu0 %v2371
        %2400 = vmatprep.subr.bf16.mxu0 0
        %2401 = vmatpush1.bf16.msra.mxu0 %v2370
        %2402 = vmatprep.subr.bf16.mxu0 0
        %2403 = vmatpush2.bf16.msra.mxu0 0
        %2404 = vmatprep.subr.bf16.mxu0 0
        %2405 = vmatpush2.bf16.msra.mxu0 0
        %2406 = vmatprep.subr.bf16.mxu0 0
        %2407 = vmatpush2.bf16.msra.mxu0 0
        %2408 = vmatprep.subr.bf16.mxu0 0
        %2409 = vmatpush2.bf16.msra.mxu0 0
        %2410 = vmatprep.subr.bf16.mxu0 0
        %2411 = vmatpush2.bf16.msra.mxu0 0
        %2412 = vmatprep.subr.bf16.mxu0 0
        %2413 = vmatpush2.bf16.msra.mxu0 0
        %2414 = vmatprep.subr.bf16.mxu0 0
        %2415 = vmatpush2.bf16.msra.mxu0 0
        %2416 = vmatprep.subr.bf16.mxu0 0
        %2417 = vmatpush2.bf16.msra.mxu0 0
        %2418 = vmatprep.mubr.bf16.mxu0 0
        %2419 = vmatmul.mubr.bf16.gmra.mxu0 %v2330
        %v2420 = vpop.f32.mrf.mxu0
        %v2421 = vadd.f32 0.0, %v2420
        %v2422 = vpop.f32.mrf.mxu0
        %v2423 = vpop.f32.mrf.mxu0
        %v2424 = vadd.f32 0.0, %v2423
        %v2425 = vpop.f32.mrf.mxu0
        %2426 = vmatprep.mubr.bf16.mxu0 0
        %2427 = vmatmul.mubr.bf16.gmra.mxu0 %v2331
        %v2428 = vpop.f32.mrf.mxu0
        %v2429 = vadd.f32 0.0, %v2428
        %v2430 = vpop.f32.mrf.mxu0
        %v2431 = vpop.f32.mrf.mxu0
        %v2432 = vadd.f32 0.0, %v2431
        %v2433 = vpop.f32.mrf.mxu0
        %2434 = vmatprep.mubr.bf16.mxu0 0
        %2435 = vmatmul.mubr.bf16.gmra.mxu0 %v2332
        %v2436 = vpop.f32.mrf.mxu0
        %v2437 = vadd.f32 0.0, %v2436
        %v2438 = vpop.f32.mrf.mxu0
        %v2439 = vpop.f32.mrf.mxu0
        %v2440 = vadd.f32 0.0, %v2439
        %v2441 = vpop.f32.mrf.mxu0
        %2442 = vmatprep.mubr.bf16.mxu0 0
        %2443 = vmatmul.mubr.bf16.gmra.mxu0 %v2333
        %v2444 = vpop.f32.mrf.mxu0
        %v2445 = vadd.f32 0.0, %v2444
        %v2446 = vpop.f32.mrf.mxu0
        %v2447 = vpop.f32.mrf.mxu0
        %v2448 = vadd.f32 0.0, %v2447
        %v2449 = vpop.f32.mrf.mxu0
        %2450 = vdwg.mxu0
        %v2451 = vadd.f32 %v2138, %v2421
        %v2452 = vadd.f32 %v2139, %v2424
        %v2453 = vadd.f32 %v2140, %v2429
        %v2454 = vadd.f32 %v2141, %v2432
        %v2455 = vadd.f32 %v2142, %v2437
        %v2456 = vadd.f32 %v2143, %v2440
        %v2457 = vadd.f32 %v2144, %v2445
        %v2458 = vadd.f32 %v2145, %v2448
        %v2459 = vld [vmem:[%s2] sm:$0x1]
        %v2460 = vlaneseq
        %v2461 = vshrl.u32 %v2460, 7
        %v2462 = vsub.s32 0, %v2461
        %v2463 = vrot.slane %v2459, %v2462
        %v2464 = vadd.f32 %v2451, %v2463
        %v2465 = vadd.f32 %v2452, %v2463
        %v2466 = vadd.f32 %v2453, %v2463
        %v2467 = vadd.f32 %v2454, %v2463
        %v2468 = vadd.f32 %v2455, %v2463
        %v2469 = vadd.f32 %v2456, %v2463
        %v2470 = vadd.f32 %v2457, %v2463
        %v2471 = vadd.f32 %v2458, %v2463
        %v2472 = vmax.f32 %v2464, 0.0
        %v2473 = vmax.f32 %v2465, 0.0
        %v2474 = vmax.f32 %v2466, 0.0
        %v2475 = vmax.f32 %v2467, 0.0
        %v2476 = vmax.f32 %v2468, 0.0
        %v2477 = vmax.f32 %v2469, 0.0
        %v2478 = vmax.f32 %v2470, 0.0
        %v2479 = vmax.f32 %v2471, 0.0
        %vm2480 = vcmask 64512
        %2481 = vst.msk [vmem:[%s278] sm:$0xff] %vm2480, %v2472
        %2482 = vst.msk [vmem:[%s278 + $0x8] sm:$0xff] %vm2480, %v2473
        %2483 = vst.msk [vmem:[%s278 + $0x10] sm:$0xff] %vm2480, %v2474
        %2484 = vst.msk [vmem:[%s278 + $0x18] sm:$0xff] %vm2480, %v2475
        %2485 = vst.msk [vmem:[%s278 + $0x20] sm:$0xff] %vm2480, %v2476
        %2486 = vst.msk [vmem:[%s278 + $0x28] sm:$0xff] %vm2480, %v2477
        %2487 = vst.msk [vmem:[%s278 + $0x30] sm:$0xff] %vm2480, %v2478
        %2488 = vst.msk [vmem:[%s278 + $0x38] sm:$0xff] %vm2480, %v2479
        %v2489 = vpack.c.bf16 %v2473, %v2472
        %v2490 = vpack.c.bf16 %v2475, %v2474
        %v2491 = vpack.c.bf16 %v2477, %v2476
        %v2492 = vpack.c.bf16 %v2479, %v2478
        %v2497 = vunpack.c.l.b16 %v2489
        %v2498 = vunpack.c.h.b16 %v2489
        %v2499 = vunpack.c.l.b16 %v2490
        %v2500 = vunpack.c.h.b16 %v2490
        %v2501 = vunpack.c.l.b16 %v2491
        %v2502 = vunpack.c.h.b16 %v2491
        %v2503 = vunpack.c.l.b16 %v2492
        %v2504 = vunpack.c.h.b16 %v2492
        %v2505 = vpack.c.b16 %v2497, %v2497
        %v2506 = vpack.c.b16 %v2498, %v2498
        %v2507 = vpack.c.b16 %v2499, %v2499
        %v2508 = vpack.c.b16 %v2500, %v2500
        %v2509 = vpack.c.b16 %v2501, %v2501
        %v2510 = vpack.c.b16 %v2502, %v2502
        %v2511 = vpack.c.b16 %v2503, %v2503
        %v2512 = vpack.c.b16 %v2504, %v2504
        %2521 = vst [vmem:[#allocation3] sm:$0xf] %v2505
        %2522 = vst [vmem:[#allocation3 + $0x4] sm:$0xf] %v2506
        %2523 = vst [vmem:[#allocation3 + $0x8] sm:$0xf] %v2507
        %2524 = vst [vmem:[#allocation3 + $0xc] sm:$0xf] %v2508
        %2525 = vst [vmem:[#allocation3 + $0x10] sm:$0xf] %v2509
        %2526 = vst [vmem:[#allocation3 + $0x14] sm:$0xf] %v2510
        %2527 = vst [vmem:[#allocation3 + $0x18] sm:$0xf] %v2511
        %2528 = vst [vmem:[#allocation3 + $0x1c] sm:$0xf] %v2512
        %v2529 = vld [vmem:[#allocation3] sm:$0x1]
        %s2530 = scalar_lea.vmem [#allocation4], 60
        %vm2531 = vcmask 1040384
        %vm2532 = vsmask.f32 256
        %vm2533 = vmand %vm2531, %vm2532
        %v2534 = vld [vmem:[%s2530] sm:$0x1]
        %v2535 = vsel %vm2533, %v2529, %v2534
        %2536 = vst [vmem:[%s2530] sm:$0x1] %v2535
        %v2537 = vld [vmem:[#allocation3] sm:$0x1]
        %s2538 = scalar_lea.vmem [#allocation4], 40
        %vm2539 = vsmask.f32 7938
        %vm2540 = vmand %vm2531, %vm2539
        %v2541 = vld [vmem:[%s2538] sm:$0x1]
        %v2542 = vsel %vm2540, %v2537, %v2541
        %2543 = vst [vmem:[%s2538] sm:$0x1] %v2542
        %v2544 = vld [vmem:[#allocation3] sm:$0x2]
        %v2546 = vshll.u32 %v2544, 16
        %v2548 = vrot.slane %v2546, 5
        %v2549 = vrot.slane %v2548, 4
        %v2551 = vld [vmem:[%s2530] sm:$0x1]
        %v2552 = vsel %vm2540, %v2549, %v2551
        %2553 = vst [vmem:[%s2530] sm:$0x1] %v2552
        %v2554 = vld [vmem:[#allocation3] sm:$0x2]
        %v2556 = vshrl.u32 %v2554, 16
        %v2558 = vrot.slane %v2556, 4
        %v2559 = vrot.slane %v2558, 4
        %vm2561 = vcmask 1041409
        %vm2562 = vmand %vm2561, %vm344
        %v2563 = vld [vmem:[%s2538] sm:$0x2]
        %v2564 = vsel %vm2562, %v2559, %v2563
        %2565 = vst [vmem:[%s2538] sm:$0x2] %v2564
        %v2566 = vld [vmem:[#allocation3] sm:$0x4]
        %v2568 = vrot.slane %v2566, 5
        %v2569 = vrot.slane %v2568, 4
        %v2571 = vld [vmem:[%s2530] sm:$0x2]
        %v2572 = vsel %vm2562, %v2569, %v2571
        %2573 = vst [vmem:[%s2530] sm:$0x2] %v2572
        %v2574 = vld [vmem:[#allocation3] sm:$0x4]
        %v2576 = vrot.slane %v2574, 5
        %v2577 = vrot.slane %v2576, 4
        %vm2579 = vsmask.f32 7942
        %vm2580 = vmand %vm2561, %vm2579
        %v2581 = vld [vmem:[%s2538] sm:$0x2]
        %v2582 = vsel %vm2580, %v2577, %v2581
        %2583 = vst [vmem:[%s2538] sm:$0x2] %v2582
        %v2584 = vld [vmem:[#allocation3] sm:$0x8]
        %v2586 = vshll.u32 %v2584, 16
        %v2588 = vrot.slane %v2586, 6
        %v2589 = vrot.slane %v2588, 4
        %v2591 = vld [vmem:[%s2530] sm:$0x2]
        %v2592 = vsel %vm2580, %v2589, %v2591
        %2593 = vst [vmem:[%s2530] sm:$0x2] %v2592
        %v2594 = vld [vmem:[#allocation3] sm:$0x8]
        %v2596 = vshrl.u32 %v2594, 16
        %v2598 = vrot.slane %v2596, 5
        %v2599 = vrot.slane %v2598, 4
        %vm2601 = vcmask 1042434
        %vm2602 = vmand %vm2601, %vm281
        %v2603 = vld [vmem:[%s2538] sm:$0x4]
        %v2604 = vsel %vm2602, %v2599, %v2603
        %2605 = vst [vmem:[%s2538] sm:$0x4] %v2604
        %v2606 = vld [vmem:[#allocation3 + $0x4] sm:$0x1]
        %s2607 = scalar_lea.vmem [#allocation4], 24
        %v2608 = vld [vmem:[%s2607] sm:$0x1]
        %v2609 = vsel %vm2533, %v2606, %v2608
        %2610 = vst [vmem:[%s2607] sm:$0x1] %v2609
        %v2611 = vld [vmem:[#allocation3 + $0x4] sm:$0x1]
        %s2612 = scalar_lea.vmem [#allocation4], 4
        %v2613 = vld [vmem:[%s2612] sm:$0x1]
        %v2614 = vsel %vm2540, %v2611, %v2613
        %2615 = vst [vmem:[%s2612] sm:$0x1] %v2614
        %v2616 = vld [vmem:[#allocation3 + $0x4] sm:$0x2]
        %v2618 = vshll.u32 %v2616, 16
        %v2620 = vrot.slane %v2618, 5
        %v2621 = vrot.slane %v2620, 4
        %v2623 = vld [vmem:[%s2607] sm:$0x1]
        %v2624 = vsel %vm2540, %v2621, %v2623
        %2625 = vst [vmem:[%s2607] sm:$0x1] %v2624
        %v2626 = vld [vmem:[#allocation3 + $0x4] sm:$0x2]
        %v2628 = vshrl.u32 %v2626, 16
        %v2630 = vrot.slane %v2628, 4
        %v2631 = vrot.slane %v2630, 4
        %v2633 = vld [vmem:[%s2612] sm:$0x2]
        %v2634 = vsel %vm2562, %v2631, %v2633
        %2635 = vst [vmem:[%s2612] sm:$0x2] %v2634
        %v2636 = vld [vmem:[#allocation3 + $0x4] sm:$0x4]
        %v2638 = vrot.slane %v2636, 5
        %v2639 = vrot.slane %v2638, 4
        %v2641 = vld [vmem:[%s2607] sm:$0x2]
        %v2642 = vsel %vm2562, %v2639, %v2641
        %2643 = vst [vmem:[%s2607] sm:$0x2] %v2642
        %v2644 = vld [vmem:[#allocation3 + $0x4] sm:$0x4]
        %v2646 = vrot.slane %v2644, 5
        %v2647 = vrot.slane %v2646, 4
        %v2649 = vld [vmem:[%s2612] sm:$0x2]
        %v2650 = vsel %vm2580, %v2647, %v2649
        %2651 = vst [vmem:[%s2612] sm:$0x2] %v2650
        %v2652 = vld [vmem:[#allocation3 + $0x4] sm:$0x8]
        %v2654 = vshll.u32 %v2652, 16
        %v2656 = vrot.slane %v2654, 6
        %v2657 = vrot.slane %v2656, 4
        %v2659 = vld [vmem:[%s2607] sm:$0x2]
        %v2660 = vsel %vm2580, %v2657, %v2659
        %2661 = vst [vmem:[%s2607] sm:$0x2] %v2660
        %v2662 = vld [vmem:[#allocation3 + $0x4] sm:$0x8]
        %v2664 = vshrl.u32 %v2662, 16
        %v2666 = vrot.slane %v2664, 5
        %v2667 = vrot.slane %v2666, 4
        %v2669 = vld [vmem:[%s2612] sm:$0x4]
        %v2670 = vsel %vm2602, %v2667, %v2669
        %2671 = vst [vmem:[%s2612] sm:$0x4] %v2670
        %v2672 = vld [vmem:[#allocation3 + $0x8] sm:$0x1]
        %s2673 = scalar_lea.vmem [#allocation4], 64
        %v2674 = vld [vmem:[%s2673] sm:$0x1]
        %v2675 = vsel %vm2533, %v2672, %v2674
        %2676 = vst [vmem:[%s2673] sm:$0x1] %v2675
        %v2677 = vld [vmem:[#allocation3 + $0x8] sm:$0x1]
        %s2678 = scalar_lea.vmem [#allocation4], 44
        %v2679 = vld [vmem:[%s2678] sm:$0x1]
        %v2680 = vsel %vm2540, %v2677, %v2679
        %2681 = vst [vmem:[%s2678] sm:$0x1] %v2680
        %v2682 = vld [vmem:[#allocation3 + $0x8] sm:$0x2]
        %v2684 = vshll.u32 %v2682, 16
        %v2686 = vrot.slane %v2684, 5
        %v2687 = vrot.slane %v2686, 4
        %v2689 = vld [vmem:[%s2673] sm:$0x1]
        %v2690 = vsel %vm2540, %v2687, %v2689
        %2691 = vst [vmem:[%s2673] sm:$0x1] %v2690
        %v2692 = vld [vmem:[#allocation3 + $0x8] sm:$0x2]
        %v2694 = vshrl.u32 %v2692, 16
        %v2696 = vrot.slane %v2694, 4
        %v2697 = vrot.slane %v2696, 4
        %v2699 = vld [vmem:[%s2678] sm:$0x2]
        %v2700 = vsel %vm2562, %v2697, %v2699
        %2701 = vst [vmem:[%s2678] sm:$0x2] %v2700
        %v2702 = vld [vmem:[#allocation3 + $0x8] sm:$0x4]
        %v2704 = vrot.slane %v2702, 5
        %v2705 = vrot.slane %v2704, 4
        %v2707 = vld [vmem:[%s2673] sm:$0x2]
        %v2708 = vsel %vm2562, %v2705, %v2707
        %2709 = vst [vmem:[%s2673] sm:$0x2] %v2708
        %v2710 = vld [vmem:[#allocation3 + $0x8] sm:$0x4]
        %v2712 = vrot.slane %v2710, 5
        %v2713 = vrot.slane %v2712, 4
        %v2715 = vld [vmem:[%s2678] sm:$0x2]
        %v2716 = vsel %vm2580, %v2713, %v2715
        %2717 = vst [vmem:[%s2678] sm:$0x2] %v2716
        %v2718 = vld [vmem:[#allocation3 + $0x8] sm:$0x8]
        %v2720 = vshll.u32 %v2718, 16
        %v2722 = vrot.slane %v2720, 6
        %v2723 = vrot.slane %v2722, 4
        %v2725 = vld [vmem:[%s2673] sm:$0x2]
        %v2726 = vsel %vm2580, %v2723, %v2725
        %2727 = vst [vmem:[%s2673] sm:$0x2] %v2726
        %v2728 = vld [vmem:[#allocation3 + $0x8] sm:$0x8]
        %v2730 = vshrl.u32 %v2728, 16
        %v2732 = vrot.slane %v2730, 5
        %v2733 = vrot.slane %v2732, 4
        %v2735 = vld [vmem:[%s2678] sm:$0x4]
        %v2736 = vsel %vm2602, %v2733, %v2735
        %2737 = vst [vmem:[%s2678] sm:$0x4] %v2736
        %v2738 = vld [vmem:[#allocation3 + $0xc] sm:$0x1]
        %s2739 = scalar_lea.vmem [#allocation4], 28
        %v2740 = vld [vmem:[%s2739] sm:$0x1]
        %v2741 = vsel %vm2533, %v2738, %v2740
        %2742 = vst [vmem:[%s2739] sm:$0x1] %v2741
        %v2743 = vld [vmem:[#allocation3 + $0xc] sm:$0x1]
        %s2744 = scalar_lea.vmem [#allocation4], 8
        %v2745 = vld [vmem:[%s2744] sm:$0x1]
        %v2746 = vsel %vm2540, %v2743, %v2745
        %2747 = vst [vmem:[%s2744] sm:$0x1] %v2746
        %v2748 = vld [vmem:[#allocation3 + $0xc] sm:$0x2]
        %v2750 = vshll.u32 %v2748, 16
        %v2752 = vrot.slane %v2750, 5
        %v2753 = vrot.slane %v2752, 4
        %v2755 = vld [vmem:[%s2739] sm:$0x1]
        %v2756 = vsel %vm2540, %v2753, %v2755
        %2757 = vst [vmem:[%s2739] sm:$0x1] %v2756
        %v2758 = vld [vmem:[#allocation3 + $0xc] sm:$0x2]
        %v2760 = vshrl.u32 %v2758, 16
        %v2762 = vrot.slane %v2760, 4
        %v2763 = vrot.slane %v2762, 4
        %v2765 = vld [vmem:[%s2744] sm:$0x2]
        %v2766 = vsel %vm2562, %v2763, %v2765
        %2767 = vst [vmem:[%s2744] sm:$0x2] %v2766
        %v2768 = vld [vmem:[#allocation3 + $0xc] sm:$0x4]
        %v2770 = vrot.slane %v2768, 5
        %v2771 = vrot.slane %v2770, 4
        %v2773 = vld [vmem:[%s2739] sm:$0x2]
        %v2774 = vsel %vm2562, %v2771, %v2773
        %2775 = vst [vmem:[%s2739] sm:$0x2] %v2774
        %v2776 = vld [vmem:[#allocation3 + $0xc] sm:$0x4]
        %v2778 = vrot.slane %v2776, 5
        %v2779 = vrot.slane %v2778, 4
        %v2781 = vld [vmem:[%s2744] sm:$0x2]
        %v2782 = vsel %vm2580, %v2779, %v2781
        %2783 = vst [vmem:[%s2744] sm:$0x2] %v2782
        %v2784 = vld [vmem:[#allocation3 + $0xc] sm:$0x8]
        %v2786 = vshll.u32 %v2784, 16
        %v2788 = vrot.slane %v2786, 6
        %v2789 = vrot.slane %v2788, 4
        %v2791 = vld [vmem:[%s2739] sm:$0x2]
        %v2792 = vsel %vm2580, %v2789, %v2791
        %2793 = vst [vmem:[%s2739] sm:$0x2] %v2792
        %v2794 = vld [vmem:[#allocation3 + $0xc] sm:$0x8]
        %v2796 = vshrl.u32 %v2794, 16
        %v2798 = vrot.slane %v2796, 5
        %v2799 = vrot.slane %v2798, 4
        %v2801 = vld [vmem:[%s2744] sm:$0x4]
        %v2802 = vsel %vm2602, %v2799, %v2801
        %2803 = vst [vmem:[%s2744] sm:$0x4] %v2802
        %v2804 = vld [vmem:[#allocation3 + $0x10] sm:$0x1]
        %s2805 = scalar_lea.vmem [#allocation4], 68
        %v2806 = vld [vmem:[%s2805] sm:$0x1]
        %v2807 = vsel %vm2533, %v2804, %v2806
        %2808 = vst [vmem:[%s2805] sm:$0x1] %v2807
        %v2809 = vld [vmem:[#allocation3 + $0x10] sm:$0x1]
        %s2810 = scalar_lea.vmem [#allocation4], 48
        %v2811 = vld [vmem:[%s2810] sm:$0x1]
        %v2812 = vsel %vm2540, %v2809, %v2811
        %2813 = vst [vmem:[%s2810] sm:$0x1] %v2812
        %v2814 = vld [vmem:[#allocation3 + $0x10] sm:$0x2]
        %v2816 = vshll.u32 %v2814, 16
        %v2818 = vrot.slane %v2816, 5
        %v2819 = vrot.slane %v2818, 4
        %v2821 = vld [vmem:[%s2805] sm:$0x1]
        %v2822 = vsel %vm2540, %v2819, %v2821
        %2823 = vst [vmem:[%s2805] sm:$0x1] %v2822
        %v2824 = vld [vmem:[#allocation3 + $0x10] sm:$0x2]
        %v2826 = vshrl.u32 %v2824, 16
        %v2828 = vrot.slane %v2826, 4
        %v2829 = vrot.slane %v2828, 4
        %v2831 = vld [vmem:[%s2810] sm:$0x2]
        %v2832 = vsel %vm2562, %v2829, %v2831
        %2833 = vst [vmem:[%s2810] sm:$0x2] %v2832
        %v2834 = vld [vmem:[#allocation3 + $0x10] sm:$0x4]
        %v2836 = vrot.slane %v2834, 5
        %v2837 = vrot.slane %v2836, 4
        %v2839 = vld [vmem:[%s2805] sm:$0x2]
        %v2840 = vsel %vm2562, %v2837, %v2839
        %2841 = vst [vmem:[%s2805] sm:$0x2] %v2840
        %v2842 = vld [vmem:[#allocation3 + $0x10] sm:$0x4]
        %v2844 = vrot.slane %v2842, 5
        %v2845 = vrot.slane %v2844, 4
        %v2847 = vld [vmem:[%s2810] sm:$0x2]
        %v2848 = vsel %vm2580, %v2845, %v2847
        %2849 = vst [vmem:[%s2810] sm:$0x2] %v2848
        %v2850 = vld [vmem:[#allocation3 + $0x10] sm:$0x8]
        %v2852 = vshll.u32 %v2850, 16
        %v2854 = vrot.slane %v2852, 6
        %v2855 = vrot.slane %v2854, 4
        %v2857 = vld [vmem:[%s2805] sm:$0x2]
        %v2858 = vsel %vm2580, %v2855, %v2857
        %2859 = vst [vmem:[%s2805] sm:$0x2] %v2858
        %v2860 = vld [vmem:[#allocation3 + $0x10] sm:$0x8]
        %v2862 = vshrl.u32 %v2860, 16
        %v2864 = vrot.slane %v2862, 5
        %v2865 = vrot.slane %v2864, 4
        %v2867 = vld [vmem:[%s2810] sm:$0x4]
        %v2868 = vsel %vm2602, %v2865, %v2867
        %2869 = vst [vmem:[%s2810] sm:$0x4] %v2868
        %v2870 = vld [vmem:[#allocation3 + $0x14] sm:$0x1]
        %s2871 = scalar_lea.vmem [#allocation4], 32
        %v2872 = vld [vmem:[%s2871] sm:$0x1]
        %v2873 = vsel %vm2533, %v2870, %v2872
        %2874 = vst [vmem:[%s2871] sm:$0x1] %v2873
        %v2875 = vld [vmem:[#allocation3 + $0x14] sm:$0x1]
        %s2876 = scalar_lea.vmem [#allocation4], 12
        %v2877 = vld [vmem:[%s2876] sm:$0x1]
        %v2878 = vsel %vm2540, %v2875, %v2877
        %2879 = vst [vmem:[%s2876] sm:$0x1] %v2878
        %v2880 = vld [vmem:[#allocation3 + $0x14] sm:$0x2]
        %v2882 = vshll.u32 %v2880, 16
        %v2884 = vrot.slane %v2882, 5
        %v2885 = vrot.slane %v2884, 4
        %v2887 = vld [vmem:[%s2871] sm:$0x1]
        %v2888 = vsel %vm2540, %v2885, %v2887
        %2889 = vst [vmem:[%s2871] sm:$0x1] %v2888
        %v2890 = vld [vmem:[#allocation3 + $0x14] sm:$0x2]
        %v2892 = vshrl.u32 %v2890, 16
        %v2894 = vrot.slane %v2892, 4
        %v2895 = vrot.slane %v2894, 4
        %v2897 = vld [vmem:[%s2876] sm:$0x2]
        %v2898 = vsel %vm2562, %v2895, %v2897
        %2899 = vst [vmem:[%s2876] sm:$0x2] %v2898
        %v2900 = vld [vmem:[#allocation3 + $0x14] sm:$0x4]
        %v2902 = vrot.slane %v2900, 5
        %v2903 = vrot.slane %v2902, 4
        %v2905 = vld [vmem:[%s2871] sm:$0x2]
        %v2906 = vsel %vm2562, %v2903, %v2905
        %2907 = vst [vmem:[%s2871] sm:$0x2] %v2906
        %v2908 = vld [vmem:[#allocation3 + $0x14] sm:$0x4]
        %v2910 = vrot.slane %v2908, 5
        %v2911 = vrot.slane %v2910, 4
        %v2913 = vld [vmem:[%s2876] sm:$0x2]
        %v2914 = vsel %vm2580, %v2911, %v2913
        %2915 = vst [vmem:[%s2876] sm:$0x2] %v2914
        %v2916 = vld [vmem:[#allocation3 + $0x14] sm:$0x8]
        %v2918 = vshll.u32 %v2916, 16
        %v2920 = vrot.slane %v2918, 6
        %v2921 = vrot.slane %v2920, 4
        %v2923 = vld [vmem:[%s2871] sm:$0x2]
        %v2924 = vsel %vm2580, %v2921, %v2923
        %2925 = vst [vmem:[%s2871] sm:$0x2] %v2924
        %v2926 = vld [vmem:[#allocation3 + $0x14] sm:$0x8]
        %v2928 = vshrl.u32 %v2926, 16
        %v2930 = vrot.slane %v2928, 5
        %v2931 = vrot.slane %v2930, 4
        %v2933 = vld [vmem:[%s2876] sm:$0x4]
        %v2934 = vsel %vm2602, %v2931, %v2933
        %2935 = vst [vmem:[%s2876] sm:$0x4] %v2934
        %v2936 = vld [vmem:[#allocation3 + $0x18] sm:$0x1]
        %s2937 = scalar_lea.vmem [#allocation4], 72
        %v2938 = vld [vmem:[%s2937] sm:$0x1]
        %v2939 = vsel %vm2533, %v2936, %v2938
        %2940 = vst [vmem:[%s2937] sm:$0x1] %v2939
        %v2941 = vld [vmem:[#allocation3 + $0x18] sm:$0x1]
        %s2942 = scalar_lea.vmem [#allocation4], 52
        %v2943 = vld [vmem:[%s2942] sm:$0x1]
        %v2944 = vsel %vm2540, %v2941, %v2943
        %2945 = vst [vmem:[%s2942] sm:$0x1] %v2944
        %v2946 = vld [vmem:[#allocation3 + $0x18] sm:$0x2]
        %v2948 = vshll.u32 %v2946, 16
        %v2950 = vrot.slane %v2948, 5
        %v2951 = vrot.slane %v2950, 4
        %v2953 = vld [vmem:[%s2937] sm:$0x1]
        %v2954 = vsel %vm2540, %v2951, %v2953
        %2955 = vst [vmem:[%s2937] sm:$0x1] %v2954
        %v2956 = vld [vmem:[#allocation3 + $0x18] sm:$0x2]
        %v2958 = vshrl.u32 %v2956, 16
        %v2960 = vrot.slane %v2958, 4
        %v2961 = vrot.slane %v2960, 4
        %v2963 = vld [vmem:[%s2942] sm:$0x2]
        %v2964 = vsel %vm2562, %v2961, %v2963
        %2965 = vst [vmem:[%s2942] sm:$0x2] %v2964
        %v2966 = vld [vmem:[#allocation3 + $0x18] sm:$0x4]
        %v2968 = vrot.slane %v2966, 5
        %v2969 = vrot.slane %v2968, 4
        %v2971 = vld [vmem:[%s2937] sm:$0x2]
        %v2972 = vsel %vm2562, %v2969, %v2971
        %2973 = vst [vmem:[%s2937] sm:$0x2] %v2972
        %v2974 = vld [vmem:[#allocation3 + $0x18] sm:$0x4]
        %v2976 = vrot.slane %v2974, 5
        %v2977 = vrot.slane %v2976, 4
        %v2979 = vld [vmem:[%s2942] sm:$0x2]
        %v2980 = vsel %vm2580, %v2977, %v2979
        %2981 = vst [vmem:[%s2942] sm:$0x2] %v2980
        %v2982 = vld [vmem:[#allocation3 + $0x18] sm:$0x8]
        %v2984 = vshll.u32 %v2982, 16
        %v2986 = vrot.slane %v2984, 6
        %v2987 = vrot.slane %v2986, 4
        %v2989 = vld [vmem:[%s2937] sm:$0x2]
        %v2990 = vsel %vm2580, %v2987, %v2989
        %2991 = vst [vmem:[%s2937] sm:$0x2] %v2990
        %v2992 = vld [vmem:[#allocation3 + $0x18] sm:$0x8]
        %v2994 = vshrl.u32 %v2992, 16
        %v2996 = vrot.slane %v2994, 5
        %v2997 = vrot.slane %v2996, 4
        %v2999 = vld [vmem:[%s2942] sm:$0x4]
        %v3000 = vsel %vm2602, %v2997, %v2999
        %3001 = vst [vmem:[%s2942] sm:$0x4] %v3000
        %v3002 = vld [vmem:[#allocation3 + $0x1c] sm:$0x1]
        %s3003 = scalar_lea.vmem [#allocation4], 36
        %v3004 = vld [vmem:[%s3003] sm:$0x1]
        %v3005 = vsel %vm2533, %v3002, %v3004
        %3006 = vst [vmem:[%s3003] sm:$0x1] %v3005
        %v3007 = vld [vmem:[#allocation3 + $0x1c] sm:$0x1]
        %s3008 = scalar_lea.vmem [#allocation4], 16
        %v3009 = vld [vmem:[%s3008] sm:$0x1]
        %v3010 = vsel %vm2540, %v3007, %v3009
        %3011 = vst [vmem:[%s3008] sm:$0x1] %v3010
        %v3012 = vld [vmem:[#allocation3 + $0x1c] sm:$0x2]
        %v3014 = vshll.u32 %v3012, 16
        %v3016 = vrot.slane %v3014, 5
        %v3017 = vrot.slane %v3016, 4
        %v3019 = vld [vmem:[%s3003] sm:$0x1]
        %v3020 = vsel %vm2540, %v3017, %v3019
        %3021 = vst [vmem:[%s3003] sm:$0x1] %v3020
        %v3022 = vld [vmem:[#allocation3 + $0x1c] sm:$0x2]
        %v3024 = vshrl.u32 %v3022, 16
        %v3026 = vrot.slane %v3024, 4
        %v3027 = vrot.slane %v3026, 4
        %v3029 = vld [vmem:[%s3008] sm:$0x2]
        %v3030 = vsel %vm2562, %v3027, %v3029
        %3031 = vst [vmem:[%s3008] sm:$0x2] %v3030
        %v3032 = vld [vmem:[#allocation3 + $0x1c] sm:$0x4]
        %v3034 = vrot.slane %v3032, 5
        %v3035 = vrot.slane %v3034, 4
        %v3037 = vld [vmem:[%s3003] sm:$0x2]
        %v3038 = vsel %vm2562, %v3035, %v3037
        %3039 = vst [vmem:[%s3003] sm:$0x2] %v3038
        %v3040 = vld [vmem:[#allocation3 + $0x1c] sm:$0x4]
        %v3042 = vrot.slane %v3040, 5
        %v3043 = vrot.slane %v3042, 4
        %v3045 = vld [vmem:[%s3008] sm:$0x2]
        %v3046 = vsel %vm2580, %v3043, %v3045
        %3047 = vst [vmem:[%s3008] sm:$0x2] %v3046
        %v3048 = vld [vmem:[#allocation3 + $0x1c] sm:$0x8]
        %v3050 = vshll.u32 %v3048, 16
        %v3052 = vrot.slane %v3050, 6
        %v3053 = vrot.slane %v3052, 4
        %v3055 = vld [vmem:[%s3003] sm:$0x2]
        %v3056 = vsel %vm2580, %v3053, %v3055
        %3057 = vst [vmem:[%s3003] sm:$0x2] %v3056
        %v3058 = vld [vmem:[#allocation3 + $0x1c] sm:$0x8]
        %v3060 = vshrl.u32 %v3058, 16
        %v3062 = vrot.slane %v3060, 5
        %v3063 = vrot.slane %v3062, 4
        %v3065 = vld [vmem:[%s3008] sm:$0x4]
        %v3066 = vsel %vm2602, %v3063, %v3065
        %3067 = vst [vmem:[%s3008] sm:$0x4] %v3066
        %v3068 = vld [vmem:[#allocation4] sm:$0x3]
        %3069 = vst [vmem:[#allocation2] sm:$0x3] %v3068
        %v3070 = vld [vmem:[%s2612] sm:$0x3]
        %v3072 = vrot.slane %v3070, 6
        %3074 = vst [vmem:[#allocation2] sm:$0xc] %v3072
        %v3075 = vld [vmem:[%s2744] sm:$0x3]
        %3076 = vst [vmem:[#allocation2 + $0x4] sm:$0x3] %v3075
        %v3077 = vld [vmem:[%s2876] sm:$0x3]
        %v3079 = vrot.slane %v3077, 6
        %3081 = vst [vmem:[#allocation2 + $0x4] sm:$0xc] %v3079
        %v3082 = vld [vmem:[%s1 + $0x240] sm:$0xf]
        %v3083 = vld [vmem:[%s1 + $0x244] sm:$0xf]
        %v3084 = vld [vmem:[%s1 + $0x248] sm:$0xf]
        %v3085 = vld [vmem:[%s1 + $0x24c] sm:$0xf]
        %v3086 = vld [vmem:[%s1 + $0x250] sm:$0xf]
        %v3087 = vld [vmem:[%s1 + $0x254] sm:$0xf]
        %v3088 = vld [vmem:[%s1 + $0x258] sm:$0xf]
        %v3089 = vld [vmem:[%s1 + $0x25c] sm:$0xf]
        %v3090 = vld [vmem:[%s1 + $0x260] sm:$0xf]
        %v3091 = vld [vmem:[%s1 + $0x264] sm:$0xf]
        %v3092 = vld [vmem:[%s1 + $0x268] sm:$0xf]
        %v3093 = vld [vmem:[%s1 + $0x26c] sm:$0xf]
        %v3094 = vld [vmem:[%s1 + $0x270] sm:$0xf]
        %v3095 = vld [vmem:[%s1 + $0x274] sm:$0xf]
        %v3096 = vld [vmem:[%s1 + $0x278] sm:$0xf]
        %v3097 = vld [vmem:[%s1 + $0x27c] sm:$0xf]
        %v3098 = vld [vmem:[#allocation2] sm:$0xf]
        %v3099 = vld [vmem:[#allocation2 + $0x4] sm:$0xf]
        %s3100 = scalar_lea.vmem [#allocation4], 20
        %v3101 = vld [vmem:[%s3100] sm:$0x3]
        %3102 = vst [vmem:[#allocation2] sm:$0x3] %v3101
        %v3103 = vld [vmem:[%s2607] sm:$0x3]
        %v3105 = vrot.slane %v3103, 6
        %3107 = vst [vmem:[#allocation2] sm:$0xc] %v3105
        %v3108 = vld [vmem:[%s2739] sm:$0x3]
        %3109 = vst [vmem:[#allocation2 + $0x4] sm:$0x3] %v3108
        %v3110 = vld [vmem:[%s2871] sm:$0x3]
        %v3112 = vrot.slane %v3110, 6
        %3114 = vst [vmem:[#allocation2 + $0x4] sm:$0xc] %v3112
        %v3115 = vld [vmem:[%s1 + $0x280] sm:$0xf]
        %v3116 = vld [vmem:[%s1 + $0x284] sm:$0xf]
        %v3117 = vld [vmem:[%s1 + $0x288] sm:$0xf]
        %v3118 = vld [vmem:[%s1 + $0x28c] sm:$0xf]
        %v3119 = vld [vmem:[%s1 + $0x290] sm:$0xf]
        %v3120 = vld [vmem:[%s1 + $0x294] sm:$0xf]
        %v3121 = vld [vmem:[%s1 + $0x298] sm:$0xf]
        %v3122 = vld [vmem:[%s1 + $0x29c] sm:$0xf]
        %v3123 = vld [vmem:[%s1 + $0x2a0] sm:$0xf]
        %v3124 = vld [vmem:[%s1 + $0x2a4] sm:$0xf]
        %v3125 = vld [vmem:[%s1 + $0x2a8] sm:$0xf]
        %v3126 = vld [vmem:[%s1 + $0x2ac] sm:$0xf]
        %v3127 = vld [vmem:[%s1 + $0x2b0] sm:$0xf]
        %v3128 = vld [vmem:[%s1 + $0x2b4] sm:$0xf]
        %v3129 = vld [vmem:[%s1 + $0x2b8] sm:$0xf]
        %v3130 = vld [vmem:[%s1 + $0x2bc] sm:$0xf]
        %v3131 = vld [vmem:[#allocation2] sm:$0xf]
        %v3132 = vld [vmem:[#allocation2 + $0x4] sm:$0xf]
        %v3135 = vunpack.c.l.b16 %v3131
        %v3136 = vunpack.c.l.b16 %v3132
        %v3137 = vpack.c.b16 %v3136, %v3135
        %v3155 = vunpack.c.l.b16 %v3115
        %v3156 = vunpack.c.l.b16 %v3116
        %v3157 = vunpack.c.l.b16 %v3117
        %v3158 = vunpack.c.l.b16 %v3118
        %v3159 = vunpack.c.l.b16 %v3119
        %v3160 = vunpack.c.l.b16 %v3120
        %v3161 = vunpack.c.l.b16 %v3121
        %v3162 = vunpack.c.l.b16 %v3122
        %v3163 = vunpack.c.l.b16 %v3123
        %v3164 = vunpack.c.l.b16 %v3124
        %v3165 = vunpack.c.l.b16 %v3125
        %v3166 = vunpack.c.l.b16 %v3126
        %v3167 = vunpack.c.l.b16 %v3127
        %v3168 = vunpack.c.l.b16 %v3128
        %v3169 = vunpack.c.l.b16 %v3129
        %v3170 = vunpack.c.l.b16 %v3130
        %v3171 = vpack.c.b16 %v3156, %v3155
        %v3172 = vpack.c.b16 %v3158, %v3157
        %v3173 = vpack.c.b16 %v3160, %v3159
        %v3174 = vpack.c.b16 %v3162, %v3161
        %v3175 = vpack.c.b16 %v3164, %v3163
        %v3176 = vpack.c.b16 %v3166, %v3165
        %v3177 = vpack.c.b16 %v3168, %v3167
        %v3178 = vpack.c.b16 %v3170, %v3169
        %3187 = vmatprep.subr.bf16.mxu0 0
        %3188 = vmatpush1.bf16.msra.mxu0 %v3178
        %3189 = vmatprep.subr.bf16.mxu0 0
        %3190 = vmatpush1.bf16.msra.mxu0 %v3177
        %3191 = vmatprep.subr.bf16.mxu0 0
        %3192 = vmatpush1.bf16.msra.mxu0 %v3176
        %3193 = vmatprep.subr.bf16.mxu0 0
        %3194 = vmatpush1.bf16.msra.mxu0 %v3175
        %3195 = vmatprep.subr.bf16.mxu0 0
        %3196 = vmatpush1.bf16.msra.mxu0 %v3174
        %3197 = vmatprep.subr.bf16.mxu0 0
        %3198 = vmatpush1.bf16.msra.mxu0 %v3173
        %3199 = vmatprep.subr.bf16.mxu0 0
        %3200 = vmatpush1.bf16.msra.mxu0 %v3172
        %3201 = vmatprep.subr.bf16.mxu0 0
        %3202 = vmatpush1.bf16.msra.mxu0 %v3171
        %3203 = vmatprep.subr.bf16.mxu0 0
        %3204 = vmatpush2.bf16.msra.mxu0 0
        %3205 = vmatprep.subr.bf16.mxu0 0
        %3206 = vmatpush2.bf16.msra.mxu0 0
        %3207 = vmatprep.subr.bf16.mxu0 0
        %3208 = vmatpush2.bf16.msra.mxu0 0
        %3209 = vmatprep.subr.bf16.mxu0 0
        %3210 = vmatpush2.bf16.msra.mxu0 0
        %3211 = vmatprep.subr.bf16.mxu0 0
        %3212 = vmatpush2.bf16.msra.mxu0 0
        %3213 = vmatprep.subr.bf16.mxu0 0
        %3214 = vmatpush2.bf16.msra.mxu0 0
        %3215 = vmatprep.subr.bf16.mxu0 0
        %3216 = vmatpush2.bf16.msra.mxu0 0
        %3217 = vmatprep.subr.bf16.mxu0 0
        %3218 = vmatpush2.bf16.msra.mxu0 0
        %3219 = vmatprep.mubr.bf16.mxu0 0
        %3220 = vmatmul.mubr.bf16.gmra.mxu0 %v3137
        %v3221 = vpop.f32.mrf.mxu0
        %v3222 = vadd.f32 0.0, %v3221
        %v3223 = vpop.f32.mrf.mxu0
        %v3224 = vpop.f32.mrf.mxu0
        %v3225 = vadd.f32 0.0, %v3224
        %v3226 = vpop.f32.mrf.mxu0
        %3227 = vdwg.mxu0
        %v3230 = vunpack.c.l.b16 %v3098
        %v3231 = vunpack.c.l.b16 %v3099
        %v3232 = vpack.c.b16 %v3231, %v3230
        %v3250 = vunpack.c.l.b16 %v3082
        %v3251 = vunpack.c.l.b16 %v3083
        %v3252 = vunpack.c.l.b16 %v3084
        %v3253 = vunpack.c.l.b16 %v3085
        %v3254 = vunpack.c.l.b16 %v3086
        %v3255 = vunpack.c.l.b16 %v3087
        %v3256 = vunpack.c.l.b16 %v3088
        %v3257 = vunpack.c.l.b16 %v3089
        %v3258 = vunpack.c.l.b16 %v3090
        %v3259 = vunpack.c.l.b16 %v3091
        %v3260 = vunpack.c.l.b16 %v3092
        %v3261 = vunpack.c.l.b16 %v3093
        %v3262 = vunpack.c.l.b16 %v3094
        %v3263 = vunpack.c.l.b16 %v3095
        %v3264 = vunpack.c.l.b16 %v3096
        %v3265 = vunpack.c.l.b16 %v3097
        %v3266 = vpack.c.b16 %v3251, %v3250
        %v3267 = vpack.c.b16 %v3253, %v3252
        %v3268 = vpack.c.b16 %v3255, %v3254
        %v3269 = vpack.c.b16 %v3257, %v3256
        %v3270 = vpack.c.b16 %v3259, %v3258
        %v3271 = vpack.c.b16 %v3261, %v3260
        %v3272 = vpack.c.b16 %v3263, %v3262
        %v3273 = vpack.c.b16 %v3265, %v3264
        %3282 = vmatprep.subr.bf16.mxu0 0
        %3283 = vmatpush1.bf16.msra.mxu0 %v3273
        %3284 = vmatprep.subr.bf16.mxu0 0
        %3285 = vmatpush1.bf16.msra.mxu0 %v3272
        %3286 = vmatprep.subr.bf16.mxu0 0
        %3287 = vmatpush1.bf16.msra.mxu0 %v3271
        %3288 = vmatprep.subr.bf16.mxu0 0
        %3289 = vmatpush1.bf16.msra.mxu0 %v3270
        %3290 = vmatprep.subr.bf16.mxu0 0
        %3291 = vmatpush1.bf16.msra.mxu0 %v3269
        %3292 = vmatprep.subr.bf16.mxu0 0
        %3293 = vmatpush1.bf16.msra.mxu0 %v3268
        %3294 = vmatprep.subr.bf16.mxu0 0
        %3295 = vmatpush1.bf16.msra.mxu0 %v3267
        %3296 = vmatprep.subr.bf16.mxu0 0
        %3297 = vmatpush1.bf16.msra.mxu0 %v3266
        %3298 = vmatprep.subr.bf16.mxu0 0
        %3299 = vmatpush2.bf16.msra.mxu0 0
        %3300 = vmatprep.subr.bf16.mxu0 0
        %3301 = vmatpush2.bf16.msra.mxu0 0
        %3302 = vmatprep.subr.bf16.mxu0 0
        %3303 = vmatpush2.bf16.msra.mxu0 0
        %3304 = vmatprep.subr.bf16.mxu0 0
        %3305 = vmatpush2.bf16.msra.mxu0 0
        %3306 = vmatprep.subr.bf16.mxu0 0
        %3307 = vmatpush2.bf16.msra.mxu0 0
        %3308 = vmatprep.subr.bf16.mxu0 0
        %3309 = vmatpush2.bf16.msra.mxu0 0
        %3310 = vmatprep.subr.bf16.mxu0 0
        %3311 = vmatpush2.bf16.msra.mxu0 0
        %3312 = vmatprep.subr.bf16.mxu0 0
        %3313 = vmatpush2.bf16.msra.mxu0 0
        %3314 = vmatprep.mubr.bf16.mxu0 0
        %3315 = vmatmul.mubr.bf16.gmra.mxu0 %v3232
        %v3316 = vpop.f32.mrf.mxu0
        %v3317 = vadd.f32 %v3222, %v3316
        %v3318 = vpop.f32.mrf.mxu0
        %v3319 = vpop.f32.mrf.mxu0
        %v3320 = vadd.f32 %v3225, %v3319
        %v3321 = vpop.f32.mrf.mxu0
        %3322 = vdwg.mxu0
        %v3323 = vld [vmem:[#allocation4] sm:$0x7]
        %v3325 = vshrl.u32 %v3323, 16
        %v3327 = vrot.slane %v3325, 4
        %v3328 = vshll.u32 %v3323, 16
        %v3330 = vrot.slane %v3328, 5
        %v3331 = vor.u32 %v3327, %v3330
        %v3332 = vrot.slane %v3331, 4
        %3334 = vst [vmem:[#allocation2] sm:$0x3] %v3332
        %v3335 = vld [vmem:[%s2612] sm:$0x7]
        %v3337 = vshrl.u32 %v3335, 16
        %v3339 = vrot.slane %v3337, 6
        %v3340 = vshll.u32 %v3335, 16
        %v3342 = vrot.slane %v3340, 7
        %v3343 = vor.u32 %v3339, %v3342
        %3345 = vst [vmem:[#allocation2] sm:$0xc] %v3343
        %v3346 = vld [vmem:[%s2744] sm:$0x7]
        %v3348 = vshrl.u32 %v3346, 16
        %v3350 = vrot.slane %v3348, 4
        %v3351 = vshll.u32 %v3346, 16
        %v3353 = vrot.slane %v3351, 5
        %v3354 = vor.u32 %v3350, %v3353
        %v3355 = vrot.slane %v3354, 4
        %3357 = vst [vmem:[#allocation2 + $0x4] sm:$0x3] %v3355
        %v3358 = vld [vmem:[%s2876] sm:$0x7]
        %v3360 = vshrl.u32 %v3358, 16
        %v3362 = vrot.slane %v3360, 6
        %v3363 = vshll.u32 %v3358, 16
        %v3365 = vrot.slane %v3363, 7
        %v3366 = vor.u32 %v3362, %v3365
        %3368 = vst [vmem:[#allocation2 + $0x4] sm:$0xc] %v3366
        %v3369 = vld [vmem:[%s1 + $0x2c0] sm:$0xf]
        %v3370 = vld [vmem:[%s1 + $0x2c4] sm:$0xf]
        %v3371 = vld [vmem:[%s1 + $0x2c8] sm:$0xf]
        %v3372 = vld [vmem:[%s1 + $0x2cc] sm:$0xf]
        %v3373 = vld [vmem:[%s1 + $0x2d0] sm:$0xf]
        %v3374 = vld [vmem:[%s1 + $0x2d4] sm:$0xf]
        %v3375 = vld [vmem:[%s1 + $0x2d8] sm:$0xf]
        %v3376 = vld [vmem:[%s1 + $0x2dc] sm:$0xf]
        %v3377 = vld [vmem:[%s1 + $0x2e0] sm:$0xf]
        %v3378 = vld [vmem:[%s1 + $0x2e4] sm:$0xf]
        %v3379 = vld [vmem:[%s1 + $0x2e8] sm:$0xf]
        %v3380 = vld [vmem:[%s1 + $0x2ec] sm:$0xf]
        %v3381 = vld [vmem:[%s1 + $0x2f0] sm:$0xf]
        %v3382 = vld [vmem:[%s1 + $0x2f4] sm:$0xf]
        %v3383 = vld [vmem:[%s1 + $0x2f8] sm:$0xf]
        %v3384 = vld [vmem:[%s1 + $0x2fc] sm:$0xf]
        %v3385 = vld [vmem:[#allocation2] sm:$0xf]
        %v3386 = vld [vmem:[#allocation2 + $0x4] sm:$0xf]
        %v3389 = vunpack.c.l.b16 %v3385
        %v3390 = vunpack.c.l.b16 %v3386
        %v3391 = vpack.c.b16 %v3390, %v3389
        %v3409 = vunpack.c.l.b16 %v3369
        %v3410 = vunpack.c.l.b16 %v3370
        %v3411 = vunpack.c.l.b16 %v3371
        %v3412 = vunpack.c.l.b16 %v3372
        %v3413 = vunpack.c.l.b16 %v3373
        %v3414 = vunpack.c.l.b16 %v3374
        %v3415 = vunpack.c.l.b16 %v3375
        %v3416 = vunpack.c.l.b16 %v3376
        %v3417 = vunpack.c.l.b16 %v3377
        %v3418 = vunpack.c.l.b16 %v3378
        %v3419 = vunpack.c.l.b16 %v3379
        %v3420 = vunpack.c.l.b16 %v3380
        %v3421 = vunpack.c.l.b16 %v3381
        %v3422 = vunpack.c.l.b16 %v3382
        %v3423 = vunpack.c.l.b16 %v3383
        %v3424 = vunpack.c.l.b16 %v3384
        %v3425 = vpack.c.b16 %v3410, %v3409
        %v3426 = vpack.c.b16 %v3412, %v3411
        %v3427 = vpack.c.b16 %v3414, %v3413
        %v3428 = vpack.c.b16 %v3416, %v3415
        %v3429 = vpack.c.b16 %v3418, %v3417
        %v3430 = vpack.c.b16 %v3420, %v3419
        %v3431 = vpack.c.b16 %v3422, %v3421
        %v3432 = vpack.c.b16 %v3424, %v3423
        %3441 = vmatprep.subr.bf16.mxu0 0
        %3442 = vmatpush1.bf16.msra.mxu0 %v3432
        %3443 = vmatprep.subr.bf16.mxu0 0
        %3444 = vmatpush1.bf16.msra.mxu0 %v3431
        %3445 = vmatprep.subr.bf16.mxu0 0
        %3446 = vmatpush1.bf16.msra.mxu0 %v3430
        %3447 = vmatprep.subr.bf16.mxu0 0
        %3448 = vmatpush1.bf16.msra.mxu0 %v3429
        %3449 = vmatprep.subr.bf16.mxu0 0
        %3450 = vmatpush1.bf16.msra.mxu0 %v3428
        %3451 = vmatprep.subr.bf16.mxu0 0
        %3452 = vmatpush1.bf16.msra.mxu0 %v3427
        %3453 = vmatprep.subr.bf16.mxu0 0
        %3454 = vmatpush1.bf16.msra.mxu0 %v3426
        %3455 = vmatprep.subr.bf16.mxu0 0
        %3456 = vmatpush1.bf16.msra.mxu0 %v3425
        %3457 = vmatprep.subr.bf16.mxu0 0
        %3458 = vmatpush2.bf16.msra.mxu0 0
        %3459 = vmatprep.subr.bf16.mxu0 0
        %3460 = vmatpush2.bf16.msra.mxu0 0
        %3461 = vmatprep.subr.bf16.mxu0 0
        %3462 = vmatpush2.bf16.msra.mxu0 0
        %3463 = vmatprep.subr.bf16.mxu0 0
        %3464 = vmatpush2.bf16.msra.mxu0 0
        %3465 = vmatprep.subr.bf16.mxu0 0
        %3466 = vmatpush2.bf16.msra.mxu0 0
        %3467 = vmatprep.subr.bf16.mxu0 0
        %3468 = vmatpush2.bf16.msra.mxu0 0
        %3469 = vmatprep.subr.bf16.mxu0 0
        %3470 = vmatpush2.bf16.msra.mxu0 0
        %3471 = vmatprep.subr.bf16.mxu0 0
        %3472 = vmatpush2.bf16.msra.mxu0 0
        %3473 = vmatprep.mubr.bf16.mxu0 0
        %3474 = vmatmul.mubr.bf16.gmra.mxu0 %v3391
        %v3475 = vpop.f32.mrf.mxu0
        %v3476 = vadd.f32 0.0, %v3475
        %v3477 = vpop.f32.mrf.mxu0
        %v3478 = vpop.f32.mrf.mxu0
        %v3479 = vadd.f32 0.0, %v3478
        %v3480 = vpop.f32.mrf.mxu0
        %3481 = vdwg.mxu0
        %v3482 = vadd.f32 %v3317, %v3476
        %v3483 = vadd.f32 %v3320, %v3479
        %v3484 = vld [vmem:[%s2538] sm:$0x3]
        %3485 = vst [vmem:[#allocation2] sm:$0x3] %v3484
        %v3486 = vld [vmem:[%s2678] sm:$0x3]
        %v3488 = vrot.slane %v3486, 6
        %3490 = vst [vmem:[#allocation2] sm:$0xc] %v3488
        %v3491 = vld [vmem:[%s2810] sm:$0x3]
        %3492 = vst [vmem:[#allocation2 + $0x4] sm:$0x3] %v3491
        %v3493 = vld [vmem:[%s2942] sm:$0x3]
        %v3495 = vrot.slane %v3493, 6
        %3497 = vst [vmem:[#allocation2 + $0x4] sm:$0xc] %v3495
        %v3498 = vld [vmem:[%s1 + $0x300] sm:$0xf]
        %v3499 = vld [vmem:[%s1 + $0x304] sm:$0xf]
        %v3500 = vld [vmem:[%s1 + $0x308] sm:$0xf]
        %v3501 = vld [vmem:[%s1 + $0x30c] sm:$0xf]
        %v3502 = vld [vmem:[%s1 + $0x310] sm:$0xf]
        %v3503 = vld [vmem:[%s1 + $0x314] sm:$0xf]
        %v3504 = vld [vmem:[%s1 + $0x318] sm:$0xf]
        %v3505 = vld [vmem:[%s1 + $0x31c] sm:$0xf]
        %v3506 = vld [vmem:[%s1 + $0x320] sm:$0xf]
        %v3507 = vld [vmem:[%s1 + $0x324] sm:$0xf]
        %v3508 = vld [vmem:[%s1 + $0x328] sm:$0xf]
        %v3509 = vld [vmem:[%s1 + $0x32c] sm:$0xf]
        %v3510 = vld [vmem:[%s1 + $0x330] sm:$0xf]
        %v3511 = vld [vmem:[%s1 + $0x334] sm:$0xf]
        %v3512 = vld [vmem:[%s1 + $0x338] sm:$0xf]
        %v3513 = vld [vmem:[%s1 + $0x33c] sm:$0xf]
        %v3514 = vld [vmem:[#allocation2] sm:$0xf]
        %v3515 = vld [vmem:[#allocation2 + $0x4] sm:$0xf]
        %v3518 = vunpack.c.l.b16 %v3514
        %v3519 = vunpack.c.l.b16 %v3515
        %v3520 = vpack.c.b16 %v3519, %v3518
        %v3538 = vunpack.c.l.b16 %v3498
        %v3539 = vunpack.c.l.b16 %v3499
        %v3540 = vunpack.c.l.b16 %v3500
        %v3541 = vunpack.c.l.b16 %v3501
        %v3542 = vunpack.c.l.b16 %v3502
        %v3543 = vunpack.c.l.b16 %v3503
        %v3544 = vunpack.c.l.b16 %v3504
        %v3545 = vunpack.c.l.b16 %v3505
        %v3546 = vunpack.c.l.b16 %v3506
        %v3547 = vunpack.c.l.b16 %v3507
        %v3548 = vunpack.c.l.b16 %v3508
        %v3549 = vunpack.c.l.b16 %v3509
        %v3550 = vunpack.c.l.b16 %v3510
        %v3551 = vunpack.c.l.b16 %v3511
        %v3552 = vunpack.c.l.b16 %v3512
        %v3553 = vunpack.c.l.b16 %v3513
        %v3554 = vpack.c.b16 %v3539, %v3538
        %v3555 = vpack.c.b16 %v3541, %v3540
        %v3556 = vpack.c.b16 %v3543, %v3542
        %v3557 = vpack.c.b16 %v3545, %v3544
        %v3558 = vpack.c.b16 %v3547, %v3546
        %v3559 = vpack.c.b16 %v3549, %v3548
        %v3560 = vpack.c.b16 %v3551, %v3550
        %v3561 = vpack.c.b16 %v3553, %v3552
        %3570 = vmatprep.subr.bf16.mxu0 0
        %3571 = vmatpush1.bf16.msra.mxu0 %v3561
        %3572 = vmatprep.subr.bf16.mxu0 0
        %3573 = vmatpush1.bf16.msra.mxu0 %v3560
        %3574 = vmatprep.subr.bf16.mxu0 0
        %3575 = vmatpush1.bf16.msra.mxu0 %v3559
        %3576 = vmatprep.subr.bf16.mxu0 0
        %3577 = vmatpush1.bf16.msra.mxu0 %v3558
        %3578 = vmatprep.subr.bf16.mxu0 0
        %3579 = vmatpush1.bf16.msra.mxu0 %v3557
        %3580 = vmatprep.subr.bf16.mxu0 0
        %3581 = vmatpush1.bf16.msra.mxu0 %v3556
        %3582 = vmatprep.subr.bf16.mxu0 0
        %3583 = vmatpush1.bf16.msra.mxu0 %v3555
        %3584 = vmatprep.subr.bf16.mxu0 0
        %3585 = vmatpush1.bf16.msra.mxu0 %v3554
        %3586 = vmatprep.subr.bf16.mxu0 0
        %3587 = vmatpush2.bf16.msra.mxu0 0
        %3588 = vmatprep.subr.bf16.mxu0 0
        %3589 = vmatpush2.bf16.msra.mxu0 0
        %3590 = vmatprep.subr.bf16.mxu0 0
        %3591 = vmatpush2.bf16.msra.mxu0 0
        %3592 = vmatprep.subr.bf16.mxu0 0
        %3593 = vmatpush2.bf16.msra.mxu0 0
        %3594 = vmatprep.subr.bf16.mxu0 0
        %3595 = vmatpush2.bf16.msra.mxu0 0
        %3596 = vmatprep.subr.bf16.mxu0 0
        %3597 = vmatpush2.bf16.msra.mxu0 0
        %3598 = vmatprep.subr.bf16.mxu0 0
        %3599 = vmatpush2.bf16.msra.mxu0 0
        %3600 = vmatprep.subr.bf16.mxu0 0
        %3601 = vmatpush2.bf16.msra.mxu0 0
        %3602 = vmatprep.mubr.bf16.mxu0 0
        %3603 = vmatmul.mubr.bf16.gmra.mxu0 %v3520
        %v3604 = vpop.f32.mrf.mxu0
        %v3605 = vadd.f32 0.0, %v3604
        %v3606 = vpop.f32.mrf.mxu0
        %v3607 = vpop.f32.mrf.mxu0
        %v3608 = vadd.f32 0.0, %v3607
        %v3609 = vpop.f32.mrf.mxu0
        %3610 = vdwg.mxu0
        %v3611 = vadd.f32 %v3482, %v3605
        %v3612 = vadd.f32 %v3483, %v3608
        %v3613 = vld [vmem:[%s2530] sm:$0x3]
        %3614 = vst [vmem:[#allocation2] sm:$0x3] %v3613
        %v3615 = vld [vmem:[%s2673] sm:$0x3]
        %v3617 = vrot.slane %v3615, 6
        %3619 = vst [vmem:[#allocation2] sm:$0xc] %v3617
        %v3620 = vld [vmem:[%s2805] sm:$0x3]
        %3621 = vst [vmem:[#allocation2 + $0x4] sm:$0x3] %v3620
        %v3622 = vld [vmem:[%s2937] sm:$0x3]
        %v3624 = vrot.slane %v3622, 6
        %3626 = vst [vmem:[#allocation2 + $0x4] sm:$0xc] %v3624
        %v3627 = vld [vmem:[%s1 + $0x340] sm:$0xf]
        %v3628 = vld [vmem:[%s1 + $0x344] sm:$0xf]
        %v3629 = vld [vmem:[%s1 + $0x348] sm:$0xf]
        %v3630 = vld [vmem:[%s1 + $0x34c] sm:$0xf]
        %v3631 = vld [vmem:[%s1 + $0x350] sm:$0xf]
        %v3632 = vld [vmem:[%s1 + $0x354] sm:$0xf]
        %v3633 = vld [vmem:[%s1 + $0x358] sm:$0xf]
        %v3634 = vld [vmem:[%s1 + $0x35c] sm:$0xf]
        %v3635 = vld [vmem:[%s1 + $0x360] sm:$0xf]
        %v3636 = vld [vmem:[%s1 + $0x364] sm:$0xf]
        %v3637 = vld [vmem:[%s1 + $0x368] sm:$0xf]
        %v3638 = vld [vmem:[%s1 + $0x36c] sm:$0xf]
        %v3639 = vld [vmem:[%s1 + $0x370] sm:$0xf]
        %v3640 = vld [vmem:[%s1 + $0x374] sm:$0xf]
        %v3641 = vld [vmem:[%s1 + $0x378] sm:$0xf]
        %v3642 = vld [vmem:[%s1 + $0x37c] sm:$0xf]
        %v3643 = vld [vmem:[#allocation2] sm:$0xf]
        %v3644 = vld [vmem:[#allocation2 + $0x4] sm:$0xf]
        %v3647 = vunpack.c.l.b16 %v3643
        %v3648 = vunpack.c.l.b16 %v3644
        %v3649 = vpack.c.b16 %v3648, %v3647
        %v3667 = vunpack.c.l.b16 %v3627
        %v3668 = vunpack.c.l.b16 %v3628
        %v3669 = vunpack.c.l.b16 %v3629
        %v3670 = vunpack.c.l.b16 %v3630
        %v3671 = vunpack.c.l.b16 %v3631
        %v3672 = vunpack.c.l.b16 %v3632
        %v3673 = vunpack.c.l.b16 %v3633
        %v3674 = vunpack.c.l.b16 %v3634
        %v3675 = vunpack.c.l.b16 %v3635
        %v3676 = vunpack.c.l.b16 %v3636
        %v3677 = vunpack.c.l.b16 %v3637
        %v3678 = vunpack.c.l.b16 %v3638
        %v3679 = vunpack.c.l.b16 %v3639
        %v3680 = vunpack.c.l.b16 %v3640
        %v3681 = vunpack.c.l.b16 %v3641
        %v3682 = vunpack.c.l.b16 %v3642
        %v3683 = vpack.c.b16 %v3668, %v3667
        %v3684 = vpack.c.b16 %v3670, %v3669
        %v3685 = vpack.c.b16 %v3672, %v3671
        %v3686 = vpack.c.b16 %v3674, %v3673
        %v3687 = vpack.c.b16 %v3676, %v3675
        %v3688 = vpack.c.b16 %v3678, %v3677
        %v3689 = vpack.c.b16 %v3680, %v3679
        %v3690 = vpack.c.b16 %v3682, %v3681
        %3699 = vmatprep.subr.bf16.mxu0 0
        %3700 = vmatpush1.bf16.msra.mxu0 %v3690
        %3701 = vmatprep.subr.bf16.mxu0 0
        %3702 = vmatpush1.bf16.msra.mxu0 %v3689
        %3703 = vmatprep.subr.bf16.mxu0 0
        %3704 = vmatpush1.bf16.msra.mxu0 %v3688
        %3705 = vmatprep.subr.bf16.mxu0 0
        %3706 = vmatpush1.bf16.msra.mxu0 %v3687
        %3707 = vmatprep.subr.bf16.mxu0 0
        %3708 = vmatpush1.bf16.msra.mxu0 %v3686
        %3709 = vmatprep.subr.bf16.mxu0 0
        %3710 = vmatpush1.bf16.msra.mxu0 %v3685
        %3711 = vmatprep.subr.bf16.mxu0 0
        %3712 = vmatpush1.bf16.msra.mxu0 %v3684
        %3713 = vmatprep.subr.bf16.mxu0 0
        %3714 = vmatpush1.bf16.msra.mxu0 %v3683
        %3715 = vmatprep.subr.bf16.mxu0 0
        %3716 = vmatpush2.bf16.msra.mxu0 0
        %3717 = vmatprep.subr.bf16.mxu0 0
        %3718 = vmatpush2.bf16.msra.mxu0 0
        %3719 = vmatprep.subr.bf16.mxu0 0
        %3720 = vmatpush2.bf16.msra.mxu0 0
        %3721 = vmatprep.subr.bf16.mxu0 0
        %3722 = vmatpush2.bf16.msra.mxu0 0
        %3723 = vmatprep.subr.bf16.mxu0 0
        %3724 = vmatpush2.bf16.msra.mxu0 0
        %3725 = vmatprep.subr.bf16.mxu0 0
        %3726 = vmatpush2.bf16.msra.mxu0 0
        %3727 = vmatprep.subr.bf16.mxu0 0
        %3728 = vmatpush2.bf16.msra.mxu0 0
        %3729 = vmatprep.subr.bf16.mxu0 0
        %3730 = vmatpush2.bf16.msra.mxu0 0
        %3731 = vmatprep.mubr.bf16.mxu0 0
        %3732 = vmatmul.mubr.bf16.gmra.mxu0 %v3649
        %v3733 = vpop.f32.mrf.mxu0
        %v3734 = vadd.f32 0.0, %v3733
        %v3735 = vpop.f32.mrf.mxu0
        %v3736 = vpop.f32.mrf.mxu0
        %v3737 = vadd.f32 0.0, %v3736
        %v3738 = vpop.f32.mrf.mxu0
        %3739 = vdwg.mxu0
        %v3740 = vadd.f32 %v3611, %v3734
        %v3741 = vadd.f32 %v3612, %v3737
        %v3742 = vld [vmem:[%s2538] sm:$0x7]
        %v3744 = vshrl.u32 %v3742, 16
        %v3746 = vrot.slane %v3744, 4
        %v3747 = vshll.u32 %v3742, 16
        %v3749 = vrot.slane %v3747, 5
        %v3750 = vor.u32 %v3746, %v3749
        %v3751 = vrot.slane %v3750, 4
        %3753 = vst [vmem:[#allocation2] sm:$0x3] %v3751
        %v3754 = vld [vmem:[%s2678] sm:$0x7]
        %v3756 = vshrl.u32 %v3754, 16
        %v3758 = vrot.slane %v3756, 6
        %v3759 = vshll.u32 %v3754, 16
        %v3761 = vrot.slane %v3759, 7
        %v3762 = vor.u32 %v3758, %v3761
        %3764 = vst [vmem:[#allocation2] sm:$0xc] %v3762
        %v3765 = vld [vmem:[%s2810] sm:$0x7]
        %v3767 = vshrl.u32 %v3765, 16
        %v3769 = vrot.slane %v3767, 4
        %v3770 = vshll.u32 %v3765, 16
        %v3772 = vrot.slane %v3770, 5
        %v3773 = vor.u32 %v3769, %v3772
        %v3774 = vrot.slane %v3773, 4
        %3776 = vst [vmem:[#allocation2 + $0x4] sm:$0x3] %v3774
        %v3777 = vld [vmem:[%s2942] sm:$0x7]
        %v3779 = vshrl.u32 %v3777, 16
        %v3781 = vrot.slane %v3779, 6
        %v3782 = vshll.u32 %v3777, 16
        %v3784 = vrot.slane %v3782, 7
        %v3785 = vor.u32 %v3781, %v3784
        %3787 = vst [vmem:[#allocation2 + $0x4] sm:$0xc] %v3785
        %v3788 = vld [vmem:[%s1 + $0x380] sm:$0xf]
        %v3789 = vld [vmem:[%s1 + $0x384] sm:$0xf]
        %v3790 = vld [vmem:[%s1 + $0x388] sm:$0xf]
        %v3791 = vld [vmem:[%s1 + $0x38c] sm:$0xf]
        %v3792 = vld [vmem:[%s1 + $0x390] sm:$0xf]
        %v3793 = vld [vmem:[%s1 + $0x394] sm:$0xf]
        %v3794 = vld [vmem:[%s1 + $0x398] sm:$0xf]
        %v3795 = vld [vmem:[%s1 + $0x39c] sm:$0xf]
        %v3796 = vld [vmem:[%s1 + $0x3a0] sm:$0xf]
        %v3797 = vld [vmem:[%s1 + $0x3a4] sm:$0xf]
        %v3798 = vld [vmem:[%s1 + $0x3a8] sm:$0xf]
        %v3799 = vld [vmem:[%s1 + $0x3ac] sm:$0xf]
        %v3800 = vld [vmem:[%s1 + $0x3b0] sm:$0xf]
        %v3801 = vld [vmem:[%s1 + $0x3b4] sm:$0xf]
        %v3802 = vld [vmem:[%s1 + $0x3b8] sm:$0xf]
        %v3803 = vld [vmem:[%s1 + $0x3bc] sm:$0xf]
        %v3804 = vld [vmem:[#allocation2] sm:$0xf]
        %v3805 = vld [vmem:[#allocation2 + $0x4] sm:$0xf]
        %v3808 = vunpack.c.l.b16 %v3804
        %v3809 = vunpack.c.l.b16 %v3805
        %v3810 = vpack.c.b16 %v3809, %v3808
        %v3828 = vunpack.c.l.b16 %v3788
        %v3829 = vunpack.c.l.b16 %v3789
        %v3830 = vunpack.c.l.b16 %v3790
        %v3831 = vunpack.c.l.b16 %v3791
        %v3832 = vunpack.c.l.b16 %v3792
        %v3833 = vunpack.c.l.b16 %v3793
        %v3834 = vunpack.c.l.b16 %v3794
        %v3835 = vunpack.c.l.b16 %v3795
        %v3836 = vunpack.c.l.b16 %v3796
        %v3837 = vunpack.c.l.b16 %v3797
        %v3838 = vunpack.c.l.b16 %v3798
        %v3839 = vunpack.c.l.b16 %v3799
        %v3840 = vunpack.c.l.b16 %v3800
        %v3841 = vunpack.c.l.b16 %v3801
        %v3842 = vunpack.c.l.b16 %v3802
        %v3843 = vunpack.c.l.b16 %v3803
        %v3844 = vpack.c.b16 %v3829, %v3828
        %v3845 = vpack.c.b16 %v3831, %v3830
        %v3846 = vpack.c.b16 %v3833, %v3832
        %v3847 = vpack.c.b16 %v3835, %v3834
        %v3848 = vpack.c.b16 %v3837, %v3836
        %v3849 = vpack.c.b16 %v3839, %v3838
        %v3850 = vpack.c.b16 %v3841, %v3840
        %v3851 = vpack.c.b16 %v3843, %v3842
        %3860 = vmatprep.subr.bf16.mxu0 0
        %3861 = vmatpush1.bf16.msra.mxu0 %v3851
        %3862 = vmatprep.subr.bf16.mxu0 0
        %3863 = vmatpush1.bf16.msra.mxu0 %v3850
        %3864 = vmatprep.subr.bf16.mxu0 0
        %3865 = vmatpush1.bf16.msra.mxu0 %v3849
        %3866 = vmatprep.subr.bf16.mxu0 0
        %3867 = vmatpush1.bf16.msra.mxu0 %v3848
        %3868 = vmatprep.subr.bf16.mxu0 0
        %3869 = vmatpush1.bf16.msra.mxu0 %v3847
        %3870 = vmatprep.subr.bf16.mxu0 0
        %3871 = vmatpush1.bf16.msra.mxu0 %v3846
        %3872 = vmatprep.subr.bf16.mxu0 0
        %3873 = vmatpush1.bf16.msra.mxu0 %v3845
        %3874 = vmatprep.subr.bf16.mxu0 0
        %3875 = vmatpush1.bf16.msra.mxu0 %v3844
        %3876 = vmatprep.subr.bf16.mxu0 0
        %3877 = vmatpush2.bf16.msra.mxu0 0
        %3878 = vmatprep.subr.bf16.mxu0 0
        %3879 = vmatpush2.bf16.msra.mxu0 0
        %3880 = vmatprep.subr.bf16.mxu0 0
        %3881 = vmatpush2.bf16.msra.mxu0 0
        %3882 = vmatprep.subr.bf16.mxu0 0
        %3883 = vmatpush2.bf16.msra.mxu0 0
        %3884 = vmatprep.subr.bf16.mxu0 0
        %3885 = vmatpush2.bf16.msra.mxu0 0
        %3886 = vmatprep.subr.bf16.mxu0 0
        %3887 = vmatpush2.bf16.msra.mxu0 0
        %3888 = vmatprep.subr.bf16.mxu0 0
        %3889 = vmatpush2.bf16.msra.mxu0 0
        %3890 = vmatprep.subr.bf16.mxu0 0
        %3891 = vmatpush2.bf16.msra.mxu0 0
        %3892 = vmatprep.mubr.bf16.mxu0 0
        %3893 = vmatmul.mubr.bf16.gmra.mxu0 %v3810
        %v3894 = vpop.f32.mrf.mxu0
        %v3895 = vadd.f32 0.0, %v3894
        %v3896 = vpop.f32.mrf.mxu0
        %v3897 = vpop.f32.mrf.mxu0
        %v3898 = vadd.f32 0.0, %v3897
        %v3899 = vpop.f32.mrf.mxu0
        %3900 = vdwg.mxu0
        %v3901 = vadd.f32 %v3740, %v3895
        %v3902 = vadd.f32 %v3741, %v3898
        %v3903 = vld [vmem:[%s2612] sm:$0x3]
        %3904 = vst [vmem:[#allocation2] sm:$0x3] %v3903
        %v3905 = vld [vmem:[%s2744] sm:$0x3]
        %v3907 = vrot.slane %v3905, 6
        %3909 = vst [vmem:[#allocation2] sm:$0xc] %v3907
        %v3910 = vld [vmem:[%s2876] sm:$0x3]
        %3911 = vst [vmem:[#allocation2 + $0x4] sm:$0x3] %v3910
        %v3912 = vld [vmem:[%s3008] sm:$0x3]
        %v3914 = vrot.slane %v3912, 6
        %3916 = vst [vmem:[#allocation2 + $0x4] sm:$0xc] %v3914
        %v3917 = vld [vmem:[%s1 + $0x3c0] sm:$0xf]
        %v3918 = vld [vmem:[%s1 + $0x3c4] sm:$0xf]
        %v3919 = vld [vmem:[%s1 + $0x3c8] sm:$0xf]
        %v3920 = vld [vmem:[%s1 + $0x3cc] sm:$0xf]
        %v3921 = vld [vmem:[%s1 + $0x3d0] sm:$0xf]
        %v3922 = vld [vmem:[%s1 + $0x3d4] sm:$0xf]
        %v3923 = vld [vmem:[%s1 + $0x3d8] sm:$0xf]
        %v3924 = vld [vmem:[%s1 + $0x3dc] sm:$0xf]
        %v3925 = vld [vmem:[%s1 + $0x3e0] sm:$0xf]
        %v3926 = vld [vmem:[%s1 + $0x3e4] sm:$0xf]
        %v3927 = vld [vmem:[%s1 + $0x3e8] sm:$0xf]
        %v3928 = vld [vmem:[%s1 + $0x3ec] sm:$0xf]
        %v3929 = vld [vmem:[%s1 + $0x3f0] sm:$0xf]
        %v3930 = vld [vmem:[%s1 + $0x3f4] sm:$0xf]
        %v3931 = vld [vmem:[%s1 + $0x3f8] sm:$0xf]
        %v3932 = vld [vmem:[%s1 + $0x3fc] sm:$0xf]
        %v3933 = vld [vmem:[#allocation2] sm:$0xf]
        %v3934 = vld [vmem:[#allocation2 + $0x4] sm:$0xf]
        %v3937 = vunpack.c.l.b16 %v3933
        %v3938 = vunpack.c.l.b16 %v3934
        %v3939 = vpack.c.b16 %v3938, %v3937
        %v3957 = vunpack.c.l.b16 %v3917
        %v3958 = vunpack.c.l.b16 %v3918
        %v3959 = vunpack.c.l.b16 %v3919
        %v3960 = vunpack.c.l.b16 %v3920
        %v3961 = vunpack.c.l.b16 %v3921
        %v3962 = vunpack.c.l.b16 %v3922
        %v3963 = vunpack.c.l.b16 %v3923
        %v3964 = vunpack.c.l.b16 %v3924
        %v3965 = vunpack.c.l.b16 %v3925
        %v3966 = vunpack.c.l.b16 %v3926
        %v3967 = vunpack.c.l.b16 %v3927
        %v3968 = vunpack.c.l.b16 %v3928
        %v3969 = vunpack.c.l.b16 %v3929
        %v3970 = vunpack.c.l.b16 %v3930
        %v3971 = vunpack.c.l.b16 %v3931
        %v3972 = vunpack.c.l.b16 %v3932
        %v3973 = vpack.c.b16 %v3958, %v3957
        %v3974 = vpack.c.b16 %v3960, %v3959
        %v3975 = vpack.c.b16 %v3962, %v3961
        %v3976 = vpack.c.b16 %v3964, %v3963
        %v3977 = vpack.c.b16 %v3966, %v3965
        %v3978 = vpack.c.b16 %v3968, %v3967
        %v3979 = vpack.c.b16 %v3970, %v3969
        %v3980 = vpack.c.b16 %v3972, %v3971
        %3989 = vmatprep.subr.bf16.mxu0 0
        %3990 = vmatpush1.bf16.msra.mxu0 %v3980
        %3991 = vmatprep.subr.bf16.mxu0 0
        %3992 = vmatpush1.bf16.msra.mxu0 %v3979
        %3993 = vmatprep.subr.bf16.mxu0 0
        %3994 = vmatpush1.bf16.msra.mxu0 %v3978
        %3995 = vmatprep.subr.bf16.mxu0 0
        %3996 = vmatpush1.bf16.msra.mxu0 %v3977
        %3997 = vmatprep.subr.bf16.mxu0 0
        %3998 = vmatpush1.bf16.msra.mxu0 %v3976
        %3999 = vmatprep.subr.bf16.mxu0 0
        %4000 = vmatpush1.bf16.msra.mxu0 %v3975
        %4001 = vmatprep.subr.bf16.mxu0 0
        %4002 = vmatpush1.bf16.msra.mxu0 %v3974
        %4003 = vmatprep.subr.bf16.mxu0 0
        %4004 = vmatpush1.bf16.msra.mxu0 %v3973
        %4005 = vmatprep.subr.bf16.mxu0 0
        %4006 = vmatpush2.bf16.msra.mxu0 0
        %4007 = vmatprep.subr.bf16.mxu0 0
        %4008 = vmatpush2.bf16.msra.mxu0 0
        %4009 = vmatprep.subr.bf16.mxu0 0
        %4010 = vmatpush2.bf16.msra.mxu0 0
        %4011 = vmatprep.subr.bf16.mxu0 0
        %4012 = vmatpush2.bf16.msra.mxu0 0
        %4013 = vmatprep.subr.bf16.mxu0 0
        %4014 = vmatpush2.bf16.msra.mxu0 0
        %4015 = vmatprep.subr.bf16.mxu0 0
        %4016 = vmatpush2.bf16.msra.mxu0 0
        %4017 = vmatprep.subr.bf16.mxu0 0
        %4018 = vmatpush2.bf16.msra.mxu0 0
        %4019 = vmatprep.subr.bf16.mxu0 0
        %4020 = vmatpush2.bf16.msra.mxu0 0
        %4021 = vmatprep.mubr.bf16.mxu0 0
        %4022 = vmatmul.mubr.bf16.gmra.mxu0 %v3939
        %v4023 = vpop.f32.mrf.mxu0
        %v4024 = vadd.f32 0.0, %v4023
        %v4025 = vpop.f32.mrf.mxu0
        %v4026 = vpop.f32.mrf.mxu0
        %v4027 = vadd.f32 0.0, %v4026
        %v4028 = vpop.f32.mrf.mxu0
        %4029 = vdwg.mxu0
        %v4030 = vadd.f32 %v3901, %v4024
        %v4031 = vadd.f32 %v3902, %v4027
        %v4032 = vld [vmem:[%s2607] sm:$0x3]
        %4033 = vst [vmem:[#allocation2] sm:$0x3] %v4032
        %v4034 = vld [vmem:[%s2739] sm:$0x3]
        %v4036 = vrot.slane %v4034, 6
        %4038 = vst [vmem:[#allocation2] sm:$0xc] %v4036
        %v4039 = vld [vmem:[%s2871] sm:$0x3]
        %4040 = vst [vmem:[#allocation2 + $0x4] sm:$0x3] %v4039
        %v4041 = vld [vmem:[%s3003] sm:$0x3]
        %v4043 = vrot.slane %v4041, 6
        %4045 = vst [vmem:[#allocation2 + $0x4] sm:$0xc] %v4043
        %v4046 = vld [vmem:[%s1 + $0x400] sm:$0xf]
        %v4047 = vld [vmem:[%s1 + $0x404] sm:$0xf]
        %v4048 = vld [vmem:[%s1 + $0x408] sm:$0xf]
        %v4049 = vld [vmem:[%s1 + $0x40c] sm:$0xf]
        %v4050 = vld [vmem:[%s1 + $0x410] sm:$0xf]
        %v4051 = vld [vmem:[%s1 + $0x414] sm:$0xf]
        %v4052 = vld [vmem:[%s1 + $0x418] sm:$0xf]
        %v4053 = vld [vmem:[%s1 + $0x41c] sm:$0xf]
        %v4054 = vld [vmem:[%s1 + $0x420] sm:$0xf]
        %v4055 = vld [vmem:[%s1 + $0x424] sm:$0xf]
        %v4056 = vld [vmem:[%s1 + $0x428] sm:$0xf]
        %v4057 = vld [vmem:[%s1 + $0x42c] sm:$0xf]
        %v4058 = vld [vmem:[%s1 + $0x430] sm:$0xf]
        %v4059 = vld [vmem:[%s1 + $0x434] sm:$0xf]
        %v4060 = vld [vmem:[%s1 + $0x438] sm:$0xf]
        %v4061 = vld [vmem:[%s1 + $0x43c] sm:$0xf]
        %v4062 = vld [vmem:[#allocation2] sm:$0xf]
        %v4063 = vld [vmem:[#allocation2 + $0x4] sm:$0xf]
        %v4066 = vunpack.c.l.b16 %v4062
        %v4067 = vunpack.c.l.b16 %v4063
        %v4068 = vpack.c.b16 %v4067, %v4066
        %v4086 = vunpack.c.l.b16 %v4046
        %v4087 = vunpack.c.l.b16 %v4047
        %v4088 = vunpack.c.l.b16 %v4048
        %v4089 = vunpack.c.l.b16 %v4049
        %v4090 = vunpack.c.l.b16 %v4050
        %v4091 = vunpack.c.l.b16 %v4051
        %v4092 = vunpack.c.l.b16 %v4052
        %v4093 = vunpack.c.l.b16 %v4053
        %v4094 = vunpack.c.l.b16 %v4054
        %v4095 = vunpack.c.l.b16 %v4055
        %v4096 = vunpack.c.l.b16 %v4056
        %v4097 = vunpack.c.l.b16 %v4057
        %v4098 = vunpack.c.l.b16 %v4058
        %v4099 = vunpack.c.l.b16 %v4059
        %v4100 = vunpack.c.l.b16 %v4060
        %v4101 = vunpack.c.l.b16 %v4061
        %v4102 = vpack.c.b16 %v4087, %v4086
        %v4103 = vpack.c.b16 %v4089, %v4088
        %v4104 = vpack.c.b16 %v4091, %v4090
        %v4105 = vpack.c.b16 %v4093, %v4092
        %v4106 = vpack.c.b16 %v4095, %v4094
        %v4107 = vpack.c.b16 %v4097, %v4096
        %v4108 = vpack.c.b16 %v4099, %v4098
        %v4109 = vpack.c.b16 %v4101, %v4100
        %4118 = vmatprep.subr.bf16.mxu0 0
        %4119 = vmatpush1.bf16.msra.mxu0 %v4109
        %4120 = vmatprep.subr.bf16.mxu0 0
        %4121 = vmatpush1.bf16.msra.mxu0 %v4108
        %4122 = vmatprep.subr.bf16.mxu0 0
        %4123 = vmatpush1.bf16.msra.mxu0 %v4107
        %4124 = vmatprep.subr.bf16.mxu0 0
        %4125 = vmatpush1.bf16.msra.mxu0 %v4106
        %4126 = vmatprep.subr.bf16.mxu0 0
        %4127 = vmatpush1.bf16.msra.mxu0 %v4105
        %4128 = vmatprep.subr.bf16.mxu0 0
        %4129 = vmatpush1.bf16.msra.mxu0 %v4104
        %4130 = vmatprep.subr.bf16.mxu0 0
        %4131 = vmatpush1.bf16.msra.mxu0 %v4103
        %4132 = vmatprep.subr.bf16.mxu0 0
        %4133 = vmatpush1.bf16.msra.mxu0 %v4102
        %4134 = vmatprep.subr.bf16.mxu0 0
        %4135 = vmatpush2.bf16.msra.mxu0 0
        %4136 = vmatprep.subr.bf16.mxu0 0
        %4137 = vmatpush2.bf16.msra.mxu0 0
        %4138 = vmatprep.subr.bf16.mxu0 0
        %4139 = vmatpush2.bf16.msra.mxu0 0
        %4140 = vmatprep.subr.bf16.mxu0 0
        %4141 = vmatpush2.bf16.msra.mxu0 0
        %4142 = vmatprep.subr.bf16.mxu0 0
        %4143 = vmatpush2.bf16.msra.mxu0 0
        %4144 = vmatprep.subr.bf16.mxu0 0
        %4145 = vmatpush2.bf16.msra.mxu0 0
        %4146 = vmatprep.subr.bf16.mxu0 0
        %4147 = vmatpush2.bf16.msra.mxu0 0
        %4148 = vmatprep.subr.bf16.mxu0 0
        %4149 = vmatpush2.bf16.msra.mxu0 0
        %4150 = vmatprep.mubr.bf16.mxu0 0
        %4151 = vmatmul.mubr.bf16.gmra.mxu0 %v4068
        %v4152 = vpop.f32.mrf.mxu0
        %v4153 = vadd.f32 0.0, %v4152
        %v4154 = vpop.f32.mrf.mxu0
        %v4155 = vpop.f32.mrf.mxu0
        %v4156 = vadd.f32 0.0, %v4155
        %v4157 = vpop.f32.mrf.mxu0
        %4158 = vdwg.mxu0
        %v4159 = vadd.f32 %v4030, %v4153
        %v4160 = vadd.f32 %v4031, %v4156
        %v4161 = vld [vmem:[%s2612] sm:$0x7]
        %v4163 = vshrl.u32 %v4161, 16
        %v4165 = vrot.slane %v4163, 4
        %v4166 = vshll.u32 %v4161, 16
        %v4168 = vrot.slane %v4166, 5
        %v4169 = vor.u32 %v4165, %v4168
        %v4170 = vrot.slane %v4169, 4
        %4172 = vst [vmem:[#allocation2] sm:$0x3] %v4170
        %v4173 = vld [vmem:[%s2744] sm:$0x7]
        %v4175 = vshrl.u32 %v4173, 16
        %v4177 = vrot.slane %v4175, 6
        %v4178 = vshll.u32 %v4173, 16
        %v4180 = vrot.slane %v4178, 7
        %v4181 = vor.u32 %v4177, %v4180
        %4183 = vst [vmem:[#allocation2] sm:$0xc] %v4181
        %v4184 = vld [vmem:[%s2876] sm:$0x7]
        %v4186 = vshrl.u32 %v4184, 16
        %v4188 = vrot.slane %v4186, 4
        %v4189 = vshll.u32 %v4184, 16
        %v4191 = vrot.slane %v4189, 5
        %v4192 = vor.u32 %v4188, %v4191
        %v4193 = vrot.slane %v4192, 4
        %4195 = vst [vmem:[#allocation2 + $0x4] sm:$0x3] %v4193
        %v4196 = vld [vmem:[%s3008] sm:$0x7]
        %v4198 = vshrl.u32 %v4196, 16
        %v4200 = vrot.slane %v4198, 6
        %v4201 = vshll.u32 %v4196, 16
        %v4203 = vrot.slane %v4201, 7
        %v4204 = vor.u32 %v4200, %v4203
        %4206 = vst [vmem:[#allocation2 + $0x4] sm:$0xc] %v4204
        %v4207 = vld [vmem:[%s1 + $0x440] sm:$0xf]
        %v4208 = vld [vmem:[%s1 + $0x444] sm:$0xf]
        %v4209 = vld [vmem:[%s1 + $0x448] sm:$0xf]
        %v4210 = vld [vmem:[%s1 + $0x44c] sm:$0xf]
        %v4211 = vld [vmem:[%s1 + $0x450] sm:$0xf]
        %v4212 = vld [vmem:[%s1 + $0x454] sm:$0xf]
        %v4213 = vld [vmem:[%s1 + $0x458] sm:$0xf]
        %v4214 = vld [vmem:[%s1 + $0x45c] sm:$0xf]
        %v4215 = vld [vmem:[%s1 + $0x460] sm:$0xf]
        %v4216 = vld [vmem:[%s1 + $0x464] sm:$0xf]
        %v4217 = vld [vmem:[%s1 + $0x468] sm:$0xf]
        %v4218 = vld [vmem:[%s1 + $0x46c] sm:$0xf]
        %v4219 = vld [vmem:[%s1 + $0x470] sm:$0xf]
        %v4220 = vld [vmem:[%s1 + $0x474] sm:$0xf]
        %v4221 = vld [vmem:[%s1 + $0x478] sm:$0xf]
        %v4222 = vld [vmem:[%s1 + $0x47c] sm:$0xf]
        %v4223 = vld [vmem:[#allocation2] sm:$0xf]
        %v4224 = vld [vmem:[#allocation2 + $0x4] sm:$0xf]
        %v4227 = vunpack.c.l.b16 %v4223
        %v4228 = vunpack.c.l.b16 %v4224
        %v4229 = vpack.c.b16 %v4228, %v4227
        %v4247 = vunpack.c.l.b16 %v4207
        %v4248 = vunpack.c.l.b16 %v4208
        %v4249 = vunpack.c.l.b16 %v4209
        %v4250 = vunpack.c.l.b16 %v4210
        %v4251 = vunpack.c.l.b16 %v4211
        %v4252 = vunpack.c.l.b16 %v4212
        %v4253 = vunpack.c.l.b16 %v4213
        %v4254 = vunpack.c.l.b16 %v4214
        %v4255 = vunpack.c.l.b16 %v4215
        %v4256 = vunpack.c.l.b16 %v4216
        %v4257 = vunpack.c.l.b16 %v4217
        %v4258 = vunpack.c.l.b16 %v4218
        %v4259 = vunpack.c.l.b16 %v4219
        %v4260 = vunpack.c.l.b16 %v4220
        %v4261 = vunpack.c.l.b16 %v4221
        %v4262 = vunpack.c.l.b16 %v4222
        %v4263 = vpack.c.b16 %v4248, %v4247
        %v4264 = vpack.c.b16 %v4250, %v4249
        %v4265 = vpack.c.b16 %v4252, %v4251
        %v4266 = vpack.c.b16 %v4254, %v4253
        %v4267 = vpack.c.b16 %v4256, %v4255
        %v4268 = vpack.c.b16 %v4258, %v4257
        %v4269 = vpack.c.b16 %v4260, %v4259
        %v4270 = vpack.c.b16 %v4262, %v4261
        %4279 = vmatprep.subr.bf16.mxu0 0
        %4280 = vmatpush1.bf16.msra.mxu0 %v4270
        %4281 = vmatprep.subr.bf16.mxu0 0
        %4282 = vmatpush1.bf16.msra.mxu0 %v4269
        %4283 = vmatprep.subr.bf16.mxu0 0
        %4284 = vmatpush1.bf16.msra.mxu0 %v4268
        %4285 = vmatprep.subr.bf16.mxu0 0
        %4286 = vmatpush1.bf16.msra.mxu0 %v4267
        %4287 = vmatprep.subr.bf16.mxu0 0
        %4288 = vmatpush1.bf16.msra.mxu0 %v4266
        %4289 = vmatprep.subr.bf16.mxu0 0
        %4290 = vmatpush1.bf16.msra.mxu0 %v4265
        %4291 = vmatprep.subr.bf16.mxu0 0
        %4292 = vmatpush1.bf16.msra.mxu0 %v4264
        %4293 = vmatprep.subr.bf16.mxu0 0
        %4294 = vmatpush1.bf16.msra.mxu0 %v4263
        %4295 = vmatprep.subr.bf16.mxu0 0
        %4296 = vmatpush2.bf16.msra.mxu0 0
        %4297 = vmatprep.subr.bf16.mxu0 0
        %4298 = vmatpush2.bf16.msra.mxu0 0
        %4299 = vmatprep.subr.bf16.mxu0 0
        %4300 = vmatpush2.bf16.msra.mxu0 0
        %4301 = vmatprep.subr.bf16.mxu0 0
        %4302 = vmatpush2.bf16.msra.mxu0 0
        %4303 = vmatprep.subr.bf16.mxu0 0
        %4304 = vmatpush2.bf16.msra.mxu0 0
        %4305 = vmatprep.subr.bf16.mxu0 0
        %4306 = vmatpush2.bf16.msra.mxu0 0
        %4307 = vmatprep.subr.bf16.mxu0 0
        %4308 = vmatpush2.bf16.msra.mxu0 0
        %4309 = vmatprep.subr.bf16.mxu0 0
        %4310 = vmatpush2.bf16.msra.mxu0 0
        %4311 = vmatprep.mubr.bf16.mxu0 0
        %4312 = vmatmul.mubr.bf16.gmra.mxu0 %v4229
        %v4313 = vpop.f32.mrf.mxu0
        %v4314 = vadd.f32 0.0, %v4313
        %v4315 = vpop.f32.mrf.mxu0
        %v4316 = vpop.f32.mrf.mxu0
        %v4317 = vadd.f32 0.0, %v4316
        %v4318 = vpop.f32.mrf.mxu0
        %4319 = vdwg.mxu0
        %v4320 = vadd.f32 %v4159, %v4314
        %v4321 = vadd.f32 %v4160, %v4317
        %v4322 = vld [vmem:[%s2 + $0x1] sm:$0x1]
        %v4323 = vlaneseq
        %v4324 = vshrl.u32 %v4323, 7
        %v4325 = vsub.s32 0, %v4324
        %v4326 = vrot.slane %v4322, %v4325
        %v4327 = vadd.f32 %v4320, %v4326
        %v4328 = vadd.f32 %v4321, %v4326
        %v4329 = vmax.f32 %v4327, 0.0
        %v4330 = vmax.f32 %v4328, 0.0
        %vm4331 = vcmask 130048
        %4332 = vst.msk [vmem:[%s255] sm:$0xff] %vm4331, %v4329
        %4333 = vst.msk [vmem:[%s255 + $0x8] sm:$0xff] %vm4331, %v4330
        %v4334 = vpack.c.bf16 %v4330, %v4329
        %v4336 = vunpack.c.l.b16 %v4334
        %v4337 = vunpack.c.h.b16 %v4334
        %v4338 = vpack.c.b16 %v4336, %v4336
        %v4339 = vpack.c.b16 %v4337, %v4337
        %4342 = vst [vmem:[#allocation3] sm:$0xf] %v4338
        %4343 = vst [vmem:[#allocation3 + $0x4] sm:$0xf] %v4339
        %v4344 = vld [vmem:[#allocation3] sm:$0x1]
        %s4345 = scalar_lea.vmem [#allocation5], 18
        %v4346 = vld [vmem:[%s4345] sm:$0x1]
        %v4347 = vsel %vm2533, %v4344, %v4346
        %4348 = vst [vmem:[%s4345] sm:$0x1] %v4347
        %v4349 = vld [vmem:[#allocation3] sm:$0x1]
        %s4350 = scalar_lea.vmem [#allocation5], 12
        %v4351 = vld [vmem:[%s4350] sm:$0x1]
        %v4352 = vsel %vm2540, %v4349, %v4351
        %4353 = vst [vmem:[%s4350] sm:$0x1] %v4352
        %v4354 = vld [vmem:[#allocation3] sm:$0x2]
        %v4357 = vunpack.c.l.s4 1983009808
        %v4358 = vunpack.c.0.s8 %v4357
        %v4359 = vlaneseq
        %v4360 = vshrl.u32 %v4359, 7
        %v4361 = vsub.s32 %v4358, %v4360
        %v4362 = vrot.slane %v4354, %v4361
        %v4364 = vshll.u32 %v4362, 16
        %v4366 = vrot.slane %v4364, 7
        %v4367 = vrot.slane %v4366, 2
        %v4369 = vld [vmem:[%s4345] sm:$0x1]
        %v4370 = vsel %vm2540, %v4367, %v4369
        %4371 = vst [vmem:[%s4345] sm:$0x1] %v4370
        %v4372 = vld [vmem:[#allocation3] sm:$0x2]
        %v4375 = vunpack.c.l.s4 1983009808
        %v4376 = vunpack.c.0.s8 %v4375
        %v4377 = vlaneseq
        %v4378 = vshrl.u32 %v4377, 7
        %v4379 = vsub.s32 %v4376, %v4378
        %v4380 = vrot.slane %v4372, %v4379
        %v4382 = vshrl.u32 %v4380, 16
        %v4384 = vrot.slane %v4382, 6
        %v4385 = vrot.slane %v4384, 2
        %v4387 = vld [vmem:[%s4350] sm:$0x2]
        %v4388 = vsel %vm2562, %v4385, %v4387
        %4389 = vst [vmem:[%s4350] sm:$0x2] %v4388
        %v4390 = vld [vmem:[#allocation3] sm:$0x4]
        %v4393 = vunpack.c.l.s4 1983009808
        %v4394 = vunpack.c.0.s8 %v4393
        %v4395 = vlaneseq
        %v4396 = vshrl.u32 %v4395, 7
        %v4397 = vsub.s32 %v4394, %v4396
        %v4398 = vrot.slane %v4390, %v4397
        %v4399 = vcombine.high %v4398, %v4398
        %s4401 = scalar_lea.vmem [#allocation5], 8
        %v4402 = vld [vmem:[%s4401] sm:$0x1]
        %v4403 = vsel %vm2533, %v4399, %v4402
        %4404 = vst [vmem:[%s4401] sm:$0x1] %v4403
        %v4405 = vld [vmem:[#allocation3] sm:$0x4]
        %v4408 = vunpack.c.l.s4 1983009808
        %v4409 = vunpack.c.0.s8 %v4408
        %v4410 = vlaneseq
        %v4411 = vshrl.u32 %v4410, 7
        %v4412 = vsub.s32 %v4409, %v4411
        %v4413 = vrot.slane %v4405, %v4412
        %v4414 = vcombine.high %v4413, %v4413
        %s4416 = scalar_lea.vmem [#allocation5], 2
        %v4417 = vld [vmem:[%s4416] sm:$0x1]
        %v4418 = vsel %vm2540, %v4414, %v4417
        %4419 = vst [vmem:[%s4416] sm:$0x1] %v4418
        %v4420 = vld [vmem:[#allocation3] sm:$0x8]
        %v4423 = vunpack.c.l.s4 1983009808
        %v4424 = vunpack.c.0.s8 %v4423
        %v4425 = vlaneseq
        %v4426 = vshrl.u32 %v4425, 7
        %v4427 = vsub.s32 %v4424, %v4426
        %v4428 = vrot.slane %v4420, %v4427
        %v4429 = vcombine.high %v4428, %v4428
        %v4431 = vshll.u32 %v4429, 16
        %v4433 = vrot.slane %v4431, 7
        %v4434 = vrot.slane %v4433, 2
        %v4436 = vld [vmem:[%s4401] sm:$0x1]
        %v4437 = vsel %vm2540, %v4434, %v4436
        %4438 = vst [vmem:[%s4401] sm:$0x1] %v4437
        %v4439 = vld [vmem:[#allocation3] sm:$0x8]
        %v4442 = vunpack.c.l.s4 1983009808
        %v4443 = vunpack.c.0.s8 %v4442
        %v4444 = vlaneseq
        %v4445 = vshrl.u32 %v4444, 7
        %v4446 = vsub.s32 %v4443, %v4445
        %v4447 = vrot.slane %v4439, %v4446
        %v4448 = vcombine.high %v4447, %v4447
        %v4450 = vshrl.u32 %v4448, 16
        %v4452 = vrot.slane %v4450, 6
        %v4453 = vrot.slane %v4452, 2
        %v4455 = vld [vmem:[%s4416] sm:$0x2]
        %v4456 = vsel %vm2562, %v4453, %v4455
        %4457 = vst [vmem:[%s4416] sm:$0x2] %v4456
        %v4458 = vld [vmem:[#allocation3 + $0x4] sm:$0x1]
        %s4459 = scalar_lea.vmem [#allocation5], 20
        %v4460 = vld [vmem:[%s4459] sm:$0x1]
        %v4461 = vsel %vm2533, %v4458, %v4460
        %4462 = vst [vmem:[%s4459] sm:$0x1] %v4461
        %v4463 = vld [vmem:[#allocation3 + $0x4] sm:$0x1]
        %s4464 = scalar_lea.vmem [#allocation5], 14
        %v4465 = vld [vmem:[%s4464] sm:$0x1]
        %v4466 = vsel %vm2540, %v4463, %v4465
        %4467 = vst [vmem:[%s4464] sm:$0x1] %v4466
        %v4468 = vld [vmem:[#allocation3 + $0x4] sm:$0x2]
        %v4471 = vunpack.c.l.s4 1983009808
        %v4472 = vunpack.c.0.s8 %v4471
        %v4473 = vlaneseq
        %v4474 = vshrl.u32 %v4473, 7
        %v4475 = vsub.s32 %v4472, %v4474
        %v4476 = vrot.slane %v4468, %v4475
        %v4478 = vshll.u32 %v4476, 16
        %v4480 = vrot.slane %v4478, 7
        %v4481 = vrot.slane %v4480, 2
        %v4483 = vld [vmem:[%s4459] sm:$0x1]
        %v4484 = vsel %vm2540, %v4481, %v4483
        %4485 = vst [vmem:[%s4459] sm:$0x1] %v4484
        %v4486 = vld [vmem:[#allocation3 + $0x4] sm:$0x2]
        %v4489 = vunpack.c.l.s4 1983009808
        %v4490 = vunpack.c.0.s8 %v4489
        %v4491 = vlaneseq
        %v4492 = vshrl.u32 %v4491, 7
        %v4493 = vsub.s32 %v4490, %v4492
        %v4494 = vrot.slane %v4486, %v4493
        %v4496 = vshrl.u32 %v4494, 16
        %v4498 = vrot.slane %v4496, 6
        %v4499 = vrot.slane %v4498, 2
        %v4501 = vld [vmem:[%s4464] sm:$0x2]
        %v4502 = vsel %vm2562, %v4499, %v4501
        %4503 = vst [vmem:[%s4464] sm:$0x2] %v4502
        %v4504 = vld [vmem:[#allocation3 + $0x4] sm:$0x4]
        %v4507 = vunpack.c.l.s4 1983009808
        %v4508 = vunpack.c.0.s8 %v4507
        %v4509 = vlaneseq
        %v4510 = vshrl.u32 %v4509, 7
        %v4511 = vsub.s32 %v4508, %v4510
        %v4512 = vrot.slane %v4504, %v4511
        %v4513 = vcombine.high %v4512, %v4512
        %s4515 = scalar_lea.vmem [#allocation5], 10
        %v4516 = vld [vmem:[%s4515] sm:$0x1]
        %v4517 = vsel %vm2533, %v4513, %v4516
        %4518 = vst [vmem:[%s4515] sm:$0x1] %v4517
        %v4519 = vld [vmem:[#allocation3 + $0x4] sm:$0x4]
        %v4522 = vunpack.c.l.s4 1983009808
        %v4523 = vunpack.c.0.s8 %v4522
        %v4524 = vlaneseq
        %v4525 = vshrl.u32 %v4524, 7
        %v4526 = vsub.s32 %v4523, %v4525
        %v4527 = vrot.slane %v4519, %v4526
        %v4528 = vcombine.high %v4527, %v4527
        %s4530 = scalar_lea.vmem [#allocation5], 4
        %v4531 = vld [vmem:[%s4530] sm:$0x1]
        %v4532 = vsel %vm2540, %v4528, %v4531
        %4533 = vst [vmem:[%s4530] sm:$0x1] %v4532
        %v4534 = vld [vmem:[#allocation3 + $0x4] sm:$0x8]
        %v4537 = vunpack.c.l.s4 1983009808
        %v4538 = vunpack.c.0.s8 %v4537
        %v4539 = vlaneseq
        %v4540 = vshrl.u32 %v4539, 7
        %v4541 = vsub.s32 %v4538, %v4540
        %v4542 = vrot.slane %v4534, %v4541
        %v4543 = vcombine.high %v4542, %v4542
        %v4545 = vshll.u32 %v4543, 16
        %v4547 = vrot.slane %v4545, 7
        %v4548 = vrot.slane %v4547, 2
        %v4550 = vld [vmem:[%s4515] sm:$0x1]
        %v4551 = vsel %vm2540, %v4548, %v4550
        %4552 = vst [vmem:[%s4515] sm:$0x1] %v4551
        %v4553 = vld [vmem:[#allocation3 + $0x4] sm:$0x8]
        %v4556 = vunpack.c.l.s4 1983009808
        %v4557 = vunpack.c.0.s8 %v4556
        %v4558 = vlaneseq
        %v4559 = vshrl.u32 %v4558, 7
        %v4560 = vsub.s32 %v4557, %v4559
        %v4561 = vrot.slane %v4553, %v4560
        %v4562 = vcombine.high %v4561, %v4561
        %v4564 = vshrl.u32 %v4562, 16
        %v4566 = vrot.slane %v4564, 6
        %v4567 = vrot.slane %v4566, 2
        %v4569 = vld [vmem:[%s4530] sm:$0x2]
        %v4570 = vsel %vm2562, %v4567, %v4569
        %4571 = vst [vmem:[%s4530] sm:$0x2] %v4570
        %v4572 = vld [vmem:[#allocation5] sm:$0x1]
        %4573 = vst [vmem:[#allocation2] sm:$0x1] %v4572
        %v4574 = vld [vmem:[%s4416] sm:$0x1]
        %v4577 = vunpack.c.l.s4 1983009808
        %v4578 = vunpack.c.0.s8 %v4577
        %v4579 = vlaneseq
        %v4580 = vshrl.u32 %v4579, 7
        %v4581 = vsub.s32 %v4578, %v4580
        %v4582 = vrot.slane %v4574, %v4581
        %v4583 = vrot.slane %v4582, 7
        %4585 = vst [vmem:[#allocation2] sm:$0x2] %v4583
        %v4586 = vld [vmem:[%s1 + $0x480] sm:$0xf]
        %v4587 = vld [vmem:[%s1 + $0x484] sm:$0xf]
        %v4588 = vld [vmem:[%s1 + $0x488] sm:$0xf]
        %v4589 = vld [vmem:[%s1 + $0x48c] sm:$0xf]
        %v4590 = vld [vmem:[%s1 + $0x490] sm:$0xf]
        %v4591 = vld [vmem:[%s1 + $0x494] sm:$0xf]
        %v4592 = vld [vmem:[%s1 + $0x498] sm:$0xf]
        %v4593 = vld [vmem:[%s1 + $0x49c] sm:$0xf]
        %v4594 = vld [vmem:[%s1 + $0x4a0] sm:$0xf]
        %v4595 = vld [vmem:[%s1 + $0x4a4] sm:$0xf]
        %v4596 = vld [vmem:[%s1 + $0x4a8] sm:$0xf]
        %v4597 = vld [vmem:[%s1 + $0x4ac] sm:$0xf]
        %v4598 = vld [vmem:[%s1 + $0x4b0] sm:$0xf]
        %v4599 = vld [vmem:[%s1 + $0x4b4] sm:$0xf]
        %v4600 = vld [vmem:[%s1 + $0x4b8] sm:$0xf]
        %v4601 = vld [vmem:[%s1 + $0x4bc] sm:$0xf]
        %v4602 = vld [vmem:[#allocation2] sm:$0x3]
        %s4603 = scalar_lea.vmem [#allocation5], 6
        %v4604 = vld [vmem:[%s4603] sm:$0x1]
        %4605 = vst [vmem:[#allocation2] sm:$0x1] %v4604
        %v4606 = vld [vmem:[%s4401] sm:$0x1]
        %v4609 = vunpack.c.l.s4 1983009808
        %v4610 = vunpack.c.0.s8 %v4609
        %v4611 = vlaneseq
        %v4612 = vshrl.u32 %v4611, 7
        %v4613 = vsub.s32 %v4610, %v4612
        %v4614 = vrot.slane %v4606, %v4613
        %v4615 = vrot.slane %v4614, 7
        %4617 = vst [vmem:[#allocation2] sm:$0x2] %v4615
        %v4618 = vld [vmem:[%s1 + $0x4c0] sm:$0xf]
        %v4619 = vld [vmem:[%s1 + $0x4c4] sm:$0xf]
        %v4620 = vld [vmem:[%s1 + $0x4c8] sm:$0xf]
        %v4621 = vld [vmem:[%s1 + $0x4cc] sm:$0xf]
        %v4622 = vld [vmem:[%s1 + $0x4d0] sm:$0xf]
        %v4623 = vld [vmem:[%s1 + $0x4d4] sm:$0xf]
        %v4624 = vld [vmem:[%s1 + $0x4d8] sm:$0xf]
        %v4625 = vld [vmem:[%s1 + $0x4dc] sm:$0xf]
        %v4626 = vld [vmem:[%s1 + $0x4e0] sm:$0xf]
        %v4627 = vld [vmem:[%s1 + $0x4e4] sm:$0xf]
        %v4628 = vld [vmem:[%s1 + $0x4e8] sm:$0xf]
        %v4629 = vld [vmem:[%s1 + $0x4ec] sm:$0xf]
        %v4630 = vld [vmem:[%s1 + $0x4f0] sm:$0xf]
        %v4631 = vld [vmem:[%s1 + $0x4f4] sm:$0xf]
        %v4632 = vld [vmem:[%s1 + $0x4f8] sm:$0xf]
        %v4633 = vld [vmem:[%s1 + $0x4fc] sm:$0xf]
        %v4634 = vld [vmem:[#allocation2] sm:$0x3]
        %v4651 = vunpack.c.l.b16 %v4618
        %v4652 = vunpack.c.l.b16 %v4619
        %v4653 = vunpack.c.l.b16 %v4620
        %v4654 = vunpack.c.l.b16 %v4621
        %v4655 = vunpack.c.l.b16 %v4622
        %v4656 = vunpack.c.l.b16 %v4623
        %v4657 = vunpack.c.l.b16 %v4624
        %v4658 = vunpack.c.l.b16 %v4625
        %v4659 = vunpack.c.l.b16 %v4626
        %v4660 = vunpack.c.l.b16 %v4627
        %v4661 = vunpack.c.l.b16 %v4628
        %v4662 = vunpack.c.l.b16 %v4629
        %v4663 = vunpack.c.l.b16 %v4630
        %v4664 = vunpack.c.l.b16 %v4631
        %v4665 = vunpack.c.l.b16 %v4632
        %v4666 = vunpack.c.l.b16 %v4633
        %v4667 = vpack.c.b16 %v4652, %v4651
        %v4668 = vpack.c.b16 %v4654, %v4653
        %v4669 = vpack.c.b16 %v4656, %v4655
        %v4670 = vpack.c.b16 %v4658, %v4657
        %v4671 = vpack.c.b16 %v4660, %v4659
        %v4672 = vpack.c.b16 %v4662, %v4661
        %v4673 = vpack.c.b16 %v4664, %v4663
        %v4674 = vpack.c.b16 %v4666, %v4665
        %4683 = vmatprep.subr.bf16.mxu0 0
        %4684 = vmatpush1.bf16.msra.mxu0 %v4674
        %4685 = vmatprep.subr.bf16.mxu0 0
        %4686 = vmatpush1.bf16.msra.mxu0 %v4673
        %4687 = vmatprep.subr.bf16.mxu0 0
        %4688 = vmatpush1.bf16.msra.mxu0 %v4672
        %4689 = vmatprep.subr.bf16.mxu0 0
        %4690 = vmatpush1.bf16.msra.mxu0 %v4671
        %4691 = vmatprep.subr.bf16.mxu0 0
        %4692 = vmatpush1.bf16.msra.mxu0 %v4670
        %4693 = vmatprep.subr.bf16.mxu0 0
        %4694 = vmatpush1.bf16.msra.mxu0 %v4669
        %4695 = vmatprep.subr.bf16.mxu0 0
        %4696 = vmatpush1.bf16.msra.mxu0 %v4668
        %4697 = vmatprep.subr.bf16.mxu0 0
        %4698 = vmatpush1.bf16.msra.mxu0 %v4667
        %4699 = vmatprep.subr.bf16.mxu0 0
        %4700 = vmatpush2.bf16.msra.mxu0 0
        %4701 = vmatprep.subr.bf16.mxu0 0
        %4702 = vmatpush2.bf16.msra.mxu0 0
        %4703 = vmatprep.subr.bf16.mxu0 0
        %4704 = vmatpush2.bf16.msra.mxu0 0
        %4705 = vmatprep.subr.bf16.mxu0 0
        %4706 = vmatpush2.bf16.msra.mxu0 0
        %4707 = vmatprep.subr.bf16.mxu0 0
        %4708 = vmatpush2.bf16.msra.mxu0 0
        %4709 = vmatprep.subr.bf16.mxu0 0
        %4710 = vmatpush2.bf16.msra.mxu0 0
        %4711 = vmatprep.subr.bf16.mxu0 0
        %4712 = vmatpush2.bf16.msra.mxu0 0
        %4713 = vmatprep.subr.bf16.mxu0 0
        %4714 = vmatpush2.bf16.msra.mxu0 0
        %4715 = vmatprep.mubr.bf16.mxu0 0
        %4716 = vmatmul.mubr.bf16.gmra.mxu0 %v4634
        %v4717 = vpop.f32.mrf.mxu0
        %v4718 = vadd.f32 0.0, %v4717
        %v4719 = vpop.f32.mrf.mxu0
        %v4720 = vpop.f32.mrf.mxu0
        %v4721 = vpop.f32.mrf.mxu0
        %4722 = vdwg.mxu0
        %v4739 = vunpack.c.l.b16 %v4586
        %v4740 = vunpack.c.l.b16 %v4587
        %v4741 = vunpack.c.l.b16 %v4588
        %v4742 = vunpack.c.l.b16 %v4589
        %v4743 = vunpack.c.l.b16 %v4590
        %v4744 = vunpack.c.l.b16 %v4591
        %v4745 = vunpack.c.l.b16 %v4592
        %v4746 = vunpack.c.l.b16 %v4593
        %v4747 = vunpack.c.l.b16 %v4594
        %v4748 = vunpack.c.l.b16 %v4595
        %v4749 = vunpack.c.l.b16 %v4596
        %v4750 = vunpack.c.l.b16 %v4597
        %v4751 = vunpack.c.l.b16 %v4598
        %v4752 = vunpack.c.l.b16 %v4599
        %v4753 = vunpack.c.l.b16 %v4600
        %v4754 = vunpack.c.l.b16 %v4601
        %v4755 = vpack.c.b16 %v4740, %v4739
        %v4756 = vpack.c.b16 %v4742, %v4741
        %v4757 = vpack.c.b16 %v4744, %v4743
        %v4758 = vpack.c.b16 %v4746, %v4745
        %v4759 = vpack.c.b16 %v4748, %v4747
        %v4760 = vpack.c.b16 %v4750, %v4749
        %v4761 = vpack.c.b16 %v4752, %v4751
        %v4762 = vpack.c.b16 %v4754, %v4753
        %4771 = vmatprep.subr.bf16.mxu0 0
        %4772 = vmatpush1.bf16.msra.mxu0 %v4762
        %4773 = vmatprep.subr.bf16.mxu0 0
        %4774 = vmatpush1.bf16.msra.mxu0 %v4761
        %4775 = vmatprep.subr.bf16.mxu0 0
        %4776 = vmatpush1.bf16.msra.mxu0 %v4760
        %4777 = vmatprep.subr.bf16.mxu0 0
        %4778 = vmatpush1.bf16.msra.mxu0 %v4759
        %4779 = vmatprep.subr.bf16.mxu0 0
        %4780 = vmatpush1.bf16.msra.mxu0 %v4758
        %4781 = vmatprep.subr.bf16.mxu0 0
        %4782 = vmatpush1.bf16.msra.mxu0 %v4757
        %4783 = vmatprep.subr.bf16.mxu0 0
        %4784 = vmatpush1.bf16.msra.mxu0 %v4756
        %4785 = vmatprep.subr.bf16.mxu0 0
        %4786 = vmatpush1.bf16.msra.mxu0 %v4755
        %4787 = vmatprep.subr.bf16.mxu0 0
        %4788 = vmatpush2.bf16.msra.mxu0 0
        %4789 = vmatprep.subr.bf16.mxu0 0
        %4790 = vmatpush2.bf16.msra.mxu0 0
        %4791 = vmatprep.subr.bf16.mxu0 0
        %4792 = vmatpush2.bf16.msra.mxu0 0
        %4793 = vmatprep.subr.bf16.mxu0 0
        %4794 = vmatpush2.bf16.msra.mxu0 0
        %4795 = vmatprep.subr.bf16.mxu0 0
        %4796 = vmatpush2.bf16.msra.mxu0 0
        %4797 = vmatprep.subr.bf16.mxu0 0
        %4798 = vmatpush2.bf16.msra.mxu0 0
        %4799 = vmatprep.subr.bf16.mxu0 0
        %4800 = vmatpush2.bf16.msra.mxu0 0
        %4801 = vmatprep.subr.bf16.mxu0 0
        %4802 = vmatpush2.bf16.msra.mxu0 0
        %4803 = vmatprep.mubr.bf16.mxu0 0
        %4804 = vmatmul.mubr.bf16.gmra.mxu0 %v4602
        %v4805 = vpop.f32.mrf.mxu0
        %v4806 = vadd.f32 %v4718, %v4805
        %v4807 = vpop.f32.mrf.mxu0
        %v4808 = vpop.f32.mrf.mxu0
        %v4809 = vpop.f32.mrf.mxu0
        %4810 = vdwg.mxu0
        %v4811 = vld [vmem:[#allocation5] sm:$0x3]
        %v4814 = vunpack.c.l.s4 1983009808
        %v4815 = vunpack.c.0.s8 %v4814
        %v4816 = vlaneseq
        %v4817 = vshrl.u32 %v4816, 7
        %v4818 = vsub.s32 %v4815, %v4817
        %v4819 = vrot.slane %v4811, %v4818
        %v4821 = vshrl.u32 %v4819, 16
        %v4823 = vrot.slane %v4821, 4
        %v4824 = vshll.u32 %v4819, 16
        %v4826 = vrot.slane %v4824, 5
        %v4827 = vor.u32 %v4823, %v4826
        %v4828 = vrot.slane %v4827, 4
        %4830 = vst [vmem:[#allocation2] sm:$0x1] %v4828
        %v4831 = vld [vmem:[%s4416] sm:$0x3]
        %v4834 = vunpack.c.l.s4 1983009808
        %v4835 = vunpack.c.0.s8 %v4834
        %v4836 = vlaneseq
        %v4837 = vshrl.u32 %v4836, 7
        %v4838 = vsub.s32 %v4835, %v4837
        %v4839 = vrot.slane %v4831, %v4838
        %v4841 = vshrl.u32 %v4839, 16
        %v4843 = vrot.slane %v4841, 7
        %v4844 = vshll.u32 %v4839, 16
        %v4846 = vor.u32 %v4843, %v4844
        %4848 = vst [vmem:[#allocation2] sm:$0x2] %v4846
        %v4849 = vld [vmem:[%s1 + $0x500] sm:$0xf]
        %v4850 = vld [vmem:[%s1 + $0x504] sm:$0xf]
        %v4851 = vld [vmem:[%s1 + $0x508] sm:$0xf]
        %v4852 = vld [vmem:[%s1 + $0x50c] sm:$0xf]
        %v4853 = vld [vmem:[%s1 + $0x510] sm:$0xf]
        %v4854 = vld [vmem:[%s1 + $0x514] sm:$0xf]
        %v4855 = vld [vmem:[%s1 + $0x518] sm:$0xf]
        %v4856 = vld [vmem:[%s1 + $0x51c] sm:$0xf]
        %v4857 = vld [vmem:[%s1 + $0x520] sm:$0xf]
        %v4858 = vld [vmem:[%s1 + $0x524] sm:$0xf]
        %v4859 = vld [vmem:[%s1 + $0x528] sm:$0xf]
        %v4860 = vld [vmem:[%s1 + $0x52c] sm:$0xf]
        %v4861 = vld [vmem:[%s1 + $0x530] sm:$0xf]
        %v4862 = vld [vmem:[%s1 + $0x534] sm:$0xf]
        %v4863 = vld [vmem:[%s1 + $0x538] sm:$0xf]
        %v4864 = vld [vmem:[%s1 + $0x53c] sm:$0xf]
        %v4865 = vld [vmem:[#allocation2] sm:$0x3]
        %v4882 = vunpack.c.l.b16 %v4849
        %v4883 = vunpack.c.l.b16 %v4850
        %v4884 = vunpack.c.l.b16 %v4851
        %v4885 = vunpack.c.l.b16 %v4852
        %v4886 = vunpack.c.l.b16 %v4853
        %v4887 = vunpack.c.l.b16 %v4854
        %v4888 = vunpack.c.l.b16 %v4855
        %v4889 = vunpack.c.l.b16 %v4856
        %v4890 = vunpack.c.l.b16 %v4857
        %v4891 = vunpack.c.l.b16 %v4858
        %v4892 = vunpack.c.l.b16 %v4859
        %v4893 = vunpack.c.l.b16 %v4860
        %v4894 = vunpack.c.l.b16 %v4861
        %v4895 = vunpack.c.l.b16 %v4862
        %v4896 = vunpack.c.l.b16 %v4863
        %v4897 = vunpack.c.l.b16 %v4864
        %v4898 = vpack.c.b16 %v4883, %v4882
        %v4899 = vpack.c.b16 %v4885, %v4884
        %v4900 = vpack.c.b16 %v4887, %v4886
        %v4901 = vpack.c.b16 %v4889, %v4888
        %v4902 = vpack.c.b16 %v4891, %v4890
        %v4903 = vpack.c.b16 %v4893, %v4892
        %v4904 = vpack.c.b16 %v4895, %v4894
        %v4905 = vpack.c.b16 %v4897, %v4896
        %4914 = vmatprep.subr.bf16.mxu0 0
        %4915 = vmatpush1.bf16.msra.mxu0 %v4905
        %4916 = vmatprep.subr.bf16.mxu0 0
        %4917 = vmatpush1.bf16.msra.mxu0 %v4904
        %4918 = vmatprep.subr.bf16.mxu0 0
        %4919 = vmatpush1.bf16.msra.mxu0 %v4903
        %4920 = vmatprep.subr.bf16.mxu0 0
        %4921 = vmatpush1.bf16.msra.mxu0 %v4902
        %4922 = vmatprep.subr.bf16.mxu0 0
        %4923 = vmatpush1.bf16.msra.mxu0 %v4901
        %4924 = vmatprep.subr.bf16.mxu0 0
        %4925 = vmatpush1.bf16.msra.mxu0 %v4900
        %4926 = vmatprep.subr.bf16.mxu0 0
        %4927 = vmatpush1.bf16.msra.mxu0 %v4899
        %4928 = vmatprep.subr.bf16.mxu0 0
        %4929 = vmatpush1.bf16.msra.mxu0 %v4898
        %4930 = vmatprep.subr.bf16.mxu0 0
        %4931 = vmatpush2.bf16.msra.mxu0 0
        %4932 = vmatprep.subr.bf16.mxu0 0
        %4933 = vmatpush2.bf16.msra.mxu0 0
        %4934 = vmatprep.subr.bf16.mxu0 0
        %4935 = vmatpush2.bf16.msra.mxu0 0
        %4936 = vmatprep.subr.bf16.mxu0 0
        %4937 = vmatpush2.bf16.msra.mxu0 0
        %4938 = vmatprep.subr.bf16.mxu0 0
        %4939 = vmatpush2.bf16.msra.mxu0 0
        %4940 = vmatprep.subr.bf16.mxu0 0
        %4941 = vmatpush2.bf16.msra.mxu0 0
        %4942 = vmatprep.subr.bf16.mxu0 0
        %4943 = vmatpush2.bf16.msra.mxu0 0
        %4944 = vmatprep.subr.bf16.mxu0 0
        %4945 = vmatpush2.bf16.msra.mxu0 0
        %4946 = vmatprep.mubr.bf16.mxu0 0
        %4947 = vmatmul.mubr.bf16.gmra.mxu0 %v4865
        %v4948 = vpop.f32.mrf.mxu0
        %v4949 = vadd.f32 0.0, %v4948
        %v4950 = vpop.f32.mrf.mxu0
        %v4951 = vpop.f32.mrf.mxu0
        %v4952 = vpop.f32.mrf.mxu0
        %4953 = vdwg.mxu0
        %v4954 = vadd.f32 %v4806, %v4949
        %v4955 = vld [vmem:[%s4350] sm:$0x1]
        %4956 = vst [vmem:[#allocation2] sm:$0x1] %v4955
        %v4957 = vld [vmem:[%s4464] sm:$0x1]
        %v4960 = vunpack.c.l.s4 1983009808
        %v4961 = vunpack.c.0.s8 %v4960
        %v4962 = vlaneseq
        %v4963 = vshrl.u32 %v4962, 7
        %v4964 = vsub.s32 %v4961, %v4963
        %v4965 = vrot.slane %v4957, %v4964
        %v4966 = vrot.slane %v4965, 7
        %4968 = vst [vmem:[#allocation2] sm:$0x2] %v4966
        %v4969 = vld [vmem:[%s1 + $0x540] sm:$0xf]
        %v4970 = vld [vmem:[%s1 + $0x544] sm:$0xf]
        %v4971 = vld [vmem:[%s1 + $0x548] sm:$0xf]
        %v4972 = vld [vmem:[%s1 + $0x54c] sm:$0xf]
        %v4973 = vld [vmem:[%s1 + $0x550] sm:$0xf]
        %v4974 = vld [vmem:[%s1 + $0x554] sm:$0xf]
        %v4975 = vld [vmem:[%s1 + $0x558] sm:$0xf]
        %v4976 = vld [vmem:[%s1 + $0x55c] sm:$0xf]
        %v4977 = vld [vmem:[%s1 + $0x560] sm:$0xf]
        %v4978 = vld [vmem:[%s1 + $0x564] sm:$0xf]
        %v4979 = vld [vmem:[%s1 + $0x568] sm:$0xf]
        %v4980 = vld [vmem:[%s1 + $0x56c] sm:$0xf]
        %v4981 = vld [vmem:[%s1 + $0x570] sm:$0xf]
        %v4982 = vld [vmem:[%s1 + $0x574] sm:$0xf]
        %v4983 = vld [vmem:[%s1 + $0x578] sm:$0xf]
        %v4984 = vld [vmem:[%s1 + $0x57c] sm:$0xf]
        %v4985 = vld [vmem:[#allocation2] sm:$0x3]
        %v5002 = vunpack.c.l.b16 %v4969
        %v5003 = vunpack.c.l.b16 %v4970
        %v5004 = vunpack.c.l.b16 %v4971
        %v5005 = vunpack.c.l.b16 %v4972
        %v5006 = vunpack.c.l.b16 %v4973
        %v5007 = vunpack.c.l.b16 %v4974
        %v5008 = vunpack.c.l.b16 %v4975
        %v5009 = vunpack.c.l.b16 %v4976
        %v5010 = vunpack.c.l.b16 %v4977
        %v5011 = vunpack.c.l.b16 %v4978
        %v5012 = vunpack.c.l.b16 %v4979
        %v5013 = vunpack.c.l.b16 %v4980
        %v5014 = vunpack.c.l.b16 %v4981
        %v5015 = vunpack.c.l.b16 %v4982
        %v5016 = vunpack.c.l.b16 %v4983
        %v5017 = vunpack.c.l.b16 %v4984
        %v5018 = vpack.c.b16 %v5003, %v5002
        %v5019 = vpack.c.b16 %v5005, %v5004
        %v5020 = vpack.c.b16 %v5007, %v5006
        %v5021 = vpack.c.b16 %v5009, %v5008
        %v5022 = vpack.c.b16 %v5011, %v5010
        %v5023 = vpack.c.b16 %v5013, %v5012
        %v5024 = vpack.c.b16 %v5015, %v5014
        %v5025 = vpack.c.b16 %v5017, %v5016
        %5034 = vmatprep.subr.bf16.mxu0 0
        %5035 = vmatpush1.bf16.msra.mxu0 %v5025
        %5036 = vmatprep.subr.bf16.mxu0 0
        %5037 = vmatpush1.bf16.msra.mxu0 %v5024
        %5038 = vmatprep.subr.bf16.mxu0 0
        %5039 = vmatpush1.bf16.msra.mxu0 %v5023
        %5040 = vmatprep.subr.bf16.mxu0 0
        %5041 = vmatpush1.bf16.msra.mxu0 %v5022
        %5042 = vmatprep.subr.bf16.mxu0 0
        %5043 = vmatpush1.bf16.msra.mxu0 %v5021
        %5044 = vmatprep.subr.bf16.mxu0 0
        %5045 = vmatpush1.bf16.msra.mxu0 %v5020
        %5046 = vmatprep.subr.bf16.mxu0 0
        %5047 = vmatpush1.bf16.msra.mxu0 %v5019
        %5048 = vmatprep.subr.bf16.mxu0 0
        %5049 = vmatpush1.bf16.msra.mxu0 %v5018
        %5050 = vmatprep.subr.bf16.mxu0 0
        %5051 = vmatpush2.bf16.msra.mxu0 0
        %5052 = vmatprep.subr.bf16.mxu0 0
        %5053 = vmatpush2.bf16.msra.mxu0 0
        %5054 = vmatprep.subr.bf16.mxu0 0
        %5055 = vmatpush2.bf16.msra.mxu0 0
        %5056 = vmatprep.subr.bf16.mxu0 0
        %5057 = vmatpush2.bf16.msra.mxu0 0
        %5058 = vmatprep.subr.bf16.mxu0 0
        %5059 = vmatpush2.bf16.msra.mxu0 0
        %5060 = vmatprep.subr.bf16.mxu0 0
        %5061 = vmatpush2.bf16.msra.mxu0 0
        %5062 = vmatprep.subr.bf16.mxu0 0
        %5063 = vmatpush2.bf16.msra.mxu0 0
        %5064 = vmatprep.subr.bf16.mxu0 0
        %5065 = vmatpush2.bf16.msra.mxu0 0
        %5066 = vmatprep.mubr.bf16.mxu0 0
        %5067 = vmatmul.mubr.bf16.gmra.mxu0 %v4985
        %v5068 = vpop.f32.mrf.mxu0
        %v5069 = vadd.f32 0.0, %v5068
        %v5070 = vpop.f32.mrf.mxu0
        %v5071 = vpop.f32.mrf.mxu0
        %v5072 = vpop.f32.mrf.mxu0
        %5073 = vdwg.mxu0
        %v5074 = vadd.f32 %v4954, %v5069
        %v5075 = vld [vmem:[%s4345] sm:$0x1]
        %5076 = vst [vmem:[#allocation2] sm:$0x1] %v5075
        %v5077 = vld [vmem:[%s4459] sm:$0x1]
        %v5080 = vunpack.c.l.s4 1983009808
        %v5081 = vunpack.c.0.s8 %v5080
        %v5082 = vlaneseq
        %v5083 = vshrl.u32 %v5082, 7
        %v5084 = vsub.s32 %v5081, %v5083
        %v5085 = vrot.slane %v5077, %v5084
        %v5086 = vrot.slane %v5085, 7
        %5088 = vst [vmem:[#allocation2] sm:$0x2] %v5086
        %v5089 = vld [vmem:[%s1 + $0x580] sm:$0xf]
        %v5090 = vld [vmem:[%s1 + $0x584] sm:$0xf]
        %v5091 = vld [vmem:[%s1 + $0x588] sm:$0xf]
        %v5092 = vld [vmem:[%s1 + $0x58c] sm:$0xf]
        %v5093 = vld [vmem:[%s1 + $0x590] sm:$0xf]
        %v5094 = vld [vmem:[%s1 + $0x594] sm:$0xf]
        %v5095 = vld [vmem:[%s1 + $0x598] sm:$0xf]
        %v5096 = vld [vmem:[%s1 + $0x59c] sm:$0xf]
        %v5097 = vld [vmem:[%s1 + $0x5a0] sm:$0xf]
        %v5098 = vld [vmem:[%s1 + $0x5a4] sm:$0xf]
        %v5099 = vld [vmem:[%s1 + $0x5a8] sm:$0xf]
        %v5100 = vld [vmem:[%s1 + $0x5ac] sm:$0xf]
        %v5101 = vld [vmem:[%s1 + $0x5b0] sm:$0xf]
        %v5102 = vld [vmem:[%s1 + $0x5b4] sm:$0xf]
        %v5103 = vld [vmem:[%s1 + $0x5b8] sm:$0xf]
        %v5104 = vld [vmem:[%s1 + $0x5bc] sm:$0xf]
        %v5105 = vld [vmem:[#allocation2] sm:$0x3]
        %v5122 = vunpack.c.l.b16 %v5089
        %v5123 = vunpack.c.l.b16 %v5090
        %v5124 = vunpack.c.l.b16 %v5091
        %v5125 = vunpack.c.l.b16 %v5092
        %v5126 = vunpack.c.l.b16 %v5093
        %v5127 = vunpack.c.l.b16 %v5094
        %v5128 = vunpack.c.l.b16 %v5095
        %v5129 = vunpack.c.l.b16 %v5096
        %v5130 = vunpack.c.l.b16 %v5097
        %v5131 = vunpack.c.l.b16 %v5098
        %v5132 = vunpack.c.l.b16 %v5099
        %v5133 = vunpack.c.l.b16 %v5100
        %v5134 = vunpack.c.l.b16 %v5101
        %v5135 = vunpack.c.l.b16 %v5102
        %v5136 = vunpack.c.l.b16 %v5103
        %v5137 = vunpack.c.l.b16 %v5104
        %v5138 = vpack.c.b16 %v5123, %v5122
        %v5139 = vpack.c.b16 %v5125, %v5124
        %v5140 = vpack.c.b16 %v5127, %v5126
        %v5141 = vpack.c.b16 %v5129, %v5128
        %v5142 = vpack.c.b16 %v5131, %v5130
        %v5143 = vpack.c.b16 %v5133, %v5132
        %v5144 = vpack.c.b16 %v5135, %v5134
        %v5145 = vpack.c.b16 %v5137, %v5136
        %5154 = vmatprep.subr.bf16.mxu0 0
        %5155 = vmatpush1.bf16.msra.mxu0 %v5145
        %5156 = vmatprep.subr.bf16.mxu0 0
        %5157 = vmatpush1.bf16.msra.mxu0 %v5144
        %5158 = vmatprep.subr.bf16.mxu0 0
        %5159 = vmatpush1.bf16.msra.mxu0 %v5143
        %5160 = vmatprep.subr.bf16.mxu0 0
        %5161 = vmatpush1.bf16.msra.mxu0 %v5142
        %5162 = vmatprep.subr.bf16.mxu0 0
        %5163 = vmatpush1.bf16.msra.mxu0 %v5141
        %5164 = vmatprep.subr.bf16.mxu0 0
        %5165 = vmatpush1.bf16.msra.mxu0 %v5140
        %5166 = vmatprep.subr.bf16.mxu0 0
        %5167 = vmatpush1.bf16.msra.mxu0 %v5139
        %5168 = vmatprep.subr.bf16.mxu0 0
        %5169 = vmatpush1.bf16.msra.mxu0 %v5138
        %5170 = vmatprep.subr.bf16.mxu0 0
        %5171 = vmatpush2.bf16.msra.mxu0 0
        %5172 = vmatprep.subr.bf16.mxu0 0
        %5173 = vmatpush2.bf16.msra.mxu0 0
        %5174 = vmatprep.subr.bf16.mxu0 0
        %5175 = vmatpush2.bf16.msra.mxu0 0
        %5176 = vmatprep.subr.bf16.mxu0 0
        %5177 = vmatpush2.bf16.msra.mxu0 0
        %5178 = vmatprep.subr.bf16.mxu0 0
        %5179 = vmatpush2.bf16.msra.mxu0 0
        %5180 = vmatprep.subr.bf16.mxu0 0
        %5181 = vmatpush2.bf16.msra.mxu0 0
        %5182 = vmatprep.subr.bf16.mxu0 0
        %5183 = vmatpush2.bf16.msra.mxu0 0
        %5184 = vmatprep.subr.bf16.mxu0 0
        %5185 = vmatpush2.bf16.msra.mxu0 0
        %5186 = vmatprep.mubr.bf16.mxu0 0
        %5187 = vmatmul.mubr.bf16.gmra.mxu0 %v5105
        %v5188 = vpop.f32.mrf.mxu0
        %v5189 = vadd.f32 0.0, %v5188
        %v5190 = vpop.f32.mrf.mxu0
        %v5191 = vpop.f32.mrf.mxu0
        %v5192 = vpop.f32.mrf.mxu0
        %5193 = vdwg.mxu0
        %v5194 = vadd.f32 %v5074, %v5189
        %v5195 = vld [vmem:[%s4350] sm:$0x3]
        %v5198 = vunpack.c.l.s4 1983009808
        %v5199 = vunpack.c.0.s8 %v5198
        %v5200 = vlaneseq
        %v5201 = vshrl.u32 %v5200, 7
        %v5202 = vsub.s32 %v5199, %v5201
        %v5203 = vrot.slane %v5195, %v5202
        %v5205 = vshrl.u32 %v5203, 16
        %v5207 = vrot.slane %v5205, 4
        %v5208 = vshll.u32 %v5203, 16
        %v5210 = vrot.slane %v5208, 5
        %v5211 = vor.u32 %v5207, %v5210
        %v5212 = vrot.slane %v5211, 4
        %5214 = vst [vmem:[#allocation2] sm:$0x1] %v5212
        %v5215 = vld [vmem:[%s4464] sm:$0x3]
        %v5218 = vunpack.c.l.s4 1983009808
        %v5219 = vunpack.c.0.s8 %v5218
        %v5220 = vlaneseq
        %v5221 = vshrl.u32 %v5220, 7
        %v5222 = vsub.s32 %v5219, %v5221
        %v5223 = vrot.slane %v5215, %v5222
        %v5225 = vshrl.u32 %v5223, 16
        %v5227 = vrot.slane %v5225, 7
        %v5228 = vshll.u32 %v5223, 16
        %v5230 = vor.u32 %v5227, %v5228
        %5232 = vst [vmem:[#allocation2] sm:$0x2] %v5230
        %v5233 = vld [vmem:[%s1 + $0x5c0] sm:$0xf]
        %v5234 = vld [vmem:[%s1 + $0x5c4] sm:$0xf]
        %v5235 = vld [vmem:[%s1 + $0x5c8] sm:$0xf]
        %v5236 = vld [vmem:[%s1 + $0x5cc] sm:$0xf]
        %v5237 = vld [vmem:[%s1 + $0x5d0] sm:$0xf]
        %v5238 = vld [vmem:[%s1 + $0x5d4] sm:$0xf]
        %v5239 = vld [vmem:[%s1 + $0x5d8] sm:$0xf]
        %v5240 = vld [vmem:[%s1 + $0x5dc] sm:$0xf]
        %v5241 = vld [vmem:[%s1 + $0x5e0] sm:$0xf]
        %v5242 = vld [vmem:[%s1 + $0x5e4] sm:$0xf]
        %v5243 = vld [vmem:[%s1 + $0x5e8] sm:$0xf]
        %v5244 = vld [vmem:[%s1 + $0x5ec] sm:$0xf]
        %v5245 = vld [vmem:[%s1 + $0x5f0] sm:$0xf]
        %v5246 = vld [vmem:[%s1 + $0x5f4] sm:$0xf]
        %v5247 = vld [vmem:[%s1 + $0x5f8] sm:$0xf]
        %v5248 = vld [vmem:[%s1 + $0x5fc] sm:$0xf]
        %v5249 = vld [vmem:[#allocation2] sm:$0x3]
        %v5266 = vunpack.c.l.b16 %v5233
        %v5267 = vunpack.c.l.b16 %v5234
        %v5268 = vunpack.c.l.b16 %v5235
        %v5269 = vunpack.c.l.b16 %v5236
        %v5270 = vunpack.c.l.b16 %v5237
        %v5271 = vunpack.c.l.b16 %v5238
        %v5272 = vunpack.c.l.b16 %v5239
        %v5273 = vunpack.c.l.b16 %v5240
        %v5274 = vunpack.c.l.b16 %v5241
        %v5275 = vunpack.c.l.b16 %v5242
        %v5276 = vunpack.c.l.b16 %v5243
        %v5277 = vunpack.c.l.b16 %v5244
        %v5278 = vunpack.c.l.b16 %v5245
        %v5279 = vunpack.c.l.b16 %v5246
        %v5280 = vunpack.c.l.b16 %v5247
        %v5281 = vunpack.c.l.b16 %v5248
        %v5282 = vpack.c.b16 %v5267, %v5266
        %v5283 = vpack.c.b16 %v5269, %v5268
        %v5284 = vpack.c.b16 %v5271, %v5270
        %v5285 = vpack.c.b16 %v5273, %v5272
        %v5286 = vpack.c.b16 %v5275, %v5274
        %v5287 = vpack.c.b16 %v5277, %v5276
        %v5288 = vpack.c.b16 %v5279, %v5278
        %v5289 = vpack.c.b16 %v5281, %v5280
        %5298 = vmatprep.subr.bf16.mxu0 0
        %5299 = vmatpush1.bf16.msra.mxu0 %v5289
        %5300 = vmatprep.subr.bf16.mxu0 0
        %5301 = vmatpush1.bf16.msra.mxu0 %v5288
        %5302 = vmatprep.subr.bf16.mxu0 0
        %5303 = vmatpush1.bf16.msra.mxu0 %v5287
        %5304 = vmatprep.subr.bf16.mxu0 0
        %5305 = vmatpush1.bf16.msra.mxu0 %v5286
        %5306 = vmatprep.subr.bf16.mxu0 0
        %5307 = vmatpush1.bf16.msra.mxu0 %v5285
        %5308 = vmatprep.subr.bf16.mxu0 0
        %5309 = vmatpush1.bf16.msra.mxu0 %v5284
        %5310 = vmatprep.subr.bf16.mxu0 0
        %5311 = vmatpush1.bf16.msra.mxu0 %v5283
        %5312 = vmatprep.subr.bf16.mxu0 0
        %5313 = vmatpush1.bf16.msra.mxu0 %v5282
        %5314 = vmatprep.subr.bf16.mxu0 0
        %5315 = vmatpush2.bf16.msra.mxu0 0
        %5316 = vmatprep.subr.bf16.mxu0 0
        %5317 = vmatpush2.bf16.msra.mxu0 0
        %5318 = vmatprep.subr.bf16.mxu0 0
        %5319 = vmatpush2.bf16.msra.mxu0 0
        %5320 = vmatprep.subr.bf16.mxu0 0
        %5321 = vmatpush2.bf16.msra.mxu0 0
        %5322 = vmatprep.subr.bf16.mxu0 0
        %5323 = vmatpush2.bf16.msra.mxu0 0
        %5324 = vmatprep.subr.bf16.mxu0 0
        %5325 = vmatpush2.bf16.msra.mxu0 0
        %5326 = vmatprep.subr.bf16.mxu0 0
        %5327 = vmatpush2.bf16.msra.mxu0 0
        %5328 = vmatprep.subr.bf16.mxu0 0
        %5329 = vmatpush2.bf16.msra.mxu0 0
        %5330 = vmatprep.mubr.bf16.mxu0 0
        %5331 = vmatmul.mubr.bf16.gmra.mxu0 %v5249
        %v5332 = vpop.f32.mrf.mxu0
        %v5333 = vadd.f32 0.0, %v5332
        %v5334 = vpop.f32.mrf.mxu0
        %v5335 = vpop.f32.mrf.mxu0
        %v5336 = vpop.f32.mrf.mxu0
        %5337 = vdwg.mxu0
        %v5338 = vadd.f32 %v5194, %v5333
        %v5339 = vld [vmem:[%s4416] sm:$0x1]
        %5340 = vst [vmem:[#allocation2] sm:$0x1] %v5339
        %v5341 = vld [vmem:[%s4530] sm:$0x1]
        %v5344 = vunpack.c.l.s4 1983009808
        %v5345 = vunpack.c.0.s8 %v5344
        %v5346 = vlaneseq
        %v5347 = vshrl.u32 %v5346, 7
        %v5348 = vsub.s32 %v5345, %v5347
        %v5349 = vrot.slane %v5341, %v5348
        %v5350 = vrot.slane %v5349, 7
        %5352 = vst [vmem:[#allocation2] sm:$0x2] %v5350
        %v5353 = vld [vmem:[%s1 + $0x600] sm:$0xf]
        %v5354 = vld [vmem:[%s1 + $0x604] sm:$0xf]
        %v5355 = vld [vmem:[%s1 + $0x608] sm:$0xf]
        %v5356 = vld [vmem:[%s1 + $0x60c] sm:$0xf]
        %v5357 = vld [vmem:[%s1 + $0x610] sm:$0xf]
        %v5358 = vld [vmem:[%s1 + $0x614] sm:$0xf]
        %v5359 = vld [vmem:[%s1 + $0x618] sm:$0xf]
        %v5360 = vld [vmem:[%s1 + $0x61c] sm:$0xf]
        %v5361 = vld [vmem:[%s1 + $0x620] sm:$0xf]
        %v5362 = vld [vmem:[%s1 + $0x624] sm:$0xf]
        %v5363 = vld [vmem:[%s1 + $0x628] sm:$0xf]
        %v5364 = vld [vmem:[%s1 + $0x62c] sm:$0xf]
        %v5365 = vld [vmem:[%s1 + $0x630] sm:$0xf]
        %v5366 = vld [vmem:[%s1 + $0x634] sm:$0xf]
        %v5367 = vld [vmem:[%s1 + $0x638] sm:$0xf]
        %v5368 = vld [vmem:[%s1 + $0x63c] sm:$0xf]
        %v5369 = vld [vmem:[#allocation2] sm:$0x3]
        %v5386 = vunpack.c.l.b16 %v5353
        %v5387 = vunpack.c.l.b16 %v5354
        %v5388 = vunpack.c.l.b16 %v5355
        %v5389 = vunpack.c.l.b16 %v5356
        %v5390 = vunpack.c.l.b16 %v5357
        %v5391 = vunpack.c.l.b16 %v5358
        %v5392 = vunpack.c.l.b16 %v5359
        %v5393 = vunpack.c.l.b16 %v5360
        %v5394 = vunpack.c.l.b16 %v5361
        %v5395 = vunpack.c.l.b16 %v5362
        %v5396 = vunpack.c.l.b16 %v5363
        %v5397 = vunpack.c.l.b16 %v5364
        %v5398 = vunpack.c.l.b16 %v5365
        %v5399 = vunpack.c.l.b16 %v5366
        %v5400 = vunpack.c.l.b16 %v5367
        %v5401 = vunpack.c.l.b16 %v5368
        %v5402 = vpack.c.b16 %v5387, %v5386
        %v5403 = vpack.c.b16 %v5389, %v5388
        %v5404 = vpack.c.b16 %v5391, %v5390
        %v5405 = vpack.c.b16 %v5393, %v5392
        %v5406 = vpack.c.b16 %v5395, %v5394
        %v5407 = vpack.c.b16 %v5397, %v5396
        %v5408 = vpack.c.b16 %v5399, %v5398
        %v5409 = vpack.c.b16 %v5401, %v5400
        %5418 = vmatprep.subr.bf16.mxu0 0
        %5419 = vmatpush1.bf16.msra.mxu0 %v5409
        %5420 = vmatprep.subr.bf16.mxu0 0
        %5421 = vmatpush1.bf16.msra.mxu0 %v5408
        %5422 = vmatprep.subr.bf16.mxu0 0
        %5423 = vmatpush1.bf16.msra.mxu0 %v5407
        %5424 = vmatprep.subr.bf16.mxu0 0
        %5425 = vmatpush1.bf16.msra.mxu0 %v5406
        %5426 = vmatprep.subr.bf16.mxu0 0
        %5427 = vmatpush1.bf16.msra.mxu0 %v5405
        %5428 = vmatprep.subr.bf16.mxu0 0
        %5429 = vmatpush1.bf16.msra.mxu0 %v5404
        %5430 = vmatprep.subr.bf16.mxu0 0
        %5431 = vmatpush1.bf16.msra.mxu0 %v5403
        %5432 = vmatprep.subr.bf16.mxu0 0
        %5433 = vmatpush1.bf16.msra.mxu0 %v5402
        %5434 = vmatprep.subr.bf16.mxu0 0
        %5435 = vmatpush2.bf16.msra.mxu0 0
        %5436 = vmatprep.subr.bf16.mxu0 0
        %5437 = vmatpush2.bf16.msra.mxu0 0
        %5438 = vmatprep.subr.bf16.mxu0 0
        %5439 = vmatpush2.bf16.msra.mxu0 0
        %5440 = vmatprep.subr.bf16.mxu0 0
        %5441 = vmatpush2.bf16.msra.mxu0 0
        %5442 = vmatprep.subr.bf16.mxu0 0
        %5443 = vmatpush2.bf16.msra.mxu0 0
        %5444 = vmatprep.subr.bf16.mxu0 0
        %5445 = vmatpush2.bf16.msra.mxu0 0
        %5446 = vmatprep.subr.bf16.mxu0 0
        %5447 = vmatpush2.bf16.msra.mxu0 0
        %5448 = vmatprep.subr.bf16.mxu0 0
        %5449 = vmatpush2.bf16.msra.mxu0 0
        %5450 = vmatprep.mubr.bf16.mxu0 0
        %5451 = vmatmul.mubr.bf16.gmra.mxu0 %v5369
        %v5452 = vpop.f32.mrf.mxu0
        %v5453 = vadd.f32 0.0, %v5452
        %v5454 = vpop.f32.mrf.mxu0
        %v5455 = vpop.f32.mrf.mxu0
        %v5456 = vpop.f32.mrf.mxu0
        %5457 = vdwg.mxu0
        %v5458 = vadd.f32 %v5338, %v5453
        %v5459 = vld [vmem:[%s4401] sm:$0x1]
        %5460 = vst [vmem:[#allocation2] sm:$0x1] %v5459
        %v5461 = vld [vmem:[%s4515] sm:$0x1]
        %v5464 = vunpack.c.l.s4 1983009808
        %v5465 = vunpack.c.0.s8 %v5464
        %v5466 = vlaneseq
        %v5467 = vshrl.u32 %v5466, 7
        %v5468 = vsub.s32 %v5465, %v5467
        %v5469 = vrot.slane %v5461, %v5468
        %v5470 = vrot.slane %v5469, 7
        %5472 = vst [vmem:[#allocation2] sm:$0x2] %v5470
        %v5473 = vld [vmem:[%s1 + $0x640] sm:$0xf]
        %v5474 = vld [vmem:[%s1 + $0x644] sm:$0xf]
        %v5475 = vld [vmem:[%s1 + $0x648] sm:$0xf]
        %v5476 = vld [vmem:[%s1 + $0x64c] sm:$0xf]
        %v5477 = vld [vmem:[%s1 + $0x650] sm:$0xf]
        %v5478 = vld [vmem:[%s1 + $0x654] sm:$0xf]
        %v5479 = vld [vmem:[%s1 + $0x658] sm:$0xf]
        %v5480 = vld [vmem:[%s1 + $0x65c] sm:$0xf]
        %v5481 = vld [vmem:[%s1 + $0x660] sm:$0xf]
        %v5482 = vld [vmem:[%s1 + $0x664] sm:$0xf]
        %v5483 = vld [vmem:[%s1 + $0x668] sm:$0xf]
        %v5484 = vld [vmem:[%s1 + $0x66c] sm:$0xf]
        %v5485 = vld [vmem:[%s1 + $0x670] sm:$0xf]
        %v5486 = vld [vmem:[%s1 + $0x674] sm:$0xf]
        %v5487 = vld [vmem:[%s1 + $0x678] sm:$0xf]
        %v5488 = vld [vmem:[%s1 + $0x67c] sm:$0xf]
        %v5489 = vld [vmem:[#allocation2] sm:$0x3]
        %v5506 = vunpack.c.l.b16 %v5473
        %v5507 = vunpack.c.l.b16 %v5474
        %v5508 = vunpack.c.l.b16 %v5475
        %v5509 = vunpack.c.l.b16 %v5476
        %v5510 = vunpack.c.l.b16 %v5477
        %v5511 = vunpack.c.l.b16 %v5478
        %v5512 = vunpack.c.l.b16 %v5479
        %v5513 = vunpack.c.l.b16 %v5480
        %v5514 = vunpack.c.l.b16 %v5481
        %v5515 = vunpack.c.l.b16 %v5482
        %v5516 = vunpack.c.l.b16 %v5483
        %v5517 = vunpack.c.l.b16 %v5484
        %v5518 = vunpack.c.l.b16 %v5485
        %v5519 = vunpack.c.l.b16 %v5486
        %v5520 = vunpack.c.l.b16 %v5487
        %v5521 = vunpack.c.l.b16 %v5488
        %v5522 = vpack.c.b16 %v5507, %v5506
        %v5523 = vpack.c.b16 %v5509, %v5508
        %v5524 = vpack.c.b16 %v5511, %v5510
        %v5525 = vpack.c.b16 %v5513, %v5512
        %v5526 = vpack.c.b16 %v5515, %v5514
        %v5527 = vpack.c.b16 %v5517, %v5516
        %v5528 = vpack.c.b16 %v5519, %v5518
        %v5529 = vpack.c.b16 %v5521, %v5520
        %5538 = vmatprep.subr.bf16.mxu0 0
        %5539 = vmatpush1.bf16.msra.mxu0 %v5529
        %5540 = vmatprep.subr.bf16.mxu0 0
        %5541 = vmatpush1.bf16.msra.mxu0 %v5528
        %5542 = vmatprep.subr.bf16.mxu0 0
        %5543 = vmatpush1.bf16.msra.mxu0 %v5527
        %5544 = vmatprep.subr.bf16.mxu0 0
        %5545 = vmatpush1.bf16.msra.mxu0 %v5526
        %5546 = vmatprep.subr.bf16.mxu0 0
        %5547 = vmatpush1.bf16.msra.mxu0 %v5525
        %5548 = vmatprep.subr.bf16.mxu0 0
        %5549 = vmatpush1.bf16.msra.mxu0 %v5524
        %5550 = vmatprep.subr.bf16.mxu0 0
        %5551 = vmatpush1.bf16.msra.mxu0 %v5523
        %5552 = vmatprep.subr.bf16.mxu0 0
        %5553 = vmatpush1.bf16.msra.mxu0 %v5522
        %5554 = vmatprep.subr.bf16.mxu0 0
        %5555 = vmatpush2.bf16.msra.mxu0 0
        %5556 = vmatprep.subr.bf16.mxu0 0
        %5557 = vmatpush2.bf16.msra.mxu0 0
        %5558 = vmatprep.subr.bf16.mxu0 0
        %5559 = vmatpush2.bf16.msra.mxu0 0
        %5560 = vmatprep.subr.bf16.mxu0 0
        %5561 = vmatpush2.bf16.msra.mxu0 0
        %5562 = vmatprep.subr.bf16.mxu0 0
        %5563 = vmatpush2.bf16.msra.mxu0 0
        %5564 = vmatprep.subr.bf16.mxu0 0
        %5565 = vmatpush2.bf16.msra.mxu0 0
        %5566 = vmatprep.subr.bf16.mxu0 0
        %5567 = vmatpush2.bf16.msra.mxu0 0
        %5568 = vmatprep.subr.bf16.mxu0 0
        %5569 = vmatpush2.bf16.msra.mxu0 0
        %5570 = vmatprep.mubr.bf16.mxu0 0
        %5571 = vmatmul.mubr.bf16.gmra.mxu0 %v5489
        %v5572 = vpop.f32.mrf.mxu0
        %v5573 = vadd.f32 0.0, %v5572
        %v5574 = vpop.f32.mrf.mxu0
        %v5575 = vpop.f32.mrf.mxu0
        %v5576 = vpop.f32.mrf.mxu0
        %5577 = vdwg.mxu0
        %v5578 = vadd.f32 %v5458, %v5573
        %v5579 = vld [vmem:[%s4416] sm:$0x3]
        %v5582 = vunpack.c.l.s4 1983009808
        %v5583 = vunpack.c.0.s8 %v5582
        %v5584 = vlaneseq
        %v5585 = vshrl.u32 %v5584, 7
        %v5586 = vsub.s32 %v5583, %v5585
        %v5587 = vrot.slane %v5579, %v5586
        %v5589 = vshrl.u32 %v5587, 16
        %v5591 = vrot.slane %v5589, 4
        %v5592 = vshll.u32 %v5587, 16
        %v5594 = vrot.slane %v5592, 5
        %v5595 = vor.u32 %v5591, %v5594
        %v5596 = vrot.slane %v5595, 4
        %5598 = vst [vmem:[#allocation2] sm:$0x1] %v5596
        %v5599 = vld [vmem:[%s4530] sm:$0x3]
        %v5602 = vunpack.c.l.s4 1983009808
        %v5603 = vunpack.c.0.s8 %v5602
        %v5604 = vlaneseq
        %v5605 = vshrl.u32 %v5604, 7
        %v5606 = vsub.s32 %v5603, %v5605
        %v5607 = vrot.slane %v5599, %v5606
        %v5609 = vshrl.u32 %v5607, 16
        %v5611 = vrot.slane %v5609, 7
        %v5612 = vshll.u32 %v5607, 16
        %v5614 = vor.u32 %v5611, %v5612
        %5616 = vst [vmem:[#allocation2] sm:$0x2] %v5614
        %v5617 = vld [vmem:[%s1 + $0x680] sm:$0xf]
        %v5618 = vld [vmem:[%s1 + $0x684] sm:$0xf]
        %v5619 = vld [vmem:[%s1 + $0x688] sm:$0xf]
        %v5620 = vld [vmem:[%s1 + $0x68c] sm:$0xf]
        %v5621 = vld [vmem:[%s1 + $0x690] sm:$0xf]
        %v5622 = vld [vmem:[%s1 + $0x694] sm:$0xf]
        %v5623 = vld [vmem:[%s1 + $0x698] sm:$0xf]
        %v5624 = vld [vmem:[%s1 + $0x69c] sm:$0xf]
        %v5625 = vld [vmem:[%s1 + $0x6a0] sm:$0xf]
        %v5626 = vld [vmem:[%s1 + $0x6a4] sm:$0xf]
        %v5627 = vld [vmem:[%s1 + $0x6a8] sm:$0xf]
        %v5628 = vld [vmem:[%s1 + $0x6ac] sm:$0xf]
        %v5629 = vld [vmem:[%s1 + $0x6b0] sm:$0xf]
        %v5630 = vld [vmem:[%s1 + $0x6b4] sm:$0xf]
        %v5631 = vld [vmem:[%s1 + $0x6b8] sm:$0xf]
        %v5632 = vld [vmem:[%s1 + $0x6bc] sm:$0xf]
        %v5633 = vld [vmem:[#allocation2] sm:$0x3]
        %v5650 = vunpack.c.l.b16 %v5617
        %v5651 = vunpack.c.l.b16 %v5618
        %v5652 = vunpack.c.l.b16 %v5619
        %v5653 = vunpack.c.l.b16 %v5620
        %v5654 = vunpack.c.l.b16 %v5621
        %v5655 = vunpack.c.l.b16 %v5622
        %v5656 = vunpack.c.l.b16 %v5623
        %v5657 = vunpack.c.l.b16 %v5624
        %v5658 = vunpack.c.l.b16 %v5625
        %v5659 = vunpack.c.l.b16 %v5626
        %v5660 = vunpack.c.l.b16 %v5627
        %v5661 = vunpack.c.l.b16 %v5628
        %v5662 = vunpack.c.l.b16 %v5629
        %v5663 = vunpack.c.l.b16 %v5630
        %v5664 = vunpack.c.l.b16 %v5631
        %v5665 = vunpack.c.l.b16 %v5632
        %v5666 = vpack.c.b16 %v5651, %v5650
        %v5667 = vpack.c.b16 %v5653, %v5652
        %v5668 = vpack.c.b16 %v5655, %v5654
        %v5669 = vpack.c.b16 %v5657, %v5656
        %v5670 = vpack.c.b16 %v5659, %v5658
        %v5671 = vpack.c.b16 %v5661, %v5660
        %v5672 = vpack.c.b16 %v5663, %v5662
        %v5673 = vpack.c.b16 %v5665, %v5664
        %5682 = vmatprep.subr.bf16.mxu0 0
        %5683 = vmatpush1.bf16.msra.mxu0 %v5673
        %5684 = vmatprep.subr.bf16.mxu0 0
        %5685 = vmatpush1.bf16.msra.mxu0 %v5672
        %5686 = vmatprep.subr.bf16.mxu0 0
        %5687 = vmatpush1.bf16.msra.mxu0 %v5671
        %5688 = vmatprep.subr.bf16.mxu0 0
        %5689 = vmatpush1.bf16.msra.mxu0 %v5670
        %5690 = vmatprep.subr.bf16.mxu0 0
        %5691 = vmatpush1.bf16.msra.mxu0 %v5669
        %5692 = vmatprep.subr.bf16.mxu0 0
        %5693 = vmatpush1.bf16.msra.mxu0 %v5668
        %5694 = vmatprep.subr.bf16.mxu0 0
        %5695 = vmatpush1.bf16.msra.mxu0 %v5667
        %5696 = vmatprep.subr.bf16.mxu0 0
        %5697 = vmatpush1.bf16.msra.mxu0 %v5666
        %5698 = vmatprep.subr.bf16.mxu0 0
        %5699 = vmatpush2.bf16.msra.mxu0 0
        %5700 = vmatprep.subr.bf16.mxu0 0
        %5701 = vmatpush2.bf16.msra.mxu0 0
        %5702 = vmatprep.subr.bf16.mxu0 0
        %5703 = vmatpush2.bf16.msra.mxu0 0
        %5704 = vmatprep.subr.bf16.mxu0 0
        %5705 = vmatpush2.bf16.msra.mxu0 0
        %5706 = vmatprep.subr.bf16.mxu0 0
        %5707 = vmatpush2.bf16.msra.mxu0 0
        %5708 = vmatprep.subr.bf16.mxu0 0
        %5709 = vmatpush2.bf16.msra.mxu0 0
        %5710 = vmatprep.subr.bf16.mxu0 0
        %5711 = vmatpush2.bf16.msra.mxu0 0
        %5712 = vmatprep.subr.bf16.mxu0 0
        %5713 = vmatpush2.bf16.msra.mxu0 0
        %5714 = vmatprep.mubr.bf16.mxu0 0
        %5715 = vmatmul.mubr.bf16.gmra.mxu0 %v5633
        %v5716 = vpop.f32.mrf.mxu0
        %v5717 = vadd.f32 0.0, %v5716
        %v5718 = vpop.f32.mrf.mxu0
        %v5719 = vpop.f32.mrf.mxu0
        %v5720 = vpop.f32.mrf.mxu0
        %5721 = vdwg.mxu0
        %v5722 = vadd.f32 %v5578, %v5717
        %v5723 = vld [vmem:[%s2 + $0x2] sm:$0x1]
        %v5724 = vlaneseq
        %v5725 = vshrl.u32 %v5724, 7
        %v5726 = vsub.s32 0, %v5725
        %v5727 = vrot.slane %v5723, %v5726
        %v5728 = vadd.f32 %v5722, %v5727
        %v5729 = vmax.f32 %v5728, 0.0
        %vm5730 = vcmask 257024
        %5731 = vst.msk [vmem:[%s262] sm:$0xf] %vm5730, %v5729
        %v5732 = vpack.c.bf16 %v5729, %v5729
        %5733 = vst [vmem:[#allocation3] sm:$0x3] %v5732
        %v5734 = vld [vmem:[#allocation3] sm:$0x1]
        %s5735 = scalar_lea.vmem [#allocation6], 6
        %v5736 = vld [vmem:[%s5735] sm:$0x1]
        %v5737 = vsel %vm2533, %v5734, %v5736
        %5738 = vst [vmem:[%s5735] sm:$0x1] %v5737
        %v5739 = vld [vmem:[#allocation3] sm:$0x1]
        %s5740 = scalar_lea.vmem [#allocation6], 4
        %v5741 = vld [vmem:[%s5740] sm:$0x1]
        %v5742 = vsel %vm2540, %v5739, %v5741
        %5743 = vst [vmem:[%s5740] sm:$0x1] %v5742
        %v5744 = vld [vmem:[#allocation3] sm:$0x2]
        %v5747 = vunpack.c.l.s4 1966171168
        %v5748 = vunpack.c.0.s8 %v5747
        %v5749 = vlaneseq
        %v5750 = vshrl.u32 %v5749, 7
        %v5751 = vsub.s32 %v5748, %v5750
        %v5752 = vrot.slane %v5744, %v5751
        %v5753 = vcombine.high %v5752, %v5752
        %v5755 = vunpack.c.l.s4 1966171168
        %v5756 = vunpack.c.0.s8 %v5755
        %v5757 = vlaneseq
        %v5758 = vshrl.u32 %v5757, 7
        %v5759 = vsub.s32 %v5756, %v5758
        %v5760 = vrot.slane %v5753, %v5759
        %s5762 = scalar_lea.vmem [#allocation6], 3
        %v5763 = vld [vmem:[%s5762] sm:$0x1]
        %v5764 = vsel %vm2533, %v5760, %v5763
        %5765 = vst [vmem:[%s5762] sm:$0x1] %v5764
        %v5766 = vld [vmem:[#allocation3] sm:$0x2]
        %v5769 = vunpack.c.l.s4 1966171168
        %v5770 = vunpack.c.0.s8 %v5769
        %v5771 = vlaneseq
        %v5772 = vshrl.u32 %v5771, 7
        %v5773 = vsub.s32 %v5770, %v5772
        %v5774 = vrot.slane %v5766, %v5773
        %v5775 = vcombine.high %v5774, %v5774
        %v5777 = vunpack.c.l.s4 1966171168
        %v5778 = vunpack.c.0.s8 %v5777
        %v5779 = vlaneseq
        %v5780 = vshrl.u32 %v5779, 7
        %v5781 = vsub.s32 %v5778, %v5780
        %v5782 = vrot.slane %v5775, %v5781
        %s5784 = scalar_lea.vmem [#allocation6], 1
        %v5785 = vld [vmem:[%s5784] sm:$0x1]
        %v5786 = vsel %vm2540, %v5782, %v5785
        %5787 = vst [vmem:[%s5784] sm:$0x1] %v5786
        %v5788 = vld [vmem:[#allocation6] sm:$0x1]
        %v5789 = vld [vmem:[#allocation2] sm:$0x1]
        %v5790 = vsel %vm2533, %v5788, %v5789
        %5791 = vst [vmem:[#allocation2] sm:$0x1] %v5790
        %v5792 = vld [vmem:[%s1 + $0x6c0] sm:$0xf]
        %v5793 = vld [vmem:[%s1 + $0x6c4] sm:$0xf]
        %v5794 = vld [vmem:[%s1 + $0x6c8] sm:$0xf]
        %v5795 = vld [vmem:[%s1 + $0x6cc] sm:$0xf]
        %v5796 = vld [vmem:[%s1 + $0x6d0] sm:$0xf]
        %v5797 = vld [vmem:[%s1 + $0x6d4] sm:$0xf]
        %v5798 = vld [vmem:[%s1 + $0x6d8] sm:$0xf]
        %v5799 = vld [vmem:[%s1 + $0x6dc] sm:$0xf]
        %v5800 = vld [vmem:[%s1 + $0x6e0] sm:$0xf]
        %v5801 = vld [vmem:[%s1 + $0x6e4] sm:$0xf]
        %v5802 = vld [vmem:[%s1 + $0x6e8] sm:$0xf]
        %v5803 = vld [vmem:[%s1 + $0x6ec] sm:$0xf]
        %v5804 = vld [vmem:[%s1 + $0x6f0] sm:$0xf]
        %v5805 = vld [vmem:[%s1 + $0x6f4] sm:$0xf]
        %v5806 = vld [vmem:[%s1 + $0x6f8] sm:$0xf]
        %v5807 = vld [vmem:[%s1 + $0x6fc] sm:$0xf]
        %v5808 = vld [vmem:[#allocation2] sm:$0x1]
        %s5809 = scalar_lea.vmem [#allocation6], 2
        %v5810 = vld [vmem:[%s5809] sm:$0x1]
        %v5811 = vsel %vm2533, %v5810, %v5808
        %5812 = vst [vmem:[#allocation2] sm:$0x1] %v5811
        %v5813 = vld [vmem:[%s1 + $0x700] sm:$0xf]
        %v5814 = vld [vmem:[%s1 + $0x704] sm:$0xf]
        %v5815 = vld [vmem:[%s1 + $0x708] sm:$0xf]
        %v5816 = vld [vmem:[%s1 + $0x70c] sm:$0xf]
        %v5817 = vld [vmem:[%s1 + $0x710] sm:$0xf]
        %v5818 = vld [vmem:[%s1 + $0x714] sm:$0xf]
        %v5819 = vld [vmem:[%s1 + $0x718] sm:$0xf]
        %v5820 = vld [vmem:[%s1 + $0x71c] sm:$0xf]
        %v5821 = vld [vmem:[%s1 + $0x720] sm:$0xf]
        %v5822 = vld [vmem:[%s1 + $0x724] sm:$0xf]
        %v5823 = vld [vmem:[%s1 + $0x728] sm:$0xf]
        %v5824 = vld [vmem:[%s1 + $0x72c] sm:$0xf]
        %v5825 = vld [vmem:[%s1 + $0x730] sm:$0xf]
        %v5826 = vld [vmem:[%s1 + $0x734] sm:$0xf]
        %v5827 = vld [vmem:[%s1 + $0x738] sm:$0xf]
        %v5828 = vld [vmem:[%s1 + $0x73c] sm:$0xf]
        %v5829 = vld [vmem:[#allocation2] sm:$0x1]
        %v5846 = vunpack.c.l.b16 %v5813
        %v5847 = vunpack.c.l.b16 %v5814
        %v5848 = vunpack.c.l.b16 %v5815
        %v5849 = vunpack.c.l.b16 %v5816
        %v5850 = vunpack.c.l.b16 %v5817
        %v5851 = vunpack.c.l.b16 %v5818
        %v5852 = vunpack.c.l.b16 %v5819
        %v5853 = vunpack.c.l.b16 %v5820
        %v5854 = vunpack.c.l.b16 %v5821
        %v5855 = vunpack.c.l.b16 %v5822
        %v5856 = vunpack.c.l.b16 %v5823
        %v5857 = vunpack.c.l.b16 %v5824
        %v5858 = vunpack.c.l.b16 %v5825
        %v5859 = vunpack.c.l.b16 %v5826
        %v5860 = vunpack.c.l.b16 %v5827
        %v5861 = vunpack.c.l.b16 %v5828
        %v5862 = vpack.c.b16 %v5847, %v5846
        %v5863 = vpack.c.b16 %v5849, %v5848
        %v5864 = vpack.c.b16 %v5851, %v5850
        %v5865 = vpack.c.b16 %v5853, %v5852
        %v5866 = vpack.c.b16 %v5855, %v5854
        %v5867 = vpack.c.b16 %v5857, %v5856
        %v5868 = vpack.c.b16 %v5859, %v5858
        %v5869 = vpack.c.b16 %v5861, %v5860
        %5878 = vmatprep.subr.bf16.mxu0 0
        %5879 = vmatpush1.bf16.msra.mxu0 %v5869
        %5880 = vmatprep.subr.bf16.mxu0 0
        %5881 = vmatpush1.bf16.msra.mxu0 %v5868
        %5882 = vmatprep.subr.bf16.mxu0 0
        %5883 = vmatpush1.bf16.msra.mxu0 %v5867
        %5884 = vmatprep.subr.bf16.mxu0 0
        %5885 = vmatpush1.bf16.msra.mxu0 %v5866
        %5886 = vmatprep.subr.bf16.mxu0 0
        %5887 = vmatpush1.bf16.msra.mxu0 %v5865
        %5888 = vmatprep.subr.bf16.mxu0 0
        %5889 = vmatpush1.bf16.msra.mxu0 %v5864
        %5890 = vmatprep.subr.bf16.mxu0 0
        %5891 = vmatpush1.bf16.msra.mxu0 %v5863
        %5892 = vmatprep.subr.bf16.mxu0 0
        %5893 = vmatpush1.bf16.msra.mxu0 %v5862
        %5894 = vmatprep.subr.bf16.mxu0 0
        %5895 = vmatpush2.bf16.msra.mxu0 0
        %5896 = vmatprep.subr.bf16.mxu0 0
        %5897 = vmatpush2.bf16.msra.mxu0 0
        %5898 = vmatprep.subr.bf16.mxu0 0
        %5899 = vmatpush2.bf16.msra.mxu0 0
        %5900 = vmatprep.subr.bf16.mxu0 0
        %5901 = vmatpush2.bf16.msra.mxu0 0
        %5902 = vmatprep.subr.bf16.mxu0 0
        %5903 = vmatpush2.bf16.msra.mxu0 0
        %5904 = vmatprep.subr.bf16.mxu0 0
        %5905 = vmatpush2.bf16.msra.mxu0 0
        %5906 = vmatprep.subr.bf16.mxu0 0
        %5907 = vmatpush2.bf16.msra.mxu0 0
        %5908 = vmatprep.subr.bf16.mxu0 0
        %5909 = vmatpush2.bf16.msra.mxu0 0
        %5910 = vmatprep.mubr.bf16.mxu0 0
        %5911 = vmatmul.mubr.bf16.gmra.mxu0 %v5829
        %v5912 = vpop.f32.mrf.mxu0
        %v5913 = vadd.f32 0.0, %v5912
        %v5914 = vpop.f32.mrf.mxu0
        %v5915 = vpop.f32.mrf.mxu0
        %v5916 = vpop.f32.mrf.mxu0
        %5917 = vdwg.mxu0
        %v5934 = vunpack.c.l.b16 %v5792
        %v5935 = vunpack.c.l.b16 %v5793
        %v5936 = vunpack.c.l.b16 %v5794
        %v5937 = vunpack.c.l.b16 %v5795
        %v5938 = vunpack.c.l.b16 %v5796
        %v5939 = vunpack.c.l.b16 %v5797
        %v5940 = vunpack.c.l.b16 %v5798
        %v5941 = vunpack.c.l.b16 %v5799
        %v5942 = vunpack.c.l.b16 %v5800
        %v5943 = vunpack.c.l.b16 %v5801
        %v5944 = vunpack.c.l.b16 %v5802
        %v5945 = vunpack.c.l.b16 %v5803
        %v5946 = vunpack.c.l.b16 %v5804
        %v5947 = vunpack.c.l.b16 %v5805
        %v5948 = vunpack.c.l.b16 %v5806
        %v5949 = vunpack.c.l.b16 %v5807
        %v5950 = vpack.c.b16 %v5935, %v5934
        %v5951 = vpack.c.b16 %v5937, %v5936
        %v5952 = vpack.c.b16 %v5939, %v5938
        %v5953 = vpack.c.b16 %v5941, %v5940
        %v5954 = vpack.c.b16 %v5943, %v5942
        %v5955 = vpack.c.b16 %v5945, %v5944
        %v5956 = vpack.c.b16 %v5947, %v5946
        %v5957 = vpack.c.b16 %v5949, %v5948
        %5966 = vmatprep.subr.bf16.mxu0 0
        %5967 = vmatpush1.bf16.msra.mxu0 %v5957
        %5968 = vmatprep.subr.bf16.mxu0 0
        %5969 = vmatpush1.bf16.msra.mxu0 %v5956
        %5970 = vmatprep.subr.bf16.mxu0 0
        %5971 = vmatpush1.bf16.msra.mxu0 %v5955
        %5972 = vmatprep.subr.bf16.mxu0 0
        %5973 = vmatpush1.bf16.msra.mxu0 %v5954
        %5974 = vmatprep.subr.bf16.mxu0 0
        %5975 = vmatpush1.bf16.msra.mxu0 %v5953
        %5976 = vmatprep.subr.bf16.mxu0 0
        %5977 = vmatpush1.bf16.msra.mxu0 %v5952
        %5978 = vmatprep.subr.bf16.mxu0 0
        %5979 = vmatpush1.bf16.msra.mxu0 %v5951
        %5980 = vmatprep.subr.bf16.mxu0 0
        %5981 = vmatpush1.bf16.msra.mxu0 %v5950
        %5982 = vmatprep.subr.bf16.mxu0 0
        %5983 = vmatpush2.bf16.msra.mxu0 0
        %5984 = vmatprep.subr.bf16.mxu0 0
        %5985 = vmatpush2.bf16.msra.mxu0 0
        %5986 = vmatprep.subr.bf16.mxu0 0
        %5987 = vmatpush2.bf16.msra.mxu0 0
        %5988 = vmatprep.subr.bf16.mxu0 0
        %5989 = vmatpush2.bf16.msra.mxu0 0
        %5990 = vmatprep.subr.bf16.mxu0 0
        %5991 = vmatpush2.bf16.msra.mxu0 0
        %5992 = vmatprep.subr.bf16.mxu0 0
        %5993 = vmatpush2.bf16.msra.mxu0 0
        %5994 = vmatprep.subr.bf16.mxu0 0
        %5995 = vmatpush2.bf16.msra.mxu0 0
        %5996 = vmatprep.subr.bf16.mxu0 0
        %5997 = vmatpush2.bf16.msra.mxu0 0
        %5998 = vmatprep.mubr.bf16.mxu0 0
        %5999 = vmatmul.mubr.bf16.gmra.mxu0 %v5808
        %v6000 = vpop.f32.mrf.mxu0
        %v6001 = vadd.f32 %v5913, %v6000
        %v6002 = vpop.f32.mrf.mxu0
        %v6003 = vpop.f32.mrf.mxu0
        %v6004 = vpop.f32.mrf.mxu0
        %6005 = vdwg.mxu0
        %v6006 = vld [vmem:[#allocation6] sm:$0x1]
        %v6009 = vunpack.c.l.s4 1935823168
        %v6010 = vunpack.c.0.s8 %v6009
        %v6011 = vlaneseq
        %v6012 = vshrl.u32 %v6011, 7
        %v6013 = vsub.s32 %v6010, %v6012
        %v6014 = vrot.slane %v6006, %v6013
        %v6016 = vunpack.c.l.s4 1935823168
        %v6017 = vunpack.c.0.s8 %v6016
        %v6018 = vlaneseq
        %v6019 = vshrl.u32 %v6018, 7
        %v6020 = vsub.s32 %v6017, %v6019
        %v6021 = vrot.slane %v6014, %v6020
        %v6023 = vshrl.u32 %v6021, 16
        %v6025 = vrot.slane %v6023, 4
        %v6026 = vrot.slane %v6025, 4
        %v6028 = vld [vmem:[#allocation2] sm:$0x1]
        %v6029 = vsel %vm2533, %v6026, %v6028
        %6030 = vst [vmem:[#allocation2] sm:$0x1] %v6029
        %v6031 = vld [vmem:[%s1 + $0x740] sm:$0xf]
        %v6032 = vld [vmem:[%s1 + $0x744] sm:$0xf]
        %v6033 = vld [vmem:[%s1 + $0x748] sm:$0xf]
        %v6034 = vld [vmem:[%s1 + $0x74c] sm:$0xf]
        %v6035 = vld [vmem:[%s1 + $0x750] sm:$0xf]
        %v6036 = vld [vmem:[%s1 + $0x754] sm:$0xf]
        %v6037 = vld [vmem:[%s1 + $0x758] sm:$0xf]
        %v6038 = vld [vmem:[%s1 + $0x75c] sm:$0xf]
        %v6039 = vld [vmem:[%s1 + $0x760] sm:$0xf]
        %v6040 = vld [vmem:[%s1 + $0x764] sm:$0xf]
        %v6041 = vld [vmem:[%s1 + $0x768] sm:$0xf]
        %v6042 = vld [vmem:[%s1 + $0x76c] sm:$0xf]
        %v6043 = vld [vmem:[%s1 + $0x770] sm:$0xf]
        %v6044 = vld [vmem:[%s1 + $0x774] sm:$0xf]
        %v6045 = vld [vmem:[%s1 + $0x778] sm:$0xf]
        %v6046 = vld [vmem:[%s1 + $0x77c] sm:$0xf]
        %v6047 = vld [vmem:[#allocation2] sm:$0x1]
        %v6064 = vunpack.c.l.b16 %v6031
        %v6065 = vunpack.c.l.b16 %v6032
        %v6066 = vunpack.c.l.b16 %v6033
        %v6067 = vunpack.c.l.b16 %v6034
        %v6068 = vunpack.c.l.b16 %v6035
        %v6069 = vunpack.c.l.b16 %v6036
        %v6070 = vunpack.c.l.b16 %v6037
        %v6071 = vunpack.c.l.b16 %v6038
        %v6072 = vunpack.c.l.b16 %v6039
        %v6073 = vunpack.c.l.b16 %v6040
        %v6074 = vunpack.c.l.b16 %v6041
        %v6075 = vunpack.c.l.b16 %v6042
        %v6076 = vunpack.c.l.b16 %v6043
        %v6077 = vunpack.c.l.b16 %v6044
        %v6078 = vunpack.c.l.b16 %v6045
        %v6079 = vunpack.c.l.b16 %v6046
        %v6080 = vpack.c.b16 %v6065, %v6064
        %v6081 = vpack.c.b16 %v6067, %v6066
        %v6082 = vpack.c.b16 %v6069, %v6068
        %v6083 = vpack.c.b16 %v6071, %v6070
        %v6084 = vpack.c.b16 %v6073, %v6072
        %v6085 = vpack.c.b16 %v6075, %v6074
        %v6086 = vpack.c.b16 %v6077, %v6076
        %v6087 = vpack.c.b16 %v6079, %v6078
        %6096 = vmatprep.subr.bf16.mxu0 0
        %6097 = vmatpush1.bf16.msra.mxu0 %v6087
        %6098 = vmatprep.subr.bf16.mxu0 0
        %6099 = vmatpush1.bf16.msra.mxu0 %v6086
        %6100 = vmatprep.subr.bf16.mxu0 0
        %6101 = vmatpush1.bf16.msra.mxu0 %v6085
        %6102 = vmatprep.subr.bf16.mxu0 0
        %6103 = vmatpush1.bf16.msra.mxu0 %v6084
        %6104 = vmatprep.subr.bf16.mxu0 0
        %6105 = vmatpush1.bf16.msra.mxu0 %v6083
        %6106 = vmatprep.subr.bf16.mxu0 0
        %6107 = vmatpush1.bf16.msra.mxu0 %v6082
        %6108 = vmatprep.subr.bf16.mxu0 0
        %6109 = vmatpush1.bf16.msra.mxu0 %v6081
        %6110 = vmatprep.subr.bf16.mxu0 0
        %6111 = vmatpush1.bf16.msra.mxu0 %v6080
        %6112 = vmatprep.subr.bf16.mxu0 0
        %6113 = vmatpush2.bf16.msra.mxu0 0
        %6114 = vmatprep.subr.bf16.mxu0 0
        %6115 = vmatpush2.bf16.msra.mxu0 0
        %6116 = vmatprep.subr.bf16.mxu0 0
        %6117 = vmatpush2.bf16.msra.mxu0 0
        %6118 = vmatprep.subr.bf16.mxu0 0
        %6119 = vmatpush2.bf16.msra.mxu0 0
        %6120 = vmatprep.subr.bf16.mxu0 0
        %6121 = vmatpush2.bf16.msra.mxu0 0
        %6122 = vmatprep.subr.bf16.mxu0 0
        %6123 = vmatpush2.bf16.msra.mxu0 0
        %6124 = vmatprep.subr.bf16.mxu0 0
        %6125 = vmatpush2.bf16.msra.mxu0 0
        %6126 = vmatprep.subr.bf16.mxu0 0
        %6127 = vmatpush2.bf16.msra.mxu0 0
        %6128 = vmatprep.mubr.bf16.mxu0 0
        %6129 = vmatmul.mubr.bf16.gmra.mxu0 %v6047
        %v6130 = vpop.f32.mrf.mxu0
        %v6131 = vadd.f32 0.0, %v6130
        %v6132 = vpop.f32.mrf.mxu0
        %v6133 = vpop.f32.mrf.mxu0
        %v6134 = vpop.f32.mrf.mxu0
        %6135 = vdwg.mxu0
        %v6136 = vadd.f32 %v6001, %v6131
        %v6137 = vld [vmem:[%s5740] sm:$0x1]
        %v6138 = vsel %vm2533, %v6137, %v6047
        %6139 = vst [vmem:[#allocation2] sm:$0x1] %v6138
        %v6140 = vld [vmem:[%s1 + $0x780] sm:$0xf]
        %v6141 = vld [vmem:[%s1 + $0x784] sm:$0xf]
        %v6142 = vld [vmem:[%s1 + $0x788] sm:$0xf]
        %v6143 = vld [vmem:[%s1 + $0x78c] sm:$0xf]
        %v6144 = vld [vmem:[%s1 + $0x790] sm:$0xf]
        %v6145 = vld [vmem:[%s1 + $0x794] sm:$0xf]
        %v6146 = vld [vmem:[%s1 + $0x798] sm:$0xf]
        %v6147 = vld [vmem:[%s1 + $0x79c] sm:$0xf]
        %v6148 = vld [vmem:[%s1 + $0x7a0] sm:$0xf]
        %v6149 = vld [vmem:[%s1 + $0x7a4] sm:$0xf]
        %v6150 = vld [vmem:[%s1 + $0x7a8] sm:$0xf]
        %v6151 = vld [vmem:[%s1 + $0x7ac] sm:$0xf]
        %v6152 = vld [vmem:[%s1 + $0x7b0] sm:$0xf]
        %v6153 = vld [vmem:[%s1 + $0x7b4] sm:$0xf]
        %v6154 = vld [vmem:[%s1 + $0x7b8] sm:$0xf]
        %v6155 = vld [vmem:[%s1 + $0x7bc] sm:$0xf]
        %v6156 = vld [vmem:[#allocation2] sm:$0x1]
        %v6173 = vunpack.c.l.b16 %v6140
        %v6174 = vunpack.c.l.b16 %v6141
        %v6175 = vunpack.c.l.b16 %v6142
        %v6176 = vunpack.c.l.b16 %v6143
        %v6177 = vunpack.c.l.b16 %v6144
        %v6178 = vunpack.c.l.b16 %v6145
        %v6179 = vunpack.c.l.b16 %v6146
        %v6180 = vunpack.c.l.b16 %v6147
        %v6181 = vunpack.c.l.b16 %v6148
        %v6182 = vunpack.c.l.b16 %v6149
        %v6183 = vunpack.c.l.b16 %v6150
        %v6184 = vunpack.c.l.b16 %v6151
        %v6185 = vunpack.c.l.b16 %v6152
        %v6186 = vunpack.c.l.b16 %v6153
        %v6187 = vunpack.c.l.b16 %v6154
        %v6188 = vunpack.c.l.b16 %v6155
        %v6189 = vpack.c.b16 %v6174, %v6173
        %v6190 = vpack.c.b16 %v6176, %v6175
        %v6191 = vpack.c.b16 %v6178, %v6177
        %v6192 = vpack.c.b16 %v6180, %v6179
        %v6193 = vpack.c.b16 %v6182, %v6181
        %v6194 = vpack.c.b16 %v6184, %v6183
        %v6195 = vpack.c.b16 %v6186, %v6185
        %v6196 = vpack.c.b16 %v6188, %v6187
        %6205 = vmatprep.subr.bf16.mxu0 0
        %6206 = vmatpush1.bf16.msra.mxu0 %v6196
        %6207 = vmatprep.subr.bf16.mxu0 0
        %6208 = vmatpush1.bf16.msra.mxu0 %v6195
        %6209 = vmatprep.subr.bf16.mxu0 0
        %6210 = vmatpush1.bf16.msra.mxu0 %v6194
        %6211 = vmatprep.subr.bf16.mxu0 0
        %6212 = vmatpush1.bf16.msra.mxu0 %v6193
        %6213 = vmatprep.subr.bf16.mxu0 0
        %6214 = vmatpush1.bf16.msra.mxu0 %v6192
        %6215 = vmatprep.subr.bf16.mxu0 0
        %6216 = vmatpush1.bf16.msra.mxu0 %v6191
        %6217 = vmatprep.subr.bf16.mxu0 0
        %6218 = vmatpush1.bf16.msra.mxu0 %v6190
        %6219 = vmatprep.subr.bf16.mxu0 0
        %6220 = vmatpush1.bf16.msra.mxu0 %v6189
        %6221 = vmatprep.subr.bf16.mxu0 0
        %6222 = vmatpush2.bf16.msra.mxu0 0
        %6223 = vmatprep.subr.bf16.mxu0 0
        %6224 = vmatpush2.bf16.msra.mxu0 0
        %6225 = vmatprep.subr.bf16.mxu0 0
        %6226 = vmatpush2.bf16.msra.mxu0 0
        %6227 = vmatprep.subr.bf16.mxu0 0
        %6228 = vmatpush2.bf16.msra.mxu0 0
        %6229 = vmatprep.subr.bf16.mxu0 0
        %6230 = vmatpush2.bf16.msra.mxu0 0
        %6231 = vmatprep.subr.bf16.mxu0 0
        %6232 = vmatpush2.bf16.msra.mxu0 0
        %6233 = vmatprep.subr.bf16.mxu0 0
        %6234 = vmatpush2.bf16.msra.mxu0 0
        %6235 = vmatprep.subr.bf16.mxu0 0
        %6236 = vmatpush2.bf16.msra.mxu0 0
        %6237 = vmatprep.mubr.bf16.mxu0 0
        %6238 = vmatmul.mubr.bf16.gmra.mxu0 %v6156
        %v6239 = vpop.f32.mrf.mxu0
        %v6240 = vadd.f32 0.0, %v6239
        %v6241 = vpop.f32.mrf.mxu0
        %v6242 = vpop.f32.mrf.mxu0
        %v6243 = vpop.f32.mrf.mxu0
        %6244 = vdwg.mxu0
        %v6245 = vadd.f32 %v6136, %v6240
        %v6246 = vld [vmem:[%s5735] sm:$0x1]
        %v6247 = vsel %vm2533, %v6246, %v6156
        %6248 = vst [vmem:[#allocation2] sm:$0x1] %v6247
        %v6249 = vld [vmem:[%s1 + $0x7c0] sm:$0xf]
        %v6250 = vld [vmem:[%s1 + $0x7c4] sm:$0xf]
        %v6251 = vld [vmem:[%s1 + $0x7c8] sm:$0xf]
        %v6252 = vld [vmem:[%s1 + $0x7cc] sm:$0xf]
        %v6253 = vld [vmem:[%s1 + $0x7d0] sm:$0xf]
        %v6254 = vld [vmem:[%s1 + $0x7d4] sm:$0xf]
        %v6255 = vld [vmem:[%s1 + $0x7d8] sm:$0xf]
        %v6256 = vld [vmem:[%s1 + $0x7dc] sm:$0xf]
        %v6257 = vld [vmem:[%s1 + $0x7e0] sm:$0xf]
        %v6258 = vld [vmem:[%s1 + $0x7e4] sm:$0xf]
        %v6259 = vld [vmem:[%s1 + $0x7e8] sm:$0xf]
        %v6260 = vld [vmem:[%s1 + $0x7ec] sm:$0xf]
        %v6261 = vld [vmem:[%s1 + $0x7f0] sm:$0xf]
        %v6262 = vld [vmem:[%s1 + $0x7f4] sm:$0xf]
        %v6263 = vld [vmem:[%s1 + $0x7f8] sm:$0xf]
        %v6264 = vld [vmem:[%s1 + $0x7fc] sm:$0xf]
        %v6265 = vld [vmem:[#allocation2] sm:$0x1]
        %v6282 = vunpack.c.l.b16 %v6249
        %v6283 = vunpack.c.l.b16 %v6250
        %v6284 = vunpack.c.l.b16 %v6251
        %v6285 = vunpack.c.l.b16 %v6252
        %v6286 = vunpack.c.l.b16 %v6253
        %v6287 = vunpack.c.l.b16 %v6254
        %v6288 = vunpack.c.l.b16 %v6255
        %v6289 = vunpack.c.l.b16 %v6256
        %v6290 = vunpack.c.l.b16 %v6257
        %v6291 = vunpack.c.l.b16 %v6258
        %v6292 = vunpack.c.l.b16 %v6259
        %v6293 = vunpack.c.l.b16 %v6260
        %v6294 = vunpack.c.l.b16 %v6261
        %v6295 = vunpack.c.l.b16 %v6262
        %v6296 = vunpack.c.l.b16 %v6263
        %v6297 = vunpack.c.l.b16 %v6264
        %v6298 = vpack.c.b16 %v6283, %v6282
        %v6299 = vpack.c.b16 %v6285, %v6284
        %v6300 = vpack.c.b16 %v6287, %v6286
        %v6301 = vpack.c.b16 %v6289, %v6288
        %v6302 = vpack.c.b16 %v6291, %v6290
        %v6303 = vpack.c.b16 %v6293, %v6292
        %v6304 = vpack.c.b16 %v6295, %v6294
        %v6305 = vpack.c.b16 %v6297, %v6296
        %6314 = vmatprep.subr.bf16.mxu0 0
        %6315 = vmatpush1.bf16.msra.mxu0 %v6305
        %6316 = vmatprep.subr.bf16.mxu0 0
        %6317 = vmatpush1.bf16.msra.mxu0 %v6304
        %6318 = vmatprep.subr.bf16.mxu0 0
        %6319 = vmatpush1.bf16.msra.mxu0 %v6303
        %6320 = vmatprep.subr.bf16.mxu0 0
        %6321 = vmatpush1.bf16.msra.mxu0 %v6302
        %6322 = vmatprep.subr.bf16.mxu0 0
        %6323 = vmatpush1.bf16.msra.mxu0 %v6301
        %6324 = vmatprep.subr.bf16.mxu0 0
        %6325 = vmatpush1.bf16.msra.mxu0 %v6300
        %6326 = vmatprep.subr.bf16.mxu0 0
        %6327 = vmatpush1.bf16.msra.mxu0 %v6299
        %6328 = vmatprep.subr.bf16.mxu0 0
        %6329 = vmatpush1.bf16.msra.mxu0 %v6298
        %6330 = vmatprep.subr.bf16.mxu0 0
        %6331 = vmatpush2.bf16.msra.mxu0 0
        %6332 = vmatprep.subr.bf16.mxu0 0
        %6333 = vmatpush2.bf16.msra.mxu0 0
        %6334 = vmatprep.subr.bf16.mxu0 0
        %6335 = vmatpush2.bf16.msra.mxu0 0
        %6336 = vmatprep.subr.bf16.mxu0 0
        %6337 = vmatpush2.bf16.msra.mxu0 0
        %6338 = vmatprep.subr.bf16.mxu0 0
        %6339 = vmatpush2.bf16.msra.mxu0 0
        %6340 = vmatprep.subr.bf16.mxu0 0
        %6341 = vmatpush2.bf16.msra.mxu0 0
        %6342 = vmatprep.subr.bf16.mxu0 0
        %6343 = vmatpush2.bf16.msra.mxu0 0
        %6344 = vmatprep.subr.bf16.mxu0 0
        %6345 = vmatpush2.bf16.msra.mxu0 0
        %6346 = vmatprep.mubr.bf16.mxu0 0
        %6347 = vmatmul.mubr.bf16.gmra.mxu0 %v6265
        %v6348 = vpop.f32.mrf.mxu0
        %v6349 = vadd.f32 0.0, %v6348
        %v6350 = vpop.f32.mrf.mxu0
        %v6351 = vpop.f32.mrf.mxu0
        %v6352 = vpop.f32.mrf.mxu0
        %6353 = vdwg.mxu0
        %v6354 = vadd.f32 %v6245, %v6349
        %v6355 = vld [vmem:[%s5740] sm:$0x1]
        %v6358 = vunpack.c.l.s4 1935823168
        %v6359 = vunpack.c.0.s8 %v6358
        %v6360 = vlaneseq
        %v6361 = vshrl.u32 %v6360, 7
        %v6362 = vsub.s32 %v6359, %v6361
        %v6363 = vrot.slane %v6355, %v6362
        %v6365 = vunpack.c.l.s4 1935823168
        %v6366 = vunpack.c.0.s8 %v6365
        %v6367 = vlaneseq
        %v6368 = vshrl.u32 %v6367, 7
        %v6369 = vsub.s32 %v6366, %v6368
        %v6370 = vrot.slane %v6363, %v6369
        %v6372 = vshrl.u32 %v6370, 16
        %v6374 = vrot.slane %v6372, 4
        %v6375 = vrot.slane %v6374, 4
        %v6377 = vld [vmem:[#allocation2] sm:$0x1]
        %v6378 = vsel %vm2533, %v6375, %v6377
        %6379 = vst [vmem:[#allocation2] sm:$0x1] %v6378
        %v6380 = vld [vmem:[%s1 + $0x800] sm:$0xf]
        %v6381 = vld [vmem:[%s1 + $0x804] sm:$0xf]
        %v6382 = vld [vmem:[%s1 + $0x808] sm:$0xf]
        %v6383 = vld [vmem:[%s1 + $0x80c] sm:$0xf]
        %v6384 = vld [vmem:[%s1 + $0x810] sm:$0xf]
        %v6385 = vld [vmem:[%s1 + $0x814] sm:$0xf]
        %v6386 = vld [vmem:[%s1 + $0x818] sm:$0xf]
        %v6387 = vld [vmem:[%s1 + $0x81c] sm:$0xf]
        %v6388 = vld [vmem:[%s1 + $0x820] sm:$0xf]
        %v6389 = vld [vmem:[%s1 + $0x824] sm:$0xf]
        %v6390 = vld [vmem:[%s1 + $0x828] sm:$0xf]
        %v6391 = vld [vmem:[%s1 + $0x82c] sm:$0xf]
        %v6392 = vld [vmem:[%s1 + $0x830] sm:$0xf]
        %v6393 = vld [vmem:[%s1 + $0x834] sm:$0xf]
        %v6394 = vld [vmem:[%s1 + $0x838] sm:$0xf]
        %v6395 = vld [vmem:[%s1 + $0x83c] sm:$0xf]
        %v6396 = vld [vmem:[#allocation2] sm:$0x1]
        %v6413 = vunpack.c.l.b16 %v6380
        %v6414 = vunpack.c.l.b16 %v6381
        %v6415 = vunpack.c.l.b16 %v6382
        %v6416 = vunpack.c.l.b16 %v6383
        %v6417 = vunpack.c.l.b16 %v6384
        %v6418 = vunpack.c.l.b16 %v6385
        %v6419 = vunpack.c.l.b16 %v6386
        %v6420 = vunpack.c.l.b16 %v6387
        %v6421 = vunpack.c.l.b16 %v6388
        %v6422 = vunpack.c.l.b16 %v6389
        %v6423 = vunpack.c.l.b16 %v6390
        %v6424 = vunpack.c.l.b16 %v6391
        %v6425 = vunpack.c.l.b16 %v6392
        %v6426 = vunpack.c.l.b16 %v6393
        %v6427 = vunpack.c.l.b16 %v6394
        %v6428 = vunpack.c.l.b16 %v6395
        %v6429 = vpack.c.b16 %v6414, %v6413
        %v6430 = vpack.c.b16 %v6416, %v6415
        %v6431 = vpack.c.b16 %v6418, %v6417
        %v6432 = vpack.c.b16 %v6420, %v6419
        %v6433 = vpack.c.b16 %v6422, %v6421
        %v6434 = vpack.c.b16 %v6424, %v6423
        %v6435 = vpack.c.b16 %v6426, %v6425
        %v6436 = vpack.c.b16 %v6428, %v6427
        %6445 = vmatprep.subr.bf16.mxu0 0
        %6446 = vmatpush1.bf16.msra.mxu0 %v6436
        %6447 = vmatprep.subr.bf16.mxu0 0
        %6448 = vmatpush1.bf16.msra.mxu0 %v6435
        %6449 = vmatprep.subr.bf16.mxu0 0
        %6450 = vmatpush1.bf16.msra.mxu0 %v6434
        %6451 = vmatprep.subr.bf16.mxu0 0
        %6452 = vmatpush1.bf16.msra.mxu0 %v6433
        %6453 = vmatprep.subr.bf16.mxu0 0
        %6454 = vmatpush1.bf16.msra.mxu0 %v6432
        %6455 = vmatprep.subr.bf16.mxu0 0
        %6456 = vmatpush1.bf16.msra.mxu0 %v6431
        %6457 = vmatprep.subr.bf16.mxu0 0
        %6458 = vmatpush1.bf16.msra.mxu0 %v6430
        %6459 = vmatprep.subr.bf16.mxu0 0
        %6460 = vmatpush1.bf16.msra.mxu0 %v6429
        %6461 = vmatprep.subr.bf16.mxu0 0
        %6462 = vmatpush2.bf16.msra.mxu0 0
        %6463 = vmatprep.subr.bf16.mxu0 0
        %6464 = vmatpush2.bf16.msra.mxu0 0
        %6465 = vmatprep.subr.bf16.mxu0 0
        %6466 = vmatpush2.bf16.msra.mxu0 0
        %6467 = vmatprep.subr.bf16.mxu0 0
        %6468 = vmatpush2.bf16.msra.mxu0 0
        %6469 = vmatprep.subr.bf16.mxu0 0
        %6470 = vmatpush2.bf16.msra.mxu0 0
        %6471 = vmatprep.subr.bf16.mxu0 0
        %6472 = vmatpush2.bf16.msra.mxu0 0
        %6473 = vmatprep.subr.bf16.mxu0 0
        %6474 = vmatpush2.bf16.msra.mxu0 0
        %6475 = vmatprep.subr.bf16.mxu0 0
        %6476 = vmatpush2.bf16.msra.mxu0 0
        %6477 = vmatprep.mubr.bf16.mxu0 0
        %6478 = vmatmul.mubr.bf16.gmra.mxu0 %v6396
        %v6479 = vpop.f32.mrf.mxu0
        %v6480 = vadd.f32 0.0, %v6479
        %v6481 = vpop.f32.mrf.mxu0
        %v6482 = vpop.f32.mrf.mxu0
        %v6483 = vpop.f32.mrf.mxu0
        %6484 = vdwg.mxu0
        %v6485 = vadd.f32 %v6354, %v6480
        %v6486 = vld [vmem:[%s5784] sm:$0x1]
        %v6487 = vsel %vm2533, %v6486, %v6396
        %6488 = vst [vmem:[#allocation2] sm:$0x1] %v6487
        %v6489 = vld [vmem:[%s1 + $0x840] sm:$0xf]
        %v6490 = vld [vmem:[%s1 + $0x844] sm:$0xf]
        %v6491 = vld [vmem:[%s1 + $0x848] sm:$0xf]
        %v6492 = vld [vmem:[%s1 + $0x84c] sm:$0xf]
        %v6493 = vld [vmem:[%s1 + $0x850] sm:$0xf]
        %v6494 = vld [vmem:[%s1 + $0x854] sm:$0xf]
        %v6495 = vld [vmem:[%s1 + $0x858] sm:$0xf]
        %v6496 = vld [vmem:[%s1 + $0x85c] sm:$0xf]
        %v6497 = vld [vmem:[%s1 + $0x860] sm:$0xf]
        %v6498 = vld [vmem:[%s1 + $0x864] sm:$0xf]
        %v6499 = vld [vmem:[%s1 + $0x868] sm:$0xf]
        %v6500 = vld [vmem:[%s1 + $0x86c] sm:$0xf]
        %v6501 = vld [vmem:[%s1 + $0x870] sm:$0xf]
        %v6502 = vld [vmem:[%s1 + $0x874] sm:$0xf]
        %v6503 = vld [vmem:[%s1 + $0x878] sm:$0xf]
        %v6504 = vld [vmem:[%s1 + $0x87c] sm:$0xf]
        %v6505 = vld [vmem:[#allocation2] sm:$0x1]
        %v6522 = vunpack.c.l.b16 %v6489
        %v6523 = vunpack.c.l.b16 %v6490
        %v6524 = vunpack.c.l.b16 %v6491
        %v6525 = vunpack.c.l.b16 %v6492
        %v6526 = vunpack.c.l.b16 %v6493
        %v6527 = vunpack.c.l.b16 %v6494
        %v6528 = vunpack.c.l.b16 %v6495
        %v6529 = vunpack.c.l.b16 %v6496
        %v6530 = vunpack.c.l.b16 %v6497
        %v6531 = vunpack.c.l.b16 %v6498
        %v6532 = vunpack.c.l.b16 %v6499
        %v6533 = vunpack.c.l.b16 %v6500
        %v6534 = vunpack.c.l.b16 %v6501
        %v6535 = vunpack.c.l.b16 %v6502
        %v6536 = vunpack.c.l.b16 %v6503
        %v6537 = vunpack.c.l.b16 %v6504
        %v6538 = vpack.c.b16 %v6523, %v6522
        %v6539 = vpack.c.b16 %v6525, %v6524
        %v6540 = vpack.c.b16 %v6527, %v6526
        %v6541 = vpack.c.b16 %v6529, %v6528
        %v6542 = vpack.c.b16 %v6531, %v6530
        %v6543 = vpack.c.b16 %v6533, %v6532
        %v6544 = vpack.c.b16 %v6535, %v6534
        %v6545 = vpack.c.b16 %v6537, %v6536
        %6554 = vmatprep.subr.bf16.mxu0 0
        %6555 = vmatpush1.bf16.msra.mxu0 %v6545
        %6556 = vmatprep.subr.bf16.mxu0 0
        %6557 = vmatpush1.bf16.msra.mxu0 %v6544
        %6558 = vmatprep.subr.bf16.mxu0 0
        %6559 = vmatpush1.bf16.msra.mxu0 %v6543
        %6560 = vmatprep.subr.bf16.mxu0 0
        %6561 = vmatpush1.bf16.msra.mxu0 %v6542
        %6562 = vmatprep.subr.bf16.mxu0 0
        %6563 = vmatpush1.bf16.msra.mxu0 %v6541
        %6564 = vmatprep.subr.bf16.mxu0 0
        %6565 = vmatpush1.bf16.msra.mxu0 %v6540
        %6566 = vmatprep.subr.bf16.mxu0 0
        %6567 = vmatpush1.bf16.msra.mxu0 %v6539
        %6568 = vmatprep.subr.bf16.mxu0 0
        %6569 = vmatpush1.bf16.msra.mxu0 %v6538
        %6570 = vmatprep.subr.bf16.mxu0 0
        %6571 = vmatpush2.bf16.msra.mxu0 0
        %6572 = vmatprep.subr.bf16.mxu0 0
        %6573 = vmatpush2.bf16.msra.mxu0 0
        %6574 = vmatprep.subr.bf16.mxu0 0
        %6575 = vmatpush2.bf16.msra.mxu0 0
        %6576 = vmatprep.subr.bf16.mxu0 0
        %6577 = vmatpush2.bf16.msra.mxu0 0
        %6578 = vmatprep.subr.bf16.mxu0 0
        %6579 = vmatpush2.bf16.msra.mxu0 0
        %6580 = vmatprep.subr.bf16.mxu0 0
        %6581 = vmatpush2.bf16.msra.mxu0 0
        %6582 = vmatprep.subr.bf16.mxu0 0
        %6583 = vmatpush2.bf16.msra.mxu0 0
        %6584 = vmatprep.subr.bf16.mxu0 0
        %6585 = vmatpush2.bf16.msra.mxu0 0
        %6586 = vmatprep.mubr.bf16.mxu0 0
        %6587 = vmatmul.mubr.bf16.gmra.mxu0 %v6505
        %v6588 = vpop.f32.mrf.mxu0
        %v6589 = vadd.f32 0.0, %v6588
        %v6590 = vpop.f32.mrf.mxu0
        %v6591 = vpop.f32.mrf.mxu0
        %v6592 = vpop.f32.mrf.mxu0
        %6593 = vdwg.mxu0
        %v6594 = vadd.f32 %v6485, %v6589
        %v6595 = vld [vmem:[%s5762] sm:$0x1]
        %v6596 = vsel %vm2533, %v6595, %v6505
        %6597 = vst [vmem:[#allocation2] sm:$0x1] %v6596
        %v6598 = vld [vmem:[%s1 + $0x880] sm:$0xf]
        %v6599 = vld [vmem:[%s1 + $0x884] sm:$0xf]
        %v6600 = vld [vmem:[%s1 + $0x888] sm:$0xf]
        %v6601 = vld [vmem:[%s1 + $0x88c] sm:$0xf]
        %v6602 = vld [vmem:[%s1 + $0x890] sm:$0xf]
        %v6603 = vld [vmem:[%s1 + $0x894] sm:$0xf]
        %v6604 = vld [vmem:[%s1 + $0x898] sm:$0xf]
        %v6605 = vld [vmem:[%s1 + $0x89c] sm:$0xf]
        %v6606 = vld [vmem:[%s1 + $0x8a0] sm:$0xf]
        %v6607 = vld [vmem:[%s1 + $0x8a4] sm:$0xf]
        %v6608 = vld [vmem:[%s1 + $0x8a8] sm:$0xf]
        %v6609 = vld [vmem:[%s1 + $0x8ac] sm:$0xf]
        %v6610 = vld [vmem:[%s1 + $0x8b0] sm:$0xf]
        %v6611 = vld [vmem:[%s1 + $0x8b4] sm:$0xf]
        %v6612 = vld [vmem:[%s1 + $0x8b8] sm:$0xf]
        %v6613 = vld [vmem:[%s1 + $0x8bc] sm:$0xf]
        %v6614 = vld [vmem:[#allocation2] sm:$0x1]
        %v6631 = vunpack.c.l.b16 %v6598
        %v6632 = vunpack.c.l.b16 %v6599
        %v6633 = vunpack.c.l.b16 %v6600
        %v6634 = vunpack.c.l.b16 %v6601
        %v6635 = vunpack.c.l.b16 %v6602
        %v6636 = vunpack.c.l.b16 %v6603
        %v6637 = vunpack.c.l.b16 %v6604
        %v6638 = vunpack.c.l.b16 %v6605
        %v6639 = vunpack.c.l.b16 %v6606
        %v6640 = vunpack.c.l.b16 %v6607
        %v6641 = vunpack.c.l.b16 %v6608
        %v6642 = vunpack.c.l.b16 %v6609
        %v6643 = vunpack.c.l.b16 %v6610
        %v6644 = vunpack.c.l.b16 %v6611
        %v6645 = vunpack.c.l.b16 %v6612
        %v6646 = vunpack.c.l.b16 %v6613
        %v6647 = vpack.c.b16 %v6632, %v6631
        %v6648 = vpack.c.b16 %v6634, %v6633
        %v6649 = vpack.c.b16 %v6636, %v6635
        %v6650 = vpack.c.b16 %v6638, %v6637
        %v6651 = vpack.c.b16 %v6640, %v6639
        %v6652 = vpack.c.b16 %v6642, %v6641
        %v6653 = vpack.c.b16 %v6644, %v6643
        %v6654 = vpack.c.b16 %v6646, %v6645
        %6663 = vmatprep.subr.bf16.mxu0 0
        %6664 = vmatpush1.bf16.msra.mxu0 %v6654
        %6665 = vmatprep.subr.bf16.mxu0 0
        %6666 = vmatpush1.bf16.msra.mxu0 %v6653
        %6667 = vmatprep.subr.bf16.mxu0 0
        %6668 = vmatpush1.bf16.msra.mxu0 %v6652
        %6669 = vmatprep.subr.bf16.mxu0 0
        %6670 = vmatpush1.bf16.msra.mxu0 %v6651
        %6671 = vmatprep.subr.bf16.mxu0 0
        %6672 = vmatpush1.bf16.msra.mxu0 %v6650
        %6673 = vmatprep.subr.bf16.mxu0 0
        %6674 = vmatpush1.bf16.msra.mxu0 %v6649
        %6675 = vmatprep.subr.bf16.mxu0 0
        %6676 = vmatpush1.bf16.msra.mxu0 %v6648
        %6677 = vmatprep.subr.bf16.mxu0 0
        %6678 = vmatpush1.bf16.msra.mxu0 %v6647
        %6679 = vmatprep.subr.bf16.mxu0 0
        %6680 = vmatpush2.bf16.msra.mxu0 0
        %6681 = vmatprep.subr.bf16.mxu0 0
        %6682 = vmatpush2.bf16.msra.mxu0 0
        %6683 = vmatprep.subr.bf16.mxu0 0
        %6684 = vmatpush2.bf16.msra.mxu0 0
        %6685 = vmatprep.subr.bf16.mxu0 0
        %6686 = vmatpush2.bf16.msra.mxu0 0
        %6687 = vmatprep.subr.bf16.mxu0 0
        %6688 = vmatpush2.bf16.msra.mxu0 0
        %6689 = vmatprep.subr.bf16.mxu0 0
        %6690 = vmatpush2.bf16.msra.mxu0 0
        %6691 = vmatprep.subr.bf16.mxu0 0
        %6692 = vmatpush2.bf16.msra.mxu0 0
        %6693 = vmatprep.subr.bf16.mxu0 0
        %6694 = vmatpush2.bf16.msra.mxu0 0
        %6695 = vmatprep.mubr.bf16.mxu0 0
        %6696 = vmatmul.mubr.bf16.gmra.mxu0 %v6614
        %v6697 = vpop.f32.mrf.mxu0
        %v6698 = vadd.f32 0.0, %v6697
        %v6699 = vpop.f32.mrf.mxu0
        %v6700 = vpop.f32.mrf.mxu0
        %v6701 = vpop.f32.mrf.mxu0
        %6702 = vdwg.mxu0
        %v6703 = vadd.f32 %v6594, %v6698
        %v6704 = vld [vmem:[%s5784] sm:$0x1]
        %v6707 = vunpack.c.l.s4 1935823168
        %v6708 = vunpack.c.0.s8 %v6707
        %v6709 = vlaneseq
        %v6710 = vshrl.u32 %v6709, 7
        %v6711 = vsub.s32 %v6708, %v6710
        %v6712 = vrot.slane %v6704, %v6711
        %v6714 = vunpack.c.l.s4 1935823168
        %v6715 = vunpack.c.0.s8 %v6714
        %v6716 = vlaneseq
        %v6717 = vshrl.u32 %v6716, 7
        %v6718 = vsub.s32 %v6715, %v6717
        %v6719 = vrot.slane %v6712, %v6718
        %v6721 = vshrl.u32 %v6719, 16
        %v6723 = vrot.slane %v6721, 4
        %v6724 = vrot.slane %v6723, 4
        %v6726 = vld [vmem:[#allocation2] sm:$0x1]
        %v6727 = vsel %vm2533, %v6724, %v6726
        %6728 = vst [vmem:[#allocation2] sm:$0x1] %v6727
        %v6729 = vld [vmem:[%s1 + $0x8c0] sm:$0xf]
        %v6730 = vld [vmem:[%s1 + $0x8c4] sm:$0xf]
        %v6731 = vld [vmem:[%s1 + $0x8c8] sm:$0xf]
        %v6732 = vld [vmem:[%s1 + $0x8cc] sm:$0xf]
        %v6733 = vld [vmem:[%s1 + $0x8d0] sm:$0xf]
        %v6734 = vld [vmem:[%s1 + $0x8d4] sm:$0xf]
        %v6735 = vld [vmem:[%s1 + $0x8d8] sm:$0xf]
        %v6736 = vld [vmem:[%s1 + $0x8dc] sm:$0xf]
        %v6737 = vld [vmem:[%s1 + $0x8e0] sm:$0xf]
        %v6738 = vld [vmem:[%s1 + $0x8e4] sm:$0xf]
        %v6739 = vld [vmem:[%s1 + $0x8e8] sm:$0xf]
        %v6740 = vld [vmem:[%s1 + $0x8ec] sm:$0xf]
        %v6741 = vld [vmem:[%s1 + $0x8f0] sm:$0xf]
        %v6742 = vld [vmem:[%s1 + $0x8f4] sm:$0xf]
        %v6743 = vld [vmem:[%s1 + $0x8f8] sm:$0xf]
        %v6744 = vld [vmem:[%s1 + $0x8fc] sm:$0xf]
        %v6745 = vld [vmem:[#allocation2] sm:$0x1]
        %v6762 = vunpack.c.l.b16 %v6729
        %v6763 = vunpack.c.l.b16 %v6730
        %v6764 = vunpack.c.l.b16 %v6731
        %v6765 = vunpack.c.l.b16 %v6732
        %v6766 = vunpack.c.l.b16 %v6733
        %v6767 = vunpack.c.l.b16 %v6734
        %v6768 = vunpack.c.l.b16 %v6735
        %v6769 = vunpack.c.l.b16 %v6736
        %v6770 = vunpack.c.l.b16 %v6737
        %v6771 = vunpack.c.l.b16 %v6738
        %v6772 = vunpack.c.l.b16 %v6739
        %v6773 = vunpack.c.l.b16 %v6740
        %v6774 = vunpack.c.l.b16 %v6741
        %v6775 = vunpack.c.l.b16 %v6742
        %v6776 = vunpack.c.l.b16 %v6743
        %v6777 = vunpack.c.l.b16 %v6744
        %v6778 = vpack.c.b16 %v6763, %v6762
        %v6779 = vpack.c.b16 %v6765, %v6764
        %v6780 = vpack.c.b16 %v6767, %v6766
        %v6781 = vpack.c.b16 %v6769, %v6768
        %v6782 = vpack.c.b16 %v6771, %v6770
        %v6783 = vpack.c.b16 %v6773, %v6772
        %v6784 = vpack.c.b16 %v6775, %v6774
        %v6785 = vpack.c.b16 %v6777, %v6776
        %6794 = vmatprep.subr.bf16.mxu0 0
        %6795 = vmatpush1.bf16.msra.mxu0 %v6785
        %6796 = vmatprep.subr.bf16.mxu0 0
        %6797 = vmatpush1.bf16.msra.mxu0 %v6784
        %6798 = vmatprep.subr.bf16.mxu0 0
        %6799 = vmatpush1.bf16.msra.mxu0 %v6783
        %6800 = vmatprep.subr.bf16.mxu0 0
        %6801 = vmatpush1.bf16.msra.mxu0 %v6782
        %6802 = vmatprep.subr.bf16.mxu0 0
        %6803 = vmatpush1.bf16.msra.mxu0 %v6781
        %6804 = vmatprep.subr.bf16.mxu0 0
        %6805 = vmatpush1.bf16.msra.mxu0 %v6780
        %6806 = vmatprep.subr.bf16.mxu0 0
        %6807 = vmatpush1.bf16.msra.mxu0 %v6779
        %6808 = vmatprep.subr.bf16.mxu0 0
        %6809 = vmatpush1.bf16.msra.mxu0 %v6778
        %6810 = vmatprep.subr.bf16.mxu0 0
        %6811 = vmatpush2.bf16.msra.mxu0 0
        %6812 = vmatprep.subr.bf16.mxu0 0
        %6813 = vmatpush2.bf16.msra.mxu0 0
        %6814 = vmatprep.subr.bf16.mxu0 0
        %6815 = vmatpush2.bf16.msra.mxu0 0
        %6816 = vmatprep.subr.bf16.mxu0 0
        %6817 = vmatpush2.bf16.msra.mxu0 0
        %6818 = vmatprep.subr.bf16.mxu0 0
        %6819 = vmatpush2.bf16.msra.mxu0 0
        %6820 = vmatprep.subr.bf16.mxu0 0
        %6821 = vmatpush2.bf16.msra.mxu0 0
        %6822 = vmatprep.subr.bf16.mxu0 0
        %6823 = vmatpush2.bf16.msra.mxu0 0
        %6824 = vmatprep.subr.bf16.mxu0 0
        %6825 = vmatpush2.bf16.msra.mxu0 0
        %6826 = vmatprep.mubr.bf16.mxu0 0
        %6827 = vmatmul.mubr.bf16.gmra.mxu0 %v6745
        %v6828 = vpop.f32.mrf.mxu0
        %v6829 = vadd.f32 0.0, %v6828
        %v6830 = vpop.f32.mrf.mxu0
        %v6831 = vpop.f32.mrf.mxu0
        %v6832 = vpop.f32.mrf.mxu0
        %6833 = vdwg.mxu0
        %v6834 = vadd.f32 %v6703, %v6829
        %v6835 = vld [vmem:[%s2 + $0x3] sm:$0x1]
        %v6836 = vadd.f32 %v6834, %v6835
        %v6837 = vmax.f32 %v6836, 0.0
        %vm6838 = vcmask 516096
        %6839 = vst.msk [vmem:[%s268] sm:$0x1] %vm6838, %v6837
        %p6840 = scmp.lt.s32.totalorder %s24, 1
        %s6841 = scalar_select %p6840, %s24, 1
        %s6842 = smul.addr %s6841, 8
        %s6843 = smul.addr %s6842, 8
        %s6844 = scalar_lea.vmem %s3, %s6843
        %s6845 = sand.u32 %s126, 1
        %s6846 = scalar_lea.sflag [#allocation8], %s6845
        %s6847 = sand.u32 %s126, 1
        %s6848 = smul.addr %s6847, 16
        %s6849 = scalar_lea.vmem [#allocation7], %s6848
        %s6850 = sand.u32 %s24, 1
        %s6851 = scalar_lea.sflag [#allocation10], %s6850
        %s6852 = sand.u32 %s152, 1
        %s6853 = smul.addr %s6852, 4
        %s6854 = scalar_lea.vmem [#allocation9], %s6853
        %s6855 = sand.u32 %s24, 1
        %s6856 = scalar_lea.sflag [#allocation10], %s6855
        %s6857 = sand.u32 %s178, 1
        %s6858 = scalar_lea.vmem [#allocation11], %s6857
        // Predicated region
        $region33: #{_lambda_.1} parent=31 // pred_check
          %p6859 = pneg %p110
        $region34: #{_lambda_.1} parent=31 // pred_check_branch
          %6861 = sbr.rel (%p6859) target = $region36
        $region35: #{_lambda_.1} parent=31 // pred_region
          _
        $region36: #{_lambda_.1} parent=31 // pred_fallthru
          _
        // Predicated region
        $region37: #{_lambda_.1} parent=31 // pred_check
          %p6862 = pneg %p136
        $region38: #{_lambda_.1} parent=31 // pred_check_branch
          %6864 = sbr.rel (%p6862) target = $region40
        $region39: #{_lambda_.1} parent=31 // pred_region
          %s6866 = ssub.s32 256, 256
          %6867 = vsyncadd %s6846, %s6866
          %s6868 = smul.addr %s24, 2
          %s6869 = smul.addr %s6868, 128
          %s6870 = scalar_lea.hbm %s4, %s6869
          %s6871 = sshll.u32 %s6849, 4
          %s6872 = int_to_ptr.vmem [resolvable:$true] %s6871
          %6877 = dma.vmem_to_hbm [thread:$0]  %s6872, 256, %s6870, %s6846, 128, 128, 8
        $region40: #{_lambda_.1} parent=31 // pred_fallthru
          _
        // Predicated region
        $region41: #{_lambda_.1} parent=31 // pred_check
          %p6878 = pneg %p162
        $region42: #{_lambda_.1} parent=31 // pred_check_branch
          %6880 = sbr.rel (%p6878) target = $region44
        $region43: #{_lambda_.1} parent=31 // pred_region
          %s6882 = ssub.s32 64, 64
          %6883 = vsyncadd %s6851, %s6882
          %s6884 = smul.addr %s24, 64
          %s6885 = scalar_lea.hbm %s5, %s6884
          %s6887 = sshll.u32 %s6854, 4
          %s6888 = int_to_ptr.vmem [resolvable:$true] %s6887
          %6890 = dma.vmem_to_hbm [thread:$0]  %s6888, 64, %s6885, %s6851
        $region44: #{_lambda_.1} parent=31 // pred_fallthru
          _
        // Predicated region
        $region45: #{_lambda_.1} parent=31 // pred_check
          %p6891 = pneg %p188
        $region46: #{_lambda_.1} parent=31 // pred_check_branch
          %6893 = sbr.rel (%p6891) target = $region48
        $region47: #{_lambda_.1} parent=31 // pred_region
          %s6895 = ssub.s32 16, 16
          %6896 = vsyncadd %s6856, %s6895
          %s6897 = smul.addr %s24, 16
          %s6898 = scalar_lea.hbm %s6, %s6897
          %s6900 = sshll.u32 %s6858, 4
          %s6901 = int_to_ptr.vmem [resolvable:$true] %s6900
          %6903 = dma.vmem_to_hbm [thread:$0]  %s6901, 16, %s6898, %s6856
        $region48: #{_lambda_.1} parent=31 // pred_fallthru
          _
      $region32: #{_lambda_.1} parent=5 // pred_fallthru
        _
      %p6904 = scmp.le.s32.totalorder 2, %s19
      // Predicated region
      $region49: #{_lambda_.1} parent=5 // pred_check
        %p6905 = pneg %p6904
      $region50: #{_lambda_.1} parent=5 // pred_check_branch
        %6907 = sbr.rel (%p6905) target = $region52
      $region51: #{_lambda_.1} parent=5 // pred_region
        %s6908 = ssub.s32 %s19, 2
        // Predicated region
        $region53: #{_lambda_.1} parent=51 // pred_check
          %p6909 = pneg %p116
        $region54: #{_lambda_.1} parent=51 // pred_check_branch
          %6911 = sbr.rel (%p6909) target = $region56
        $region55: #{_lambda_.1} parent=51 // pred_region
          %p6912 = scmp.lt.s32.totalorder %s25, 1
          %s6913 = scalar_select %p6912, %s25, 1
          %s6914 = smul.addr %s6913, 8
          %s6915 = smul.addr %s6914, 8
          %s6916 = scalar_lea.vmem %s3, %s6915
        $region56: #{_lambda_.1} parent=51 // pred_fallthru
          _
        // Predicated region
        $region57: #{_lambda_.1} parent=51 // pred_check
          %p6917 = pneg %p142
        $region58: #{_lambda_.1} parent=51 // pred_check_branch
          %6919 = sbr.rel (%p6917) target = $region60
        $region59: #{_lambda_.1} parent=51 // pred_region
          %s6920 = sand.u32 %s127, 1
          %s6921 = scalar_lea.sflag [#allocation8], %s6920
          %s6922 = sand.u32 %s127, 1
          %s6923 = smul.addr %s6922, 16
          %s6924 = scalar_lea.vmem [#allocation7], %s6923
          %6925 = dma.done %s6921, 256
        $region60: #{_lambda_.1} parent=51 // pred_fallthru
          _
        // Predicated region
        $region61: #{_lambda_.1} parent=51 // pred_check
          %p6926 = pneg %p168
        $region62: #{_lambda_.1} parent=51 // pred_check_branch
          %6928 = sbr.rel (%p6926) target = $region64
        $region63: #{_lambda_.1} parent=51 // pred_region
          %s6929 = sand.u32 %s25, 1
          %s6930 = scalar_lea.sflag [#allocation10], %s6929
          %s6931 = sand.u32 %s153, 1
          %s6932 = smul.addr %s6931, 4
          %s6933 = scalar_lea.vmem [#allocation9], %s6932
          %6934 = dma.done %s6930, 64
        $region64: #{_lambda_.1} parent=51 // pred_fallthru
          _
        // Predicated region
        $region65: #{_lambda_.1} parent=51 // pred_check
          %p6935 = pneg %p194
        $region66: #{_lambda_.1} parent=51 // pred_check_branch
          %6937 = sbr.rel (%p6935) target = $region68
        $region67: #{_lambda_.1} parent=51 // pred_region
          %s6938 = sand.u32 %s25, 1
          %s6939 = scalar_lea.sflag [#allocation10], %s6938
          %s6940 = sand.u32 %s179, 1
          %s6941 = scalar_lea.vmem [#allocation11], %s6940
          %6942 = dma.done %s6939, 16
        $region68: #{_lambda_.1} parent=51 // pred_fallthru
          _
      $region52: #{_lambda_.1} parent=5 // pred_fallthru
        _
    $region6: #{_lambda_.1} parent=1 // loop_footer
      %s23 = sadd.s32 1, %s19
    $region7: #{_lambda_.1} parent=1 // loop_footer_branch
      %18 = sbr.rel target = $region3
    $region8: #{_lambda_.1} parent=1 // loop_exit
      _
    %6943 = vsyncpa [#allocation8], 1
    %s6944 = scalar_lea.sflag [#allocation8], 1
    %6945 = vsyncpa %s6944, 1
    %6946 = vsyncpa [#allocation10], 1
    %s6947 = scalar_lea.sflag [#allocation10], 1
    %6948 = vsyncpa %s6947, 1

</llo_original>
